<compile_context>
chip_gen: v6e
topology: v6e:2x2x1
jax: 0.10.0
libtpu: 0.0.40
codegen_flags: <defaults>
</compile_context>

<pallas_src>
import jax
import jax.numpy as jnp
from jax.experimental import pallas as pl
from jax.experimental.pallas import tpu as pltpu

K_RAW, K_PAD = 784, 896      # 7 * 128 -> lane-aligned K for the first matmul
N_RAW, N_PAD = 10, 128       # lane-dense output block
H1, H2 = 1024, 512
TB_MAX = 512                 # max batch tile (VMEM-safe on all gens incl. v7x)


def mlp_kernel(x_ref, w1_ref, b1_ref, w2_ref, b2_ref, w3_ref, b3_ref, o_ref):
    # x: (TB, 896) bf16, w1: (896, 1024) bf16, b1: (1, 1024) f32
    h1 = jnp.dot(x_ref[...], w1_ref[...], preferred_element_type=jnp.float32)
    h1 = jnp.maximum(h1 + b1_ref[...], 0.0).astype(jnp.bfloat16)        # ReLU (f32 epilogue)
    # h1: (TB, 1024) bf16, w2: (1024, 512) bf16, b2: (1, 512) f32
    h2 = jnp.dot(h1, w2_ref[...], preferred_element_type=jnp.float32)
    h2 = jnp.maximum(h2 + b2_ref[...], 0.0).astype(jnp.bfloat16)        # ReLU (f32 epilogue)
    # h2: (TB, 512) bf16, w3: (512, 128) bf16 (cols 10..127 are zero)
    out = jnp.dot(h2, w3_ref[...], preferred_element_type=jnp.float32)
    o_ref[...] = (out + b3_ref[...]).astype(o_ref.dtype)


def _round_up(x, m):
    return ((x + m - 1) // m) * m


def _select_batch_tile(B):
    """Batch tile: 16-aligned (bf16 sublane packing), balanced so padding is
    < one tile, capped at TB_MAX, and >= 2 grid steps once B > 64 so both
    v7x TensorCores get work."""
    if B <= 64:
        # Small-batch serving path: one tile; the kernel is weight-DMA /
        # launch-overhead bound here, so further tiling buys nothing.
        return max(16, _round_up(B, 16))
    n_steps = max(2, pl.cdiv(B, TB_MAX))
    return _round_up(pl.cdiv(B, n_steps), 16)


def _const_spec(shape, single_buffer):
    """Weight-resident BlockSpec: constant index map; optionally single-buffered."""
    if single_buffer:
        return pl.BlockSpec(shape, lambda i: (0, 0), pipeline_mode=pl.Buffered(1))
    return pl.BlockSpec(shape, lambda i: (0, 0))


def prepare_params(params):
    """One-time (hoisted) pad + bf16 cast of the f32 nn.Linear parameters."""
    w1, b1, w2, b2, w3, b3 = params
    w1p = jnp.zeros((K_PAD, H1), jnp.float32).at[:K_RAW, :].set(w1)
    w3p = jnp.zeros((H2, N_PAD), jnp.float32).at[:, :N_RAW].set(w3)
    b3p = jnp.zeros((1, N_PAD), jnp.float32).at[:, :N_RAW].set(b3)
    return (w1p.astype(jnp.bfloat16), b1.astype(jnp.float32),
            w2.astype(jnp.bfloat16),  b2.astype(jnp.float32),
            w3p.astype(jnp.bfloat16), b3p)


def mlp_forward(x_nchw, prepared):
    """x_nchw: (B, 1, 28, 28) float32 -> logits (B, 10) float32."""
    w1, b1, w2, b2, w3, b3 = prepared
    B = x_nchw.shape[0]
    x_flat = x_nchw.reshape(B, -1)                       # nn.Flatten() -> (B, 784)

    tb = _select_batch_tile(B)
    b_pad = pl.cdiv(B, tb) * tb

    # Build the padded activation buffer directly in bf16 (no f32 round trip).
    xp = (jnp.zeros((b_pad, K_PAD), jnp.bfloat16)
          .at[:B, :K_RAW].set(x_flat.astype(jnp.bfloat16)))

    def call(single_buffer_weights):
        const = lambda shape: _const_spec(shape, single_buffer_weights)
        return pl.pallas_call(
            mlp_kernel,
            out_shape=jax.ShapeDtypeStruct((b_pad, N_PAD), jnp.float32),
            grid=(b_pad // tb,),
            in_specs=[
                pl.BlockSpec((tb, K_PAD), lambda i: (i, 0)),   # x tile, pipelined
                const((K_PAD, H1)), const((1, H1)),            # w1, b1 (resident)
                const((H1, H2)),    const((1, H2)),            # w2, b2 (resident)
                const((H2, N_PAD)), const((1, N_PAD)),         # w3, b3 (padded, resident)
            ],
            out_specs=pl.BlockSpec((tb, N_PAD), lambda i: (i, 0)),
            compiler_params=pltpu.CompilerParams(
                dimension_semantics=("parallel",),
                vmem_limit_bytes=32 << 20,
            ),
        )(xp, w1, b1, w2, b2, w3, b3)

    try:
        out = call(single_buffer_weights=True)
    except Exception:
        # Fallback for jax versions without pl.Buffered support on the TPU
        # pipeline: default double-buffered weight specs (correct, just
        # ~2.9 MiB more VMEM).
        out = call(single_buffer_weights=False)
    return out[:B, :N_RAW]


def init_params(key):
    """Deterministic synthetic params, shapes matching the nn.Linear layers.

    PyTorch nn.Linear(in, out) stores weight (out, in) and computes
    y = x @ W.T + b; we store the transposed (in, out) form directly.
    """
    k1, k2, k3 = jax.random.split(key, 3)

    def linear(k, fan_in, fan_out):
        bound = 1.0 / jnp.sqrt(fan_in)
        kw, kb = jax.random.split(k)
        w = jax.random.uniform(kw, (fan_in, fan_out), jnp.float32, -bound, bound)
        b = jax.random.uniform(kb, (1, fan_out), jnp.float32, -bound, bound)
        return w, b

    w1, b1 = linear(k1, K_RAW, H1)
    w2, b2 = linear(k2, H1, H2)
    w3, b3 = linear(k3, H2, N_RAW)
    return (w1, b1, w2, b2, w3, b3)


def _ref_bf16(x_nchw, params):
    """Reference mirroring the kernel's bf16-input / f32-accumulate math."""
    w1, b1, w2, b2, w3, b3 = params
    B = x_nchw.shape[0]
    xf = x_nchw.reshape(B, -1).astype(jnp.bfloat16)
    h1 = jnp.maximum(
        jnp.dot(xf, w1.astype(jnp.bfloat16), preferred_element_type=jnp.float32) + b1, 0.0
    ).astype(jnp.bfloat16)
    h2 = jnp.maximum(
        jnp.dot(h1, w2.astype(jnp.bfloat16), preferred_element_type=jnp.float32) + b2, 0.0
    ).astype(jnp.bfloat16)
    return jnp.dot(h2, w3.astype(jnp.bfloat16), preferred_element_type=jnp.float32) + b3


def _ref_f32(x_nchw, params):
    """Pure-f32 forward pass (matches the PyTorch module exactly)."""
    w1, b1, w2, b2, w3, b3 = params
    B = x_nchw.shape[0]
    xf = x_nchw.reshape(B, -1)
    h1 = jnp.maximum(xf @ w1 + b1, 0.0)
    h2 = jnp.maximum(h1 @ w2 + b2, 0.0)
    return h2 @ w3 + b3


if __name__ == "__main__":
    key = jax.random.PRNGKey(0)
    kx1, kx2, kp = jax.random.split(key, 3)

    params = init_params(kp)
    prepared = prepare_params(params)   # pad + bf16 cast, hoisted out of the call

    # Small serving-style batch (single tile path).
    B_small = 8
    x_small = jax.random.normal(kx1, (B_small, 1, 28, 28), dtype=jnp.float32)
    out_small = mlp_forward(x_small, prepared)
    jax.block_until_ready(out_small)
    assert out_small.shape == (B_small, 10) and out_small.dtype == jnp.float32
    assert jnp.allclose(out_small, _ref_bf16(x_small, params), atol=1e-2, rtol=1e-2)
    assert jnp.allclose(out_small, _ref_f32(x_small, params), atol=5e-2, rtol=5e-2)

    # Slightly larger batch: exercises the balanced 2-step parallel grid
    # (tb=48, b_pad=96) used for the dual-TensorCore path.
    B_big = 96
    x_big = jax.random.normal(kx2, (B_big, 1, 28, 28), dtype=jnp.float32)
    out_big = mlp_forward(x_big, prepared)
    jax.block_until_ready(out_big)
    assert out_big.shape == (B_big, 10) and out_big.dtype == jnp.float32
    assert jnp.allclose(out_big, _ref_bf16(x_big, params), atol=1e-2, rtol=1e-2)
    assert jnp.allclose(out_big, _ref_f32(x_big, params), atol=5e-2, rtol=5e-2)

    print("KERNEL_OK")
</pallas_src>

<mosaic_0001>
module attributes {stable_mosaic.version = 11 : i64} {
  func.func @mlp_kernel(%arg0: i32, %arg1: memref<16x896xbf16, #tpu.memory_space<vmem>>, %arg2: memref<896x1024xbf16, #tpu.memory_space<vmem>>, %arg3: memref<1x1024xf32, #tpu.memory_space<vmem>>, %arg4: memref<1024x512xbf16, #tpu.memory_space<vmem>>, %arg5: memref<1x512xf32, #tpu.memory_space<vmem>>, %arg6: memref<512x128xbf16, #tpu.memory_space<vmem>>, %arg7: memref<1x128xf32, #tpu.memory_space<vmem>>, %arg8: memref<16x128xf32, #tpu.memory_space<vmem>>) attributes {dimension_semantics = [#tpu.dimension_semantics<parallel>], iteration_bounds = array<i64: 1>, scalar_prefetch = 0 : i64, scratch_operands = 0 : i64, tpu.core_type = #tpu.core_type<tc>, window_params = [{transform_indices = @transform_0, window_bounds = array<i64: 16, 896>}, {pipeline_mode = #tpu.pipeline_mode<synchronous>, transform_indices = @transform_1, window_bounds = array<i64: 896, 1024>}, {pipeline_mode = #tpu.pipeline_mode<synchronous>, transform_indices = @transform_2, window_bounds = array<i64: 1, 1024>}, {pipeline_mode = #tpu.pipeline_mode<synchronous>, transform_indices = @transform_3, window_bounds = array<i64: 1024, 512>}, {pipeline_mode = #tpu.pipeline_mode<synchronous>, transform_indices = @transform_4, window_bounds = array<i64: 1, 512>}, {pipeline_mode = #tpu.pipeline_mode<synchronous>, transform_indices = @transform_5, window_bounds = array<i64: 512, 128>}, {pipeline_mode = #tpu.pipeline_mode<synchronous>, transform_indices = @transform_6, window_bounds = array<i64: 1, 128>}, {transform_indices = @transform_7, window_bounds = array<i64: 16, 128>}]} {
    %c0 = arith.constant 0 : index
    %c0_0 = arith.constant 0 : index
    %0 = vector.load %arg1[%c0, %c0_0] : memref<16x896xbf16, #tpu.memory_space<vmem>>, vector<16x896xbf16>
    %c0_1 = arith.constant 0 : index
    %c0_2 = arith.constant 0 : index
    %1 = vector.load %arg2[%c0_1, %c0_2] : memref<896x1024xbf16, #tpu.memory_space<vmem>>, vector<896x1024xbf16>
    %cst = arith.constant dense<0.000000e+00> : vector<16x1024xf32>
    %2 = tpu.matmul %0, %1, %cst {dimension_numbers = #tpu.dot_dimension_numbers<[1], [0], [0], [1], [0, 0, 1, 1], [], []>} : vector<16x896xbf16>, vector<896x1024xbf16>, vector<16x1024xf32> -> vector<16x1024xf32>
    %c0_3 = arith.constant 0 : index
    %c0_4 = arith.constant 0 : index
    %3 = vector.load %arg3[%c0_3, %c0_4] : memref<1x1024xf32, #tpu.memory_space<vmem>>, vector<1x1024xf32>
    %4 = vector.broadcast %3 : vector<1x1024xf32> to vector<16x1024xf32>
    %5 = arith.addf %2, %4 : vector<16x1024xf32>
    %cst_5 = arith.constant 0.000000e+00 : f32
    %6 = vector.broadcast %cst_5 : f32 to vector<16x1024xf32>
    %7 = arith.maximumf %5, %6 : vector<16x1024xf32>
    %8 = arith.truncf %7 : vector<16x1024xf32> to vector<16x1024xbf16>
    %c0_6 = arith.constant 0 : index
    %c0_7 = arith.constant 0 : index
    %9 = vector.load %arg4[%c0_6, %c0_7] : memref<1024x512xbf16, #tpu.memory_space<vmem>>, vector<1024x512xbf16>
    %cst_8 = arith.constant dense<0.000000e+00> : vector<16x512xf32>
    %10 = tpu.matmul %8, %9, %cst_8 {dimension_numbers = #tpu.dot_dimension_numbers<[1], [0], [0], [1], [0, 0, 1, 1], [], []>} : vector<16x1024xbf16>, vector<1024x512xbf16>, vector<16x512xf32> -> vector<16x512xf32>
    %c0_9 = arith.constant 0 : index
    %c0_10 = arith.constant 0 : index
    %11 = vector.load %arg5[%c0_9, %c0_10] : memref<1x512xf32, #tpu.memory_space<vmem>>, vector<1x512xf32>
    %12 = vector.broadcast %11 : vector<1x512xf32> to vector<16x512xf32>
    %13 = arith.addf %10, %12 : vector<16x512xf32>
    %cst_11 = arith.constant 0.000000e+00 : f32
    %14 = vector.broadcast %cst_11 : f32 to vector<16x512xf32>
    %15 = arith.maximumf %13, %14 : vector<16x512xf32>
    %16 = arith.truncf %15 : vector<16x512xf32> to vector<16x512xbf16>
    %c0_12 = arith.constant 0 : index
    %c0_13 = arith.constant 0 : index
    %17 = vector.load %arg6[%c0_12, %c0_13] : memref<512x128xbf16, #tpu.memory_space<vmem>>, vector<512x128xbf16>
    %cst_14 = arith.constant dense<0.000000e+00> : vector<16x128xf32>
    %18 = tpu.matmul %16, %17, %cst_14 {dimension_numbers = #tpu.dot_dimension_numbers<[1], [0], [0], [1], [0, 0, 1, 1], [], []>} : vector<16x512xbf16>, vector<512x128xbf16>, vector<16x128xf32> -> vector<16x128xf32>
    %c0_15 = arith.constant 0 : index
    %c0_16 = arith.constant 0 : index
    %19 = vector.load %arg7[%c0_15, %c0_16] : memref<1x128xf32, #tpu.memory_space<vmem>>, vector<1x128xf32>
    %20 = vector.broadcast %19 : vector<1x128xf32> to vector<16x128xf32>
    %21 = arith.addf %18, %20 : vector<16x128xf32>
    %c0_17 = arith.constant 0 : index
    %c0_18 = arith.constant 0 : index
    %22 = vector.load %arg8[%c0_17, %c0_18] : memref<16x128xf32, #tpu.memory_space<vmem>>, vector<16x128xf32>
    tpu.vector_store %arg8[%c0_17, %c0_18], %21 {strides = array<i32>} : memref<16x128xf32, #tpu.memory_space<vmem>>, vector<16x128xf32>,
    return
  }
  func.func @transform_0(%arg0: i32) -> (i32, i32) {
    %c0_i32 = arith.constant 0 : i32
    %c0_i32_0 = arith.constant 0 : i32
    return %arg0, %c0_i32 : i32, i32
  }
  func.func @transform_1(%arg0: i32) -> (i32, i32) {
    %c0_i32 = arith.constant 0 : i32
    %c0_i32_0 = arith.constant 0 : i32
    %c0_i32_1 = arith.constant 0 : i32
    return %c0_i32, %c0_i32_0 : i32, i32
  }
  func.func @transform_2(%arg0: i32) -> (i32, i32) {
    %c0_i32 = arith.constant 0 : i32
    %c0_i32_0 = arith.constant 0 : i32
    %c0_i32_1 = arith.constant 0 : i32
    return %c0_i32, %c0_i32_0 : i32, i32
  }
  func.func @transform_3(%arg0: i32) -> (i32, i32) {
    %c0_i32 = arith.constant 0 : i32
    %c0_i32_0 = arith.constant 0 : i32
    %c0_i32_1 = arith.constant 0 : i32
    return %c0_i32, %c0_i32_0 : i32, i32
  }
  func.func @transform_4(%arg0: i32) -> (i32, i32) {
    %c0_i32 = arith.constant 0 : i32
    %c0_i32_0 = arith.constant 0 : i32
    %c0_i32_1 = arith.constant 0 : i32
    return %c0_i32, %c0_i32_0 : i32, i32
  }
  func.func @transform_5(%arg0: i32) -> (i32, i32) {
    %c0_i32 = arith.constant 0 : i32
    %c0_i32_0 = arith.constant 0 : i32
    %c0_i32_1 = arith.constant 0 : i32
    return %c0_i32, %c0_i32_0 : i32, i32
  }
  func.func @transform_6(%arg0: i32) -> (i32, i32) {
    %c0_i32 = arith.constant 0 : i32
    %c0_i32_0 = arith.constant 0 : i32
    %c0_i32_1 = arith.constant 0 : i32
    return %c0_i32, %c0_i32_0 : i32, i32
  }
  func.func @transform_7(%arg0: i32) -> (i32, i32) {
    %c0_i32 = arith.constant 0 : i32
    %c0_i32_0 = arith.constant 0 : i32
    return %arg0, %c0_i32 : i32, i32
  }
}

module attributes {stable_mosaic.version = 11 : i64} {
  func.func @mlp_kernel(%arg0: i32, %arg1: memref<16x896xbf16, #tpu.memory_space<vmem>>, %arg2: memref<896x1024xbf16, #tpu.memory_space<vmem>>, %arg3: memref<1x1024xf32, #tpu.memory_space<vmem>>, %arg4: memref<1024x512xbf16, #tpu.memory_space<vmem>>, %arg5: memref<1x512xf32, #tpu.memory_space<vmem>>, %arg6: memref<512x128xbf16, #tpu.memory_space<vmem>>, %arg7: memref<1x128xf32, #tpu.memory_space<vmem>>, %arg8: memref<16x128xf32, #tpu.memory_space<vmem>>) attributes {dimension_semantics = [#tpu.dimension_semantics<parallel>], iteration_bounds = array<i64: 1>, scalar_prefetch = 0 : i64, scratch_operands = 0 : i64, tpu.core_type = #tpu.core_type<tc>, window_params = [{transform_indices = @transform_0, window_bounds = array<i64: 16, 896>}, {pipeline_mode = #tpu.pipeline_mode<synchronous>, transform_indices = @transform_1, window_bounds = array<i64: 896, 1024>}, {pipeline_mode = #tpu.pipeline_mode<synchronous>, transform_indices = @transform_2, window_bounds = array<i64: 1, 1024>}, {pipeline_mode = #tpu.pipeline_mode<synchronous>, transform_indices = @transform_3, window_bounds = array<i64: 1024, 512>}, {pipeline_mode = #tpu.pipeline_mode<synchronous>, transform_indices = @transform_4, window_bounds = array<i64: 1, 512>}, {pipeline_mode = #tpu.pipeline_mode<synchronous>, transform_indices = @transform_5, window_bounds = array<i64: 512, 128>}, {pipeline_mode = #tpu.pipeline_mode<synchronous>, transform_indices = @transform_6, window_bounds = array<i64: 1, 128>}, {transform_indices = @transform_7, window_bounds = array<i64: 16, 128>}]} {
    %c0 = arith.constant 0 : index
    %c0_0 = arith.constant 0 : index
    %0 = vector.load %arg1[%c0, %c0_0] : memref<16x896xbf16, #tpu.memory_space<vmem>>, vector<16x896xbf16>
    %c0_1 = arith.constant 0 : index
    %c0_2 = arith.constant 0 : index
    %1 = vector.load %arg2[%c0_1, %c0_2] : memref<896x1024xbf16, #tpu.memory_space<vmem>>, vector<896x1024xbf16>
    %cst = arith.constant dense<0.000000e+00> : vector<16x1024xf32>
    %2 = tpu.matmul %0, %1, %cst {dimension_numbers = #tpu.dot_dimension_numbers<[1], [0], [0], [1], [0, 0, 1, 1], [], []>} : vector<16x896xbf16>, vector<896x1024xbf16>, vector<16x1024xf32> -> vector<16x1024xf32>
    %c0_3 = arith.constant 0 : index
    %c0_4 = arith.constant 0 : index
    %3 = vector.load %arg3[%c0_3, %c0_4] : memref<1x1024xf32, #tpu.memory_space<vmem>>, vector<1x1024xf32>
    %4 = vector.broadcast %3 : vector<1x1024xf32> to vector<16x1024xf32>
    %5 = arith.addf %2, %4 : vector<16x1024xf32>
    %cst_5 = arith.constant 0.000000e+00 : f32
    %6 = vector.broadcast %cst_5 : f32 to vector<16x1024xf32>
    %7 = arith.maximumf %5, %6 : vector<16x1024xf32>
    %8 = arith.truncf %7 : vector<16x1024xf32> to vector<16x1024xbf16>
    %c0_6 = arith.constant 0 : index
    %c0_7 = arith.constant 0 : index
    %9 = vector.load %arg4[%c0_6, %c0_7] : memref<1024x512xbf16, #tpu.memory_space<vmem>>, vector<1024x512xbf16>
    %cst_8 = arith.constant dense<0.000000e+00> : vector<16x512xf32>
    %10 = tpu.matmul %8, %9, %cst_8 {dimension_numbers = #tpu.dot_dimension_numbers<[1], [0], [0], [1], [0, 0, 1, 1], [], []>} : vector<16x1024xbf16>, vector<1024x512xbf16>, vector<16x512xf32> -> vector<16x512xf32>
    %c0_9 = arith.constant 0 : index
    %c0_10 = arith.constant 0 : index
    %11 = vector.load %arg5[%c0_9, %c0_10] : memref<1x512xf32, #tpu.memory_space<vmem>>, vector<1x512xf32>
    %12 = vector.broadcast %11 : vector<1x512xf32> to vector<16x512xf32>
    %13 = arith.addf %10, %12 : vector<16x512xf32>
    %cst_11 = arith.constant 0.000000e+00 : f32
    %14 = vector.broadcast %cst_11 : f32 to vector<16x512xf32>
    %15 = arith.maximumf %13, %14 : vector<16x512xf32>
    %16 = arith.truncf %15 : vector<16x512xf32> to vector<16x512xbf16>
    %c0_12 = arith.constant 0 : index
    %c0_13 = arith.constant 0 : index
    %17 = vector.load %arg6[%c0_12, %c0_13] : memref<512x128xbf16, #tpu.memory_space<vmem>>, vector<512x128xbf16>
    %cst_14 = arith.constant dense<0.000000e+00> : vector<16x128xf32>
    %18 = tpu.matmul %16, %17, %cst_14 {dimension_numbers = #tpu.dot_dimension_numbers<[1], [0], [0], [1], [0, 0, 1, 1], [], []>} : vector<16x512xbf16>, vector<512x128xbf16>, vector<16x128xf32> -> vector<16x128xf32>
    %c0_15 = arith.constant 0 : index
    %c0_16 = arith.constant 0 : index
    %19 = vector.load %arg7[%c0_15, %c0_16] : memref<1x128xf32, #tpu.memory_space<vmem>>, vector<1x128xf32>
    %20 = vector.broadcast %19 : vector<1x128xf32> to vector<16x128xf32>
    %21 = arith.addf %18, %20 : vector<16x128xf32>
    %c0_17 = arith.constant 0 : index
    %c0_18 = arith.constant 0 : index
    %22 = vector.load %arg8[%c0_17, %c0_18] : memref<16x128xf32, #tpu.memory_space<vmem>>, vector<16x128xf32>
    tpu.vector_store %arg8[%c0_17, %c0_18], %21 {strides = array<i32>} : memref<16x128xf32, #tpu.memory_space<vmem>>, vector<16x128xf32>,
    return
  }
  func.func @transform_0(%arg0: i32) -> (i32, i32) {
    %c0_i32 = arith.constant 0 : i32
    %c0_i32_0 = arith.constant 0 : i32
    return %arg0, %c0_i32 : i32, i32
  }
  func.func @transform_1(%arg0: i32) -> (i32, i32) {
    %c0_i32 = arith.constant 0 : i32
    %c0_i32_0 = arith.constant 0 : i32
    %c0_i32_1 = arith.constant 0 : i32
    return %c0_i32, %c0_i32_0 : i32, i32
  }
  func.func @transform_2(%arg0: i32) -> (i32, i32) {
    %c0_i32 = arith.constant 0 : i32
    %c0_i32_0 = arith.constant 0 : i32
    %c0_i32_1 = arith.constant 0 : i32
    return %c0_i32, %c0_i32_0 : i32, i32
  }
  func.func @transform_3(%arg0: i32) -> (i32, i32) {
    %c0_i32 = arith.constant 0 : i32
    %c0_i32_0 = arith.constant 0 : i32
    %c0_i32_1 = arith.constant 0 : i32
    return %c0_i32, %c0_i32_0 : i32, i32
  }
  func.func @transform_4(%arg0: i32) -> (i32, i32) {
    %c0_i32 = arith.constant 0 : i32
    %c0_i32_0 = arith.constant 0 : i32
    %c0_i32_1 = arith.constant 0 : i32
    return %c0_i32, %c0_i32_0 : i32, i32
  }
  func.func @transform_5(%arg0: i32) -> (i32, i32) {
    %c0_i32 = arith.constant 0 : i32
    %c0_i32_0 = arith.constant 0 : i32
    %c0_i32_1 = arith.constant 0 : i32
    return %c0_i32, %c0_i32_0 : i32, i32
  }
  func.func @transform_6(%arg0: i32) -> (i32, i32) {
    %c0_i32 = arith.constant 0 : i32
    %c0_i32_0 = arith.constant 0 : i32
    %c0_i32_1 = arith.constant 0 : i32
    return %c0_i32, %c0_i32_0 : i32, i32
  }
  func.func @transform_7(%arg0: i32) -> (i32, i32) {
    %c0_i32 = arith.constant 0 : i32
    %c0_i32_0 = arith.constant 0 : i32
    return %arg0, %c0_i32 : i32, i32
  }
}

</mosaic_0001>

<llo_original>
// kernel: tpu_custom_call.1
$region0: #{tpu_custom_call.1}
  #allocation0 [shape = 'u32[]', space=smem, size = 0x4, offset = 0x4, fixed_abs, tag = 'smem constant byte address 0x4 - core index']
  #allocation1 [shape = 'u32[144,128]{1,0:T(1,128)}', space=vmem, size = 0x12000, scoped, tag = 'internal scratch']
  %s0 = inlined_call_operand.hbm [shape: bf16[16,896], index: 0, kind: input, shape index: {}]
  %s1 = inlined_call_operand.hbm [shape: bf16[896,1024], index: 1, kind: input, shape index: {}]
  %s2 = inlined_call_operand.hbm [shape: f32[1,1024], index: 2, kind: input, shape index: {}]
  %s3 = inlined_call_operand.hbm [shape: bf16[1024,512], index: 3, kind: input, shape index: {}]
  %s4 = inlined_call_operand.hbm [shape: f32[1,512], index: 4, kind: input, shape index: {}]
  %s5 = inlined_call_operand.hbm [shape: bf16[512,128], index: 5, kind: input, shape index: {}]
  %s6 = inlined_call_operand.hbm [shape: f32[1,128], index: 6, kind: input, shape index: {}]
  %s7 = inlined_call_operand.hbm [shape: f32[16,128], index: 7, kind: output, shape index: {}]
  %s8 = sld [smem:[#allocation0]]
  $region66: #{tpu_custom_call.1} parent=0
    _
  %s10 = ssub.s32 1, %s8
  %s11 = scalar_select 0, %s10, %s8
  $region1: #{tpu_custom_call.1} parent=0
    #allocation2 [shape = 'u8[28672]{0}', space=vmem, size = 0x7000, scoped, tag = 'input window, operand 0, single buffered']
    #allocation3 [shape = 's32[1]{0}', space=sflag, size = 0x4, scoped, tag = 'scoped memory for tpu_custom_call.1']
    #allocation4 [shape = 's32[1]{0}', space=sflag, size = 0x4, scoped, tag = 'scoped memory for tpu_custom_call.1']
    #allocation5 [shape = 'u8[1835008]{0}', space=vmem, size = 0x1c0000, scoped, tag = 'input window, operand 1, single buffered']
    #allocation6 [shape = 's32[1]{0}', space=sflag, size = 0x4, scoped, tag = 'scoped memory for tpu_custom_call.1']
    #allocation7 [shape = 'u8[4096]{0}', space=vmem, size = 0x1000, scoped, tag = 'input window, operand 2, single buffered']
    #allocation8 [shape = 'u8[1048576]{0}', space=vmem, size = 0x100000, scoped, tag = 'input window, operand 3, single buffered']
    #allocation9 [shape = 's32[1]{0}', space=sflag, size = 0x4, scoped, tag = 'scoped memory for tpu_custom_call.1']
    #allocation10 [shape = 'u8[2048]{0}', space=vmem, size = 0x800, scoped, tag = 'input window, operand 4, single buffered']
    #allocation11 [shape = 'u8[131072]{0}', space=vmem, size = 0x20000, scoped, tag = 'input window, operand 5, single buffered']
    #allocation12 [shape = 's32[1]{0}', space=sflag, size = 0x4, scoped, tag = 'scoped memory for tpu_custom_call.1']
    #allocation13 [shape = 'u8[512]{0}', space=vmem, size = 0x400, scoped, tag = 'input window, operand 6, single buffered']
    #allocation14 [shape = 'u8[8192]{0}', space=vmem, size = 0x2000, scoped, tag = 'output window, operand 0, single buffered']
    %12 = vsyncpa [#allocation3], 0
    %13 = vsyncpa [#allocation6], 0
    %14 = vsyncpa [#allocation9], 0
    %15 = vsyncpa [#allocation12], 0
    %16 = vsyncpa [#allocation4], 0
    // Predicated region
    $region2: #{tpu_custom_call.1} parent=1 // pred_check
      _
    $region3: #{tpu_custom_call.1} parent=1 // pred_check_branch
      %18 = sbr.rel (0) target = $region5
    $region4: #{tpu_custom_call.1} parent=1 // pred_region
      %s20 = ssub.s32 896, 896
      %21 = vsyncadd [#allocation3], %s20
      %s22 = sshll.u32 [#allocation2], 4
      %s23 = int_to_ptr.vmem [resolvable:$true] %s22
      %28 = dma.hbm_to_vmem [thread:$0]  %s0, 896, %s23, [#allocation3], 448, 448, 28
    $region5: #{tpu_custom_call.1} parent=1 // pred_fallthru
      _
    // Predicated region
    $region6: #{tpu_custom_call.1} parent=1 // pred_check
      _
    $region7: #{tpu_custom_call.1} parent=1 // pred_check_branch
      %30 = sbr.rel (0) target = $region9
    $region8: #{tpu_custom_call.1} parent=1 // pred_region
      %s32 = ssub.s32 57344, 57344
      %33 = vsyncadd [#allocation6], %s32
      %s34 = sshll.u32 [#allocation5], 4
      %s35 = int_to_ptr.vmem [resolvable:$true] %s34
      %40 = dma.hbm_to_vmem [thread:$0]  %s1, 57344, %s35, [#allocation6], 512, 512, 32
    $region9: #{tpu_custom_call.1} parent=1 // pred_fallthru
      _
    // Predicated region
    $region10: #{tpu_custom_call.1} parent=1 // pred_check
      _
    $region11: #{tpu_custom_call.1} parent=1 // pred_check_branch
      %42 = sbr.rel (0) target = $region13
    $region12: #{tpu_custom_call.1} parent=1 // pred_region
      %s44 = ssub.s32 128, 128
      %45 = vsyncadd [#allocation6], %s44
      %s47 = sshll.u32 [#allocation7], 4
      %s48 = int_to_ptr.vmem [resolvable:$true] %s47
      %50 = dma.hbm_to_vmem [thread:$0]  %s2, 128, %s48, [#allocation6]
    $region13: #{tpu_custom_call.1} parent=1 // pred_fallthru
      _
    // Predicated region
    $region14: #{tpu_custom_call.1} parent=1 // pred_check
      _
    $region15: #{tpu_custom_call.1} parent=1 // pred_check_branch
      %52 = sbr.rel (0) target = $region17
    $region16: #{tpu_custom_call.1} parent=1 // pred_region
      %s54 = ssub.s32 32768, 32768
      %55 = vsyncadd [#allocation9], %s54
      %s56 = sshll.u32 [#allocation8], 4
      %s57 = int_to_ptr.vmem [resolvable:$true] %s56
      %62 = dma.hbm_to_vmem [thread:$0]  %s3, 32768, %s57, [#allocation9], 256, 256, 16
    $region17: #{tpu_custom_call.1} parent=1 // pred_fallthru
      _
    // Predicated region
    $region18: #{tpu_custom_call.1} parent=1 // pred_check
      _
    $region19: #{tpu_custom_call.1} parent=1 // pred_check_branch
      %64 = sbr.rel (0) target = $region21
    $region20: #{tpu_custom_call.1} parent=1 // pred_region
      %s66 = ssub.s32 64, 64
      %67 = vsyncadd [#allocation9], %s66
      %s69 = sshll.u32 [#allocation10], 4
      %s70 = int_to_ptr.vmem [resolvable:$true] %s69
      %72 = dma.hbm_to_vmem [thread:$0]  %s4, 64, %s70, [#allocation9]
    $region21: #{tpu_custom_call.1} parent=1 // pred_fallthru
      _
    // Predicated region
    $region22: #{tpu_custom_call.1} parent=1 // pred_check
      _
    $region23: #{tpu_custom_call.1} parent=1 // pred_check_branch
      %74 = sbr.rel (0) target = $region25
    $region24: #{tpu_custom_call.1} parent=1 // pred_region
      %s76 = ssub.s32 4096, 4096
      %77 = vsyncadd [#allocation12], %s76
      %s78 = sshll.u32 [#allocation11], 4
      %s79 = int_to_ptr.vmem [resolvable:$true] %s78
      %84 = dma.hbm_to_vmem [thread:$0]  %s5, 4096, %s79, [#allocation12], 64, 64, 4
    $region25: #{tpu_custom_call.1} parent=1 // pred_fallthru
      _
    // Predicated region
    $region26: #{tpu_custom_call.1} parent=1 // pred_check
      _
    $region27: #{tpu_custom_call.1} parent=1 // pred_check_branch
      %86 = sbr.rel (0) target = $region29
    $region28: #{tpu_custom_call.1} parent=1 // pred_region
      %s88 = ssub.s32 16, 16
      %89 = vsyncadd [#allocation12], %s88
      %s91 = sshll.u32 [#allocation13], 4
      %s92 = int_to_ptr.vmem [resolvable:$true] %s91
      %94 = dma.hbm_to_vmem [thread:$0]  %s6, 16, %s92, [#allocation12]
    $region29: #{tpu_custom_call.1} parent=1 // pred_fallthru
      _
    // Predicated region
    $region30: #{tpu_custom_call.1} parent=1 // pred_check
      _
    $region31: #{tpu_custom_call.1} parent=1 // pred_check_branch
      %96 = sbr.rel (0) target = $region33
    $region32: #{tpu_custom_call.1} parent=1 // pred_region
      %97 = dma.done [#allocation3], 896
    $region33: #{tpu_custom_call.1} parent=1 // pred_fallthru
      _
    // Predicated region
    $region34: #{tpu_custom_call.1} parent=1 // pred_check
      _
    $region35: #{tpu_custom_call.1} parent=1 // pred_check_branch
      %99 = sbr.rel (0) target = $region37
    $region36: #{tpu_custom_call.1} parent=1 // pred_region
      %100 = dma.done [#allocation6], 57344
    $region37: #{tpu_custom_call.1} parent=1 // pred_fallthru
      _
    // Predicated region
    $region38: #{tpu_custom_call.1} parent=1 // pred_check
      _
    $region39: #{tpu_custom_call.1} parent=1 // pred_check_branch
      %102 = sbr.rel (0) target = $region41
    $region40: #{tpu_custom_call.1} parent=1 // pred_region
      %103 = dma.done [#allocation6], 128
    $region41: #{tpu_custom_call.1} parent=1 // pred_fallthru
      _
    // Predicated region
    $region42: #{tpu_custom_call.1} parent=1 // pred_check
      _
    $region43: #{tpu_custom_call.1} parent=1 // pred_check_branch
      %105 = sbr.rel (0) target = $region45
    $region44: #{tpu_custom_call.1} parent=1 // pred_region
      %106 = dma.done [#allocation9], 32768
    $region45: #{tpu_custom_call.1} parent=1 // pred_fallthru
      _
    // Predicated region
    $region46: #{tpu_custom_call.1} parent=1 // pred_check
      _
    $region47: #{tpu_custom_call.1} parent=1 // pred_check_branch
      %108 = sbr.rel (0) target = $region49
    $region48: #{tpu_custom_call.1} parent=1 // pred_region
      %109 = dma.done [#allocation9], 64
    $region49: #{tpu_custom_call.1} parent=1 // pred_fallthru
      _
    // Predicated region
    $region50: #{tpu_custom_call.1} parent=1 // pred_check
      _
    $region51: #{tpu_custom_call.1} parent=1 // pred_check_branch
      %111 = sbr.rel (0) target = $region53
    $region52: #{tpu_custom_call.1} parent=1 // pred_region
      %112 = dma.done [#allocation12], 4096
    $region53: #{tpu_custom_call.1} parent=1 // pred_fallthru
      _
    // Predicated region
    $region54: #{tpu_custom_call.1} parent=1 // pred_check
      _
    $region55: #{tpu_custom_call.1} parent=1 // pred_check_branch
      %114 = sbr.rel (0) target = $region57
    $region56: #{tpu_custom_call.1} parent=1 // pred_region
      %115 = dma.done [#allocation12], 16
    $region57: #{tpu_custom_call.1} parent=1 // pred_fallthru
      _
    %v117 = vld [vmem:[#allocation2] sm:$0xff]
    %v118 = vld [vmem:[#allocation2 + $0x8] sm:$0xff]
    %v119 = vld [vmem:[#allocation2 + $0x10] sm:$0xff]
    %v120 = vld [vmem:[#allocation2 + $0x18] sm:$0xf]
    %v121 = vld [vmem:[#allocation2 + $0x1c] sm:$0xff]
    %v122 = vld [vmem:[#allocation2 + $0x24] sm:$0xff]
    %v123 = vld [vmem:[#allocation2 + $0x2c] sm:$0xff]
    %v124 = vld [vmem:[#allocation2 + $0x34] sm:$0xf]
    %v125 = vld [vmem:[#allocation5] sm:$0xff]
    %v126 = vld [vmem:[#allocation5 + $0x8] sm:$0xff]
    %v127 = vld [vmem:[#allocation5 + $0x10] sm:$0xff]
    %v128 = vld [vmem:[#allocation5 + $0x18] sm:$0xff]
    %v129 = vld [vmem:[#allocation5 + $0x20] sm:$0xff]
    %v130 = vld [vmem:[#allocation5 + $0x28] sm:$0xff]
    %v131 = vld [vmem:[#allocation5 + $0x30] sm:$0xff]
    %v132 = vld [vmem:[#allocation5 + $0x38] sm:$0xff]
    %v133 = vld [vmem:[#allocation5 + $0x40] sm:$0xff]
    %v134 = vld [vmem:[#allocation5 + $0x48] sm:$0xff]
    %v135 = vld [vmem:[#allocation5 + $0x50] sm:$0xff]
    %v136 = vld [vmem:[#allocation5 + $0x58] sm:$0xff]
    %v137 = vld [vmem:[#allocation5 + $0x60] sm:$0xff]
    %v138 = vld [vmem:[#allocation5 + $0x68] sm:$0xff]
    %v139 = vld [vmem:[#allocation5 + $0x70] sm:$0xff]
    %v140 = vld [vmem:[#allocation5 + $0x78] sm:$0xff]
    %v141 = vld [vmem:[#allocation5 + $0x80] sm:$0xff]
    %v142 = vld [vmem:[#allocation5 + $0x88] sm:$0xff]
    %v143 = vld [vmem:[#allocation5 + $0x90] sm:$0xff]
    %v144 = vld [vmem:[#allocation5 + $0x98] sm:$0xff]
    %v145 = vld [vmem:[#allocation5 + $0xa0] sm:$0xff]
    %v146 = vld [vmem:[#allocation5 + $0xa8] sm:$0xff]
    %v147 = vld [vmem:[#allocation5 + $0xb0] sm:$0xff]
    %v148 = vld [vmem:[#allocation5 + $0xb8] sm:$0xff]
    %v149 = vld [vmem:[#allocation5 + $0xc0] sm:$0xff]
    %v150 = vld [vmem:[#allocation5 + $0xc8] sm:$0xff]
    %v151 = vld [vmem:[#allocation5 + $0xd0] sm:$0xff]
    %v152 = vld [vmem:[#allocation5 + $0xd8] sm:$0xff]
    %v153 = vld [vmem:[#allocation5 + $0xe0] sm:$0xff]
    %v154 = vld [vmem:[#allocation5 + $0xe8] sm:$0xff]
    %v155 = vld [vmem:[#allocation5 + $0xf0] sm:$0xff]
    %v156 = vld [vmem:[#allocation5 + $0xf8] sm:$0xff]
    %v157 = vld [vmem:[#allocation5 + $0x100] sm:$0xff]
    %v158 = vld [vmem:[#allocation5 + $0x108] sm:$0xff]
    %v159 = vld [vmem:[#allocation5 + $0x110] sm:$0xff]
    %v160 = vld [vmem:[#allocation5 + $0x118] sm:$0xff]
    %v161 = vld [vmem:[#allocation5 + $0x120] sm:$0xff]
    %v162 = vld [vmem:[#allocation5 + $0x128] sm:$0xff]
    %v163 = vld [vmem:[#allocation5 + $0x130] sm:$0xff]
    %v164 = vld [vmem:[#allocation5 + $0x138] sm:$0xff]
    %v165 = vld [vmem:[#allocation5 + $0x140] sm:$0xff]
    %v166 = vld [vmem:[#allocation5 + $0x148] sm:$0xff]
    %v167 = vld [vmem:[#allocation5 + $0x150] sm:$0xff]
    %v168 = vld [vmem:[#allocation5 + $0x158] sm:$0xff]
    %v169 = vld [vmem:[#allocation5 + $0x160] sm:$0xff]
    %v170 = vld [vmem:[#allocation5 + $0x168] sm:$0xff]
    %v171 = vld [vmem:[#allocation5 + $0x170] sm:$0xff]
    %v172 = vld [vmem:[#allocation5 + $0x178] sm:$0xff]
    %v173 = vld [vmem:[#allocation5 + $0x180] sm:$0xff]
    %v174 = vld [vmem:[#allocation5 + $0x188] sm:$0xff]
    %v175 = vld [vmem:[#allocation5 + $0x190] sm:$0xff]
    %v176 = vld [vmem:[#allocation5 + $0x198] sm:$0xff]
    %v177 = vld [vmem:[#allocation5 + $0x1a0] sm:$0xff]
    %v178 = vld [vmem:[#allocation5 + $0x1a8] sm:$0xff]
    %v179 = vld [vmem:[#allocation5 + $0x1b0] sm:$0xff]
    %v180 = vld [vmem:[#allocation5 + $0x1b8] sm:$0xff]
    %v181 = vld [vmem:[#allocation5 + $0x1c0] sm:$0xff]
    %v182 = vld [vmem:[#allocation5 + $0x1c8] sm:$0xff]
    %v183 = vld [vmem:[#allocation5 + $0x1d0] sm:$0xff]
    %v184 = vld [vmem:[#allocation5 + $0x1d8] sm:$0xff]
    %v185 = vld [vmem:[#allocation5 + $0x1e0] sm:$0xff]
    %v186 = vld [vmem:[#allocation5 + $0x1e8] sm:$0xff]
    %v187 = vld [vmem:[#allocation5 + $0x1f0] sm:$0xff]
    %v188 = vld [vmem:[#allocation5 + $0x1f8] sm:$0xff]
    %v189 = vld [vmem:[#allocation5 + $0x200] sm:$0xff]
    %v190 = vld [vmem:[#allocation5 + $0x208] sm:$0xff]
    %v191 = vld [vmem:[#allocation5 + $0x210] sm:$0xff]
    %v192 = vld [vmem:[#allocation5 + $0x218] sm:$0xff]
    %v193 = vld [vmem:[#allocation5 + $0x220] sm:$0xff]
    %v194 = vld [vmem:[#allocation5 + $0x228] sm:$0xff]
    %v195 = vld [vmem:[#allocation5 + $0x230] sm:$0xff]
    %v196 = vld [vmem:[#allocation5 + $0x238] sm:$0xff]
    %v197 = vld [vmem:[#allocation5 + $0x240] sm:$0xff]
    %v198 = vld [vmem:[#allocation5 + $0x248] sm:$0xff]
    %v199 = vld [vmem:[#allocation5 + $0x250] sm:$0xff]
    %v200 = vld [vmem:[#allocation5 + $0x258] sm:$0xff]
    %v201 = vld [vmem:[#allocation5 + $0x260] sm:$0xff]
    %v202 = vld [vmem:[#allocation5 + $0x268] sm:$0xff]
    %v203 = vld [vmem:[#allocation5 + $0x270] sm:$0xff]
    %v204 = vld [vmem:[#allocation5 + $0x278] sm:$0xff]
    %v205 = vld [vmem:[#allocation5 + $0x280] sm:$0xff]
    %v206 = vld [vmem:[#allocation5 + $0x288] sm:$0xff]
    %v207 = vld [vmem:[#allocation5 + $0x290] sm:$0xff]
    %v208 = vld [vmem:[#allocation5 + $0x298] sm:$0xff]
    %v209 = vld [vmem:[#allocation5 + $0x2a0] sm:$0xff]
    %v210 = vld [vmem:[#allocation5 + $0x2a8] sm:$0xff]
    %v211 = vld [vmem:[#allocation5 + $0x2b0] sm:$0xff]
    %v212 = vld [vmem:[#allocation5 + $0x2b8] sm:$0xff]
    %v213 = vld [vmem:[#allocation5 + $0x2c0] sm:$0xff]
    %v214 = vld [vmem:[#allocation5 + $0x2c8] sm:$0xff]
    %v215 = vld [vmem:[#allocation5 + $0x2d0] sm:$0xff]
    %v216 = vld [vmem:[#allocation5 + $0x2d8] sm:$0xff]
    %v217 = vld [vmem:[#allocation5 + $0x2e0] sm:$0xff]
    %v218 = vld [vmem:[#allocation5 + $0x2e8] sm:$0xff]
    %v219 = vld [vmem:[#allocation5 + $0x2f0] sm:$0xff]
    %v220 = vld [vmem:[#allocation5 + $0x2f8] sm:$0xff]
    %v221 = vld [vmem:[#allocation5 + $0x300] sm:$0xff]
    %v222 = vld [vmem:[#allocation5 + $0x308] sm:$0xff]
    %v223 = vld [vmem:[#allocation5 + $0x310] sm:$0xff]
    %v224 = vld [vmem:[#allocation5 + $0x318] sm:$0xff]
    %v225 = vld [vmem:[#allocation5 + $0x320] sm:$0xff]
    %v226 = vld [vmem:[#allocation5 + $0x328] sm:$0xff]
    %v227 = vld [vmem:[#allocation5 + $0x330] sm:$0xff]
    %v228 = vld [vmem:[#allocation5 + $0x338] sm:$0xff]
    %v229 = vld [vmem:[#allocation5 + $0x340] sm:$0xff]
    %v230 = vld [vmem:[#allocation5 + $0x348] sm:$0xff]
    %v231 = vld [vmem:[#allocation5 + $0x350] sm:$0xff]
    %v232 = vld [vmem:[#allocation5 + $0x358] sm:$0xff]
    %v233 = vld [vmem:[#allocation5 + $0x360] sm:$0xff]
    %v234 = vld [vmem:[#allocation5 + $0x368] sm:$0xff]
    %v235 = vld [vmem:[#allocation5 + $0x370] sm:$0xff]
    %v236 = vld [vmem:[#allocation5 + $0x378] sm:$0xff]
    %v237 = vld [vmem:[#allocation5 + $0x380] sm:$0xff]
    %v238 = vld [vmem:[#allocation5 + $0x388] sm:$0xff]
    %v239 = vld [vmem:[#allocation5 + $0x390] sm:$0xff]
    %v240 = vld [vmem:[#allocation5 + $0x398] sm:$0xff]
    %v241 = vld [vmem:[#allocation5 + $0x3a0] sm:$0xff]
    %v242 = vld [vmem:[#allocation5 + $0x3a8] sm:$0xff]
    %v243 = vld [vmem:[#allocation5 + $0x3b0] sm:$0xff]
    %v244 = vld [vmem:[#allocation5 + $0x3b8] sm:$0xff]
    %v245 = vld [vmem:[#allocation5 + $0x3c0] sm:$0xff]
    %v246 = vld [vmem:[#allocation5 + $0x3c8] sm:$0xff]
    %v247 = vld [vmem:[#allocation5 + $0x3d0] sm:$0xff]
    %v248 = vld [vmem:[#allocation5 + $0x3d8] sm:$0xff]
    %v249 = vld [vmem:[#allocation5 + $0x3e0] sm:$0xff]
    %v250 = vld [vmem:[#allocation5 + $0x3e8] sm:$0xff]
    %v251 = vld [vmem:[#allocation5 + $0x3f0] sm:$0xff]
    %v252 = vld [vmem:[#allocation5 + $0x3f8] sm:$0xff]
    %v253 = vld [vmem:[#allocation5 + $0x400] sm:$0xff]
    %v254 = vld [vmem:[#allocation5 + $0x408] sm:$0xff]
    %v255 = vld [vmem:[#allocation5 + $0x410] sm:$0xff]
    %v256 = vld [vmem:[#allocation5 + $0x418] sm:$0xff]
    %v257 = vld [vmem:[#allocation5 + $0x420] sm:$0xff]
    %v258 = vld [vmem:[#allocation5 + $0x428] sm:$0xff]
    %v259 = vld [vmem:[#allocation5 + $0x430] sm:$0xff]
    %v260 = vld [vmem:[#allocation5 + $0x438] sm:$0xff]
    %v261 = vld [vmem:[#allocation5 + $0x440] sm:$0xff]
    %v262 = vld [vmem:[#allocation5 + $0x448] sm:$0xff]
    %v263 = vld [vmem:[#allocation5 + $0x450] sm:$0xff]
    %v264 = vld [vmem:[#allocation5 + $0x458] sm:$0xff]
    %v265 = vld [vmem:[#allocation5 + $0x460] sm:$0xff]
    %v266 = vld [vmem:[#allocation5 + $0x468] sm:$0xff]
    %v267 = vld [vmem:[#allocation5 + $0x470] sm:$0xff]
    %v268 = vld [vmem:[#allocation5 + $0x478] sm:$0xff]
    %v269 = vld [vmem:[#allocation5 + $0x480] sm:$0xff]
    %v270 = vld [vmem:[#allocation5 + $0x488] sm:$0xff]
    %v271 = vld [vmem:[#allocation5 + $0x490] sm:$0xff]
    %v272 = vld [vmem:[#allocation5 + $0x498] sm:$0xff]
    %v273 = vld [vmem:[#allocation5 + $0x4a0] sm:$0xff]
    %v274 = vld [vmem:[#allocation5 + $0x4a8] sm:$0xff]
    %v275 = vld [vmem:[#allocation5 + $0x4b0] sm:$0xff]
    %v276 = vld [vmem:[#allocation5 + $0x4b8] sm:$0xff]
    %v277 = vld [vmem:[#allocation5 + $0x4c0] sm:$0xff]
    %v278 = vld [vmem:[#allocation5 + $0x4c8] sm:$0xff]
    %v279 = vld [vmem:[#allocation5 + $0x4d0] sm:$0xff]
    %v280 = vld [vmem:[#allocation5 + $0x4d8] sm:$0xff]
    %v281 = vld [vmem:[#allocation5 + $0x4e0] sm:$0xff]
    %v282 = vld [vmem:[#allocation5 + $0x4e8] sm:$0xff]
    %v283 = vld [vmem:[#allocation5 + $0x4f0] sm:$0xff]
    %v284 = vld [vmem:[#allocation5 + $0x4f8] sm:$0xff]
    %v285 = vld [vmem:[#allocation5 + $0x500] sm:$0xff]
    %v286 = vld [vmem:[#allocation5 + $0x508] sm:$0xff]
    %v287 = vld [vmem:[#allocation5 + $0x510] sm:$0xff]
    %v288 = vld [vmem:[#allocation5 + $0x518] sm:$0xff]
    %v289 = vld [vmem:[#allocation5 + $0x520] sm:$0xff]
    %v290 = vld [vmem:[#allocation5 + $0x528] sm:$0xff]
    %v291 = vld [vmem:[#allocation5 + $0x530] sm:$0xff]
    %v292 = vld [vmem:[#allocation5 + $0x538] sm:$0xff]
    %v293 = vld [vmem:[#allocation5 + $0x540] sm:$0xff]
    %v294 = vld [vmem:[#allocation5 + $0x548] sm:$0xff]
    %v295 = vld [vmem:[#allocation5 + $0x550] sm:$0xff]
    %v296 = vld [vmem:[#allocation5 + $0x558] sm:$0xff]
    %v297 = vld [vmem:[#allocation5 + $0x560] sm:$0xff]
    %v298 = vld [vmem:[#allocation5 + $0x568] sm:$0xff]
    %v299 = vld [vmem:[#allocation5 + $0x570] sm:$0xff]
    %v300 = vld [vmem:[#allocation5 + $0x578] sm:$0xff]
    %v301 = vld [vmem:[#allocation5 + $0x580] sm:$0xff]
    %v302 = vld [vmem:[#allocation5 + $0x588] sm:$0xff]
    %v303 = vld [vmem:[#allocation5 + $0x590] sm:$0xff]
    %v304 = vld [vmem:[#allocation5 + $0x598] sm:$0xff]
    %v305 = vld [vmem:[#allocation5 + $0x5a0] sm:$0xff]
    %v306 = vld [vmem:[#allocation5 + $0x5a8] sm:$0xff]
    %v307 = vld [vmem:[#allocation5 + $0x5b0] sm:$0xff]
    %v308 = vld [vmem:[#allocation5 + $0x5b8] sm:$0xff]
    %v309 = vld [vmem:[#allocation5 + $0x5c0] sm:$0xff]
    %v310 = vld [vmem:[#allocation5 + $0x5c8] sm:$0xff]
    %v311 = vld [vmem:[#allocation5 + $0x5d0] sm:$0xff]
    %v312 = vld [vmem:[#allocation5 + $0x5d8] sm:$0xff]
    %v313 = vld [vmem:[#allocation5 + $0x5e0] sm:$0xff]
    %v314 = vld [vmem:[#allocation5 + $0x5e8] sm:$0xff]
    %v315 = vld [vmem:[#allocation5 + $0x5f0] sm:$0xff]
    %v316 = vld [vmem:[#allocation5 + $0x5f8] sm:$0xff]
    %v317 = vld [vmem:[#allocation5 + $0x600] sm:$0xff]
    %v318 = vld [vmem:[#allocation5 + $0x608] sm:$0xff]
    %v319 = vld [vmem:[#allocation5 + $0x610] sm:$0xff]
    %v320 = vld [vmem:[#allocation5 + $0x618] sm:$0xff]
    %v321 = vld [vmem:[#allocation5 + $0x620] sm:$0xff]
    %v322 = vld [vmem:[#allocation5 + $0x628] sm:$0xff]
    %v323 = vld [vmem:[#allocation5 + $0x630] sm:$0xff]
    %v324 = vld [vmem:[#allocation5 + $0x638] sm:$0xff]
    %v325 = vld [vmem:[#allocation5 + $0x640] sm:$0xff]
    %v326 = vld [vmem:[#allocation5 + $0x648] sm:$0xff]
    %v327 = vld [vmem:[#allocation5 + $0x650] sm:$0xff]
    %v328 = vld [vmem:[#allocation5 + $0x658] sm:$0xff]
    %v329 = vld [vmem:[#allocation5 + $0x660] sm:$0xff]
    %v330 = vld [vmem:[#allocation5 + $0x668] sm:$0xff]
    %v331 = vld [vmem:[#allocation5 + $0x670] sm:$0xff]
    %v332 = vld [vmem:[#allocation5 + $0x678] sm:$0xff]
    %v333 = vld [vmem:[#allocation5 + $0x680] sm:$0xff]
    %v334 = vld [vmem:[#allocation5 + $0x688] sm:$0xff]
    %v335 = vld [vmem:[#allocation5 + $0x690] sm:$0xff]
    %v336 = vld [vmem:[#allocation5 + $0x698] sm:$0xff]
    %v337 = vld [vmem:[#allocation5 + $0x6a0] sm:$0xff]
    %v338 = vld [vmem:[#allocation5 + $0x6a8] sm:$0xff]
    %v339 = vld [vmem:[#allocation5 + $0x6b0] sm:$0xff]
    %v340 = vld [vmem:[#allocation5 + $0x6b8] sm:$0xff]
    %v341 = vld [vmem:[#allocation5 + $0x6c0] sm:$0xff]
    %v342 = vld [vmem:[#allocation5 + $0x6c8] sm:$0xff]
    %v343 = vld [vmem:[#allocation5 + $0x6d0] sm:$0xff]
    %v344 = vld [vmem:[#allocation5 + $0x6d8] sm:$0xff]
    %v345 = vld [vmem:[#allocation5 + $0x6e0] sm:$0xff]
    %v346 = vld [vmem:[#allocation5 + $0x6e8] sm:$0xff]
    %v347 = vld [vmem:[#allocation5 + $0x6f0] sm:$0xff]
    %v348 = vld [vmem:[#allocation5 + $0x6f8] sm:$0xff]
    %v349 = vld [vmem:[#allocation5 + $0x700] sm:$0xff]
    %v350 = vld [vmem:[#allocation5 + $0x708] sm:$0xff]
    %v351 = vld [vmem:[#allocation5 + $0x710] sm:$0xff]
    %v352 = vld [vmem:[#allocation5 + $0x718] sm:$0xff]
    %v353 = vld [vmem:[#allocation5 + $0x720] sm:$0xff]
    %v354 = vld [vmem:[#allocation5 + $0x728] sm:$0xff]
    %v355 = vld [vmem:[#allocation5 + $0x730] sm:$0xff]
    %v356 = vld [vmem:[#allocation5 + $0x738] sm:$0xff]
    %v357 = vld [vmem:[#allocation5 + $0x740] sm:$0xff]
    %v358 = vld [vmem:[#allocation5 + $0x748] sm:$0xff]
    %v359 = vld [vmem:[#allocation5 + $0x750] sm:$0xff]
    %v360 = vld [vmem:[#allocation5 + $0x758] sm:$0xff]
    %v361 = vld [vmem:[#allocation5 + $0x760] sm:$0xff]
    %v362 = vld [vmem:[#allocation5 + $0x768] sm:$0xff]
    %v363 = vld [vmem:[#allocation5 + $0x770] sm:$0xff]
    %v364 = vld [vmem:[#allocation5 + $0x778] sm:$0xff]
    %v365 = vld [vmem:[#allocation5 + $0x780] sm:$0xff]
    %v366 = vld [vmem:[#allocation5 + $0x788] sm:$0xff]
    %v367 = vld [vmem:[#allocation5 + $0x790] sm:$0xff]
    %v368 = vld [vmem:[#allocation5 + $0x798] sm:$0xff]
    %v369 = vld [vmem:[#allocation5 + $0x7a0] sm:$0xff]
    %v370 = vld [vmem:[#allocation5 + $0x7a8] sm:$0xff]
    %v371 = vld [vmem:[#allocation5 + $0x7b0] sm:$0xff]
    %v372 = vld [vmem:[#allocation5 + $0x7b8] sm:$0xff]
    %v373 = vld [vmem:[#allocation5 + $0x7c0] sm:$0xff]
    %v374 = vld [vmem:[#allocation5 + $0x7c8] sm:$0xff]
    %v375 = vld [vmem:[#allocation5 + $0x7d0] sm:$0xff]
    %v376 = vld [vmem:[#allocation5 + $0x7d8] sm:$0xff]
    %v377 = vld [vmem:[#allocation5 + $0x7e0] sm:$0xff]
    %v378 = vld [vmem:[#allocation5 + $0x7e8] sm:$0xff]
    %v379 = vld [vmem:[#allocation5 + $0x7f0] sm:$0xff]
    %v380 = vld [vmem:[#allocation5 + $0x7f8] sm:$0xff]
    %v381 = vld [vmem:[#allocation5 + $0x800] sm:$0xff]
    %v382 = vld [vmem:[#allocation5 + $0x808] sm:$0xff]
    %v383 = vld [vmem:[#allocation5 + $0x810] sm:$0xff]
    %v384 = vld [vmem:[#allocation5 + $0x818] sm:$0xff]
    %v385 = vld [vmem:[#allocation5 + $0x820] sm:$0xff]
    %v386 = vld [vmem:[#allocation5 + $0x828] sm:$0xff]
    %v387 = vld [vmem:[#allocation5 + $0x830] sm:$0xff]
    %v388 = vld [vmem:[#allocation5 + $0x838] sm:$0xff]
    %v389 = vld [vmem:[#allocation5 + $0x840] sm:$0xff]
    %v390 = vld [vmem:[#allocation5 + $0x848] sm:$0xff]
    %v391 = vld [vmem:[#allocation5 + $0x850] sm:$0xff]
    %v392 = vld [vmem:[#allocation5 + $0x858] sm:$0xff]
    %v393 = vld [vmem:[#allocation5 + $0x860] sm:$0xff]
    %v394 = vld [vmem:[#allocation5 + $0x868] sm:$0xff]
    %v395 = vld [vmem:[#allocation5 + $0x870] sm:$0xff]
    %v396 = vld [vmem:[#allocation5 + $0x878] sm:$0xff]
    %v397 = vld [vmem:[#allocation5 + $0x880] sm:$0xff]
    %v398 = vld [vmem:[#allocation5 + $0x888] sm:$0xff]
    %v399 = vld [vmem:[#allocation5 + $0x890] sm:$0xff]
    %v400 = vld [vmem:[#allocation5 + $0x898] sm:$0xff]
    %v401 = vld [vmem:[#allocation5 + $0x8a0] sm:$0xff]
    %v402 = vld [vmem:[#allocation5 + $0x8a8] sm:$0xff]
    %v403 = vld [vmem:[#allocation5 + $0x8b0] sm:$0xff]
    %v404 = vld [vmem:[#allocation5 + $0x8b8] sm:$0xff]
    %v405 = vld [vmem:[#allocation5 + $0x8c0] sm:$0xff]
    %v406 = vld [vmem:[#allocation5 + $0x8c8] sm:$0xff]
    %v407 = vld [vmem:[#allocation5 + $0x8d0] sm:$0xff]
    %v408 = vld [vmem:[#allocation5 + $0x8d8] sm:$0xff]
    %v409 = vld [vmem:[#allocation5 + $0x8e0] sm:$0xff]
    %v410 = vld [vmem:[#allocation5 + $0x8e8] sm:$0xff]
    %v411 = vld [vmem:[#allocation5 + $0x8f0] sm:$0xff]
    %v412 = vld [vmem:[#allocation5 + $0x8f8] sm:$0xff]
    %v413 = vld [vmem:[#allocation5 + $0x900] sm:$0xff]
    %v414 = vld [vmem:[#allocation5 + $0x908] sm:$0xff]
    %v415 = vld [vmem:[#allocation5 + $0x910] sm:$0xff]
    %v416 = vld [vmem:[#allocation5 + $0x918] sm:$0xff]
    %v417 = vld [vmem:[#allocation5 + $0x920] sm:$0xff]
    %v418 = vld [vmem:[#allocation5 + $0x928] sm:$0xff]
    %v419 = vld [vmem:[#allocation5 + $0x930] sm:$0xff]
    %v420 = vld [vmem:[#allocation5 + $0x938] sm:$0xff]
    %v421 = vld [vmem:[#allocation5 + $0x940] sm:$0xff]
    %v422 = vld [vmem:[#allocation5 + $0x948] sm:$0xff]
    %v423 = vld [vmem:[#allocation5 + $0x950] sm:$0xff]
    %v424 = vld [vmem:[#allocation5 + $0x958] sm:$0xff]
    %v425 = vld [vmem:[#allocation5 + $0x960] sm:$0xff]
    %v426 = vld [vmem:[#allocation5 + $0x968] sm:$0xff]
    %v427 = vld [vmem:[#allocation5 + $0x970] sm:$0xff]
    %v428 = vld [vmem:[#allocation5 + $0x978] sm:$0xff]
    %v429 = vld [vmem:[#allocation5 + $0x980] sm:$0xff]
    %v430 = vld [vmem:[#allocation5 + $0x988] sm:$0xff]
    %v431 = vld [vmem:[#allocation5 + $0x990] sm:$0xff]
    %v432 = vld [vmem:[#allocation5 + $0x998] sm:$0xff]
    %v433 = vld [vmem:[#allocation5 + $0x9a0] sm:$0xff]
    %v434 = vld [vmem:[#allocation5 + $0x9a8] sm:$0xff]
    %v435 = vld [vmem:[#allocation5 + $0x9b0] sm:$0xff]
    %v436 = vld [vmem:[#allocation5 + $0x9b8] sm:$0xff]
    %v437 = vld [vmem:[#allocation5 + $0x9c0] sm:$0xff]
    %v438 = vld [vmem:[#allocation5 + $0x9c8] sm:$0xff]
    %v439 = vld [vmem:[#allocation5 + $0x9d0] sm:$0xff]
    %v440 = vld [vmem:[#allocation5 + $0x9d8] sm:$0xff]
    %v441 = vld [vmem:[#allocation5 + $0x9e0] sm:$0xff]
    %v442 = vld [vmem:[#allocation5 + $0x9e8] sm:$0xff]
    %v443 = vld [vmem:[#allocation5 + $0x9f0] sm:$0xff]
    %v444 = vld [vmem:[#allocation5 + $0x9f8] sm:$0xff]
    %v445 = vld [vmem:[#allocation5 + $0xa00] sm:$0xff]
    %v446 = vld [vmem:[#allocation5 + $0xa08] sm:$0xff]
    %v447 = vld [vmem:[#allocation5 + $0xa10] sm:$0xff]
    %v448 = vld [vmem:[#allocation5 + $0xa18] sm:$0xff]
    %v449 = vld [vmem:[#allocation5 + $0xa20] sm:$0xff]
    %v450 = vld [vmem:[#allocation5 + $0xa28] sm:$0xff]
    %v451 = vld [vmem:[#allocation5 + $0xa30] sm:$0xff]
    %v452 = vld [vmem:[#allocation5 + $0xa38] sm:$0xff]
    %v453 = vld [vmem:[#allocation5 + $0xa40] sm:$0xff]
    %v454 = vld [vmem:[#allocation5 + $0xa48] sm:$0xff]
    %v455 = vld [vmem:[#allocation5 + $0xa50] sm:$0xff]
    %v456 = vld [vmem:[#allocation5 + $0xa58] sm:$0xff]
    %v457 = vld [vmem:[#allocation5 + $0xa60] sm:$0xff]
    %v458 = vld [vmem:[#allocation5 + $0xa68] sm:$0xff]
    %v459 = vld [vmem:[#allocation5 + $0xa70] sm:$0xff]
    %v460 = vld [vmem:[#allocation5 + $0xa78] sm:$0xff]
    %v461 = vld [vmem:[#allocation5 + $0xa80] sm:$0xff]
    %v462 = vld [vmem:[#allocation5 + $0xa88] sm:$0xff]
    %v463 = vld [vmem:[#allocation5 + $0xa90] sm:$0xff]
    %v464 = vld [vmem:[#allocation5 + $0xa98] sm:$0xff]
    %v465 = vld [vmem:[#allocation5 + $0xaa0] sm:$0xff]
    %v466 = vld [vmem:[#allocation5 + $0xaa8] sm:$0xff]
    %v467 = vld [vmem:[#allocation5 + $0xab0] sm:$0xff]
    %v468 = vld [vmem:[#allocation5 + $0xab8] sm:$0xff]
    %v469 = vld [vmem:[#allocation5 + $0xac0] sm:$0xff]
    %v470 = vld [vmem:[#allocation5 + $0xac8] sm:$0xff]
    %v471 = vld [vmem:[#allocation5 + $0xad0] sm:$0xff]
    %v472 = vld [vmem:[#allocation5 + $0xad8] sm:$0xff]
    %v473 = vld [vmem:[#allocation5 + $0xae0] sm:$0xff]
    %v474 = vld [vmem:[#allocation5 + $0xae8] sm:$0xff]
    %v475 = vld [vmem:[#allocation5 + $0xaf0] sm:$0xff]
    %v476 = vld [vmem:[#allocation5 + $0xaf8] sm:$0xff]
    %v477 = vld [vmem:[#allocation5 + $0xb00] sm:$0xff]
    %v478 = vld [vmem:[#allocation5 + $0xb08] sm:$0xff]
    %v479 = vld [vmem:[#allocation5 + $0xb10] sm:$0xff]
    %v480 = vld [vmem:[#allocation5 + $0xb18] sm:$0xff]
    %v481 = vld [vmem:[#allocation5 + $0xb20] sm:$0xff]
    %v482 = vld [vmem:[#allocation5 + $0xb28] sm:$0xff]
    %v483 = vld [vmem:[#allocation5 + $0xb30] sm:$0xff]
    %v484 = vld [vmem:[#allocation5 + $0xb38] sm:$0xff]
    %v485 = vld [vmem:[#allocation5 + $0xb40] sm:$0xff]
    %v486 = vld [vmem:[#allocation5 + $0xb48] sm:$0xff]
    %v487 = vld [vmem:[#allocation5 + $0xb50] sm:$0xff]
    %v488 = vld [vmem:[#allocation5 + $0xb58] sm:$0xff]
    %v489 = vld [vmem:[#allocation5 + $0xb60] sm:$0xff]
    %v490 = vld [vmem:[#allocation5 + $0xb68] sm:$0xff]
    %v491 = vld [vmem:[#allocation5 + $0xb70] sm:$0xff]
    %v492 = vld [vmem:[#allocation5 + $0xb78] sm:$0xff]
    %v493 = vld [vmem:[#allocation5 + $0xb80] sm:$0xff]
    %v494 = vld [vmem:[#allocation5 + $0xb88] sm:$0xff]
    %v495 = vld [vmem:[#allocation5 + $0xb90] sm:$0xff]
    %v496 = vld [vmem:[#allocation5 + $0xb98] sm:$0xff]
    %v497 = vld [vmem:[#allocation5 + $0xba0] sm:$0xff]
    %v498 = vld [vmem:[#allocation5 + $0xba8] sm:$0xff]
    %v499 = vld [vmem:[#allocation5 + $0xbb0] sm:$0xff]
    %v500 = vld [vmem:[#allocation5 + $0xbb8] sm:$0xff]
    %v501 = vld [vmem:[#allocation5 + $0xbc0] sm:$0xff]
    %v502 = vld [vmem:[#allocation5 + $0xbc8] sm:$0xff]
    %v503 = vld [vmem:[#allocation5 + $0xbd0] sm:$0xff]
    %v504 = vld [vmem:[#allocation5 + $0xbd8] sm:$0xff]
    %v505 = vld [vmem:[#allocation5 + $0xbe0] sm:$0xff]
    %v506 = vld [vmem:[#allocation5 + $0xbe8] sm:$0xff]
    %v507 = vld [vmem:[#allocation5 + $0xbf0] sm:$0xff]
    %v508 = vld [vmem:[#allocation5 + $0xbf8] sm:$0xff]
    %v509 = vld [vmem:[#allocation5 + $0xc00] sm:$0xff]
    %v510 = vld [vmem:[#allocation5 + $0xc08] sm:$0xff]
    %v511 = vld [vmem:[#allocation5 + $0xc10] sm:$0xff]
    %v512 = vld [vmem:[#allocation5 + $0xc18] sm:$0xff]
    %v513 = vld [vmem:[#allocation5 + $0xc20] sm:$0xff]
    %v514 = vld [vmem:[#allocation5 + $0xc28] sm:$0xff]
    %v515 = vld [vmem:[#allocation5 + $0xc30] sm:$0xff]
    %v516 = vld [vmem:[#allocation5 + $0xc38] sm:$0xff]
    %v517 = vld [vmem:[#allocation5 + $0xc40] sm:$0xff]
    %v518 = vld [vmem:[#allocation5 + $0xc48] sm:$0xff]
    %v519 = vld [vmem:[#allocation5 + $0xc50] sm:$0xff]
    %v520 = vld [vmem:[#allocation5 + $0xc58] sm:$0xff]
    %v521 = vld [vmem:[#allocation5 + $0xc60] sm:$0xff]
    %v522 = vld [vmem:[#allocation5 + $0xc68] sm:$0xff]
    %v523 = vld [vmem:[#allocation5 + $0xc70] sm:$0xff]
    %v524 = vld [vmem:[#allocation5 + $0xc78] sm:$0xff]
    %v525 = vld [vmem:[#allocation5 + $0xc80] sm:$0xff]
    %v526 = vld [vmem:[#allocation5 + $0xc88] sm:$0xff]
    %v527 = vld [vmem:[#allocation5 + $0xc90] sm:$0xff]
    %v528 = vld [vmem:[#allocation5 + $0xc98] sm:$0xff]
    %v529 = vld [vmem:[#allocation5 + $0xca0] sm:$0xff]
    %v530 = vld [vmem:[#allocation5 + $0xca8] sm:$0xff]
    %v531 = vld [vmem:[#allocation5 + $0xcb0] sm:$0xff]
    %v532 = vld [vmem:[#allocation5 + $0xcb8] sm:$0xff]
    %v533 = vld [vmem:[#allocation5 + $0xcc0] sm:$0xff]
    %v534 = vld [vmem:[#allocation5 + $0xcc8] sm:$0xff]
    %v535 = vld [vmem:[#allocation5 + $0xcd0] sm:$0xff]
    %v536 = vld [vmem:[#allocation5 + $0xcd8] sm:$0xff]
    %v537 = vld [vmem:[#allocation5 + $0xce0] sm:$0xff]
    %v538 = vld [vmem:[#allocation5 + $0xce8] sm:$0xff]
    %v539 = vld [vmem:[#allocation5 + $0xcf0] sm:$0xff]
    %v540 = vld [vmem:[#allocation5 + $0xcf8] sm:$0xff]
    %v541 = vld [vmem:[#allocation5 + $0xd00] sm:$0xff]
    %v542 = vld [vmem:[#allocation5 + $0xd08] sm:$0xff]
    %v543 = vld [vmem:[#allocation5 + $0xd10] sm:$0xff]
    %v544 = vld [vmem:[#allocation5 + $0xd18] sm:$0xff]
    %v545 = vld [vmem:[#allocation5 + $0xd20] sm:$0xff]
    %v546 = vld [vmem:[#allocation5 + $0xd28] sm:$0xff]
    %v547 = vld [vmem:[#allocation5 + $0xd30] sm:$0xff]
    %v548 = vld [vmem:[#allocation5 + $0xd38] sm:$0xff]
    %v549 = vld [vmem:[#allocation5 + $0xd40] sm:$0xff]
    %v550 = vld [vmem:[#allocation5 + $0xd48] sm:$0xff]
    %v551 = vld [vmem:[#allocation5 + $0xd50] sm:$0xff]
    %v552 = vld [vmem:[#allocation5 + $0xd58] sm:$0xff]
    %v553 = vld [vmem:[#allocation5 + $0xd60] sm:$0xff]
    %v554 = vld [vmem:[#allocation5 + $0xd68] sm:$0xff]
    %v555 = vld [vmem:[#allocation5 + $0xd70] sm:$0xff]
    %v556 = vld [vmem:[#allocation5 + $0xd78] sm:$0xff]
    %v557 = vld [vmem:[#allocation5 + $0xd80] sm:$0xff]
    %v558 = vld [vmem:[#allocation5 + $0xd88] sm:$0xff]
    %v559 = vld [vmem:[#allocation5 + $0xd90] sm:$0xff]
    %v560 = vld [vmem:[#allocation5 + $0xd98] sm:$0xff]
    %v561 = vld [vmem:[#allocation5 + $0xda0] sm:$0xff]
    %v562 = vld [vmem:[#allocation5 + $0xda8] sm:$0xff]
    %v563 = vld [vmem:[#allocation5 + $0xdb0] sm:$0xff]
    %v564 = vld [vmem:[#allocation5 + $0xdb8] sm:$0xff]
    %v565 = vld [vmem:[#allocation5 + $0xdc0] sm:$0xff]
    %v566 = vld [vmem:[#allocation5 + $0xdc8] sm:$0xff]
    %v567 = vld [vmem:[#allocation5 + $0xdd0] sm:$0xff]
    %v568 = vld [vmem:[#allocation5 + $0xdd8] sm:$0xff]
    %v569 = vld [vmem:[#allocation5 + $0xde0] sm:$0xff]
    %v570 = vld [vmem:[#allocation5 + $0xde8] sm:$0xff]
    %v571 = vld [vmem:[#allocation5 + $0xdf0] sm:$0xff]
    %v572 = vld [vmem:[#allocation5 + $0xdf8] sm:$0xff]
    %v573 = vld [vmem:[#allocation7] sm:$0xff]
    %v575 = vlaneseq
    %v576 = vshrl.u32 %v575, 7
    %v577 = vsub.s32 0, %v576
    %v578 = vrot.slane %v573, %v577
    %v579 = vlaneseq
    %v580 = vshrl.u32 %v579, 7
    %v581 = vsub.s32 1, %v580
    %v582 = vrot.slane %v573, %v581
    %v583 = vlaneseq
    %v584 = vshrl.u32 %v583, 7
    %v585 = vsub.s32 2, %v584
    %v586 = vrot.slane %v573, %v585
    %v587 = vlaneseq
    %v588 = vshrl.u32 %v587, 7
    %v589 = vsub.s32 3, %v588
    %v590 = vrot.slane %v573, %v589
    %v591 = vlaneseq
    %v592 = vshrl.u32 %v591, 7
    %v593 = vsub.s32 4, %v592
    %v594 = vrot.slane %v573, %v593
    %v595 = vlaneseq
    %v596 = vshrl.u32 %v595, 7
    %v597 = vsub.s32 5, %v596
    %v598 = vrot.slane %v573, %v597
    %v599 = vlaneseq
    %v600 = vshrl.u32 %v599, 7
    %v601 = vsub.s32 6, %v600
    %v602 = vrot.slane %v573, %v601
    %v603 = vlaneseq
    %v604 = vshrl.u32 %v603, 7
    %v605 = vsub.s32 7, %v604
    %v606 = vrot.slane %v573, %v605
    %v623 = vunpack.c.l.b16 %v117
    %v624 = vunpack.c.h.b16 %v117
    %v625 = vunpack.c.l.b16 %v118
    %v626 = vunpack.c.h.b16 %v118
    %v627 = vunpack.c.l.b16 %v119
    %v628 = vunpack.c.h.b16 %v119
    %v629 = vunpack.c.l.b16 %v120
    %v630 = vunpack.c.l.b16 %v121
    %v631 = vunpack.c.h.b16 %v121
    %v632 = vunpack.c.l.b16 %v122
    %v633 = vunpack.c.h.b16 %v122
    %v634 = vunpack.c.l.b16 %v123
    %v635 = vunpack.c.h.b16 %v123
    %v636 = vunpack.c.l.b16 %v124
    %v637 = vpack.c.b16 %v630, %v623
    %v638 = vpack.c.b16 %v631, %v624
    %v639 = vpack.c.b16 %v632, %v625
    %v640 = vpack.c.b16 %v633, %v626
    %v641 = vpack.c.b16 %v634, %v627
    %v642 = vpack.c.b16 %v635, %v628
    %v643 = vpack.c.b16 %v636, %v629
    %v1099 = vunpack.c.l.b16 %v125
    %v1100 = vunpack.c.h.b16 %v125
    %v1101 = vunpack.c.l.b16 %v126
    %v1102 = vunpack.c.h.b16 %v126
    %v1103 = vunpack.c.l.b16 %v127
    %v1104 = vunpack.c.h.b16 %v127
    %v1105 = vunpack.c.l.b16 %v128
    %v1106 = vunpack.c.h.b16 %v128
    %v1107 = vunpack.c.l.b16 %v129
    %v1108 = vunpack.c.h.b16 %v129
    %v1109 = vunpack.c.l.b16 %v130
    %v1110 = vunpack.c.h.b16 %v130
    %v1111 = vunpack.c.l.b16 %v131
    %v1112 = vunpack.c.h.b16 %v131
    %v1113 = vunpack.c.l.b16 %v132
    %v1114 = vunpack.c.h.b16 %v132
    %v1115 = vunpack.c.l.b16 %v133
    %v1116 = vunpack.c.h.b16 %v133
    %v1117 = vunpack.c.l.b16 %v134
    %v1118 = vunpack.c.h.b16 %v134
    %v1119 = vunpack.c.l.b16 %v135
    %v1120 = vunpack.c.h.b16 %v135
    %v1121 = vunpack.c.l.b16 %v136
    %v1122 = vunpack.c.h.b16 %v136
    %v1123 = vunpack.c.l.b16 %v137
    %v1124 = vunpack.c.h.b16 %v137
    %v1125 = vunpack.c.l.b16 %v138
    %v1126 = vunpack.c.h.b16 %v138
    %v1127 = vunpack.c.l.b16 %v139
    %v1128 = vunpack.c.h.b16 %v139
    %v1129 = vunpack.c.l.b16 %v140
    %v1130 = vunpack.c.h.b16 %v140
    %v1131 = vunpack.c.l.b16 %v141
    %v1132 = vunpack.c.h.b16 %v141
    %v1133 = vunpack.c.l.b16 %v142
    %v1134 = vunpack.c.h.b16 %v142
    %v1135 = vunpack.c.l.b16 %v143
    %v1136 = vunpack.c.h.b16 %v143
    %v1137 = vunpack.c.l.b16 %v144
    %v1138 = vunpack.c.h.b16 %v144
    %v1139 = vunpack.c.l.b16 %v145
    %v1140 = vunpack.c.h.b16 %v145
    %v1141 = vunpack.c.l.b16 %v146
    %v1142 = vunpack.c.h.b16 %v146
    %v1143 = vunpack.c.l.b16 %v147
    %v1144 = vunpack.c.h.b16 %v147
    %v1145 = vunpack.c.l.b16 %v148
    %v1146 = vunpack.c.h.b16 %v148
    %v1147 = vunpack.c.l.b16 %v149
    %v1148 = vunpack.c.h.b16 %v149
    %v1149 = vunpack.c.l.b16 %v150
    %v1150 = vunpack.c.h.b16 %v150
    %v1151 = vunpack.c.l.b16 %v151
    %v1152 = vunpack.c.h.b16 %v151
    %v1153 = vunpack.c.l.b16 %v152
    %v1154 = vunpack.c.h.b16 %v152
    %v1155 = vunpack.c.l.b16 %v153
    %v1156 = vunpack.c.h.b16 %v153
    %v1157 = vunpack.c.l.b16 %v154
    %v1158 = vunpack.c.h.b16 %v154
    %v1159 = vunpack.c.l.b16 %v155
    %v1160 = vunpack.c.h.b16 %v155
    %v1161 = vunpack.c.l.b16 %v156
    %v1162 = vunpack.c.h.b16 %v156
    %v1163 = vunpack.c.l.b16 %v157
    %v1164 = vunpack.c.h.b16 %v157
    %v1165 = vunpack.c.l.b16 %v158
    %v1166 = vunpack.c.h.b16 %v158
    %v1167 = vunpack.c.l.b16 %v159
    %v1168 = vunpack.c.h.b16 %v159
    %v1169 = vunpack.c.l.b16 %v160
    %v1170 = vunpack.c.h.b16 %v160
    %v1171 = vunpack.c.l.b16 %v161
    %v1172 = vunpack.c.h.b16 %v161
    %v1173 = vunpack.c.l.b16 %v162
    %v1174 = vunpack.c.h.b16 %v162
    %v1175 = vunpack.c.l.b16 %v163
    %v1176 = vunpack.c.h.b16 %v163
    %v1177 = vunpack.c.l.b16 %v164
    %v1178 = vunpack.c.h.b16 %v164
    %v1179 = vunpack.c.l.b16 %v165
    %v1180 = vunpack.c.h.b16 %v165
    %v1181 = vunpack.c.l.b16 %v166
    %v1182 = vunpack.c.h.b16 %v166
    %v1183 = vunpack.c.l.b16 %v167
    %v1184 = vunpack.c.h.b16 %v167
    %v1185 = vunpack.c.l.b16 %v168
    %v1186 = vunpack.c.h.b16 %v168
    %v1187 = vunpack.c.l.b16 %v169
    %v1188 = vunpack.c.h.b16 %v169
    %v1189 = vunpack.c.l.b16 %v170
    %v1190 = vunpack.c.h.b16 %v170
    %v1191 = vunpack.c.l.b16 %v171
    %v1192 = vunpack.c.h.b16 %v171
    %v1193 = vunpack.c.l.b16 %v172
    %v1194 = vunpack.c.h.b16 %v172
    %v1195 = vunpack.c.l.b16 %v173
    %v1196 = vunpack.c.h.b16 %v173
    %v1197 = vunpack.c.l.b16 %v174
    %v1198 = vunpack.c.h.b16 %v174
    %v1199 = vunpack.c.l.b16 %v175
    %v1200 = vunpack.c.h.b16 %v175
    %v1201 = vunpack.c.l.b16 %v176
    %v1202 = vunpack.c.h.b16 %v176
    %v1203 = vunpack.c.l.b16 %v177
    %v1204 = vunpack.c.h.b16 %v177
    %v1205 = vunpack.c.l.b16 %v178
    %v1206 = vunpack.c.h.b16 %v178
    %v1207 = vunpack.c.l.b16 %v179
    %v1208 = vunpack.c.h.b16 %v179
    %v1209 = vunpack.c.l.b16 %v180
    %v1210 = vunpack.c.h.b16 %v180
    %v1211 = vunpack.c.l.b16 %v181
    %v1212 = vunpack.c.h.b16 %v181
    %v1213 = vunpack.c.l.b16 %v182
    %v1214 = vunpack.c.h.b16 %v182
    %v1215 = vunpack.c.l.b16 %v183
    %v1216 = vunpack.c.h.b16 %v183
    %v1217 = vunpack.c.l.b16 %v184
    %v1218 = vunpack.c.h.b16 %v184
    %v1219 = vunpack.c.l.b16 %v185
    %v1220 = vunpack.c.h.b16 %v185
    %v1221 = vunpack.c.l.b16 %v186
    %v1222 = vunpack.c.h.b16 %v186
    %v1223 = vunpack.c.l.b16 %v187
    %v1224 = vunpack.c.h.b16 %v187
    %v1225 = vunpack.c.l.b16 %v188
    %v1226 = vunpack.c.h.b16 %v188
    %v1227 = vunpack.c.l.b16 %v189
    %v1228 = vunpack.c.h.b16 %v189
    %v1229 = vunpack.c.l.b16 %v190
    %v1230 = vunpack.c.h.b16 %v190
    %v1231 = vunpack.c.l.b16 %v191
    %v1232 = vunpack.c.h.b16 %v191
    %v1233 = vunpack.c.l.b16 %v192
    %v1234 = vunpack.c.h.b16 %v192
    %v1235 = vunpack.c.l.b16 %v193
    %v1236 = vunpack.c.h.b16 %v193
    %v1237 = vunpack.c.l.b16 %v194
    %v1238 = vunpack.c.h.b16 %v194
    %v1239 = vunpack.c.l.b16 %v195
    %v1240 = vunpack.c.h.b16 %v195
    %v1241 = vunpack.c.l.b16 %v196
    %v1242 = vunpack.c.h.b16 %v196
    %v1243 = vunpack.c.l.b16 %v197
    %v1244 = vunpack.c.h.b16 %v197
    %v1245 = vunpack.c.l.b16 %v198
    %v1246 = vunpack.c.h.b16 %v198
    %v1247 = vunpack.c.l.b16 %v199
    %v1248 = vunpack.c.h.b16 %v199
    %v1249 = vunpack.c.l.b16 %v200
    %v1250 = vunpack.c.h.b16 %v200
    %v1251 = vunpack.c.l.b16 %v201
    %v1252 = vunpack.c.h.b16 %v201
    %v1253 = vunpack.c.l.b16 %v202
    %v1254 = vunpack.c.h.b16 %v202
    %v1255 = vunpack.c.l.b16 %v203
    %v1256 = vunpack.c.h.b16 %v203
    %v1257 = vunpack.c.l.b16 %v204
    %v1258 = vunpack.c.h.b16 %v204
    %v1259 = vunpack.c.l.b16 %v205
    %v1260 = vunpack.c.h.b16 %v205
    %v1261 = vunpack.c.l.b16 %v206
    %v1262 = vunpack.c.h.b16 %v206
    %v1263 = vunpack.c.l.b16 %v207
    %v1264 = vunpack.c.h.b16 %v207
    %v1265 = vunpack.c.l.b16 %v208
    %v1266 = vunpack.c.h.b16 %v208
    %v1267 = vunpack.c.l.b16 %v209
    %v1268 = vunpack.c.h.b16 %v209
    %v1269 = vunpack.c.l.b16 %v210
    %v1270 = vunpack.c.h.b16 %v210
    %v1271 = vunpack.c.l.b16 %v211
    %v1272 = vunpack.c.h.b16 %v211
    %v1273 = vunpack.c.l.b16 %v212
    %v1274 = vunpack.c.h.b16 %v212
    %v1275 = vunpack.c.l.b16 %v213
    %v1276 = vunpack.c.h.b16 %v213
    %v1277 = vunpack.c.l.b16 %v214
    %v1278 = vunpack.c.h.b16 %v214
    %v1279 = vunpack.c.l.b16 %v215
    %v1280 = vunpack.c.h.b16 %v215
    %v1281 = vunpack.c.l.b16 %v216
    %v1282 = vunpack.c.h.b16 %v216
    %v1283 = vunpack.c.l.b16 %v217
    %v1284 = vunpack.c.h.b16 %v217
    %v1285 = vunpack.c.l.b16 %v218
    %v1286 = vunpack.c.h.b16 %v218
    %v1287 = vunpack.c.l.b16 %v219
    %v1288 = vunpack.c.h.b16 %v219
    %v1289 = vunpack.c.l.b16 %v220
    %v1290 = vunpack.c.h.b16 %v220
    %v1291 = vunpack.c.l.b16 %v221
    %v1292 = vunpack.c.h.b16 %v221
    %v1293 = vunpack.c.l.b16 %v222
    %v1294 = vunpack.c.h.b16 %v222
    %v1295 = vunpack.c.l.b16 %v223
    %v1296 = vunpack.c.h.b16 %v223
    %v1297 = vunpack.c.l.b16 %v224
    %v1298 = vunpack.c.h.b16 %v224
    %v1299 = vunpack.c.l.b16 %v225
    %v1300 = vunpack.c.h.b16 %v225
    %v1301 = vunpack.c.l.b16 %v226
    %v1302 = vunpack.c.h.b16 %v226
    %v1303 = vunpack.c.l.b16 %v227
    %v1304 = vunpack.c.h.b16 %v227
    %v1305 = vunpack.c.l.b16 %v228
    %v1306 = vunpack.c.h.b16 %v228
    %v1307 = vunpack.c.l.b16 %v229
    %v1308 = vunpack.c.h.b16 %v229
    %v1309 = vunpack.c.l.b16 %v230
    %v1310 = vunpack.c.h.b16 %v230
    %v1311 = vunpack.c.l.b16 %v231
    %v1312 = vunpack.c.h.b16 %v231
    %v1313 = vunpack.c.l.b16 %v232
    %v1314 = vunpack.c.h.b16 %v232
    %v1315 = vunpack.c.l.b16 %v233
    %v1316 = vunpack.c.h.b16 %v233
    %v1317 = vunpack.c.l.b16 %v234
    %v1318 = vunpack.c.h.b16 %v234
    %v1319 = vunpack.c.l.b16 %v235
    %v1320 = vunpack.c.h.b16 %v235
    %v1321 = vunpack.c.l.b16 %v236
    %v1322 = vunpack.c.h.b16 %v236
    %v1323 = vunpack.c.l.b16 %v237
    %v1324 = vunpack.c.h.b16 %v237
    %v1325 = vunpack.c.l.b16 %v238
    %v1326 = vunpack.c.h.b16 %v238
    %v1327 = vunpack.c.l.b16 %v239
    %v1328 = vunpack.c.h.b16 %v239
    %v1329 = vunpack.c.l.b16 %v240
    %v1330 = vunpack.c.h.b16 %v240
    %v1331 = vunpack.c.l.b16 %v241
    %v1332 = vunpack.c.h.b16 %v241
    %v1333 = vunpack.c.l.b16 %v242
    %v1334 = vunpack.c.h.b16 %v242
    %v1335 = vunpack.c.l.b16 %v243
    %v1336 = vunpack.c.h.b16 %v243
    %v1337 = vunpack.c.l.b16 %v244
    %v1338 = vunpack.c.h.b16 %v244
    %v1339 = vunpack.c.l.b16 %v245
    %v1340 = vunpack.c.h.b16 %v245
    %v1341 = vunpack.c.l.b16 %v246
    %v1342 = vunpack.c.h.b16 %v246
    %v1343 = vunpack.c.l.b16 %v247
    %v1344 = vunpack.c.h.b16 %v247
    %v1345 = vunpack.c.l.b16 %v248
    %v1346 = vunpack.c.h.b16 %v248
    %v1347 = vunpack.c.l.b16 %v249
    %v1348 = vunpack.c.h.b16 %v249
    %v1349 = vunpack.c.l.b16 %v250
    %v1350 = vunpack.c.h.b16 %v250
    %v1351 = vunpack.c.l.b16 %v251
    %v1352 = vunpack.c.h.b16 %v251
    %v1353 = vunpack.c.l.b16 %v252
    %v1354 = vunpack.c.h.b16 %v252
    %v1355 = vunpack.c.l.b16 %v253
    %v1356 = vunpack.c.h.b16 %v253
    %v1357 = vunpack.c.l.b16 %v254
    %v1358 = vunpack.c.h.b16 %v254
    %v1359 = vunpack.c.l.b16 %v255
    %v1360 = vunpack.c.h.b16 %v255
    %v1361 = vunpack.c.l.b16 %v256
    %v1362 = vunpack.c.h.b16 %v256
    %v1363 = vunpack.c.l.b16 %v257
    %v1364 = vunpack.c.h.b16 %v257
    %v1365 = vunpack.c.l.b16 %v258
    %v1366 = vunpack.c.h.b16 %v258
    %v1367 = vunpack.c.l.b16 %v259
    %v1368 = vunpack.c.h.b16 %v259
    %v1369 = vunpack.c.l.b16 %v260
    %v1370 = vunpack.c.h.b16 %v260
    %v1371 = vunpack.c.l.b16 %v261
    %v1372 = vunpack.c.h.b16 %v261
    %v1373 = vunpack.c.l.b16 %v262
    %v1374 = vunpack.c.h.b16 %v262
    %v1375 = vunpack.c.l.b16 %v263
    %v1376 = vunpack.c.h.b16 %v263
    %v1377 = vunpack.c.l.b16 %v264
    %v1378 = vunpack.c.h.b16 %v264
    %v1379 = vunpack.c.l.b16 %v265
    %v1380 = vunpack.c.h.b16 %v265
    %v1381 = vunpack.c.l.b16 %v266
    %v1382 = vunpack.c.h.b16 %v266
    %v1383 = vunpack.c.l.b16 %v267
    %v1384 = vunpack.c.h.b16 %v267
    %v1385 = vunpack.c.l.b16 %v268
    %v1386 = vunpack.c.h.b16 %v268
    %v1387 = vunpack.c.l.b16 %v269
    %v1388 = vunpack.c.h.b16 %v269
    %v1389 = vunpack.c.l.b16 %v270
    %v1390 = vunpack.c.h.b16 %v270
    %v1391 = vunpack.c.l.b16 %v271
    %v1392 = vunpack.c.h.b16 %v271
    %v1393 = vunpack.c.l.b16 %v272
    %v1394 = vunpack.c.h.b16 %v272
    %v1395 = vunpack.c.l.b16 %v273
    %v1396 = vunpack.c.h.b16 %v273
    %v1397 = vunpack.c.l.b16 %v274
    %v1398 = vunpack.c.h.b16 %v274
    %v1399 = vunpack.c.l.b16 %v275
    %v1400 = vunpack.c.h.b16 %v275
    %v1401 = vunpack.c.l.b16 %v276
    %v1402 = vunpack.c.h.b16 %v276
    %v1403 = vunpack.c.l.b16 %v277
    %v1404 = vunpack.c.h.b16 %v277
    %v1405 = vunpack.c.l.b16 %v278
    %v1406 = vunpack.c.h.b16 %v278
    %v1407 = vunpack.c.l.b16 %v279
    %v1408 = vunpack.c.h.b16 %v279
    %v1409 = vunpack.c.l.b16 %v280
    %v1410 = vunpack.c.h.b16 %v280
    %v1411 = vunpack.c.l.b16 %v281
    %v1412 = vunpack.c.h.b16 %v281
    %v1413 = vunpack.c.l.b16 %v282
    %v1414 = vunpack.c.h.b16 %v282
    %v1415 = vunpack.c.l.b16 %v283
    %v1416 = vunpack.c.h.b16 %v283
    %v1417 = vunpack.c.l.b16 %v284
    %v1418 = vunpack.c.h.b16 %v284
    %v1419 = vunpack.c.l.b16 %v285
    %v1420 = vunpack.c.h.b16 %v285
    %v1421 = vunpack.c.l.b16 %v286
    %v1422 = vunpack.c.h.b16 %v286
    %v1423 = vunpack.c.l.b16 %v287
    %v1424 = vunpack.c.h.b16 %v287
    %v1425 = vunpack.c.l.b16 %v288
    %v1426 = vunpack.c.h.b16 %v288
    %v1427 = vunpack.c.l.b16 %v289
    %v1428 = vunpack.c.h.b16 %v289
    %v1429 = vunpack.c.l.b16 %v290
    %v1430 = vunpack.c.h.b16 %v290
    %v1431 = vunpack.c.l.b16 %v291
    %v1432 = vunpack.c.h.b16 %v291
    %v1433 = vunpack.c.l.b16 %v292
    %v1434 = vunpack.c.h.b16 %v292
    %v1435 = vunpack.c.l.b16 %v293
    %v1436 = vunpack.c.h.b16 %v293
    %v1437 = vunpack.c.l.b16 %v294
    %v1438 = vunpack.c.h.b16 %v294
    %v1439 = vunpack.c.l.b16 %v295
    %v1440 = vunpack.c.h.b16 %v295
    %v1441 = vunpack.c.l.b16 %v296
    %v1442 = vunpack.c.h.b16 %v296
    %v1443 = vunpack.c.l.b16 %v297
    %v1444 = vunpack.c.h.b16 %v297
    %v1445 = vunpack.c.l.b16 %v298
    %v1446 = vunpack.c.h.b16 %v298
    %v1447 = vunpack.c.l.b16 %v299
    %v1448 = vunpack.c.h.b16 %v299
    %v1449 = vunpack.c.l.b16 %v300
    %v1450 = vunpack.c.h.b16 %v300
    %v1451 = vunpack.c.l.b16 %v301
    %v1452 = vunpack.c.h.b16 %v301
    %v1453 = vunpack.c.l.b16 %v302
    %v1454 = vunpack.c.h.b16 %v302
    %v1455 = vunpack.c.l.b16 %v303
    %v1456 = vunpack.c.h.b16 %v303
    %v1457 = vunpack.c.l.b16 %v304
    %v1458 = vunpack.c.h.b16 %v304
    %v1459 = vunpack.c.l.b16 %v305
    %v1460 = vunpack.c.h.b16 %v305
    %v1461 = vunpack.c.l.b16 %v306
    %v1462 = vunpack.c.h.b16 %v306
    %v1463 = vunpack.c.l.b16 %v307
    %v1464 = vunpack.c.h.b16 %v307
    %v1465 = vunpack.c.l.b16 %v308
    %v1466 = vunpack.c.h.b16 %v308
    %v1467 = vunpack.c.l.b16 %v309
    %v1468 = vunpack.c.h.b16 %v309
    %v1469 = vunpack.c.l.b16 %v310
    %v1470 = vunpack.c.h.b16 %v310
    %v1471 = vunpack.c.l.b16 %v311
    %v1472 = vunpack.c.h.b16 %v311
    %v1473 = vunpack.c.l.b16 %v312
    %v1474 = vunpack.c.h.b16 %v312
    %v1475 = vunpack.c.l.b16 %v313
    %v1476 = vunpack.c.h.b16 %v313
    %v1477 = vunpack.c.l.b16 %v314
    %v1478 = vunpack.c.h.b16 %v314
    %v1479 = vunpack.c.l.b16 %v315
    %v1480 = vunpack.c.h.b16 %v315
    %v1481 = vunpack.c.l.b16 %v316
    %v1482 = vunpack.c.h.b16 %v316
    %v1483 = vunpack.c.l.b16 %v317
    %v1484 = vunpack.c.h.b16 %v317
    %v1485 = vunpack.c.l.b16 %v318
    %v1486 = vunpack.c.h.b16 %v318
    %v1487 = vunpack.c.l.b16 %v319
    %v1488 = vunpack.c.h.b16 %v319
    %v1489 = vunpack.c.l.b16 %v320
    %v1490 = vunpack.c.h.b16 %v320
    %v1491 = vunpack.c.l.b16 %v321
    %v1492 = vunpack.c.h.b16 %v321
    %v1493 = vunpack.c.l.b16 %v322
    %v1494 = vunpack.c.h.b16 %v322
    %v1495 = vunpack.c.l.b16 %v323
    %v1496 = vunpack.c.h.b16 %v323
    %v1497 = vunpack.c.l.b16 %v324
    %v1498 = vunpack.c.h.b16 %v324
    %v1499 = vunpack.c.l.b16 %v325
    %v1500 = vunpack.c.h.b16 %v325
    %v1501 = vunpack.c.l.b16 %v326
    %v1502 = vunpack.c.h.b16 %v326
    %v1503 = vunpack.c.l.b16 %v327
    %v1504 = vunpack.c.h.b16 %v327
    %v1505 = vunpack.c.l.b16 %v328
    %v1506 = vunpack.c.h.b16 %v328
    %v1507 = vunpack.c.l.b16 %v329
    %v1508 = vunpack.c.h.b16 %v329
    %v1509 = vunpack.c.l.b16 %v330
    %v1510 = vunpack.c.h.b16 %v330
    %v1511 = vunpack.c.l.b16 %v331
    %v1512 = vunpack.c.h.b16 %v331
    %v1513 = vunpack.c.l.b16 %v332
    %v1514 = vunpack.c.h.b16 %v332
    %v1515 = vunpack.c.l.b16 %v333
    %v1516 = vunpack.c.h.b16 %v333
    %v1517 = vunpack.c.l.b16 %v334
    %v1518 = vunpack.c.h.b16 %v334
    %v1519 = vunpack.c.l.b16 %v335
    %v1520 = vunpack.c.h.b16 %v335
    %v1521 = vunpack.c.l.b16 %v336
    %v1522 = vunpack.c.h.b16 %v336
    %v1523 = vunpack.c.l.b16 %v337
    %v1524 = vunpack.c.h.b16 %v337
    %v1525 = vunpack.c.l.b16 %v338
    %v1526 = vunpack.c.h.b16 %v338
    %v1527 = vunpack.c.l.b16 %v339
    %v1528 = vunpack.c.h.b16 %v339
    %v1529 = vunpack.c.l.b16 %v340
    %v1530 = vunpack.c.h.b16 %v340
    %v1531 = vunpack.c.l.b16 %v341
    %v1532 = vunpack.c.h.b16 %v341
    %v1533 = vunpack.c.l.b16 %v342
    %v1534 = vunpack.c.h.b16 %v342
    %v1535 = vunpack.c.l.b16 %v343
    %v1536 = vunpack.c.h.b16 %v343
    %v1537 = vunpack.c.l.b16 %v344
    %v1538 = vunpack.c.h.b16 %v344
    %v1539 = vunpack.c.l.b16 %v345
    %v1540 = vunpack.c.h.b16 %v345
    %v1541 = vunpack.c.l.b16 %v346
    %v1542 = vunpack.c.h.b16 %v346
    %v1543 = vunpack.c.l.b16 %v347
    %v1544 = vunpack.c.h.b16 %v347
    %v1545 = vunpack.c.l.b16 %v348
    %v1546 = vunpack.c.h.b16 %v348
    %v1547 = vunpack.c.l.b16 %v349
    %v1548 = vunpack.c.h.b16 %v349
    %v1549 = vunpack.c.l.b16 %v350
    %v1550 = vunpack.c.h.b16 %v350
    %v1551 = vunpack.c.l.b16 %v351
    %v1552 = vunpack.c.h.b16 %v351
    %v1553 = vunpack.c.l.b16 %v352
    %v1554 = vunpack.c.h.b16 %v352
    %v1555 = vunpack.c.l.b16 %v353
    %v1556 = vunpack.c.h.b16 %v353
    %v1557 = vunpack.c.l.b16 %v354
    %v1558 = vunpack.c.h.b16 %v354
    %v1559 = vunpack.c.l.b16 %v355
    %v1560 = vunpack.c.h.b16 %v355
    %v1561 = vunpack.c.l.b16 %v356
    %v1562 = vunpack.c.h.b16 %v356
    %v1563 = vunpack.c.l.b16 %v357
    %v1564 = vunpack.c.h.b16 %v357
    %v1565 = vunpack.c.l.b16 %v358
    %v1566 = vunpack.c.h.b16 %v358
    %v1567 = vunpack.c.l.b16 %v359
    %v1568 = vunpack.c.h.b16 %v359
    %v1569 = vunpack.c.l.b16 %v360
    %v1570 = vunpack.c.h.b16 %v360
    %v1571 = vunpack.c.l.b16 %v361
    %v1572 = vunpack.c.h.b16 %v361
    %v1573 = vunpack.c.l.b16 %v362
    %v1574 = vunpack.c.h.b16 %v362
    %v1575 = vunpack.c.l.b16 %v363
    %v1576 = vunpack.c.h.b16 %v363
    %v1577 = vunpack.c.l.b16 %v364
    %v1578 = vunpack.c.h.b16 %v364
    %v1579 = vunpack.c.l.b16 %v365
    %v1580 = vunpack.c.h.b16 %v365
    %v1581 = vunpack.c.l.b16 %v366
    %v1582 = vunpack.c.h.b16 %v366
    %v1583 = vunpack.c.l.b16 %v367
    %v1584 = vunpack.c.h.b16 %v367
    %v1585 = vunpack.c.l.b16 %v368
    %v1586 = vunpack.c.h.b16 %v368
    %v1587 = vunpack.c.l.b16 %v369
    %v1588 = vunpack.c.h.b16 %v369
    %v1589 = vunpack.c.l.b16 %v370
    %v1590 = vunpack.c.h.b16 %v370
    %v1591 = vunpack.c.l.b16 %v371
    %v1592 = vunpack.c.h.b16 %v371
    %v1593 = vunpack.c.l.b16 %v372
    %v1594 = vunpack.c.h.b16 %v372
    %v1595 = vunpack.c.l.b16 %v373
    %v1596 = vunpack.c.h.b16 %v373
    %v1597 = vunpack.c.l.b16 %v374
    %v1598 = vunpack.c.h.b16 %v374
    %v1599 = vunpack.c.l.b16 %v375
    %v1600 = vunpack.c.h.b16 %v375
    %v1601 = vunpack.c.l.b16 %v376
    %v1602 = vunpack.c.h.b16 %v376
    %v1603 = vunpack.c.l.b16 %v377
    %v1604 = vunpack.c.h.b16 %v377
    %v1605 = vunpack.c.l.b16 %v378
    %v1606 = vunpack.c.h.b16 %v378
    %v1607 = vunpack.c.l.b16 %v379
    %v1608 = vunpack.c.h.b16 %v379
    %v1609 = vunpack.c.l.b16 %v380
    %v1610 = vunpack.c.h.b16 %v380
    %v1611 = vunpack.c.l.b16 %v381
    %v1612 = vunpack.c.h.b16 %v381
    %v1613 = vunpack.c.l.b16 %v382
    %v1614 = vunpack.c.h.b16 %v382
    %v1615 = vunpack.c.l.b16 %v383
    %v1616 = vunpack.c.h.b16 %v383
    %v1617 = vunpack.c.l.b16 %v384
    %v1618 = vunpack.c.h.b16 %v384
    %v1619 = vunpack.c.l.b16 %v385
    %v1620 = vunpack.c.h.b16 %v385
    %v1621 = vunpack.c.l.b16 %v386
    %v1622 = vunpack.c.h.b16 %v386
    %v1623 = vunpack.c.l.b16 %v387
    %v1624 = vunpack.c.h.b16 %v387
    %v1625 = vunpack.c.l.b16 %v388
    %v1626 = vunpack.c.h.b16 %v388
    %v1627 = vunpack.c.l.b16 %v389
    %v1628 = vunpack.c.h.b16 %v389
    %v1629 = vunpack.c.l.b16 %v390
    %v1630 = vunpack.c.h.b16 %v390
    %v1631 = vunpack.c.l.b16 %v391
    %v1632 = vunpack.c.h.b16 %v391
    %v1633 = vunpack.c.l.b16 %v392
    %v1634 = vunpack.c.h.b16 %v392
    %v1635 = vunpack.c.l.b16 %v393
    %v1636 = vunpack.c.h.b16 %v393
    %v1637 = vunpack.c.l.b16 %v394
    %v1638 = vunpack.c.h.b16 %v394
    %v1639 = vunpack.c.l.b16 %v395
    %v1640 = vunpack.c.h.b16 %v395
    %v1641 = vunpack.c.l.b16 %v396
    %v1642 = vunpack.c.h.b16 %v396
    %v1643 = vunpack.c.l.b16 %v397
    %v1644 = vunpack.c.h.b16 %v397
    %v1645 = vunpack.c.l.b16 %v398
    %v1646 = vunpack.c.h.b16 %v398
    %v1647 = vunpack.c.l.b16 %v399
    %v1648 = vunpack.c.h.b16 %v399
    %v1649 = vunpack.c.l.b16 %v400
    %v1650 = vunpack.c.h.b16 %v400
    %v1651 = vunpack.c.l.b16 %v401
    %v1652 = vunpack.c.h.b16 %v401
    %v1653 = vunpack.c.l.b16 %v402
    %v1654 = vunpack.c.h.b16 %v402
    %v1655 = vunpack.c.l.b16 %v403
    %v1656 = vunpack.c.h.b16 %v403
    %v1657 = vunpack.c.l.b16 %v404
    %v1658 = vunpack.c.h.b16 %v404
    %v1659 = vunpack.c.l.b16 %v405
    %v1660 = vunpack.c.h.b16 %v405
    %v1661 = vunpack.c.l.b16 %v406
    %v1662 = vunpack.c.h.b16 %v406
    %v1663 = vunpack.c.l.b16 %v407
    %v1664 = vunpack.c.h.b16 %v407
    %v1665 = vunpack.c.l.b16 %v408
    %v1666 = vunpack.c.h.b16 %v408
    %v1667 = vunpack.c.l.b16 %v409
    %v1668 = vunpack.c.h.b16 %v409
    %v1669 = vunpack.c.l.b16 %v410
    %v1670 = vunpack.c.h.b16 %v410
    %v1671 = vunpack.c.l.b16 %v411
    %v1672 = vunpack.c.h.b16 %v411
    %v1673 = vunpack.c.l.b16 %v412
    %v1674 = vunpack.c.h.b16 %v412
    %v1675 = vunpack.c.l.b16 %v413
    %v1676 = vunpack.c.h.b16 %v413
    %v1677 = vunpack.c.l.b16 %v414
    %v1678 = vunpack.c.h.b16 %v414
    %v1679 = vunpack.c.l.b16 %v415
    %v1680 = vunpack.c.h.b16 %v415
    %v1681 = vunpack.c.l.b16 %v416
    %v1682 = vunpack.c.h.b16 %v416
    %v1683 = vunpack.c.l.b16 %v417
    %v1684 = vunpack.c.h.b16 %v417
    %v1685 = vunpack.c.l.b16 %v418
    %v1686 = vunpack.c.h.b16 %v418
    %v1687 = vunpack.c.l.b16 %v419
    %v1688 = vunpack.c.h.b16 %v419
    %v1689 = vunpack.c.l.b16 %v420
    %v1690 = vunpack.c.h.b16 %v420
    %v1691 = vunpack.c.l.b16 %v421
    %v1692 = vunpack.c.h.b16 %v421
    %v1693 = vunpack.c.l.b16 %v422
    %v1694 = vunpack.c.h.b16 %v422
    %v1695 = vunpack.c.l.b16 %v423
    %v1696 = vunpack.c.h.b16 %v423
    %v1697 = vunpack.c.l.b16 %v424
    %v1698 = vunpack.c.h.b16 %v424
    %v1699 = vunpack.c.l.b16 %v425
    %v1700 = vunpack.c.h.b16 %v425
    %v1701 = vunpack.c.l.b16 %v426
    %v1702 = vunpack.c.h.b16 %v426
    %v1703 = vunpack.c.l.b16 %v427
    %v1704 = vunpack.c.h.b16 %v427
    %v1705 = vunpack.c.l.b16 %v428
    %v1706 = vunpack.c.h.b16 %v428
    %v1707 = vunpack.c.l.b16 %v429
    %v1708 = vunpack.c.h.b16 %v429
    %v1709 = vunpack.c.l.b16 %v430
    %v1710 = vunpack.c.h.b16 %v430
    %v1711 = vunpack.c.l.b16 %v431
    %v1712 = vunpack.c.h.b16 %v431
    %v1713 = vunpack.c.l.b16 %v432
    %v1714 = vunpack.c.h.b16 %v432
    %v1715 = vunpack.c.l.b16 %v433
    %v1716 = vunpack.c.h.b16 %v433
    %v1717 = vunpack.c.l.b16 %v434
    %v1718 = vunpack.c.h.b16 %v434
    %v1719 = vunpack.c.l.b16 %v435
    %v1720 = vunpack.c.h.b16 %v435
    %v1721 = vunpack.c.l.b16 %v436
    %v1722 = vunpack.c.h.b16 %v436
    %v1723 = vunpack.c.l.b16 %v437
    %v1724 = vunpack.c.h.b16 %v437
    %v1725 = vunpack.c.l.b16 %v438
    %v1726 = vunpack.c.h.b16 %v438
    %v1727 = vunpack.c.l.b16 %v439
    %v1728 = vunpack.c.h.b16 %v439
    %v1729 = vunpack.c.l.b16 %v440
    %v1730 = vunpack.c.h.b16 %v440
    %v1731 = vunpack.c.l.b16 %v441
    %v1732 = vunpack.c.h.b16 %v441
    %v1733 = vunpack.c.l.b16 %v442
    %v1734 = vunpack.c.h.b16 %v442
    %v1735 = vunpack.c.l.b16 %v443
    %v1736 = vunpack.c.h.b16 %v443
    %v1737 = vunpack.c.l.b16 %v444
    %v1738 = vunpack.c.h.b16 %v444
    %v1739 = vunpack.c.l.b16 %v445
    %v1740 = vunpack.c.h.b16 %v445
    %v1741 = vunpack.c.l.b16 %v446
    %v1742 = vunpack.c.h.b16 %v446
    %v1743 = vunpack.c.l.b16 %v447
    %v1744 = vunpack.c.h.b16 %v447
    %v1745 = vunpack.c.l.b16 %v448
    %v1746 = vunpack.c.h.b16 %v448
    %v1747 = vunpack.c.l.b16 %v449
    %v1748 = vunpack.c.h.b16 %v449
    %v1749 = vunpack.c.l.b16 %v450
    %v1750 = vunpack.c.h.b16 %v450
    %v1751 = vunpack.c.l.b16 %v451
    %v1752 = vunpack.c.h.b16 %v451
    %v1753 = vunpack.c.l.b16 %v452
    %v1754 = vunpack.c.h.b16 %v452
    %v1755 = vunpack.c.l.b16 %v453
    %v1756 = vunpack.c.h.b16 %v453
    %v1757 = vunpack.c.l.b16 %v454
    %v1758 = vunpack.c.h.b16 %v454
    %v1759 = vunpack.c.l.b16 %v455
    %v1760 = vunpack.c.h.b16 %v455
    %v1761 = vunpack.c.l.b16 %v456
    %v1762 = vunpack.c.h.b16 %v456
    %v1763 = vunpack.c.l.b16 %v457
    %v1764 = vunpack.c.h.b16 %v457
    %v1765 = vunpack.c.l.b16 %v458
    %v1766 = vunpack.c.h.b16 %v458
    %v1767 = vunpack.c.l.b16 %v459
    %v1768 = vunpack.c.h.b16 %v459
    %v1769 = vunpack.c.l.b16 %v460
    %v1770 = vunpack.c.h.b16 %v460
    %v1771 = vunpack.c.l.b16 %v461
    %v1772 = vunpack.c.h.b16 %v461
    %v1773 = vunpack.c.l.b16 %v462
    %v1774 = vunpack.c.h.b16 %v462
    %v1775 = vunpack.c.l.b16 %v463
    %v1776 = vunpack.c.h.b16 %v463
    %v1777 = vunpack.c.l.b16 %v464
    %v1778 = vunpack.c.h.b16 %v464
    %v1779 = vunpack.c.l.b16 %v465
    %v1780 = vunpack.c.h.b16 %v465
    %v1781 = vunpack.c.l.b16 %v466
    %v1782 = vunpack.c.h.b16 %v466
    %v1783 = vunpack.c.l.b16 %v467
    %v1784 = vunpack.c.h.b16 %v467
    %v1785 = vunpack.c.l.b16 %v468
    %v1786 = vunpack.c.h.b16 %v468
    %v1787 = vunpack.c.l.b16 %v469
    %v1788 = vunpack.c.h.b16 %v469
    %v1789 = vunpack.c.l.b16 %v470
    %v1790 = vunpack.c.h.b16 %v470
    %v1791 = vunpack.c.l.b16 %v471
    %v1792 = vunpack.c.h.b16 %v471
    %v1793 = vunpack.c.l.b16 %v472
    %v1794 = vunpack.c.h.b16 %v472
    %v1795 = vunpack.c.l.b16 %v473
    %v1796 = vunpack.c.h.b16 %v473
    %v1797 = vunpack.c.l.b16 %v474
    %v1798 = vunpack.c.h.b16 %v474
    %v1799 = vunpack.c.l.b16 %v475
    %v1800 = vunpack.c.h.b16 %v475
    %v1801 = vunpack.c.l.b16 %v476
    %v1802 = vunpack.c.h.b16 %v476
    %v1803 = vunpack.c.l.b16 %v477
    %v1804 = vunpack.c.h.b16 %v477
    %v1805 = vunpack.c.l.b16 %v478
    %v1806 = vunpack.c.h.b16 %v478
    %v1807 = vunpack.c.l.b16 %v479
    %v1808 = vunpack.c.h.b16 %v479
    %v1809 = vunpack.c.l.b16 %v480
    %v1810 = vunpack.c.h.b16 %v480
    %v1811 = vunpack.c.l.b16 %v481
    %v1812 = vunpack.c.h.b16 %v481
    %v1813 = vunpack.c.l.b16 %v482
    %v1814 = vunpack.c.h.b16 %v482
    %v1815 = vunpack.c.l.b16 %v483
    %v1816 = vunpack.c.h.b16 %v483
    %v1817 = vunpack.c.l.b16 %v484
    %v1818 = vunpack.c.h.b16 %v484
    %v1819 = vunpack.c.l.b16 %v485
    %v1820 = vunpack.c.h.b16 %v485
    %v1821 = vunpack.c.l.b16 %v486
    %v1822 = vunpack.c.h.b16 %v486
    %v1823 = vunpack.c.l.b16 %v487
    %v1824 = vunpack.c.h.b16 %v487
    %v1825 = vunpack.c.l.b16 %v488
    %v1826 = vunpack.c.h.b16 %v488
    %v1827 = vunpack.c.l.b16 %v489
    %v1828 = vunpack.c.h.b16 %v489
    %v1829 = vunpack.c.l.b16 %v490
    %v1830 = vunpack.c.h.b16 %v490
    %v1831 = vunpack.c.l.b16 %v491
    %v1832 = vunpack.c.h.b16 %v491
    %v1833 = vunpack.c.l.b16 %v492
    %v1834 = vunpack.c.h.b16 %v492
    %v1835 = vunpack.c.l.b16 %v493
    %v1836 = vunpack.c.h.b16 %v493
    %v1837 = vunpack.c.l.b16 %v494
    %v1838 = vunpack.c.h.b16 %v494
    %v1839 = vunpack.c.l.b16 %v495
    %v1840 = vunpack.c.h.b16 %v495
    %v1841 = vunpack.c.l.b16 %v496
    %v1842 = vunpack.c.h.b16 %v496
    %v1843 = vunpack.c.l.b16 %v497
    %v1844 = vunpack.c.h.b16 %v497
    %v1845 = vunpack.c.l.b16 %v498
    %v1846 = vunpack.c.h.b16 %v498
    %v1847 = vunpack.c.l.b16 %v499
    %v1848 = vunpack.c.h.b16 %v499
    %v1849 = vunpack.c.l.b16 %v500
    %v1850 = vunpack.c.h.b16 %v500
    %v1851 = vunpack.c.l.b16 %v501
    %v1852 = vunpack.c.h.b16 %v501
    %v1853 = vunpack.c.l.b16 %v502
    %v1854 = vunpack.c.h.b16 %v502
    %v1855 = vunpack.c.l.b16 %v503
    %v1856 = vunpack.c.h.b16 %v503
    %v1857 = vunpack.c.l.b16 %v504
    %v1858 = vunpack.c.h.b16 %v504
    %v1859 = vunpack.c.l.b16 %v505
    %v1860 = vunpack.c.h.b16 %v505
    %v1861 = vunpack.c.l.b16 %v506
    %v1862 = vunpack.c.h.b16 %v506
    %v1863 = vunpack.c.l.b16 %v507
    %v1864 = vunpack.c.h.b16 %v507
    %v1865 = vunpack.c.l.b16 %v508
    %v1866 = vunpack.c.h.b16 %v508
    %v1867 = vunpack.c.l.b16 %v509
    %v1868 = vunpack.c.h.b16 %v509
    %v1869 = vunpack.c.l.b16 %v510
    %v1870 = vunpack.c.h.b16 %v510
    %v1871 = vunpack.c.l.b16 %v511
    %v1872 = vunpack.c.h.b16 %v511
    %v1873 = vunpack.c.l.b16 %v512
    %v1874 = vunpack.c.h.b16 %v512
    %v1875 = vunpack.c.l.b16 %v513
    %v1876 = vunpack.c.h.b16 %v513
    %v1877 = vunpack.c.l.b16 %v514
    %v1878 = vunpack.c.h.b16 %v514
    %v1879 = vunpack.c.l.b16 %v515
    %v1880 = vunpack.c.h.b16 %v515
    %v1881 = vunpack.c.l.b16 %v516
    %v1882 = vunpack.c.h.b16 %v516
    %v1883 = vunpack.c.l.b16 %v517
    %v1884 = vunpack.c.h.b16 %v517
    %v1885 = vunpack.c.l.b16 %v518
    %v1886 = vunpack.c.h.b16 %v518
    %v1887 = vunpack.c.l.b16 %v519
    %v1888 = vunpack.c.h.b16 %v519
    %v1889 = vunpack.c.l.b16 %v520
    %v1890 = vunpack.c.h.b16 %v520
    %v1891 = vunpack.c.l.b16 %v521
    %v1892 = vunpack.c.h.b16 %v521
    %v1893 = vunpack.c.l.b16 %v522
    %v1894 = vunpack.c.h.b16 %v522
    %v1895 = vunpack.c.l.b16 %v523
    %v1896 = vunpack.c.h.b16 %v523
    %v1897 = vunpack.c.l.b16 %v524
    %v1898 = vunpack.c.h.b16 %v524
    %v1899 = vunpack.c.l.b16 %v525
    %v1900 = vunpack.c.h.b16 %v525
    %v1901 = vunpack.c.l.b16 %v526
    %v1902 = vunpack.c.h.b16 %v526
    %v1903 = vunpack.c.l.b16 %v527
    %v1904 = vunpack.c.h.b16 %v527
    %v1905 = vunpack.c.l.b16 %v528
    %v1906 = vunpack.c.h.b16 %v528
    %v1907 = vunpack.c.l.b16 %v529
    %v1908 = vunpack.c.h.b16 %v529
    %v1909 = vunpack.c.l.b16 %v530
    %v1910 = vunpack.c.h.b16 %v530
    %v1911 = vunpack.c.l.b16 %v531
    %v1912 = vunpack.c.h.b16 %v531
    %v1913 = vunpack.c.l.b16 %v532
    %v1914 = vunpack.c.h.b16 %v532
    %v1915 = vunpack.c.l.b16 %v533
    %v1916 = vunpack.c.h.b16 %v533
    %v1917 = vunpack.c.l.b16 %v534
    %v1918 = vunpack.c.h.b16 %v534
    %v1919 = vunpack.c.l.b16 %v535
    %v1920 = vunpack.c.h.b16 %v535
    %v1921 = vunpack.c.l.b16 %v536
    %v1922 = vunpack.c.h.b16 %v536
    %v1923 = vunpack.c.l.b16 %v537
    %v1924 = vunpack.c.h.b16 %v537
    %v1925 = vunpack.c.l.b16 %v538
    %v1926 = vunpack.c.h.b16 %v538
    %v1927 = vunpack.c.l.b16 %v539
    %v1928 = vunpack.c.h.b16 %v539
    %v1929 = vunpack.c.l.b16 %v540
    %v1930 = vunpack.c.h.b16 %v540
    %v1931 = vunpack.c.l.b16 %v541
    %v1932 = vunpack.c.h.b16 %v541
    %v1933 = vunpack.c.l.b16 %v542
    %v1934 = vunpack.c.h.b16 %v542
    %v1935 = vunpack.c.l.b16 %v543
    %v1936 = vunpack.c.h.b16 %v543
    %v1937 = vunpack.c.l.b16 %v544
    %v1938 = vunpack.c.h.b16 %v544
    %v1939 = vunpack.c.l.b16 %v545
    %v1940 = vunpack.c.h.b16 %v545
    %v1941 = vunpack.c.l.b16 %v546
    %v1942 = vunpack.c.h.b16 %v546
    %v1943 = vunpack.c.l.b16 %v547
    %v1944 = vunpack.c.h.b16 %v547
    %v1945 = vunpack.c.l.b16 %v548
    %v1946 = vunpack.c.h.b16 %v548
    %v1947 = vunpack.c.l.b16 %v549
    %v1948 = vunpack.c.h.b16 %v549
    %v1949 = vunpack.c.l.b16 %v550
    %v1950 = vunpack.c.h.b16 %v550
    %v1951 = vunpack.c.l.b16 %v551
    %v1952 = vunpack.c.h.b16 %v551
    %v1953 = vunpack.c.l.b16 %v552
    %v1954 = vunpack.c.h.b16 %v552
    %v1955 = vunpack.c.l.b16 %v553
    %v1956 = vunpack.c.h.b16 %v553
    %v1957 = vunpack.c.l.b16 %v554
    %v1958 = vunpack.c.h.b16 %v554
    %v1959 = vunpack.c.l.b16 %v555
    %v1960 = vunpack.c.h.b16 %v555
    %v1961 = vunpack.c.l.b16 %v556
    %v1962 = vunpack.c.h.b16 %v556
    %v1963 = vunpack.c.l.b16 %v557
    %v1964 = vunpack.c.h.b16 %v557
    %v1965 = vunpack.c.l.b16 %v558
    %v1966 = vunpack.c.h.b16 %v558
    %v1967 = vunpack.c.l.b16 %v559
    %v1968 = vunpack.c.h.b16 %v559
    %v1969 = vunpack.c.l.b16 %v560
    %v1970 = vunpack.c.h.b16 %v560
    %v1971 = vunpack.c.l.b16 %v561
    %v1972 = vunpack.c.h.b16 %v561
    %v1973 = vunpack.c.l.b16 %v562
    %v1974 = vunpack.c.h.b16 %v562
    %v1975 = vunpack.c.l.b16 %v563
    %v1976 = vunpack.c.h.b16 %v563
    %v1977 = vunpack.c.l.b16 %v564
    %v1978 = vunpack.c.h.b16 %v564
    %v1979 = vunpack.c.l.b16 %v565
    %v1980 = vunpack.c.h.b16 %v565
    %v1981 = vunpack.c.l.b16 %v566
    %v1982 = vunpack.c.h.b16 %v566
    %v1983 = vunpack.c.l.b16 %v567
    %v1984 = vunpack.c.h.b16 %v567
    %v1985 = vunpack.c.l.b16 %v568
    %v1986 = vunpack.c.h.b16 %v568
    %v1987 = vunpack.c.l.b16 %v569
    %v1988 = vunpack.c.h.b16 %v569
    %v1989 = vunpack.c.l.b16 %v570
    %v1990 = vunpack.c.h.b16 %v570
    %v1991 = vunpack.c.l.b16 %v571
    %v1992 = vunpack.c.h.b16 %v571
    %v1993 = vunpack.c.l.b16 %v572
    %v1994 = vunpack.c.h.b16 %v572
    %v1995 = vpack.c.b16 %v1107, %v1099
    %v1996 = vpack.c.b16 %v1108, %v1100
    %v1997 = vpack.c.b16 %v1109, %v1101
    %v1998 = vpack.c.b16 %v1110, %v1102
    %v1999 = vpack.c.b16 %v1111, %v1103
    %v2000 = vpack.c.b16 %v1112, %v1104
    %v2001 = vpack.c.b16 %v1113, %v1105
    %v2002 = vpack.c.b16 %v1114, %v1106
    %v2003 = vpack.c.b16 %v1123, %v1115
    %v2004 = vpack.c.b16 %v1124, %v1116
    %v2005 = vpack.c.b16 %v1125, %v1117
    %v2006 = vpack.c.b16 %v1126, %v1118
    %v2007 = vpack.c.b16 %v1127, %v1119
    %v2008 = vpack.c.b16 %v1128, %v1120
    %v2009 = vpack.c.b16 %v1129, %v1121
    %v2010 = vpack.c.b16 %v1130, %v1122
    %v2011 = vpack.c.b16 %v1139, %v1131
    %v2012 = vpack.c.b16 %v1140, %v1132
    %v2013 = vpack.c.b16 %v1141, %v1133
    %v2014 = vpack.c.b16 %v1142, %v1134
    %v2015 = vpack.c.b16 %v1143, %v1135
    %v2016 = vpack.c.b16 %v1144, %v1136
    %v2017 = vpack.c.b16 %v1145, %v1137
    %v2018 = vpack.c.b16 %v1146, %v1138
    %v2019 = vpack.c.b16 %v1155, %v1147
    %v2020 = vpack.c.b16 %v1156, %v1148
    %v2021 = vpack.c.b16 %v1157, %v1149
    %v2022 = vpack.c.b16 %v1158, %v1150
    %v2023 = vpack.c.b16 %v1159, %v1151
    %v2024 = vpack.c.b16 %v1160, %v1152
    %v2025 = vpack.c.b16 %v1161, %v1153
    %v2026 = vpack.c.b16 %v1162, %v1154
    %v2027 = vpack.c.b16 %v1171, %v1163
    %v2028 = vpack.c.b16 %v1172, %v1164
    %v2029 = vpack.c.b16 %v1173, %v1165
    %v2030 = vpack.c.b16 %v1174, %v1166
    %v2031 = vpack.c.b16 %v1175, %v1167
    %v2032 = vpack.c.b16 %v1176, %v1168
    %v2033 = vpack.c.b16 %v1177, %v1169
    %v2034 = vpack.c.b16 %v1178, %v1170
    %v2035 = vpack.c.b16 %v1187, %v1179
    %v2036 = vpack.c.b16 %v1188, %v1180
    %v2037 = vpack.c.b16 %v1189, %v1181
    %v2038 = vpack.c.b16 %v1190, %v1182
    %v2039 = vpack.c.b16 %v1191, %v1183
    %v2040 = vpack.c.b16 %v1192, %v1184
    %v2041 = vpack.c.b16 %v1193, %v1185
    %v2042 = vpack.c.b16 %v1194, %v1186
    %v2043 = vpack.c.b16 %v1203, %v1195
    %v2044 = vpack.c.b16 %v1204, %v1196
    %v2045 = vpack.c.b16 %v1205, %v1197
    %v2046 = vpack.c.b16 %v1206, %v1198
    %v2047 = vpack.c.b16 %v1207, %v1199
    %v2048 = vpack.c.b16 %v1208, %v1200
    %v2049 = vpack.c.b16 %v1209, %v1201
    %v2050 = vpack.c.b16 %v1210, %v1202
    %v2051 = vpack.c.b16 %v1219, %v1211
    %v2052 = vpack.c.b16 %v1220, %v1212
    %v2053 = vpack.c.b16 %v1221, %v1213
    %v2054 = vpack.c.b16 %v1222, %v1214
    %v2055 = vpack.c.b16 %v1223, %v1215
    %v2056 = vpack.c.b16 %v1224, %v1216
    %v2057 = vpack.c.b16 %v1225, %v1217
    %v2058 = vpack.c.b16 %v1226, %v1218
    %v2059 = vpack.c.b16 %v1235, %v1227
    %v2060 = vpack.c.b16 %v1236, %v1228
    %v2061 = vpack.c.b16 %v1237, %v1229
    %v2062 = vpack.c.b16 %v1238, %v1230
    %v2063 = vpack.c.b16 %v1239, %v1231
    %v2064 = vpack.c.b16 %v1240, %v1232
    %v2065 = vpack.c.b16 %v1241, %v1233
    %v2066 = vpack.c.b16 %v1242, %v1234
    %v2067 = vpack.c.b16 %v1251, %v1243
    %v2068 = vpack.c.b16 %v1252, %v1244
    %v2069 = vpack.c.b16 %v1253, %v1245
    %v2070 = vpack.c.b16 %v1254, %v1246
    %v2071 = vpack.c.b16 %v1255, %v1247
    %v2072 = vpack.c.b16 %v1256, %v1248
    %v2073 = vpack.c.b16 %v1257, %v1249
    %v2074 = vpack.c.b16 %v1258, %v1250
    %v2075 = vpack.c.b16 %v1267, %v1259
    %v2076 = vpack.c.b16 %v1268, %v1260
    %v2077 = vpack.c.b16 %v1269, %v1261
    %v2078 = vpack.c.b16 %v1270, %v1262
    %v2079 = vpack.c.b16 %v1271, %v1263
    %v2080 = vpack.c.b16 %v1272, %v1264
    %v2081 = vpack.c.b16 %v1273, %v1265
    %v2082 = vpack.c.b16 %v1274, %v1266
    %v2083 = vpack.c.b16 %v1283, %v1275
    %v2084 = vpack.c.b16 %v1284, %v1276
    %v2085 = vpack.c.b16 %v1285, %v1277
    %v2086 = vpack.c.b16 %v1286, %v1278
    %v2087 = vpack.c.b16 %v1287, %v1279
    %v2088 = vpack.c.b16 %v1288, %v1280
    %v2089 = vpack.c.b16 %v1289, %v1281
    %v2090 = vpack.c.b16 %v1290, %v1282
    %v2091 = vpack.c.b16 %v1299, %v1291
    %v2092 = vpack.c.b16 %v1300, %v1292
    %v2093 = vpack.c.b16 %v1301, %v1293
    %v2094 = vpack.c.b16 %v1302, %v1294
    %v2095 = vpack.c.b16 %v1303, %v1295
    %v2096 = vpack.c.b16 %v1304, %v1296
    %v2097 = vpack.c.b16 %v1305, %v1297
    %v2098 = vpack.c.b16 %v1306, %v1298
    %v2099 = vpack.c.b16 %v1315, %v1307
    %v2100 = vpack.c.b16 %v1316, %v1308
    %v2101 = vpack.c.b16 %v1317, %v1309
    %v2102 = vpack.c.b16 %v1318, %v1310
    %v2103 = vpack.c.b16 %v1319, %v1311
    %v2104 = vpack.c.b16 %v1320, %v1312
    %v2105 = vpack.c.b16 %v1321, %v1313
    %v2106 = vpack.c.b16 %v1322, %v1314
    %v2107 = vpack.c.b16 %v1331, %v1323
    %v2108 = vpack.c.b16 %v1332, %v1324
    %v2109 = vpack.c.b16 %v1333, %v1325
    %v2110 = vpack.c.b16 %v1334, %v1326
    %v2111 = vpack.c.b16 %v1335, %v1327
    %v2112 = vpack.c.b16 %v1336, %v1328
    %v2113 = vpack.c.b16 %v1337, %v1329
    %v2114 = vpack.c.b16 %v1338, %v1330
    %v2115 = vpack.c.b16 %v1347, %v1339
    %v2116 = vpack.c.b16 %v1348, %v1340
    %v2117 = vpack.c.b16 %v1349, %v1341
    %v2118 = vpack.c.b16 %v1350, %v1342
    %v2119 = vpack.c.b16 %v1351, %v1343
    %v2120 = vpack.c.b16 %v1352, %v1344
    %v2121 = vpack.c.b16 %v1353, %v1345
    %v2122 = vpack.c.b16 %v1354, %v1346
    %v2123 = vpack.c.b16 %v1363, %v1355
    %v2124 = vpack.c.b16 %v1364, %v1356
    %v2125 = vpack.c.b16 %v1365, %v1357
    %v2126 = vpack.c.b16 %v1366, %v1358
    %v2127 = vpack.c.b16 %v1367, %v1359
    %v2128 = vpack.c.b16 %v1368, %v1360
    %v2129 = vpack.c.b16 %v1369, %v1361
    %v2130 = vpack.c.b16 %v1370, %v1362
    %v2131 = vpack.c.b16 %v1379, %v1371
    %v2132 = vpack.c.b16 %v1380, %v1372
    %v2133 = vpack.c.b16 %v1381, %v1373
    %v2134 = vpack.c.b16 %v1382, %v1374
    %v2135 = vpack.c.b16 %v1383, %v1375
    %v2136 = vpack.c.b16 %v1384, %v1376
    %v2137 = vpack.c.b16 %v1385, %v1377
    %v2138 = vpack.c.b16 %v1386, %v1378
    %v2139 = vpack.c.b16 %v1395, %v1387
    %v2140 = vpack.c.b16 %v1396, %v1388
    %v2141 = vpack.c.b16 %v1397, %v1389
    %v2142 = vpack.c.b16 %v1398, %v1390
    %v2143 = vpack.c.b16 %v1399, %v1391
    %v2144 = vpack.c.b16 %v1400, %v1392
    %v2145 = vpack.c.b16 %v1401, %v1393
    %v2146 = vpack.c.b16 %v1402, %v1394
    %v2147 = vpack.c.b16 %v1411, %v1403
    %v2148 = vpack.c.b16 %v1412, %v1404
    %v2149 = vpack.c.b16 %v1413, %v1405
    %v2150 = vpack.c.b16 %v1414, %v1406
    %v2151 = vpack.c.b16 %v1415, %v1407
    %v2152 = vpack.c.b16 %v1416, %v1408
    %v2153 = vpack.c.b16 %v1417, %v1409
    %v2154 = vpack.c.b16 %v1418, %v1410
    %v2155 = vpack.c.b16 %v1427, %v1419
    %v2156 = vpack.c.b16 %v1428, %v1420
    %v2157 = vpack.c.b16 %v1429, %v1421
    %v2158 = vpack.c.b16 %v1430, %v1422
    %v2159 = vpack.c.b16 %v1431, %v1423
    %v2160 = vpack.c.b16 %v1432, %v1424
    %v2161 = vpack.c.b16 %v1433, %v1425
    %v2162 = vpack.c.b16 %v1434, %v1426
    %v2163 = vpack.c.b16 %v1443, %v1435
    %v2164 = vpack.c.b16 %v1444, %v1436
    %v2165 = vpack.c.b16 %v1445, %v1437
    %v2166 = vpack.c.b16 %v1446, %v1438
    %v2167 = vpack.c.b16 %v1447, %v1439
    %v2168 = vpack.c.b16 %v1448, %v1440
    %v2169 = vpack.c.b16 %v1449, %v1441
    %v2170 = vpack.c.b16 %v1450, %v1442
    %v2171 = vpack.c.b16 %v1459, %v1451
    %v2172 = vpack.c.b16 %v1460, %v1452
    %v2173 = vpack.c.b16 %v1461, %v1453
    %v2174 = vpack.c.b16 %v1462, %v1454
    %v2175 = vpack.c.b16 %v1463, %v1455
    %v2176 = vpack.c.b16 %v1464, %v1456
    %v2177 = vpack.c.b16 %v1465, %v1457
    %v2178 = vpack.c.b16 %v1466, %v1458
    %v2179 = vpack.c.b16 %v1475, %v1467
    %v2180 = vpack.c.b16 %v1476, %v1468
    %v2181 = vpack.c.b16 %v1477, %v1469
    %v2182 = vpack.c.b16 %v1478, %v1470
    %v2183 = vpack.c.b16 %v1479, %v1471
    %v2184 = vpack.c.b16 %v1480, %v1472
    %v2185 = vpack.c.b16 %v1481, %v1473
    %v2186 = vpack.c.b16 %v1482, %v1474
    %v2187 = vpack.c.b16 %v1491, %v1483
    %v2188 = vpack.c.b16 %v1492, %v1484
    %v2189 = vpack.c.b16 %v1493, %v1485
    %v2190 = vpack.c.b16 %v1494, %v1486
    %v2191 = vpack.c.b16 %v1495, %v1487
    %v2192 = vpack.c.b16 %v1496, %v1488
    %v2193 = vpack.c.b16 %v1497, %v1489
    %v2194 = vpack.c.b16 %v1498, %v1490
    %v2195 = vpack.c.b16 %v1507, %v1499
    %v2196 = vpack.c.b16 %v1508, %v1500
    %v2197 = vpack.c.b16 %v1509, %v1501
    %v2198 = vpack.c.b16 %v1510, %v1502
    %v2199 = vpack.c.b16 %v1511, %v1503
    %v2200 = vpack.c.b16 %v1512, %v1504
    %v2201 = vpack.c.b16 %v1513, %v1505
    %v2202 = vpack.c.b16 %v1514, %v1506
    %v2203 = vpack.c.b16 %v1523, %v1515
    %v2204 = vpack.c.b16 %v1524, %v1516
    %v2205 = vpack.c.b16 %v1525, %v1517
    %v2206 = vpack.c.b16 %v1526, %v1518
    %v2207 = vpack.c.b16 %v1527, %v1519
    %v2208 = vpack.c.b16 %v1528, %v1520
    %v2209 = vpack.c.b16 %v1529, %v1521
    %v2210 = vpack.c.b16 %v1530, %v1522
    %v2211 = vpack.c.b16 %v1539, %v1531
    %v2212 = vpack.c.b16 %v1540, %v1532
    %v2213 = vpack.c.b16 %v1541, %v1533
    %v2214 = vpack.c.b16 %v1542, %v1534
    %v2215 = vpack.c.b16 %v1543, %v1535
    %v2216 = vpack.c.b16 %v1544, %v1536
    %v2217 = vpack.c.b16 %v1545, %v1537
    %v2218 = vpack.c.b16 %v1546, %v1538
    %v2219 = vpack.c.b16 %v1555, %v1547
    %v2220 = vpack.c.b16 %v1556, %v1548
    %v2221 = vpack.c.b16 %v1557, %v1549
    %v2222 = vpack.c.b16 %v1558, %v1550
    %v2223 = vpack.c.b16 %v1559, %v1551
    %v2224 = vpack.c.b16 %v1560, %v1552
    %v2225 = vpack.c.b16 %v1561, %v1553
    %v2226 = vpack.c.b16 %v1562, %v1554
    %v2227 = vpack.c.b16 %v1571, %v1563
    %v2228 = vpack.c.b16 %v1572, %v1564
    %v2229 = vpack.c.b16 %v1573, %v1565
    %v2230 = vpack.c.b16 %v1574, %v1566
    %v2231 = vpack.c.b16 %v1575, %v1567
    %v2232 = vpack.c.b16 %v1576, %v1568
    %v2233 = vpack.c.b16 %v1577, %v1569
    %v2234 = vpack.c.b16 %v1578, %v1570
    %v2235 = vpack.c.b16 %v1587, %v1579
    %v2236 = vpack.c.b16 %v1588, %v1580
    %v2237 = vpack.c.b16 %v1589, %v1581
    %v2238 = vpack.c.b16 %v1590, %v1582
    %v2239 = vpack.c.b16 %v1591, %v1583
    %v2240 = vpack.c.b16 %v1592, %v1584
    %v2241 = vpack.c.b16 %v1593, %v1585
    %v2242 = vpack.c.b16 %v1594, %v1586
    %v2243 = vpack.c.b16 %v1603, %v1595
    %v2244 = vpack.c.b16 %v1604, %v1596
    %v2245 = vpack.c.b16 %v1605, %v1597
    %v2246 = vpack.c.b16 %v1606, %v1598
    %v2247 = vpack.c.b16 %v1607, %v1599
    %v2248 = vpack.c.b16 %v1608, %v1600
    %v2249 = vpack.c.b16 %v1609, %v1601
    %v2250 = vpack.c.b16 %v1610, %v1602
    %v2251 = vpack.c.b16 %v1619, %v1611
    %v2252 = vpack.c.b16 %v1620, %v1612
    %v2253 = vpack.c.b16 %v1621, %v1613
    %v2254 = vpack.c.b16 %v1622, %v1614
    %v2255 = vpack.c.b16 %v1623, %v1615
    %v2256 = vpack.c.b16 %v1624, %v1616
    %v2257 = vpack.c.b16 %v1625, %v1617
    %v2258 = vpack.c.b16 %v1626, %v1618
    %v2259 = vpack.c.b16 %v1635, %v1627
    %v2260 = vpack.c.b16 %v1636, %v1628
    %v2261 = vpack.c.b16 %v1637, %v1629
    %v2262 = vpack.c.b16 %v1638, %v1630
    %v2263 = vpack.c.b16 %v1639, %v1631
    %v2264 = vpack.c.b16 %v1640, %v1632
    %v2265 = vpack.c.b16 %v1641, %v1633
    %v2266 = vpack.c.b16 %v1642, %v1634
    %v2267 = vpack.c.b16 %v1651, %v1643
    %v2268 = vpack.c.b16 %v1652, %v1644
    %v2269 = vpack.c.b16 %v1653, %v1645
    %v2270 = vpack.c.b16 %v1654, %v1646
    %v2271 = vpack.c.b16 %v1655, %v1647
    %v2272 = vpack.c.b16 %v1656, %v1648
    %v2273 = vpack.c.b16 %v1657, %v1649
    %v2274 = vpack.c.b16 %v1658, %v1650
    %v2275 = vpack.c.b16 %v1667, %v1659
    %v2276 = vpack.c.b16 %v1668, %v1660
    %v2277 = vpack.c.b16 %v1669, %v1661
    %v2278 = vpack.c.b16 %v1670, %v1662
    %v2279 = vpack.c.b16 %v1671, %v1663
    %v2280 = vpack.c.b16 %v1672, %v1664
    %v2281 = vpack.c.b16 %v1673, %v1665
    %v2282 = vpack.c.b16 %v1674, %v1666
    %v2283 = vpack.c.b16 %v1683, %v1675
    %v2284 = vpack.c.b16 %v1684, %v1676
    %v2285 = vpack.c.b16 %v1685, %v1677
    %v2286 = vpack.c.b16 %v1686, %v1678
    %v2287 = vpack.c.b16 %v1687, %v1679
    %v2288 = vpack.c.b16 %v1688, %v1680
    %v2289 = vpack.c.b16 %v1689, %v1681
    %v2290 = vpack.c.b16 %v1690, %v1682
    %v2291 = vpack.c.b16 %v1699, %v1691
    %v2292 = vpack.c.b16 %v1700, %v1692
    %v2293 = vpack.c.b16 %v1701, %v1693
    %v2294 = vpack.c.b16 %v1702, %v1694
    %v2295 = vpack.c.b16 %v1703, %v1695
    %v2296 = vpack.c.b16 %v1704, %v1696
    %v2297 = vpack.c.b16 %v1705, %v1697
    %v2298 = vpack.c.b16 %v1706, %v1698
    %v2299 = vpack.c.b16 %v1715, %v1707
    %v2300 = vpack.c.b16 %v1716, %v1708
    %v2301 = vpack.c.b16 %v1717, %v1709
    %v2302 = vpack.c.b16 %v1718, %v1710
    %v2303 = vpack.c.b16 %v1719, %v1711
    %v2304 = vpack.c.b16 %v1720, %v1712
    %v2305 = vpack.c.b16 %v1721, %v1713
    %v2306 = vpack.c.b16 %v1722, %v1714
    %v2307 = vpack.c.b16 %v1731, %v1723
    %v2308 = vpack.c.b16 %v1732, %v1724
    %v2309 = vpack.c.b16 %v1733, %v1725
    %v2310 = vpack.c.b16 %v1734, %v1726
    %v2311 = vpack.c.b16 %v1735, %v1727
    %v2312 = vpack.c.b16 %v1736, %v1728
    %v2313 = vpack.c.b16 %v1737, %v1729
    %v2314 = vpack.c.b16 %v1738, %v1730
    %v2315 = vpack.c.b16 %v1747, %v1739
    %v2316 = vpack.c.b16 %v1748, %v1740
    %v2317 = vpack.c.b16 %v1749, %v1741
    %v2318 = vpack.c.b16 %v1750, %v1742
    %v2319 = vpack.c.b16 %v1751, %v1743
    %v2320 = vpack.c.b16 %v1752, %v1744
    %v2321 = vpack.c.b16 %v1753, %v1745
    %v2322 = vpack.c.b16 %v1754, %v1746
    %v2323 = vpack.c.b16 %v1763, %v1755
    %v2324 = vpack.c.b16 %v1764, %v1756
    %v2325 = vpack.c.b16 %v1765, %v1757
    %v2326 = vpack.c.b16 %v1766, %v1758
    %v2327 = vpack.c.b16 %v1767, %v1759
    %v2328 = vpack.c.b16 %v1768, %v1760
    %v2329 = vpack.c.b16 %v1769, %v1761
    %v2330 = vpack.c.b16 %v1770, %v1762
    %v2331 = vpack.c.b16 %v1779, %v1771
    %v2332 = vpack.c.b16 %v1780, %v1772
    %v2333 = vpack.c.b16 %v1781, %v1773
    %v2334 = vpack.c.b16 %v1782, %v1774
    %v2335 = vpack.c.b16 %v1783, %v1775
    %v2336 = vpack.c.b16 %v1784, %v1776
    %v2337 = vpack.c.b16 %v1785, %v1777
    %v2338 = vpack.c.b16 %v1786, %v1778
    %v2339 = vpack.c.b16 %v1795, %v1787
    %v2340 = vpack.c.b16 %v1796, %v1788
    %v2341 = vpack.c.b16 %v1797, %v1789
    %v2342 = vpack.c.b16 %v1798, %v1790
    %v2343 = vpack.c.b16 %v1799, %v1791
    %v2344 = vpack.c.b16 %v1800, %v1792
    %v2345 = vpack.c.b16 %v1801, %v1793
    %v2346 = vpack.c.b16 %v1802, %v1794
    %v2347 = vpack.c.b16 %v1811, %v1803
    %v2348 = vpack.c.b16 %v1812, %v1804
    %v2349 = vpack.c.b16 %v1813, %v1805
    %v2350 = vpack.c.b16 %v1814, %v1806
    %v2351 = vpack.c.b16 %v1815, %v1807
    %v2352 = vpack.c.b16 %v1816, %v1808
    %v2353 = vpack.c.b16 %v1817, %v1809
    %v2354 = vpack.c.b16 %v1818, %v1810
    %v2355 = vpack.c.b16 %v1827, %v1819
    %v2356 = vpack.c.b16 %v1828, %v1820
    %v2357 = vpack.c.b16 %v1829, %v1821
    %v2358 = vpack.c.b16 %v1830, %v1822
    %v2359 = vpack.c.b16 %v1831, %v1823
    %v2360 = vpack.c.b16 %v1832, %v1824
    %v2361 = vpack.c.b16 %v1833, %v1825
    %v2362 = vpack.c.b16 %v1834, %v1826
    %v2363 = vpack.c.b16 %v1843, %v1835
    %v2364 = vpack.c.b16 %v1844, %v1836
    %v2365 = vpack.c.b16 %v1845, %v1837
    %v2366 = vpack.c.b16 %v1846, %v1838
    %v2367 = vpack.c.b16 %v1847, %v1839
    %v2368 = vpack.c.b16 %v1848, %v1840
    %v2369 = vpack.c.b16 %v1849, %v1841
    %v2370 = vpack.c.b16 %v1850, %v1842
    %v2371 = vpack.c.b16 %v1859, %v1851
    %v2372 = vpack.c.b16 %v1860, %v1852
    %v2373 = vpack.c.b16 %v1861, %v1853
    %v2374 = vpack.c.b16 %v1862, %v1854
    %v2375 = vpack.c.b16 %v1863, %v1855
    %v2376 = vpack.c.b16 %v1864, %v1856
    %v2377 = vpack.c.b16 %v1865, %v1857
    %v2378 = vpack.c.b16 %v1866, %v1858
    %v2379 = vpack.c.b16 %v1875, %v1867
    %v2380 = vpack.c.b16 %v1876, %v1868
    %v2381 = vpack.c.b16 %v1877, %v1869
    %v2382 = vpack.c.b16 %v1878, %v1870
    %v2383 = vpack.c.b16 %v1879, %v1871
    %v2384 = vpack.c.b16 %v1880, %v1872
    %v2385 = vpack.c.b16 %v1881, %v1873
    %v2386 = vpack.c.b16 %v1882, %v1874
    %v2387 = vpack.c.b16 %v1891, %v1883
    %v2388 = vpack.c.b16 %v1892, %v1884
    %v2389 = vpack.c.b16 %v1893, %v1885
    %v2390 = vpack.c.b16 %v1894, %v1886
    %v2391 = vpack.c.b16 %v1895, %v1887
    %v2392 = vpack.c.b16 %v1896, %v1888
    %v2393 = vpack.c.b16 %v1897, %v1889
    %v2394 = vpack.c.b16 %v1898, %v1890
    %v2395 = vpack.c.b16 %v1907, %v1899
    %v2396 = vpack.c.b16 %v1908, %v1900
    %v2397 = vpack.c.b16 %v1909, %v1901
    %v2398 = vpack.c.b16 %v1910, %v1902
    %v2399 = vpack.c.b16 %v1911, %v1903
    %v2400 = vpack.c.b16 %v1912, %v1904
    %v2401 = vpack.c.b16 %v1913, %v1905
    %v2402 = vpack.c.b16 %v1914, %v1906
    %v2403 = vpack.c.b16 %v1923, %v1915
    %v2404 = vpack.c.b16 %v1924, %v1916
    %v2405 = vpack.c.b16 %v1925, %v1917
    %v2406 = vpack.c.b16 %v1926, %v1918
    %v2407 = vpack.c.b16 %v1927, %v1919
    %v2408 = vpack.c.b16 %v1928, %v1920
    %v2409 = vpack.c.b16 %v1929, %v1921
    %v2410 = vpack.c.b16 %v1930, %v1922
    %v2411 = vpack.c.b16 %v1939, %v1931
    %v2412 = vpack.c.b16 %v1940, %v1932
    %v2413 = vpack.c.b16 %v1941, %v1933
    %v2414 = vpack.c.b16 %v1942, %v1934
    %v2415 = vpack.c.b16 %v1943, %v1935
    %v2416 = vpack.c.b16 %v1944, %v1936
    %v2417 = vpack.c.b16 %v1945, %v1937
    %v2418 = vpack.c.b16 %v1946, %v1938
    %v2419 = vpack.c.b16 %v1955, %v1947
    %v2420 = vpack.c.b16 %v1956, %v1948
    %v2421 = vpack.c.b16 %v1957, %v1949
    %v2422 = vpack.c.b16 %v1958, %v1950
    %v2423 = vpack.c.b16 %v1959, %v1951
    %v2424 = vpack.c.b16 %v1960, %v1952
    %v2425 = vpack.c.b16 %v1961, %v1953
    %v2426 = vpack.c.b16 %v1962, %v1954
    %v2427 = vpack.c.b16 %v1971, %v1963
    %v2428 = vpack.c.b16 %v1972, %v1964
    %v2429 = vpack.c.b16 %v1973, %v1965
    %v2430 = vpack.c.b16 %v1974, %v1966
    %v2431 = vpack.c.b16 %v1975, %v1967
    %v2432 = vpack.c.b16 %v1976, %v1968
    %v2433 = vpack.c.b16 %v1977, %v1969
    %v2434 = vpack.c.b16 %v1978, %v1970
    %v2435 = vpack.c.b16 %v1987, %v1979
    %v2436 = vpack.c.b16 %v1988, %v1980
    %v2437 = vpack.c.b16 %v1989, %v1981
    %v2438 = vpack.c.b16 %v1990, %v1982
    %v2439 = vpack.c.b16 %v1991, %v1983
    %v2440 = vpack.c.b16 %v1992, %v1984
    %v2441 = vpack.c.b16 %v1993, %v1985
    %v2442 = vpack.c.b16 %v1994, %v1986
    %2891 = vmatprep.subr.bf16.mxu0 %v2052
    %2892 = vmatpush1.bf16.msra.mxu0 %v2051
    %2893 = vmatprep.subr.bf16.mxu0 %v2044
    %2894 = vmatpush1.bf16.msra.mxu0 %v2043
    %2895 = vmatprep.subr.bf16.mxu0 %v2036
    %2896 = vmatpush1.bf16.msra.mxu0 %v2035
    %2897 = vmatprep.subr.bf16.mxu0 %v2028
    %2898 = vmatpush1.bf16.msra.mxu0 %v2027
    %2899 = vmatprep.subr.bf16.mxu0 %v2020
    %2900 = vmatpush1.bf16.msra.mxu0 %v2019
    %2901 = vmatprep.subr.bf16.mxu0 %v2012
    %2902 = vmatpush1.bf16.msra.mxu0 %v2011
    %2903 = vmatprep.subr.bf16.mxu0 %v2004
    %2904 = vmatpush1.bf16.msra.mxu0 %v2003
    %2905 = vmatprep.subr.bf16.mxu0 %v1996
    %2906 = vmatpush1.bf16.msra.mxu0 %v1995
    %2907 = vmatprep.subr.bf16.mxu0 %v2116
    %2908 = vmatpush2.bf16.msra.mxu0 %v2115
    %2909 = vmatprep.subr.bf16.mxu0 %v2108
    %2910 = vmatpush2.bf16.msra.mxu0 %v2107
    %2911 = vmatprep.subr.bf16.mxu0 %v2100
    %2912 = vmatpush2.bf16.msra.mxu0 %v2099
    %2913 = vmatprep.subr.bf16.mxu0 %v2092
    %2914 = vmatpush2.bf16.msra.mxu0 %v2091
    %2915 = vmatprep.subr.bf16.mxu0 %v2084
    %2916 = vmatpush2.bf16.msra.mxu0 %v2083
    %2917 = vmatprep.subr.bf16.mxu0 %v2076
    %2918 = vmatpush2.bf16.msra.mxu0 %v2075
    %2919 = vmatprep.subr.bf16.mxu0 %v2068
    %2920 = vmatpush2.bf16.msra.mxu0 %v2067
    %2921 = vmatprep.subr.bf16.mxu0 %v2060
    %2922 = vmatpush2.bf16.msra.mxu0 %v2059
    %2923 = vmatprep.mubr.bf16.mxu0 %v638
    %2924 = vmatmul.mubr.bf16.gmra.mxu0 %v637
    %v2925 = vpop.f32.mrf.mxu0
    %v2926 = vadd.f32 %v578, %v2925
    %v2927 = vpop.f32.mrf.mxu0
    %v2928 = vadd.f32 %v582, %v2927
    %v2929 = vpop.f32.mrf.mxu0
    %v2930 = vadd.f32 %v578, %v2929
    %v2931 = vpop.f32.mrf.mxu0
    %v2932 = vadd.f32 %v582, %v2931
    %2933 = vdwg.mxu0
    %2934 = vmatprep.subr.bf16.mxu0 %v2180
    %2935 = vmatpush1.bf16.msra.mxu0 %v2179
    %2936 = vmatprep.subr.bf16.mxu0 %v2172
    %2937 = vmatpush1.bf16.msra.mxu0 %v2171
    %2938 = vmatprep.subr.bf16.mxu0 %v2164
    %2939 = vmatpush1.bf16.msra.mxu0 %v2163
    %2940 = vmatprep.subr.bf16.mxu0 %v2156
    %2941 = vmatpush1.bf16.msra.mxu0 %v2155
    %2942 = vmatprep.subr.bf16.mxu0 %v2148
    %2943 = vmatpush1.bf16.msra.mxu0 %v2147
    %2944 = vmatprep.subr.bf16.mxu0 %v2140
    %2945 = vmatpush1.bf16.msra.mxu0 %v2139
    %2946 = vmatprep.subr.bf16.mxu0 %v2132
    %2947 = vmatpush1.bf16.msra.mxu0 %v2131
    %2948 = vmatprep.subr.bf16.mxu0 %v2124
    %2949 = vmatpush1.bf16.msra.mxu0 %v2123
    %2950 = vmatprep.subr.bf16.mxu0 %v2244
    %2951 = vmatpush2.bf16.msra.mxu0 %v2243
    %2952 = vmatprep.subr.bf16.mxu0 %v2236
    %2953 = vmatpush2.bf16.msra.mxu0 %v2235
    %2954 = vmatprep.subr.bf16.mxu0 %v2228
    %2955 = vmatpush2.bf16.msra.mxu0 %v2227
    %2956 = vmatprep.subr.bf16.mxu0 %v2220
    %2957 = vmatpush2.bf16.msra.mxu0 %v2219
    %2958 = vmatprep.subr.bf16.mxu0 %v2212
    %2959 = vmatpush2.bf16.msra.mxu0 %v2211
    %2960 = vmatprep.subr.bf16.mxu0 %v2204
    %2961 = vmatpush2.bf16.msra.mxu0 %v2203
    %2962 = vmatprep.subr.bf16.mxu0 %v2196
    %2963 = vmatpush2.bf16.msra.mxu0 %v2195
    %2964 = vmatprep.subr.bf16.mxu0 %v2188
    %2965 = vmatpush2.bf16.msra.mxu0 %v2187
    %2966 = vmatprep.mubr.bf16.mxu0 %v640
    %2967 = vmatmul.mubr.bf16.gmra.mxu0 %v639
    %v2968 = vpop.f32.mrf.mxu0
    %v2969 = vadd.f32 %v2926, %v2968
    %v2970 = vpop.f32.mrf.mxu0
    %v2971 = vadd.f32 %v2928, %v2970
    %v2972 = vpop.f32.mrf.mxu0
    %v2973 = vadd.f32 %v2930, %v2972
    %v2974 = vpop.f32.mrf.mxu0
    %v2975 = vadd.f32 %v2932, %v2974
    %2976 = vdwg.mxu0
    %2977 = vmatprep.subr.bf16.mxu0 %v2308
    %2978 = vmatpush1.bf16.msra.mxu0 %v2307
    %2979 = vmatprep.subr.bf16.mxu0 %v2300
    %2980 = vmatpush1.bf16.msra.mxu0 %v2299
    %2981 = vmatprep.subr.bf16.mxu0 %v2292
    %2982 = vmatpush1.bf16.msra.mxu0 %v2291
    %2983 = vmatprep.subr.bf16.mxu0 %v2284
    %2984 = vmatpush1.bf16.msra.mxu0 %v2283
    %2985 = vmatprep.subr.bf16.mxu0 %v2276
    %2986 = vmatpush1.bf16.msra.mxu0 %v2275
    %2987 = vmatprep.subr.bf16.mxu0 %v2268
    %2988 = vmatpush1.bf16.msra.mxu0 %v2267
    %2989 = vmatprep.subr.bf16.mxu0 %v2260
    %2990 = vmatpush1.bf16.msra.mxu0 %v2259
    %2991 = vmatprep.subr.bf16.mxu0 %v2252
    %2992 = vmatpush1.bf16.msra.mxu0 %v2251
    %2993 = vmatprep.subr.bf16.mxu0 %v2372
    %2994 = vmatpush2.bf16.msra.mxu0 %v2371
    %2995 = vmatprep.subr.bf16.mxu0 %v2364
    %2996 = vmatpush2.bf16.msra.mxu0 %v2363
    %2997 = vmatprep.subr.bf16.mxu0 %v2356
    %2998 = vmatpush2.bf16.msra.mxu0 %v2355
    %2999 = vmatprep.subr.bf16.mxu0 %v2348
    %3000 = vmatpush2.bf16.msra.mxu0 %v2347
    %3001 = vmatprep.subr.bf16.mxu0 %v2340
    %3002 = vmatpush2.bf16.msra.mxu0 %v2339
    %3003 = vmatprep.subr.bf16.mxu0 %v2332
    %3004 = vmatpush2.bf16.msra.mxu0 %v2331
    %3005 = vmatprep.subr.bf16.mxu0 %v2324
    %3006 = vmatpush2.bf16.msra.mxu0 %v2323
    %3007 = vmatprep.subr.bf16.mxu0 %v2316
    %3008 = vmatpush2.bf16.msra.mxu0 %v2315
    %3009 = vmatprep.mubr.bf16.mxu0 %v642
    %3010 = vmatmul.mubr.bf16.gmra.mxu0 %v641
    %v3011 = vpop.f32.mrf.mxu0
    %v3012 = vadd.f32 %v2969, %v3011
    %v3013 = vpop.f32.mrf.mxu0
    %v3014 = vadd.f32 %v2971, %v3013
    %v3015 = vpop.f32.mrf.mxu0
    %v3016 = vadd.f32 %v2973, %v3015
    %v3017 = vpop.f32.mrf.mxu0
    %v3018 = vadd.f32 %v2975, %v3017
    %3019 = vdwg.mxu0
    %3020 = vmatprep.subr.bf16.mxu0 %v2436
    %3021 = vmatpush1.bf16.msra.mxu0 %v2435
    %3022 = vmatprep.subr.bf16.mxu0 %v2428
    %3023 = vmatpush1.bf16.msra.mxu0 %v2427
    %3024 = vmatprep.subr.bf16.mxu0 %v2420
    %3025 = vmatpush1.bf16.msra.mxu0 %v2419
    %3026 = vmatprep.subr.bf16.mxu0 %v2412
    %3027 = vmatpush1.bf16.msra.mxu0 %v2411
    %3028 = vmatprep.subr.bf16.mxu0 %v2404
    %3029 = vmatpush1.bf16.msra.mxu0 %v2403
    %3030 = vmatprep.subr.bf16.mxu0 %v2396
    %3031 = vmatpush1.bf16.msra.mxu0 %v2395
    %3032 = vmatprep.subr.bf16.mxu0 %v2388
    %3033 = vmatpush1.bf16.msra.mxu0 %v2387
    %3034 = vmatprep.subr.bf16.mxu0 %v2380
    %3035 = vmatpush1.bf16.msra.mxu0 %v2379
    %3036 = vmatprep.subr.bf16.mxu0 0
    %3037 = vmatpush2.bf16.msra.mxu0 0
    %3038 = vmatprep.subr.bf16.mxu0 0
    %3039 = vmatpush2.bf16.msra.mxu0 0
    %3040 = vmatprep.subr.bf16.mxu0 0
    %3041 = vmatpush2.bf16.msra.mxu0 0
    %3042 = vmatprep.subr.bf16.mxu0 0
    %3043 = vmatpush2.bf16.msra.mxu0 0
    %3044 = vmatprep.subr.bf16.mxu0 0
    %3045 = vmatpush2.bf16.msra.mxu0 0
    %3046 = vmatprep.subr.bf16.mxu0 0
    %3047 = vmatpush2.bf16.msra.mxu0 0
    %3048 = vmatprep.subr.bf16.mxu0 0
    %3049 = vmatpush2.bf16.msra.mxu0 0
    %3050 = vmatprep.subr.bf16.mxu0 0
    %3051 = vmatpush2.bf16.msra.mxu0 0
    %3052 = vmatprep.mubr.bf16.mxu0 0
    %3053 = vmatmul.mubr.bf16.gmra.mxu0 %v643
    %v3054 = vpop.f32.mrf.mxu0
    %v3055 = vadd.f32 %v3012, %v3054
    %v3056 = vpop.f32.mrf.mxu0
    %v3057 = vadd.f32 %v3014, %v3056
    %v3058 = vpop.f32.mrf.mxu0
    %v3059 = vadd.f32 %v3016, %v3058
    %v3060 = vpop.f32.mrf.mxu0
    %v3061 = vadd.f32 %v3018, %v3060
    %3062 = vdwg.mxu0
    %3063 = vmatprep.subr.bf16.mxu0 %v2054
    %3064 = vmatpush1.bf16.msra.mxu0 %v2053
    %3065 = vmatprep.subr.bf16.mxu0 %v2046
    %3066 = vmatpush1.bf16.msra.mxu0 %v2045
    %3067 = vmatprep.subr.bf16.mxu0 %v2038
    %3068 = vmatpush1.bf16.msra.mxu0 %v2037
    %3069 = vmatprep.subr.bf16.mxu0 %v2030
    %3070 = vmatpush1.bf16.msra.mxu0 %v2029
    %3071 = vmatprep.subr.bf16.mxu0 %v2022
    %3072 = vmatpush1.bf16.msra.mxu0 %v2021
    %3073 = vmatprep.subr.bf16.mxu0 %v2014
    %3074 = vmatpush1.bf16.msra.mxu0 %v2013
    %3075 = vmatprep.subr.bf16.mxu0 %v2006
    %3076 = vmatpush1.bf16.msra.mxu0 %v2005
    %3077 = vmatprep.subr.bf16.mxu0 %v1998
    %3078 = vmatpush1.bf16.msra.mxu0 %v1997
    %3079 = vmatprep.subr.bf16.mxu0 %v2118
    %3080 = vmatpush2.bf16.msra.mxu0 %v2117
    %3081 = vmatprep.subr.bf16.mxu0 %v2110
    %3082 = vmatpush2.bf16.msra.mxu0 %v2109
    %3083 = vmatprep.subr.bf16.mxu0 %v2102
    %3084 = vmatpush2.bf16.msra.mxu0 %v2101
    %3085 = vmatprep.subr.bf16.mxu0 %v2094
    %3086 = vmatpush2.bf16.msra.mxu0 %v2093
    %3087 = vmatprep.subr.bf16.mxu0 %v2086
    %3088 = vmatpush2.bf16.msra.mxu0 %v2085
    %3089 = vmatprep.subr.bf16.mxu0 %v2078
    %3090 = vmatpush2.bf16.msra.mxu0 %v2077
    %3091 = vmatprep.subr.bf16.mxu0 %v2070
    %3092 = vmatpush2.bf16.msra.mxu0 %v2069
    %3093 = vmatprep.subr.bf16.mxu0 %v2062
    %3094 = vmatpush2.bf16.msra.mxu0 %v2061
    %3095 = vmatprep.mubr.bf16.mxu0 %v638
    %3096 = vmatmul.mubr.bf16.gmra.mxu0 %v637
    %v3097 = vpop.f32.mrf.mxu0
    %v3098 = vadd.f32 %v586, %v3097
    %v3099 = vpop.f32.mrf.mxu0
    %v3100 = vadd.f32 %v590, %v3099
    %v3101 = vpop.f32.mrf.mxu0
    %v3102 = vadd.f32 %v586, %v3101
    %v3103 = vpop.f32.mrf.mxu0
    %v3104 = vadd.f32 %v590, %v3103
    %3105 = vdwg.mxu0
    %3106 = vmatprep.subr.bf16.mxu0 %v2182
    %3107 = vmatpush1.bf16.msra.mxu0 %v2181
    %3108 = vmatprep.subr.bf16.mxu0 %v2174
    %3109 = vmatpush1.bf16.msra.mxu0 %v2173
    %3110 = vmatprep.subr.bf16.mxu0 %v2166
    %3111 = vmatpush1.bf16.msra.mxu0 %v2165
    %3112 = vmatprep.subr.bf16.mxu0 %v2158
    %3113 = vmatpush1.bf16.msra.mxu0 %v2157
    %3114 = vmatprep.subr.bf16.mxu0 %v2150
    %3115 = vmatpush1.bf16.msra.mxu0 %v2149
    %3116 = vmatprep.subr.bf16.mxu0 %v2142
    %3117 = vmatpush1.bf16.msra.mxu0 %v2141
    %3118 = vmatprep.subr.bf16.mxu0 %v2134
    %3119 = vmatpush1.bf16.msra.mxu0 %v2133
    %3120 = vmatprep.subr.bf16.mxu0 %v2126
    %3121 = vmatpush1.bf16.msra.mxu0 %v2125
    %3122 = vmatprep.subr.bf16.mxu0 %v2246
    %3123 = vmatpush2.bf16.msra.mxu0 %v2245
    %3124 = vmatprep.subr.bf16.mxu0 %v2238
    %3125 = vmatpush2.bf16.msra.mxu0 %v2237
    %3126 = vmatprep.subr.bf16.mxu0 %v2230
    %3127 = vmatpush2.bf16.msra.mxu0 %v2229
    %3128 = vmatprep.subr.bf16.mxu0 %v2222
    %3129 = vmatpush2.bf16.msra.mxu0 %v2221
    %3130 = vmatprep.subr.bf16.mxu0 %v2214
    %3131 = vmatpush2.bf16.msra.mxu0 %v2213
    %3132 = vmatprep.subr.bf16.mxu0 %v2206
    %3133 = vmatpush2.bf16.msra.mxu0 %v2205
    %3134 = vmatprep.subr.bf16.mxu0 %v2198
    %3135 = vmatpush2.bf16.msra.mxu0 %v2197
    %3136 = vmatprep.subr.bf16.mxu0 %v2190
    %3137 = vmatpush2.bf16.msra.mxu0 %v2189
    %3138 = vmatprep.mubr.bf16.mxu0 %v640
    %3139 = vmatmul.mubr.bf16.gmra.mxu0 %v639
    %v3140 = vpop.f32.mrf.mxu0
    %v3141 = vadd.f32 %v3098, %v3140
    %v3142 = vpop.f32.mrf.mxu0
    %v3143 = vadd.f32 %v3100, %v3142
    %v3144 = vpop.f32.mrf.mxu0
    %v3145 = vadd.f32 %v3102, %v3144
    %v3146 = vpop.f32.mrf.mxu0
    %v3147 = vadd.f32 %v3104, %v3146
    %3148 = vdwg.mxu0
    %3149 = vmatprep.subr.bf16.mxu0 %v2310
    %3150 = vmatpush1.bf16.msra.mxu0 %v2309
    %3151 = vmatprep.subr.bf16.mxu0 %v2302
    %3152 = vmatpush1.bf16.msra.mxu0 %v2301
    %3153 = vmatprep.subr.bf16.mxu0 %v2294
    %3154 = vmatpush1.bf16.msra.mxu0 %v2293
    %3155 = vmatprep.subr.bf16.mxu0 %v2286
    %3156 = vmatpush1.bf16.msra.mxu0 %v2285
    %3157 = vmatprep.subr.bf16.mxu0 %v2278
    %3158 = vmatpush1.bf16.msra.mxu0 %v2277
    %3159 = vmatprep.subr.bf16.mxu0 %v2270
    %3160 = vmatpush1.bf16.msra.mxu0 %v2269
    %3161 = vmatprep.subr.bf16.mxu0 %v2262
    %3162 = vmatpush1.bf16.msra.mxu0 %v2261
    %3163 = vmatprep.subr.bf16.mxu0 %v2254
    %3164 = vmatpush1.bf16.msra.mxu0 %v2253
    %3165 = vmatprep.subr.bf16.mxu0 %v2374
    %3166 = vmatpush2.bf16.msra.mxu0 %v2373
    %3167 = vmatprep.subr.bf16.mxu0 %v2366
    %3168 = vmatpush2.bf16.msra.mxu0 %v2365
    %3169 = vmatprep.subr.bf16.mxu0 %v2358
    %3170 = vmatpush2.bf16.msra.mxu0 %v2357
    %3171 = vmatprep.subr.bf16.mxu0 %v2350
    %3172 = vmatpush2.bf16.msra.mxu0 %v2349
    %3173 = vmatprep.subr.bf16.mxu0 %v2342
    %3174 = vmatpush2.bf16.msra.mxu0 %v2341
    %3175 = vmatprep.subr.bf16.mxu0 %v2334
    %3176 = vmatpush2.bf16.msra.mxu0 %v2333
    %3177 = vmatprep.subr.bf16.mxu0 %v2326
    %3178 = vmatpush2.bf16.msra.mxu0 %v2325
    %3179 = vmatprep.subr.bf16.mxu0 %v2318
    %3180 = vmatpush2.bf16.msra.mxu0 %v2317
    %3181 = vmatprep.mubr.bf16.mxu0 %v642
    %3182 = vmatmul.mubr.bf16.gmra.mxu0 %v641
    %v3183 = vpop.f32.mrf.mxu0
    %v3184 = vadd.f32 %v3141, %v3183
    %v3185 = vpop.f32.mrf.mxu0
    %v3186 = vadd.f32 %v3143, %v3185
    %v3187 = vpop.f32.mrf.mxu0
    %v3188 = vadd.f32 %v3145, %v3187
    %v3189 = vpop.f32.mrf.mxu0
    %v3190 = vadd.f32 %v3147, %v3189
    %3191 = vdwg.mxu0
    %3192 = vmatprep.subr.bf16.mxu0 %v2438
    %3193 = vmatpush1.bf16.msra.mxu0 %v2437
    %3194 = vmatprep.subr.bf16.mxu0 %v2430
    %3195 = vmatpush1.bf16.msra.mxu0 %v2429
    %3196 = vmatprep.subr.bf16.mxu0 %v2422
    %3197 = vmatpush1.bf16.msra.mxu0 %v2421
    %3198 = vmatprep.subr.bf16.mxu0 %v2414
    %3199 = vmatpush1.bf16.msra.mxu0 %v2413
    %3200 = vmatprep.subr.bf16.mxu0 %v2406
    %3201 = vmatpush1.bf16.msra.mxu0 %v2405
    %3202 = vmatprep.subr.bf16.mxu0 %v2398
    %3203 = vmatpush1.bf16.msra.mxu0 %v2397
    %3204 = vmatprep.subr.bf16.mxu0 %v2390
    %3205 = vmatpush1.bf16.msra.mxu0 %v2389
    %3206 = vmatprep.subr.bf16.mxu0 %v2382
    %3207 = vmatpush1.bf16.msra.mxu0 %v2381
    %3208 = vmatprep.subr.bf16.mxu0 0
    %3209 = vmatpush2.bf16.msra.mxu0 0
    %3210 = vmatprep.subr.bf16.mxu0 0
    %3211 = vmatpush2.bf16.msra.mxu0 0
    %3212 = vmatprep.subr.bf16.mxu0 0
    %3213 = vmatpush2.bf16.msra.mxu0 0
    %3214 = vmatprep.subr.bf16.mxu0 0
    %3215 = vmatpush2.bf16.msra.mxu0 0
    %3216 = vmatprep.subr.bf16.mxu0 0
    %3217 = vmatpush2.bf16.msra.mxu0 0
    %3218 = vmatprep.subr.bf16.mxu0 0
    %3219 = vmatpush2.bf16.msra.mxu0 0
    %3220 = vmatprep.subr.bf16.mxu0 0
    %3221 = vmatpush2.bf16.msra.mxu0 0
    %3222 = vmatprep.subr.bf16.mxu0 0
    %3223 = vmatpush2.bf16.msra.mxu0 0
    %3224 = vmatprep.mubr.bf16.mxu0 0
    %3225 = vmatmul.mubr.bf16.gmra.mxu0 %v643
    %v3226 = vpop.f32.mrf.mxu0
    %v3227 = vadd.f32 %v3184, %v3226
    %v3228 = vpop.f32.mrf.mxu0
    %v3229 = vadd.f32 %v3186, %v3228
    %v3230 = vpop.f32.mrf.mxu0
    %v3231 = vadd.f32 %v3188, %v3230
    %v3232 = vpop.f32.mrf.mxu0
    %v3233 = vadd.f32 %v3190, %v3232
    %3234 = vdwg.mxu0
    %3235 = vmatprep.subr.bf16.mxu0 %v2056
    %3236 = vmatpush1.bf16.msra.mxu0 %v2055
    %3237 = vmatprep.subr.bf16.mxu0 %v2048
    %3238 = vmatpush1.bf16.msra.mxu0 %v2047
    %3239 = vmatprep.subr.bf16.mxu0 %v2040
    %3240 = vmatpush1.bf16.msra.mxu0 %v2039
    %3241 = vmatprep.subr.bf16.mxu0 %v2032
    %3242 = vmatpush1.bf16.msra.mxu0 %v2031
    %3243 = vmatprep.subr.bf16.mxu0 %v2024
    %3244 = vmatpush1.bf16.msra.mxu0 %v2023
    %3245 = vmatprep.subr.bf16.mxu0 %v2016
    %3246 = vmatpush1.bf16.msra.mxu0 %v2015
    %3247 = vmatprep.subr.bf16.mxu0 %v2008
    %3248 = vmatpush1.bf16.msra.mxu0 %v2007
    %3249 = vmatprep.subr.bf16.mxu0 %v2000
    %3250 = vmatpush1.bf16.msra.mxu0 %v1999
    %3251 = vmatprep.subr.bf16.mxu0 %v2120
    %3252 = vmatpush2.bf16.msra.mxu0 %v2119
    %3253 = vmatprep.subr.bf16.mxu0 %v2112
    %3254 = vmatpush2.bf16.msra.mxu0 %v2111
    %3255 = vmatprep.subr.bf16.mxu0 %v2104
    %3256 = vmatpush2.bf16.msra.mxu0 %v2103
    %3257 = vmatprep.subr.bf16.mxu0 %v2096
    %3258 = vmatpush2.bf16.msra.mxu0 %v2095
    %3259 = vmatprep.subr.bf16.mxu0 %v2088
    %3260 = vmatpush2.bf16.msra.mxu0 %v2087
    %3261 = vmatprep.subr.bf16.mxu0 %v2080
    %3262 = vmatpush2.bf16.msra.mxu0 %v2079
    %3263 = vmatprep.subr.bf16.mxu0 %v2072
    %3264 = vmatpush2.bf16.msra.mxu0 %v2071
    %3265 = vmatprep.subr.bf16.mxu0 %v2064
    %3266 = vmatpush2.bf16.msra.mxu0 %v2063
    %3267 = vmatprep.mubr.bf16.mxu0 %v638
    %3268 = vmatmul.mubr.bf16.gmra.mxu0 %v637
    %v3269 = vpop.f32.mrf.mxu0
    %v3270 = vadd.f32 %v594, %v3269
    %v3271 = vpop.f32.mrf.mxu0
    %v3272 = vadd.f32 %v598, %v3271
    %v3273 = vpop.f32.mrf.mxu0
    %v3274 = vadd.f32 %v594, %v3273
    %v3275 = vpop.f32.mrf.mxu0
    %v3276 = vadd.f32 %v598, %v3275
    %3277 = vdwg.mxu0
    %3278 = vmatprep.subr.bf16.mxu0 %v2184
    %3279 = vmatpush1.bf16.msra.mxu0 %v2183
    %3280 = vmatprep.subr.bf16.mxu0 %v2176
    %3281 = vmatpush1.bf16.msra.mxu0 %v2175
    %3282 = vmatprep.subr.bf16.mxu0 %v2168
    %3283 = vmatpush1.bf16.msra.mxu0 %v2167
    %3284 = vmatprep.subr.bf16.mxu0 %v2160
    %3285 = vmatpush1.bf16.msra.mxu0 %v2159
    %3286 = vmatprep.subr.bf16.mxu0 %v2152
    %3287 = vmatpush1.bf16.msra.mxu0 %v2151
    %3288 = vmatprep.subr.bf16.mxu0 %v2144
    %3289 = vmatpush1.bf16.msra.mxu0 %v2143
    %3290 = vmatprep.subr.bf16.mxu0 %v2136
    %3291 = vmatpush1.bf16.msra.mxu0 %v2135
    %3292 = vmatprep.subr.bf16.mxu0 %v2128
    %3293 = vmatpush1.bf16.msra.mxu0 %v2127
    %3294 = vmatprep.subr.bf16.mxu0 %v2248
    %3295 = vmatpush2.bf16.msra.mxu0 %v2247
    %3296 = vmatprep.subr.bf16.mxu0 %v2240
    %3297 = vmatpush2.bf16.msra.mxu0 %v2239
    %3298 = vmatprep.subr.bf16.mxu0 %v2232
    %3299 = vmatpush2.bf16.msra.mxu0 %v2231
    %3300 = vmatprep.subr.bf16.mxu0 %v2224
    %3301 = vmatpush2.bf16.msra.mxu0 %v2223
    %3302 = vmatprep.subr.bf16.mxu0 %v2216
    %3303 = vmatpush2.bf16.msra.mxu0 %v2215
    %3304 = vmatprep.subr.bf16.mxu0 %v2208
    %3305 = vmatpush2.bf16.msra.mxu0 %v2207
    %3306 = vmatprep.subr.bf16.mxu0 %v2200
    %3307 = vmatpush2.bf16.msra.mxu0 %v2199
    %3308 = vmatprep.subr.bf16.mxu0 %v2192
    %3309 = vmatpush2.bf16.msra.mxu0 %v2191
    %3310 = vmatprep.mubr.bf16.mxu0 %v640
    %3311 = vmatmul.mubr.bf16.gmra.mxu0 %v639
    %v3312 = vpop.f32.mrf.mxu0
    %v3313 = vadd.f32 %v3270, %v3312
    %v3314 = vpop.f32.mrf.mxu0
    %v3315 = vadd.f32 %v3272, %v3314
    %v3316 = vpop.f32.mrf.mxu0
    %v3317 = vadd.f32 %v3274, %v3316
    %v3318 = vpop.f32.mrf.mxu0
    %v3319 = vadd.f32 %v3276, %v3318
    %3320 = vdwg.mxu0
    %3321 = vmatprep.subr.bf16.mxu0 %v2312
    %3322 = vmatpush1.bf16.msra.mxu0 %v2311
    %3323 = vmatprep.subr.bf16.mxu0 %v2304
    %3324 = vmatpush1.bf16.msra.mxu0 %v2303
    %3325 = vmatprep.subr.bf16.mxu0 %v2296
    %3326 = vmatpush1.bf16.msra.mxu0 %v2295
    %3327 = vmatprep.subr.bf16.mxu0 %v2288
    %3328 = vmatpush1.bf16.msra.mxu0 %v2287
    %3329 = vmatprep.subr.bf16.mxu0 %v2280
    %3330 = vmatpush1.bf16.msra.mxu0 %v2279
    %3331 = vmatprep.subr.bf16.mxu0 %v2272
    %3332 = vmatpush1.bf16.msra.mxu0 %v2271
    %3333 = vmatprep.subr.bf16.mxu0 %v2264
    %3334 = vmatpush1.bf16.msra.mxu0 %v2263
    %3335 = vmatprep.subr.bf16.mxu0 %v2256
    %3336 = vmatpush1.bf16.msra.mxu0 %v2255
    %3337 = vmatprep.subr.bf16.mxu0 %v2376
    %3338 = vmatpush2.bf16.msra.mxu0 %v2375
    %3339 = vmatprep.subr.bf16.mxu0 %v2368
    %3340 = vmatpush2.bf16.msra.mxu0 %v2367
    %3341 = vmatprep.subr.bf16.mxu0 %v2360
    %3342 = vmatpush2.bf16.msra.mxu0 %v2359
    %3343 = vmatprep.subr.bf16.mxu0 %v2352
    %3344 = vmatpush2.bf16.msra.mxu0 %v2351
    %3345 = vmatprep.subr.bf16.mxu0 %v2344
    %3346 = vmatpush2.bf16.msra.mxu0 %v2343
    %3347 = vmatprep.subr.bf16.mxu0 %v2336
    %3348 = vmatpush2.bf16.msra.mxu0 %v2335
    %3349 = vmatprep.subr.bf16.mxu0 %v2328
    %3350 = vmatpush2.bf16.msra.mxu0 %v2327
    %3351 = vmatprep.subr.bf16.mxu0 %v2320
    %3352 = vmatpush2.bf16.msra.mxu0 %v2319
    %3353 = vmatprep.mubr.bf16.mxu0 %v642
    %3354 = vmatmul.mubr.bf16.gmra.mxu0 %v641
    %v3355 = vpop.f32.mrf.mxu0
    %v3356 = vadd.f32 %v3313, %v3355
    %v3357 = vpop.f32.mrf.mxu0
    %v3358 = vadd.f32 %v3315, %v3357
    %v3359 = vpop.f32.mrf.mxu0
    %v3360 = vadd.f32 %v3317, %v3359
    %v3361 = vpop.f32.mrf.mxu0
    %v3362 = vadd.f32 %v3319, %v3361
    %3363 = vdwg.mxu0
    %3364 = vmatprep.subr.bf16.mxu0 %v2440
    %3365 = vmatpush1.bf16.msra.mxu0 %v2439
    %3366 = vmatprep.subr.bf16.mxu0 %v2432
    %3367 = vmatpush1.bf16.msra.mxu0 %v2431
    %3368 = vmatprep.subr.bf16.mxu0 %v2424
    %3369 = vmatpush1.bf16.msra.mxu0 %v2423
    %3370 = vmatprep.subr.bf16.mxu0 %v2416
    %3371 = vmatpush1.bf16.msra.mxu0 %v2415
    %3372 = vmatprep.subr.bf16.mxu0 %v2408
    %3373 = vmatpush1.bf16.msra.mxu0 %v2407
    %3374 = vmatprep.subr.bf16.mxu0 %v2400
    %3375 = vmatpush1.bf16.msra.mxu0 %v2399
    %3376 = vmatprep.subr.bf16.mxu0 %v2392
    %3377 = vmatpush1.bf16.msra.mxu0 %v2391
    %3378 = vmatprep.subr.bf16.mxu0 %v2384
    %3379 = vmatpush1.bf16.msra.mxu0 %v2383
    %3380 = vmatprep.subr.bf16.mxu0 0
    %3381 = vmatpush2.bf16.msra.mxu0 0
    %3382 = vmatprep.subr.bf16.mxu0 0
    %3383 = vmatpush2.bf16.msra.mxu0 0
    %3384 = vmatprep.subr.bf16.mxu0 0
    %3385 = vmatpush2.bf16.msra.mxu0 0
    %3386 = vmatprep.subr.bf16.mxu0 0
    %3387 = vmatpush2.bf16.msra.mxu0 0
    %3388 = vmatprep.subr.bf16.mxu0 0
    %3389 = vmatpush2.bf16.msra.mxu0 0
    %3390 = vmatprep.subr.bf16.mxu0 0
    %3391 = vmatpush2.bf16.msra.mxu0 0
    %3392 = vmatprep.subr.bf16.mxu0 0
    %3393 = vmatpush2.bf16.msra.mxu0 0
    %3394 = vmatprep.subr.bf16.mxu0 0
    %3395 = vmatpush2.bf16.msra.mxu0 0
    %3396 = vmatprep.mubr.bf16.mxu0 0
    %3397 = vmatmul.mubr.bf16.gmra.mxu0 %v643
    %v3398 = vpop.f32.mrf.mxu0
    %v3399 = vadd.f32 %v3356, %v3398
    %v3400 = vpop.f32.mrf.mxu0
    %v3401 = vadd.f32 %v3358, %v3400
    %v3402 = vpop.f32.mrf.mxu0
    %v3403 = vadd.f32 %v3360, %v3402
    %v3404 = vpop.f32.mrf.mxu0
    %v3405 = vadd.f32 %v3362, %v3404
    %3406 = vdwg.mxu0
    %3407 = vmatprep.subr.bf16.mxu0 %v2058
    %3408 = vmatpush1.bf16.msra.mxu0 %v2057
    %3409 = vmatprep.subr.bf16.mxu0 %v2050
    %3410 = vmatpush1.bf16.msra.mxu0 %v2049
    %3411 = vmatprep.subr.bf16.mxu0 %v2042
    %3412 = vmatpush1.bf16.msra.mxu0 %v2041
    %3413 = vmatprep.subr.bf16.mxu0 %v2034
    %3414 = vmatpush1.bf16.msra.mxu0 %v2033
    %3415 = vmatprep.subr.bf16.mxu0 %v2026
    %3416 = vmatpush1.bf16.msra.mxu0 %v2025
    %3417 = vmatprep.subr.bf16.mxu0 %v2018
    %3418 = vmatpush1.bf16.msra.mxu0 %v2017
    %3419 = vmatprep.subr.bf16.mxu0 %v2010
    %3420 = vmatpush1.bf16.msra.mxu0 %v2009
    %3421 = vmatprep.subr.bf16.mxu0 %v2002
    %3422 = vmatpush1.bf16.msra.mxu0 %v2001
    %3423 = vmatprep.subr.bf16.mxu0 %v2122
    %3424 = vmatpush2.bf16.msra.mxu0 %v2121
    %3425 = vmatprep.subr.bf16.mxu0 %v2114
    %3426 = vmatpush2.bf16.msra.mxu0 %v2113
    %3427 = vmatprep.subr.bf16.mxu0 %v2106
    %3428 = vmatpush2.bf16.msra.mxu0 %v2105
    %3429 = vmatprep.subr.bf16.mxu0 %v2098
    %3430 = vmatpush2.bf16.msra.mxu0 %v2097
    %3431 = vmatprep.subr.bf16.mxu0 %v2090
    %3432 = vmatpush2.bf16.msra.mxu0 %v2089
    %3433 = vmatprep.subr.bf16.mxu0 %v2082
    %3434 = vmatpush2.bf16.msra.mxu0 %v2081
    %3435 = vmatprep.subr.bf16.mxu0 %v2074
    %3436 = vmatpush2.bf16.msra.mxu0 %v2073
    %3437 = vmatprep.subr.bf16.mxu0 %v2066
    %3438 = vmatpush2.bf16.msra.mxu0 %v2065
    %3439 = vmatprep.mubr.bf16.mxu0 %v638
    %3440 = vmatmul.mubr.bf16.gmra.mxu0 %v637
    %v3441 = vpop.f32.mrf.mxu0
    %v3442 = vadd.f32 %v602, %v3441
    %v3443 = vpop.f32.mrf.mxu0
    %v3444 = vadd.f32 %v606, %v3443
    %v3445 = vpop.f32.mrf.mxu0
    %v3446 = vadd.f32 %v602, %v3445
    %v3447 = vpop.f32.mrf.mxu0
    %v3448 = vadd.f32 %v606, %v3447
    %3449 = vdwg.mxu0
    %3450 = vmatprep.subr.bf16.mxu0 %v2186
    %3451 = vmatpush1.bf16.msra.mxu0 %v2185
    %3452 = vmatprep.subr.bf16.mxu0 %v2178
    %3453 = vmatpush1.bf16.msra.mxu0 %v2177
    %3454 = vmatprep.subr.bf16.mxu0 %v2170
    %3455 = vmatpush1.bf16.msra.mxu0 %v2169
    %3456 = vmatprep.subr.bf16.mxu0 %v2162
    %3457 = vmatpush1.bf16.msra.mxu0 %v2161
    %3458 = vmatprep.subr.bf16.mxu0 %v2154
    %3459 = vmatpush1.bf16.msra.mxu0 %v2153
    %3460 = vmatprep.subr.bf16.mxu0 %v2146
    %3461 = vmatpush1.bf16.msra.mxu0 %v2145
    %3462 = vmatprep.subr.bf16.mxu0 %v2138
    %3463 = vmatpush1.bf16.msra.mxu0 %v2137
    %3464 = vmatprep.subr.bf16.mxu0 %v2130
    %3465 = vmatpush1.bf16.msra.mxu0 %v2129
    %3466 = vmatprep.subr.bf16.mxu0 %v2250
    %3467 = vmatpush2.bf16.msra.mxu0 %v2249
    %3468 = vmatprep.subr.bf16.mxu0 %v2242
    %3469 = vmatpush2.bf16.msra.mxu0 %v2241
    %3470 = vmatprep.subr.bf16.mxu0 %v2234
    %3471 = vmatpush2.bf16.msra.mxu0 %v2233
    %3472 = vmatprep.subr.bf16.mxu0 %v2226
    %3473 = vmatpush2.bf16.msra.mxu0 %v2225
    %3474 = vmatprep.subr.bf16.mxu0 %v2218
    %3475 = vmatpush2.bf16.msra.mxu0 %v2217
    %3476 = vmatprep.subr.bf16.mxu0 %v2210
    %3477 = vmatpush2.bf16.msra.mxu0 %v2209
    %3478 = vmatprep.subr.bf16.mxu0 %v2202
    %3479 = vmatpush2.bf16.msra.mxu0 %v2201
    %3480 = vmatprep.subr.bf16.mxu0 %v2194
    %3481 = vmatpush2.bf16.msra.mxu0 %v2193
    %3482 = vmatprep.mubr.bf16.mxu0 %v640
    %3483 = vmatmul.mubr.bf16.gmra.mxu0 %v639
    %v3484 = vpop.f32.mrf.mxu0
    %v3485 = vadd.f32 %v3442, %v3484
    %v3486 = vpop.f32.mrf.mxu0
    %v3487 = vadd.f32 %v3444, %v3486
    %v3488 = vpop.f32.mrf.mxu0
    %v3489 = vadd.f32 %v3446, %v3488
    %v3490 = vpop.f32.mrf.mxu0
    %v3491 = vadd.f32 %v3448, %v3490
    %3492 = vdwg.mxu0
    %3493 = vmatprep.subr.bf16.mxu0 %v2314
    %3494 = vmatpush1.bf16.msra.mxu0 %v2313
    %3495 = vmatprep.subr.bf16.mxu0 %v2306
    %3496 = vmatpush1.bf16.msra.mxu0 %v2305
    %3497 = vmatprep.subr.bf16.mxu0 %v2298
    %3498 = vmatpush1.bf16.msra.mxu0 %v2297
    %3499 = vmatprep.subr.bf16.mxu0 %v2290
    %3500 = vmatpush1.bf16.msra.mxu0 %v2289
    %3501 = vmatprep.subr.bf16.mxu0 %v2282
    %3502 = vmatpush1.bf16.msra.mxu0 %v2281
    %3503 = vmatprep.subr.bf16.mxu0 %v2274
    %3504 = vmatpush1.bf16.msra.mxu0 %v2273
    %3505 = vmatprep.subr.bf16.mxu0 %v2266
    %3506 = vmatpush1.bf16.msra.mxu0 %v2265
    %3507 = vmatprep.subr.bf16.mxu0 %v2258
    %3508 = vmatpush1.bf16.msra.mxu0 %v2257
    %3509 = vmatprep.subr.bf16.mxu0 %v2378
    %3510 = vmatpush2.bf16.msra.mxu0 %v2377
    %3511 = vmatprep.subr.bf16.mxu0 %v2370
    %3512 = vmatpush2.bf16.msra.mxu0 %v2369
    %3513 = vmatprep.subr.bf16.mxu0 %v2362
    %3514 = vmatpush2.bf16.msra.mxu0 %v2361
    %3515 = vmatprep.subr.bf16.mxu0 %v2354
    %3516 = vmatpush2.bf16.msra.mxu0 %v2353
    %3517 = vmatprep.subr.bf16.mxu0 %v2346
    %3518 = vmatpush2.bf16.msra.mxu0 %v2345
    %3519 = vmatprep.subr.bf16.mxu0 %v2338
    %3520 = vmatpush2.bf16.msra.mxu0 %v2337
    %3521 = vmatprep.subr.bf16.mxu0 %v2330
    %3522 = vmatpush2.bf16.msra.mxu0 %v2329
    %3523 = vmatprep.subr.bf16.mxu0 %v2322
    %3524 = vmatpush2.bf16.msra.mxu0 %v2321
    %3525 = vmatprep.mubr.bf16.mxu0 %v642
    %3526 = vmatmul.mubr.bf16.gmra.mxu0 %v641
    %v3527 = vpop.f32.mrf.mxu0
    %v3528 = vadd.f32 %v3485, %v3527
    %v3529 = vpop.f32.mrf.mxu0
    %v3530 = vadd.f32 %v3487, %v3529
    %v3531 = vpop.f32.mrf.mxu0
    %v3532 = vadd.f32 %v3489, %v3531
    %v3533 = vpop.f32.mrf.mxu0
    %v3534 = vadd.f32 %v3491, %v3533
    %3535 = vdwg.mxu0
    %3536 = vmatprep.subr.bf16.mxu0 %v2442
    %3537 = vmatpush1.bf16.msra.mxu0 %v2441
    %3538 = vmatprep.subr.bf16.mxu0 %v2434
    %3539 = vmatpush1.bf16.msra.mxu0 %v2433
    %3540 = vmatprep.subr.bf16.mxu0 %v2426
    %3541 = vmatpush1.bf16.msra.mxu0 %v2425
    %3542 = vmatprep.subr.bf16.mxu0 %v2418
    %3543 = vmatpush1.bf16.msra.mxu0 %v2417
    %3544 = vmatprep.subr.bf16.mxu0 %v2410
    %3545 = vmatpush1.bf16.msra.mxu0 %v2409
    %3546 = vmatprep.subr.bf16.mxu0 %v2402
    %3547 = vmatpush1.bf16.msra.mxu0 %v2401
    %3548 = vmatprep.subr.bf16.mxu0 %v2394
    %3549 = vmatpush1.bf16.msra.mxu0 %v2393
    %3550 = vmatprep.subr.bf16.mxu0 %v2386
    %3551 = vmatpush1.bf16.msra.mxu0 %v2385
    %3552 = vmatprep.subr.bf16.mxu0 0
    %3553 = vmatpush2.bf16.msra.mxu0 0
    %3554 = vmatprep.subr.bf16.mxu0 0
    %3555 = vmatpush2.bf16.msra.mxu0 0
    %3556 = vmatprep.subr.bf16.mxu0 0
    %3557 = vmatpush2.bf16.msra.mxu0 0
    %3558 = vmatprep.subr.bf16.mxu0 0
    %3559 = vmatpush2.bf16.msra.mxu0 0
    %3560 = vmatprep.subr.bf16.mxu0 0
    %3561 = vmatpush2.bf16.msra.mxu0 0
    %3562 = vmatprep.subr.bf16.mxu0 0
    %3563 = vmatpush2.bf16.msra.mxu0 0
    %3564 = vmatprep.subr.bf16.mxu0 0
    %3565 = vmatpush2.bf16.msra.mxu0 0
    %3566 = vmatprep.subr.bf16.mxu0 0
    %3567 = vmatpush2.bf16.msra.mxu0 0
    %3568 = vmatprep.mubr.bf16.mxu0 0
    %3569 = vmatmul.mubr.bf16.gmra.mxu0 %v643
    %v3570 = vpop.f32.mrf.mxu0
    %v3571 = vadd.f32 %v3528, %v3570
    %v3572 = vpop.f32.mrf.mxu0
    %v3573 = vadd.f32 %v3530, %v3572
    %v3574 = vpop.f32.mrf.mxu0
    %v3575 = vadd.f32 %v3532, %v3574
    %v3576 = vpop.f32.mrf.mxu0
    %v3577 = vadd.f32 %v3534, %v3576
    %3578 = vdwg.mxu0
    %v3579 = vmax.f32 %v3055, 0.0
    %v3580 = vmax.f32 %v3057, 0.0
    %v3581 = vmax.f32 %v3227, 0.0
    %v3582 = vmax.f32 %v3229, 0.0
    %v3583 = vmax.f32 %v3399, 0.0
    %v3584 = vmax.f32 %v3401, 0.0
    %v3585 = vmax.f32 %v3571, 0.0
    %v3586 = vmax.f32 %v3573, 0.0
    %v3587 = vmax.f32 %v3059, 0.0
    %v3588 = vmax.f32 %v3061, 0.0
    %v3589 = vmax.f32 %v3231, 0.0
    %v3590 = vmax.f32 %v3233, 0.0
    %v3591 = vmax.f32 %v3403, 0.0
    %v3592 = vmax.f32 %v3405, 0.0
    %v3593 = vmax.f32 %v3575, 0.0
    %v3594 = vmax.f32 %v3577, 0.0
    %v3595 = vpack.c.bf16 %v3587, %v3579
    %v3596 = vpack.c.bf16 %v3588, %v3580
    %v3597 = vpack.c.bf16 %v3589, %v3581
    %v3598 = vpack.c.bf16 %v3590, %v3582
    %v3599 = vpack.c.bf16 %v3591, %v3583
    %v3600 = vpack.c.bf16 %v3592, %v3584
    %v3601 = vpack.c.bf16 %v3593, %v3585
    %v3602 = vpack.c.bf16 %v3594, %v3586
    %v3603 = vld [vmem:[#allocation8] sm:$0xff]
    %v3604 = vld [vmem:[#allocation8 + $0x8] sm:$0xff]
    %v3605 = vld [vmem:[#allocation8 + $0x10] sm:$0xff]
    %v3606 = vld [vmem:[#allocation8 + $0x18] sm:$0xff]
    %v3607 = vld [vmem:[#allocation8 + $0x20] sm:$0xff]
    %v3608 = vld [vmem:[#allocation8 + $0x28] sm:$0xff]
    %v3609 = vld [vmem:[#allocation8 + $0x30] sm:$0xff]
    %v3610 = vld [vmem:[#allocation8 + $0x38] sm:$0xff]
    %v3611 = vld [vmem:[#allocation8 + $0x40] sm:$0xff]
    %v3612 = vld [vmem:[#allocation8 + $0x48] sm:$0xff]
    %v3613 = vld [vmem:[#allocation8 + $0x50] sm:$0xff]
    %v3614 = vld [vmem:[#allocation8 + $0x58] sm:$0xff]
    %v3615 = vld [vmem:[#allocation8 + $0x60] sm:$0xff]
    %v3616 = vld [vmem:[#allocation8 + $0x68] sm:$0xff]
    %v3617 = vld [vmem:[#allocation8 + $0x70] sm:$0xff]
    %v3618 = vld [vmem:[#allocation8 + $0x78] sm:$0xff]
    %v3619 = vld [vmem:[#allocation8 + $0x80] sm:$0xff]
    %v3620 = vld [vmem:[#allocation8 + $0x88] sm:$0xff]
    %v3621 = vld [vmem:[#allocation8 + $0x90] sm:$0xff]
    %v3622 = vld [vmem:[#allocation8 + $0x98] sm:$0xff]
    %v3623 = vld [vmem:[#allocation8 + $0xa0] sm:$0xff]
    %v3624 = vld [vmem:[#allocation8 + $0xa8] sm:$0xff]
    %v3625 = vld [vmem:[#allocation8 + $0xb0] sm:$0xff]
    %v3626 = vld [vmem:[#allocation8 + $0xb8] sm:$0xff]
    %v3627 = vld [vmem:[#allocation8 + $0xc0] sm:$0xff]
    %v3628 = vld [vmem:[#allocation8 + $0xc8] sm:$0xff]
    %v3629 = vld [vmem:[#allocation8 + $0xd0] sm:$0xff]
    %v3630 = vld [vmem:[#allocation8 + $0xd8] sm:$0xff]
    %v3631 = vld [vmem:[#allocation8 + $0xe0] sm:$0xff]
    %v3632 = vld [vmem:[#allocation8 + $0xe8] sm:$0xff]
    %v3633 = vld [vmem:[#allocation8 + $0xf0] sm:$0xff]
    %v3634 = vld [vmem:[#allocation8 + $0xf8] sm:$0xff]
    %v3635 = vld [vmem:[#allocation8 + $0x100] sm:$0xff]
    %v3636 = vld [vmem:[#allocation8 + $0x108] sm:$0xff]
    %v3637 = vld [vmem:[#allocation8 + $0x110] sm:$0xff]
    %v3638 = vld [vmem:[#allocation8 + $0x118] sm:$0xff]
    %v3639 = vld [vmem:[#allocation8 + $0x120] sm:$0xff]
    %v3640 = vld [vmem:[#allocation8 + $0x128] sm:$0xff]
    %v3641 = vld [vmem:[#allocation8 + $0x130] sm:$0xff]
    %v3642 = vld [vmem:[#allocation8 + $0x138] sm:$0xff]
    %v3643 = vld [vmem:[#allocation8 + $0x140] sm:$0xff]
    %v3644 = vld [vmem:[#allocation8 + $0x148] sm:$0xff]
    %v3645 = vld [vmem:[#allocation8 + $0x150] sm:$0xff]
    %v3646 = vld [vmem:[#allocation8 + $0x158] sm:$0xff]
    %v3647 = vld [vmem:[#allocation8 + $0x160] sm:$0xff]
    %v3648 = vld [vmem:[#allocation8 + $0x168] sm:$0xff]
    %v3649 = vld [vmem:[#allocation8 + $0x170] sm:$0xff]
    %v3650 = vld [vmem:[#allocation8 + $0x178] sm:$0xff]
    %v3651 = vld [vmem:[#allocation8 + $0x180] sm:$0xff]
    %v3652 = vld [vmem:[#allocation8 + $0x188] sm:$0xff]
    %v3653 = vld [vmem:[#allocation8 + $0x190] sm:$0xff]
    %v3654 = vld [vmem:[#allocation8 + $0x198] sm:$0xff]
    %v3655 = vld [vmem:[#allocation8 + $0x1a0] sm:$0xff]
    %v3656 = vld [vmem:[#allocation8 + $0x1a8] sm:$0xff]
    %v3657 = vld [vmem:[#allocation8 + $0x1b0] sm:$0xff]
    %v3658 = vld [vmem:[#allocation8 + $0x1b8] sm:$0xff]
    %v3659 = vld [vmem:[#allocation8 + $0x1c0] sm:$0xff]
    %v3660 = vld [vmem:[#allocation8 + $0x1c8] sm:$0xff]
    %v3661 = vld [vmem:[#allocation8 + $0x1d0] sm:$0xff]
    %v3662 = vld [vmem:[#allocation8 + $0x1d8] sm:$0xff]
    %v3663 = vld [vmem:[#allocation8 + $0x1e0] sm:$0xff]
    %v3664 = vld [vmem:[#allocation8 + $0x1e8] sm:$0xff]
    %v3665 = vld [vmem:[#allocation8 + $0x1f0] sm:$0xff]
    %v3666 = vld [vmem:[#allocation8 + $0x1f8] sm:$0xff]
    %v3667 = vld [vmem:[#allocation8 + $0x200] sm:$0xff]
    %v3668 = vld [vmem:[#allocation8 + $0x208] sm:$0xff]
    %v3669 = vld [vmem:[#allocation8 + $0x210] sm:$0xff]
    %v3670 = vld [vmem:[#allocation8 + $0x218] sm:$0xff]
    %v3671 = vld [vmem:[#allocation8 + $0x220] sm:$0xff]
    %v3672 = vld [vmem:[#allocation8 + $0x228] sm:$0xff]
    %v3673 = vld [vmem:[#allocation8 + $0x230] sm:$0xff]
    %v3674 = vld [vmem:[#allocation8 + $0x238] sm:$0xff]
    %v3675 = vld [vmem:[#allocation8 + $0x240] sm:$0xff]
    %v3676 = vld [vmem:[#allocation8 + $0x248] sm:$0xff]
    %v3677 = vld [vmem:[#allocation8 + $0x250] sm:$0xff]
    %v3678 = vld [vmem:[#allocation8 + $0x258] sm:$0xff]
    %v3679 = vld [vmem:[#allocation8 + $0x260] sm:$0xff]
    %v3680 = vld [vmem:[#allocation8 + $0x268] sm:$0xff]
    %v3681 = vld [vmem:[#allocation8 + $0x270] sm:$0xff]
    %v3682 = vld [vmem:[#allocation8 + $0x278] sm:$0xff]
    %v3683 = vld [vmem:[#allocation8 + $0x280] sm:$0xff]
    %v3684 = vld [vmem:[#allocation8 + $0x288] sm:$0xff]
    %v3685 = vld [vmem:[#allocation8 + $0x290] sm:$0xff]
    %v3686 = vld [vmem:[#allocation8 + $0x298] sm:$0xff]
    %v3687 = vld [vmem:[#allocation8 + $0x2a0] sm:$0xff]
    %v3688 = vld [vmem:[#allocation8 + $0x2a8] sm:$0xff]
    %v3689 = vld [vmem:[#allocation8 + $0x2b0] sm:$0xff]
    %v3690 = vld [vmem:[#allocation8 + $0x2b8] sm:$0xff]
    %v3691 = vld [vmem:[#allocation8 + $0x2c0] sm:$0xff]
    %v3692 = vld [vmem:[#allocation8 + $0x2c8] sm:$0xff]
    %v3693 = vld [vmem:[#allocation8 + $0x2d0] sm:$0xff]
    %v3694 = vld [vmem:[#allocation8 + $0x2d8] sm:$0xff]
    %v3695 = vld [vmem:[#allocation8 + $0x2e0] sm:$0xff]
    %v3696 = vld [vmem:[#allocation8 + $0x2e8] sm:$0xff]
    %v3697 = vld [vmem:[#allocation8 + $0x2f0] sm:$0xff]
    %v3698 = vld [vmem:[#allocation8 + $0x2f8] sm:$0xff]
    %v3699 = vld [vmem:[#allocation8 + $0x300] sm:$0xff]
    %v3700 = vld [vmem:[#allocation8 + $0x308] sm:$0xff]
    %v3701 = vld [vmem:[#allocation8 + $0x310] sm:$0xff]
    %v3702 = vld [vmem:[#allocation8 + $0x318] sm:$0xff]
    %v3703 = vld [vmem:[#allocation8 + $0x320] sm:$0xff]
    %v3704 = vld [vmem:[#allocation8 + $0x328] sm:$0xff]
    %v3705 = vld [vmem:[#allocation8 + $0x330] sm:$0xff]
    %v3706 = vld [vmem:[#allocation8 + $0x338] sm:$0xff]
    %v3707 = vld [vmem:[#allocation8 + $0x340] sm:$0xff]
    %v3708 = vld [vmem:[#allocation8 + $0x348] sm:$0xff]
    %v3709 = vld [vmem:[#allocation8 + $0x350] sm:$0xff]
    %v3710 = vld [vmem:[#allocation8 + $0x358] sm:$0xff]
    %v3711 = vld [vmem:[#allocation8 + $0x360] sm:$0xff]
    %v3712 = vld [vmem:[#allocation8 + $0x368] sm:$0xff]
    %v3713 = vld [vmem:[#allocation8 + $0x370] sm:$0xff]
    %v3714 = vld [vmem:[#allocation8 + $0x378] sm:$0xff]
    %v3715 = vld [vmem:[#allocation8 + $0x380] sm:$0xff]
    %v3716 = vld [vmem:[#allocation8 + $0x388] sm:$0xff]
    %v3717 = vld [vmem:[#allocation8 + $0x390] sm:$0xff]
    %v3718 = vld [vmem:[#allocation8 + $0x398] sm:$0xff]
    %v3719 = vld [vmem:[#allocation8 + $0x3a0] sm:$0xff]
    %v3720 = vld [vmem:[#allocation8 + $0x3a8] sm:$0xff]
    %v3721 = vld [vmem:[#allocation8 + $0x3b0] sm:$0xff]
    %v3722 = vld [vmem:[#allocation8 + $0x3b8] sm:$0xff]
    %v3723 = vld [vmem:[#allocation8 + $0x3c0] sm:$0xff]
    %v3724 = vld [vmem:[#allocation8 + $0x3c8] sm:$0xff]
    %v3725 = vld [vmem:[#allocation8 + $0x3d0] sm:$0xff]
    %v3726 = vld [vmem:[#allocation8 + $0x3d8] sm:$0xff]
    %v3727 = vld [vmem:[#allocation8 + $0x3e0] sm:$0xff]
    %v3728 = vld [vmem:[#allocation8 + $0x3e8] sm:$0xff]
    %v3729 = vld [vmem:[#allocation8 + $0x3f0] sm:$0xff]
    %v3730 = vld [vmem:[#allocation8 + $0x3f8] sm:$0xff]
    %v3731 = vld [vmem:[#allocation8 + $0x400] sm:$0xff]
    %v3732 = vld [vmem:[#allocation8 + $0x408] sm:$0xff]
    %v3733 = vld [vmem:[#allocation8 + $0x410] sm:$0xff]
    %v3734 = vld [vmem:[#allocation8 + $0x418] sm:$0xff]
    %v3735 = vld [vmem:[#allocation8 + $0x420] sm:$0xff]
    %v3736 = vld [vmem:[#allocation8 + $0x428] sm:$0xff]
    %v3737 = vld [vmem:[#allocation8 + $0x430] sm:$0xff]
    %v3738 = vld [vmem:[#allocation8 + $0x438] sm:$0xff]
    %v3739 = vld [vmem:[#allocation8 + $0x440] sm:$0xff]
    %v3740 = vld [vmem:[#allocation8 + $0x448] sm:$0xff]
    %v3741 = vld [vmem:[#allocation8 + $0x450] sm:$0xff]
    %v3742 = vld [vmem:[#allocation8 + $0x458] sm:$0xff]
    %v3743 = vld [vmem:[#allocation8 + $0x460] sm:$0xff]
    %v3744 = vld [vmem:[#allocation8 + $0x468] sm:$0xff]
    %v3745 = vld [vmem:[#allocation8 + $0x470] sm:$0xff]
    %v3746 = vld [vmem:[#allocation8 + $0x478] sm:$0xff]
    %v3747 = vld [vmem:[#allocation8 + $0x480] sm:$0xff]
    %v3748 = vld [vmem:[#allocation8 + $0x488] sm:$0xff]
    %v3749 = vld [vmem:[#allocation8 + $0x490] sm:$0xff]
    %v3750 = vld [vmem:[#allocation8 + $0x498] sm:$0xff]
    %v3751 = vld [vmem:[#allocation8 + $0x4a0] sm:$0xff]
    %v3752 = vld [vmem:[#allocation8 + $0x4a8] sm:$0xff]
    %v3753 = vld [vmem:[#allocation8 + $0x4b0] sm:$0xff]
    %v3754 = vld [vmem:[#allocation8 + $0x4b8] sm:$0xff]
    %v3755 = vld [vmem:[#allocation8 + $0x4c0] sm:$0xff]
    %v3756 = vld [vmem:[#allocation8 + $0x4c8] sm:$0xff]
    %v3757 = vld [vmem:[#allocation8 + $0x4d0] sm:$0xff]
    %v3758 = vld [vmem:[#allocation8 + $0x4d8] sm:$0xff]
    %v3759 = vld [vmem:[#allocation8 + $0x4e0] sm:$0xff]
    %v3760 = vld [vmem:[#allocation8 + $0x4e8] sm:$0xff]
    %v3761 = vld [vmem:[#allocation8 + $0x4f0] sm:$0xff]
    %v3762 = vld [vmem:[#allocation8 + $0x4f8] sm:$0xff]
    %v3763 = vld [vmem:[#allocation8 + $0x500] sm:$0xff]
    %v3764 = vld [vmem:[#allocation8 + $0x508] sm:$0xff]
    %v3765 = vld [vmem:[#allocation8 + $0x510] sm:$0xff]
    %v3766 = vld [vmem:[#allocation8 + $0x518] sm:$0xff]
    %v3767 = vld [vmem:[#allocation8 + $0x520] sm:$0xff]
    %v3768 = vld [vmem:[#allocation8 + $0x528] sm:$0xff]
    %v3769 = vld [vmem:[#allocation8 + $0x530] sm:$0xff]
    %v3770 = vld [vmem:[#allocation8 + $0x538] sm:$0xff]
    %v3771 = vld [vmem:[#allocation8 + $0x540] sm:$0xff]
    %v3772 = vld [vmem:[#allocation8 + $0x548] sm:$0xff]
    %v3773 = vld [vmem:[#allocation8 + $0x550] sm:$0xff]
    %v3774 = vld [vmem:[#allocation8 + $0x558] sm:$0xff]
    %v3775 = vld [vmem:[#allocation8 + $0x560] sm:$0xff]
    %v3776 = vld [vmem:[#allocation8 + $0x568] sm:$0xff]
    %v3777 = vld [vmem:[#allocation8 + $0x570] sm:$0xff]
    %v3778 = vld [vmem:[#allocation8 + $0x578] sm:$0xff]
    %v3779 = vld [vmem:[#allocation8 + $0x580] sm:$0xff]
    %v3780 = vld [vmem:[#allocation8 + $0x588] sm:$0xff]
    %v3781 = vld [vmem:[#allocation8 + $0x590] sm:$0xff]
    %v3782 = vld [vmem:[#allocation8 + $0x598] sm:$0xff]
    %v3783 = vld [vmem:[#allocation8 + $0x5a0] sm:$0xff]
    %v3784 = vld [vmem:[#allocation8 + $0x5a8] sm:$0xff]
    %v3785 = vld [vmem:[#allocation8 + $0x5b0] sm:$0xff]
    %v3786 = vld [vmem:[#allocation8 + $0x5b8] sm:$0xff]
    %v3787 = vld [vmem:[#allocation8 + $0x5c0] sm:$0xff]
    %v3788 = vld [vmem:[#allocation8 + $0x5c8] sm:$0xff]
    %v3789 = vld [vmem:[#allocation8 + $0x5d0] sm:$0xff]
    %v3790 = vld [vmem:[#allocation8 + $0x5d8] sm:$0xff]
    %v3791 = vld [vmem:[#allocation8 + $0x5e0] sm:$0xff]
    %v3792 = vld [vmem:[#allocation8 + $0x5e8] sm:$0xff]
    %v3793 = vld [vmem:[#allocation8 + $0x5f0] sm:$0xff]
    %v3794 = vld [vmem:[#allocation8 + $0x5f8] sm:$0xff]
    %v3795 = vld [vmem:[#allocation8 + $0x600] sm:$0xff]
    %v3796 = vld [vmem:[#allocation8 + $0x608] sm:$0xff]
    %v3797 = vld [vmem:[#allocation8 + $0x610] sm:$0xff]
    %v3798 = vld [vmem:[#allocation8 + $0x618] sm:$0xff]
    %v3799 = vld [vmem:[#allocation8 + $0x620] sm:$0xff]
    %v3800 = vld [vmem:[#allocation8 + $0x628] sm:$0xff]
    %v3801 = vld [vmem:[#allocation8 + $0x630] sm:$0xff]
    %v3802 = vld [vmem:[#allocation8 + $0x638] sm:$0xff]
    %v3803 = vld [vmem:[#allocation8 + $0x640] sm:$0xff]
    %v3804 = vld [vmem:[#allocation8 + $0x648] sm:$0xff]
    %v3805 = vld [vmem:[#allocation8 + $0x650] sm:$0xff]
    %v3806 = vld [vmem:[#allocation8 + $0x658] sm:$0xff]
    %v3807 = vld [vmem:[#allocation8 + $0x660] sm:$0xff]
    %v3808 = vld [vmem:[#allocation8 + $0x668] sm:$0xff]
    %v3809 = vld [vmem:[#allocation8 + $0x670] sm:$0xff]
    %v3810 = vld [vmem:[#allocation8 + $0x678] sm:$0xff]
    %v3811 = vld [vmem:[#allocation8 + $0x680] sm:$0xff]
    %v3812 = vld [vmem:[#allocation8 + $0x688] sm:$0xff]
    %v3813 = vld [vmem:[#allocation8 + $0x690] sm:$0xff]
    %v3814 = vld [vmem:[#allocation8 + $0x698] sm:$0xff]
    %v3815 = vld [vmem:[#allocation8 + $0x6a0] sm:$0xff]
    %v3816 = vld [vmem:[#allocation8 + $0x6a8] sm:$0xff]
    %v3817 = vld [vmem:[#allocation8 + $0x6b0] sm:$0xff]
    %v3818 = vld [vmem:[#allocation8 + $0x6b8] sm:$0xff]
    %v3819 = vld [vmem:[#allocation8 + $0x6c0] sm:$0xff]
    %v3820 = vld [vmem:[#allocation8 + $0x6c8] sm:$0xff]
    %v3821 = vld [vmem:[#allocation8 + $0x6d0] sm:$0xff]
    %v3822 = vld [vmem:[#allocation8 + $0x6d8] sm:$0xff]
    %v3823 = vld [vmem:[#allocation8 + $0x6e0] sm:$0xff]
    %v3824 = vld [vmem:[#allocation8 + $0x6e8] sm:$0xff]
    %v3825 = vld [vmem:[#allocation8 + $0x6f0] sm:$0xff]
    %v3826 = vld [vmem:[#allocation8 + $0x6f8] sm:$0xff]
    %v3827 = vld [vmem:[#allocation8 + $0x700] sm:$0xff]
    %v3828 = vld [vmem:[#allocation8 + $0x708] sm:$0xff]
    %v3829 = vld [vmem:[#allocation8 + $0x710] sm:$0xff]
    %v3830 = vld [vmem:[#allocation8 + $0x718] sm:$0xff]
    %v3831 = vld [vmem:[#allocation8 + $0x720] sm:$0xff]
    %v3832 = vld [vmem:[#allocation8 + $0x728] sm:$0xff]
    %v3833 = vld [vmem:[#allocation8 + $0x730] sm:$0xff]
    %v3834 = vld [vmem:[#allocation8 + $0x738] sm:$0xff]
    %v3835 = vld [vmem:[#allocation8 + $0x740] sm:$0xff]
    %v3836 = vld [vmem:[#allocation8 + $0x748] sm:$0xff]
    %v3837 = vld [vmem:[#allocation8 + $0x750] sm:$0xff]
    %v3838 = vld [vmem:[#allocation8 + $0x758] sm:$0xff]
    %v3839 = vld [vmem:[#allocation8 + $0x760] sm:$0xff]
    %v3840 = vld [vmem:[#allocation8 + $0x768] sm:$0xff]
    %v3841 = vld [vmem:[#allocation8 + $0x770] sm:$0xff]
    %v3842 = vld [vmem:[#allocation8 + $0x778] sm:$0xff]
    %v3843 = vld [vmem:[#allocation8 + $0x780] sm:$0xff]
    %v3844 = vld [vmem:[#allocation8 + $0x788] sm:$0xff]
    %v3845 = vld [vmem:[#allocation8 + $0x790] sm:$0xff]
    %v3846 = vld [vmem:[#allocation8 + $0x798] sm:$0xff]
    %v3847 = vld [vmem:[#allocation8 + $0x7a0] sm:$0xff]
    %v3848 = vld [vmem:[#allocation8 + $0x7a8] sm:$0xff]
    %v3849 = vld [vmem:[#allocation8 + $0x7b0] sm:$0xff]
    %v3850 = vld [vmem:[#allocation8 + $0x7b8] sm:$0xff]
    %v3851 = vld [vmem:[#allocation8 + $0x7c0] sm:$0xff]
    %v3852 = vld [vmem:[#allocation8 + $0x7c8] sm:$0xff]
    %v3853 = vld [vmem:[#allocation8 + $0x7d0] sm:$0xff]
    %v3854 = vld [vmem:[#allocation8 + $0x7d8] sm:$0xff]
    %v3855 = vld [vmem:[#allocation8 + $0x7e0] sm:$0xff]
    %v3856 = vld [vmem:[#allocation8 + $0x7e8] sm:$0xff]
    %v3857 = vld [vmem:[#allocation8 + $0x7f0] sm:$0xff]
    %v3858 = vld [vmem:[#allocation8 + $0x7f8] sm:$0xff]
    %v3859 = vld [vmem:[#allocation10] sm:$0xf]
    %v3861 = vlaneseq
    %v3862 = vshrl.u32 %v3861, 7
    %v3863 = vsub.s32 0, %v3862
    %v3864 = vrot.slane %v3859, %v3863
    %v3865 = vlaneseq
    %v3866 = vshrl.u32 %v3865, 7
    %v3867 = vsub.s32 1, %v3866
    %v3868 = vrot.slane %v3859, %v3867
    %v3869 = vlaneseq
    %v3870 = vshrl.u32 %v3869, 7
    %v3871 = vsub.s32 2, %v3870
    %v3872 = vrot.slane %v3859, %v3871
    %v3873 = vlaneseq
    %v3874 = vshrl.u32 %v3873, 7
    %v3875 = vsub.s32 3, %v3874
    %v3876 = vrot.slane %v3859, %v3875
    %v4137 = vunpack.c.l.b16 %v3603
    %v4138 = vunpack.c.h.b16 %v3603
    %v4139 = vunpack.c.l.b16 %v3604
    %v4140 = vunpack.c.h.b16 %v3604
    %v4141 = vunpack.c.l.b16 %v3605
    %v4142 = vunpack.c.h.b16 %v3605
    %v4143 = vunpack.c.l.b16 %v3606
    %v4144 = vunpack.c.h.b16 %v3606
    %v4145 = vunpack.c.l.b16 %v3607
    %v4146 = vunpack.c.h.b16 %v3607
    %v4147 = vunpack.c.l.b16 %v3608
    %v4148 = vunpack.c.h.b16 %v3608
    %v4149 = vunpack.c.l.b16 %v3609
    %v4150 = vunpack.c.h.b16 %v3609
    %v4151 = vunpack.c.l.b16 %v3610
    %v4152 = vunpack.c.h.b16 %v3610
    %v4153 = vunpack.c.l.b16 %v3611
    %v4154 = vunpack.c.h.b16 %v3611
    %v4155 = vunpack.c.l.b16 %v3612
    %v4156 = vunpack.c.h.b16 %v3612
    %v4157 = vunpack.c.l.b16 %v3613
    %v4158 = vunpack.c.h.b16 %v3613
    %v4159 = vunpack.c.l.b16 %v3614
    %v4160 = vunpack.c.h.b16 %v3614
    %v4161 = vunpack.c.l.b16 %v3615
    %v4162 = vunpack.c.h.b16 %v3615
    %v4163 = vunpack.c.l.b16 %v3616
    %v4164 = vunpack.c.h.b16 %v3616
    %v4165 = vunpack.c.l.b16 %v3617
    %v4166 = vunpack.c.h.b16 %v3617
    %v4167 = vunpack.c.l.b16 %v3618
    %v4168 = vunpack.c.h.b16 %v3618
    %v4169 = vunpack.c.l.b16 %v3619
    %v4170 = vunpack.c.h.b16 %v3619
    %v4171 = vunpack.c.l.b16 %v3620
    %v4172 = vunpack.c.h.b16 %v3620
    %v4173 = vunpack.c.l.b16 %v3621
    %v4174 = vunpack.c.h.b16 %v3621
    %v4175 = vunpack.c.l.b16 %v3622
    %v4176 = vunpack.c.h.b16 %v3622
    %v4177 = vunpack.c.l.b16 %v3623
    %v4178 = vunpack.c.h.b16 %v3623
    %v4179 = vunpack.c.l.b16 %v3624
    %v4180 = vunpack.c.h.b16 %v3624
    %v4181 = vunpack.c.l.b16 %v3625
    %v4182 = vunpack.c.h.b16 %v3625
    %v4183 = vunpack.c.l.b16 %v3626
    %v4184 = vunpack.c.h.b16 %v3626
    %v4185 = vunpack.c.l.b16 %v3627
    %v4186 = vunpack.c.h.b16 %v3627
    %v4187 = vunpack.c.l.b16 %v3628
    %v4188 = vunpack.c.h.b16 %v3628
    %v4189 = vunpack.c.l.b16 %v3629
    %v4190 = vunpack.c.h.b16 %v3629
    %v4191 = vunpack.c.l.b16 %v3630
    %v4192 = vunpack.c.h.b16 %v3630
    %v4193 = vunpack.c.l.b16 %v3631
    %v4194 = vunpack.c.h.b16 %v3631
    %v4195 = vunpack.c.l.b16 %v3632
    %v4196 = vunpack.c.h.b16 %v3632
    %v4197 = vunpack.c.l.b16 %v3633
    %v4198 = vunpack.c.h.b16 %v3633
    %v4199 = vunpack.c.l.b16 %v3634
    %v4200 = vunpack.c.h.b16 %v3634
    %v4201 = vunpack.c.l.b16 %v3635
    %v4202 = vunpack.c.h.b16 %v3635
    %v4203 = vunpack.c.l.b16 %v3636
    %v4204 = vunpack.c.h.b16 %v3636
    %v4205 = vunpack.c.l.b16 %v3637
    %v4206 = vunpack.c.h.b16 %v3637
    %v4207 = vunpack.c.l.b16 %v3638
    %v4208 = vunpack.c.h.b16 %v3638
    %v4209 = vunpack.c.l.b16 %v3639
    %v4210 = vunpack.c.h.b16 %v3639
    %v4211 = vunpack.c.l.b16 %v3640
    %v4212 = vunpack.c.h.b16 %v3640
    %v4213 = vunpack.c.l.b16 %v3641
    %v4214 = vunpack.c.h.b16 %v3641
    %v4215 = vunpack.c.l.b16 %v3642
    %v4216 = vunpack.c.h.b16 %v3642
    %v4217 = vunpack.c.l.b16 %v3643
    %v4218 = vunpack.c.h.b16 %v3643
    %v4219 = vunpack.c.l.b16 %v3644
    %v4220 = vunpack.c.h.b16 %v3644
    %v4221 = vunpack.c.l.b16 %v3645
    %v4222 = vunpack.c.h.b16 %v3645
    %v4223 = vunpack.c.l.b16 %v3646
    %v4224 = vunpack.c.h.b16 %v3646
    %v4225 = vunpack.c.l.b16 %v3647
    %v4226 = vunpack.c.h.b16 %v3647
    %v4227 = vunpack.c.l.b16 %v3648
    %v4228 = vunpack.c.h.b16 %v3648
    %v4229 = vunpack.c.l.b16 %v3649
    %v4230 = vunpack.c.h.b16 %v3649
    %v4231 = vunpack.c.l.b16 %v3650
    %v4232 = vunpack.c.h.b16 %v3650
    %v4233 = vunpack.c.l.b16 %v3651
    %v4234 = vunpack.c.h.b16 %v3651
    %v4235 = vunpack.c.l.b16 %v3652
    %v4236 = vunpack.c.h.b16 %v3652
    %v4237 = vunpack.c.l.b16 %v3653
    %v4238 = vunpack.c.h.b16 %v3653
    %v4239 = vunpack.c.l.b16 %v3654
    %v4240 = vunpack.c.h.b16 %v3654
    %v4241 = vunpack.c.l.b16 %v3655
    %v4242 = vunpack.c.h.b16 %v3655
    %v4243 = vunpack.c.l.b16 %v3656
    %v4244 = vunpack.c.h.b16 %v3656
    %v4245 = vunpack.c.l.b16 %v3657
    %v4246 = vunpack.c.h.b16 %v3657
    %v4247 = vunpack.c.l.b16 %v3658
    %v4248 = vunpack.c.h.b16 %v3658
    %v4249 = vunpack.c.l.b16 %v3659
    %v4250 = vunpack.c.h.b16 %v3659
    %v4251 = vunpack.c.l.b16 %v3660
    %v4252 = vunpack.c.h.b16 %v3660
    %v4253 = vunpack.c.l.b16 %v3661
    %v4254 = vunpack.c.h.b16 %v3661
    %v4255 = vunpack.c.l.b16 %v3662
    %v4256 = vunpack.c.h.b16 %v3662
    %v4257 = vunpack.c.l.b16 %v3663
    %v4258 = vunpack.c.h.b16 %v3663
    %v4259 = vunpack.c.l.b16 %v3664
    %v4260 = vunpack.c.h.b16 %v3664
    %v4261 = vunpack.c.l.b16 %v3665
    %v4262 = vunpack.c.h.b16 %v3665
    %v4263 = vunpack.c.l.b16 %v3666
    %v4264 = vunpack.c.h.b16 %v3666
    %v4265 = vunpack.c.l.b16 %v3667
    %v4266 = vunpack.c.h.b16 %v3667
    %v4267 = vunpack.c.l.b16 %v3668
    %v4268 = vunpack.c.h.b16 %v3668
    %v4269 = vunpack.c.l.b16 %v3669
    %v4270 = vunpack.c.h.b16 %v3669
    %v4271 = vunpack.c.l.b16 %v3670
    %v4272 = vunpack.c.h.b16 %v3670
    %v4273 = vunpack.c.l.b16 %v3671
    %v4274 = vunpack.c.h.b16 %v3671
    %v4275 = vunpack.c.l.b16 %v3672
    %v4276 = vunpack.c.h.b16 %v3672
    %v4277 = vunpack.c.l.b16 %v3673
    %v4278 = vunpack.c.h.b16 %v3673
    %v4279 = vunpack.c.l.b16 %v3674
    %v4280 = vunpack.c.h.b16 %v3674
    %v4281 = vunpack.c.l.b16 %v3675
    %v4282 = vunpack.c.h.b16 %v3675
    %v4283 = vunpack.c.l.b16 %v3676
    %v4284 = vunpack.c.h.b16 %v3676
    %v4285 = vunpack.c.l.b16 %v3677
    %v4286 = vunpack.c.h.b16 %v3677
    %v4287 = vunpack.c.l.b16 %v3678
    %v4288 = vunpack.c.h.b16 %v3678
    %v4289 = vunpack.c.l.b16 %v3679
    %v4290 = vunpack.c.h.b16 %v3679
    %v4291 = vunpack.c.l.b16 %v3680
    %v4292 = vunpack.c.h.b16 %v3680
    %v4293 = vunpack.c.l.b16 %v3681
    %v4294 = vunpack.c.h.b16 %v3681
    %v4295 = vunpack.c.l.b16 %v3682
    %v4296 = vunpack.c.h.b16 %v3682
    %v4297 = vunpack.c.l.b16 %v3683
    %v4298 = vunpack.c.h.b16 %v3683
    %v4299 = vunpack.c.l.b16 %v3684
    %v4300 = vunpack.c.h.b16 %v3684
    %v4301 = vunpack.c.l.b16 %v3685
    %v4302 = vunpack.c.h.b16 %v3685
    %v4303 = vunpack.c.l.b16 %v3686
    %v4304 = vunpack.c.h.b16 %v3686
    %v4305 = vunpack.c.l.b16 %v3687
    %v4306 = vunpack.c.h.b16 %v3687
    %v4307 = vunpack.c.l.b16 %v3688
    %v4308 = vunpack.c.h.b16 %v3688
    %v4309 = vunpack.c.l.b16 %v3689
    %v4310 = vunpack.c.h.b16 %v3689
    %v4311 = vunpack.c.l.b16 %v3690
    %v4312 = vunpack.c.h.b16 %v3690
    %v4313 = vunpack.c.l.b16 %v3691
    %v4314 = vunpack.c.h.b16 %v3691
    %v4315 = vunpack.c.l.b16 %v3692
    %v4316 = vunpack.c.h.b16 %v3692
    %v4317 = vunpack.c.l.b16 %v3693
    %v4318 = vunpack.c.h.b16 %v3693
    %v4319 = vunpack.c.l.b16 %v3694
    %v4320 = vunpack.c.h.b16 %v3694
    %v4321 = vunpack.c.l.b16 %v3695
    %v4322 = vunpack.c.h.b16 %v3695
    %v4323 = vunpack.c.l.b16 %v3696
    %v4324 = vunpack.c.h.b16 %v3696
    %v4325 = vunpack.c.l.b16 %v3697
    %v4326 = vunpack.c.h.b16 %v3697
    %v4327 = vunpack.c.l.b16 %v3698
    %v4328 = vunpack.c.h.b16 %v3698
    %v4329 = vunpack.c.l.b16 %v3699
    %v4330 = vunpack.c.h.b16 %v3699
    %v4331 = vunpack.c.l.b16 %v3700
    %v4332 = vunpack.c.h.b16 %v3700
    %v4333 = vunpack.c.l.b16 %v3701
    %v4334 = vunpack.c.h.b16 %v3701
    %v4335 = vunpack.c.l.b16 %v3702
    %v4336 = vunpack.c.h.b16 %v3702
    %v4337 = vunpack.c.l.b16 %v3703
    %v4338 = vunpack.c.h.b16 %v3703
    %v4339 = vunpack.c.l.b16 %v3704
    %v4340 = vunpack.c.h.b16 %v3704
    %v4341 = vunpack.c.l.b16 %v3705
    %v4342 = vunpack.c.h.b16 %v3705
    %v4343 = vunpack.c.l.b16 %v3706
    %v4344 = vunpack.c.h.b16 %v3706
    %v4345 = vunpack.c.l.b16 %v3707
    %v4346 = vunpack.c.h.b16 %v3707
    %v4347 = vunpack.c.l.b16 %v3708
    %v4348 = vunpack.c.h.b16 %v3708
    %v4349 = vunpack.c.l.b16 %v3709
    %v4350 = vunpack.c.h.b16 %v3709
    %v4351 = vunpack.c.l.b16 %v3710
    %v4352 = vunpack.c.h.b16 %v3710
    %v4353 = vunpack.c.l.b16 %v3711
    %v4354 = vunpack.c.h.b16 %v3711
    %v4355 = vunpack.c.l.b16 %v3712
    %v4356 = vunpack.c.h.b16 %v3712
    %v4357 = vunpack.c.l.b16 %v3713
    %v4358 = vunpack.c.h.b16 %v3713
    %v4359 = vunpack.c.l.b16 %v3714
    %v4360 = vunpack.c.h.b16 %v3714
    %v4361 = vunpack.c.l.b16 %v3715
    %v4362 = vunpack.c.h.b16 %v3715
    %v4363 = vunpack.c.l.b16 %v3716
    %v4364 = vunpack.c.h.b16 %v3716
    %v4365 = vunpack.c.l.b16 %v3717
    %v4366 = vunpack.c.h.b16 %v3717
    %v4367 = vunpack.c.l.b16 %v3718
    %v4368 = vunpack.c.h.b16 %v3718
    %v4369 = vunpack.c.l.b16 %v3719
    %v4370 = vunpack.c.h.b16 %v3719
    %v4371 = vunpack.c.l.b16 %v3720
    %v4372 = vunpack.c.h.b16 %v3720
    %v4373 = vunpack.c.l.b16 %v3721
    %v4374 = vunpack.c.h.b16 %v3721
    %v4375 = vunpack.c.l.b16 %v3722
    %v4376 = vunpack.c.h.b16 %v3722
    %v4377 = vunpack.c.l.b16 %v3723
    %v4378 = vunpack.c.h.b16 %v3723
    %v4379 = vunpack.c.l.b16 %v3724
    %v4380 = vunpack.c.h.b16 %v3724
    %v4381 = vunpack.c.l.b16 %v3725
    %v4382 = vunpack.c.h.b16 %v3725
    %v4383 = vunpack.c.l.b16 %v3726
    %v4384 = vunpack.c.h.b16 %v3726
    %v4385 = vunpack.c.l.b16 %v3727
    %v4386 = vunpack.c.h.b16 %v3727
    %v4387 = vunpack.c.l.b16 %v3728
    %v4388 = vunpack.c.h.b16 %v3728
    %v4389 = vunpack.c.l.b16 %v3729
    %v4390 = vunpack.c.h.b16 %v3729
    %v4391 = vunpack.c.l.b16 %v3730
    %v4392 = vunpack.c.h.b16 %v3730
    %v4393 = vunpack.c.l.b16 %v3731
    %v4394 = vunpack.c.h.b16 %v3731
    %v4395 = vunpack.c.l.b16 %v3732
    %v4396 = vunpack.c.h.b16 %v3732
    %v4397 = vunpack.c.l.b16 %v3733
    %v4398 = vunpack.c.h.b16 %v3733
    %v4399 = vunpack.c.l.b16 %v3734
    %v4400 = vunpack.c.h.b16 %v3734
    %v4401 = vunpack.c.l.b16 %v3735
    %v4402 = vunpack.c.h.b16 %v3735
    %v4403 = vunpack.c.l.b16 %v3736
    %v4404 = vunpack.c.h.b16 %v3736
    %v4405 = vunpack.c.l.b16 %v3737
    %v4406 = vunpack.c.h.b16 %v3737
    %v4407 = vunpack.c.l.b16 %v3738
    %v4408 = vunpack.c.h.b16 %v3738
    %v4409 = vunpack.c.l.b16 %v3739
    %v4410 = vunpack.c.h.b16 %v3739
    %v4411 = vunpack.c.l.b16 %v3740
    %v4412 = vunpack.c.h.b16 %v3740
    %v4413 = vunpack.c.l.b16 %v3741
    %v4414 = vunpack.c.h.b16 %v3741
    %v4415 = vunpack.c.l.b16 %v3742
    %v4416 = vunpack.c.h.b16 %v3742
    %v4417 = vunpack.c.l.b16 %v3743
    %v4418 = vunpack.c.h.b16 %v3743
    %v4419 = vunpack.c.l.b16 %v3744
    %v4420 = vunpack.c.h.b16 %v3744
    %v4421 = vunpack.c.l.b16 %v3745
    %v4422 = vunpack.c.h.b16 %v3745
    %v4423 = vunpack.c.l.b16 %v3746
    %v4424 = vunpack.c.h.b16 %v3746
    %v4425 = vunpack.c.l.b16 %v3747
    %v4426 = vunpack.c.h.b16 %v3747
    %v4427 = vunpack.c.l.b16 %v3748
    %v4428 = vunpack.c.h.b16 %v3748
    %v4429 = vunpack.c.l.b16 %v3749
    %v4430 = vunpack.c.h.b16 %v3749
    %v4431 = vunpack.c.l.b16 %v3750
    %v4432 = vunpack.c.h.b16 %v3750
    %v4433 = vunpack.c.l.b16 %v3751
    %v4434 = vunpack.c.h.b16 %v3751
    %v4435 = vunpack.c.l.b16 %v3752
    %v4436 = vunpack.c.h.b16 %v3752
    %v4437 = vunpack.c.l.b16 %v3753
    %v4438 = vunpack.c.h.b16 %v3753
    %v4439 = vunpack.c.l.b16 %v3754
    %v4440 = vunpack.c.h.b16 %v3754
    %v4441 = vunpack.c.l.b16 %v3755
    %v4442 = vunpack.c.h.b16 %v3755
    %v4443 = vunpack.c.l.b16 %v3756
    %v4444 = vunpack.c.h.b16 %v3756
    %v4445 = vunpack.c.l.b16 %v3757
    %v4446 = vunpack.c.h.b16 %v3757
    %v4447 = vunpack.c.l.b16 %v3758
    %v4448 = vunpack.c.h.b16 %v3758
    %v4449 = vunpack.c.l.b16 %v3759
    %v4450 = vunpack.c.h.b16 %v3759
    %v4451 = vunpack.c.l.b16 %v3760
    %v4452 = vunpack.c.h.b16 %v3760
    %v4453 = vunpack.c.l.b16 %v3761
    %v4454 = vunpack.c.h.b16 %v3761
    %v4455 = vunpack.c.l.b16 %v3762
    %v4456 = vunpack.c.h.b16 %v3762
    %v4457 = vunpack.c.l.b16 %v3763
    %v4458 = vunpack.c.h.b16 %v3763
    %v4459 = vunpack.c.l.b16 %v3764
    %v4460 = vunpack.c.h.b16 %v3764
    %v4461 = vunpack.c.l.b16 %v3765
    %v4462 = vunpack.c.h.b16 %v3765
    %v4463 = vunpack.c.l.b16 %v3766
    %v4464 = vunpack.c.h.b16 %v3766
    %v4465 = vunpack.c.l.b16 %v3767
    %v4466 = vunpack.c.h.b16 %v3767
    %v4467 = vunpack.c.l.b16 %v3768
    %v4468 = vunpack.c.h.b16 %v3768
    %v4469 = vunpack.c.l.b16 %v3769
    %v4470 = vunpack.c.h.b16 %v3769
    %v4471 = vunpack.c.l.b16 %v3770
    %v4472 = vunpack.c.h.b16 %v3770
    %v4473 = vunpack.c.l.b16 %v3771
    %v4474 = vunpack.c.h.b16 %v3771
    %v4475 = vunpack.c.l.b16 %v3772
    %v4476 = vunpack.c.h.b16 %v3772
    %v4477 = vunpack.c.l.b16 %v3773
    %v4478 = vunpack.c.h.b16 %v3773
    %v4479 = vunpack.c.l.b16 %v3774
    %v4480 = vunpack.c.h.b16 %v3774
    %v4481 = vunpack.c.l.b16 %v3775
    %v4482 = vunpack.c.h.b16 %v3775
    %v4483 = vunpack.c.l.b16 %v3776
    %v4484 = vunpack.c.h.b16 %v3776
    %v4485 = vunpack.c.l.b16 %v3777
    %v4486 = vunpack.c.h.b16 %v3777
    %v4487 = vunpack.c.l.b16 %v3778
    %v4488 = vunpack.c.h.b16 %v3778
    %v4489 = vunpack.c.l.b16 %v3779
    %v4490 = vunpack.c.h.b16 %v3779
    %v4491 = vunpack.c.l.b16 %v3780
    %v4492 = vunpack.c.h.b16 %v3780
    %v4493 = vunpack.c.l.b16 %v3781
    %v4494 = vunpack.c.h.b16 %v3781
    %v4495 = vunpack.c.l.b16 %v3782
    %v4496 = vunpack.c.h.b16 %v3782
    %v4497 = vunpack.c.l.b16 %v3783
    %v4498 = vunpack.c.h.b16 %v3783
    %v4499 = vunpack.c.l.b16 %v3784
    %v4500 = vunpack.c.h.b16 %v3784
    %v4501 = vunpack.c.l.b16 %v3785
    %v4502 = vunpack.c.h.b16 %v3785
    %v4503 = vunpack.c.l.b16 %v3786
    %v4504 = vunpack.c.h.b16 %v3786
    %v4505 = vunpack.c.l.b16 %v3787
    %v4506 = vunpack.c.h.b16 %v3787
    %v4507 = vunpack.c.l.b16 %v3788
    %v4508 = vunpack.c.h.b16 %v3788
    %v4509 = vunpack.c.l.b16 %v3789
    %v4510 = vunpack.c.h.b16 %v3789
    %v4511 = vunpack.c.l.b16 %v3790
    %v4512 = vunpack.c.h.b16 %v3790
    %v4513 = vunpack.c.l.b16 %v3791
    %v4514 = vunpack.c.h.b16 %v3791
    %v4515 = vunpack.c.l.b16 %v3792
    %v4516 = vunpack.c.h.b16 %v3792
    %v4517 = vunpack.c.l.b16 %v3793
    %v4518 = vunpack.c.h.b16 %v3793
    %v4519 = vunpack.c.l.b16 %v3794
    %v4520 = vunpack.c.h.b16 %v3794
    %v4521 = vunpack.c.l.b16 %v3795
    %v4522 = vunpack.c.h.b16 %v3795
    %v4523 = vunpack.c.l.b16 %v3796
    %v4524 = vunpack.c.h.b16 %v3796
    %v4525 = vunpack.c.l.b16 %v3797
    %v4526 = vunpack.c.h.b16 %v3797
    %v4527 = vunpack.c.l.b16 %v3798
    %v4528 = vunpack.c.h.b16 %v3798
    %v4529 = vunpack.c.l.b16 %v3799
    %v4530 = vunpack.c.h.b16 %v3799
    %v4531 = vunpack.c.l.b16 %v3800
    %v4532 = vunpack.c.h.b16 %v3800
    %v4533 = vunpack.c.l.b16 %v3801
    %v4534 = vunpack.c.h.b16 %v3801
    %v4535 = vunpack.c.l.b16 %v3802
    %v4536 = vunpack.c.h.b16 %v3802
    %v4537 = vunpack.c.l.b16 %v3803
    %v4538 = vunpack.c.h.b16 %v3803
    %v4539 = vunpack.c.l.b16 %v3804
    %v4540 = vunpack.c.h.b16 %v3804
    %v4541 = vunpack.c.l.b16 %v3805
    %v4542 = vunpack.c.h.b16 %v3805
    %v4543 = vunpack.c.l.b16 %v3806
    %v4544 = vunpack.c.h.b16 %v3806
    %v4545 = vunpack.c.l.b16 %v3807
    %v4546 = vunpack.c.h.b16 %v3807
    %v4547 = vunpack.c.l.b16 %v3808
    %v4548 = vunpack.c.h.b16 %v3808
    %v4549 = vunpack.c.l.b16 %v3809
    %v4550 = vunpack.c.h.b16 %v3809
    %v4551 = vunpack.c.l.b16 %v3810
    %v4552 = vunpack.c.h.b16 %v3810
    %v4553 = vunpack.c.l.b16 %v3811
    %v4554 = vunpack.c.h.b16 %v3811
    %v4555 = vunpack.c.l.b16 %v3812
    %v4556 = vunpack.c.h.b16 %v3812
    %v4557 = vunpack.c.l.b16 %v3813
    %v4558 = vunpack.c.h.b16 %v3813
    %v4559 = vunpack.c.l.b16 %v3814
    %v4560 = vunpack.c.h.b16 %v3814
    %v4561 = vunpack.c.l.b16 %v3815
    %v4562 = vunpack.c.h.b16 %v3815
    %v4563 = vunpack.c.l.b16 %v3816
    %v4564 = vunpack.c.h.b16 %v3816
    %v4565 = vunpack.c.l.b16 %v3817
    %v4566 = vunpack.c.h.b16 %v3817
    %v4567 = vunpack.c.l.b16 %v3818
    %v4568 = vunpack.c.h.b16 %v3818
    %v4569 = vunpack.c.l.b16 %v3819
    %v4570 = vunpack.c.h.b16 %v3819
    %v4571 = vunpack.c.l.b16 %v3820
    %v4572 = vunpack.c.h.b16 %v3820
    %v4573 = vunpack.c.l.b16 %v3821
    %v4574 = vunpack.c.h.b16 %v3821
    %v4575 = vunpack.c.l.b16 %v3822
    %v4576 = vunpack.c.h.b16 %v3822
    %v4577 = vunpack.c.l.b16 %v3823
    %v4578 = vunpack.c.h.b16 %v3823
    %v4579 = vunpack.c.l.b16 %v3824
    %v4580 = vunpack.c.h.b16 %v3824
    %v4581 = vunpack.c.l.b16 %v3825
    %v4582 = vunpack.c.h.b16 %v3825
    %v4583 = vunpack.c.l.b16 %v3826
    %v4584 = vunpack.c.h.b16 %v3826
    %v4585 = vunpack.c.l.b16 %v3827
    %v4586 = vunpack.c.h.b16 %v3827
    %v4587 = vunpack.c.l.b16 %v3828
    %v4588 = vunpack.c.h.b16 %v3828
    %v4589 = vunpack.c.l.b16 %v3829
    %v4590 = vunpack.c.h.b16 %v3829
    %v4591 = vunpack.c.l.b16 %v3830
    %v4592 = vunpack.c.h.b16 %v3830
    %v4593 = vunpack.c.l.b16 %v3831
    %v4594 = vunpack.c.h.b16 %v3831
    %v4595 = vunpack.c.l.b16 %v3832
    %v4596 = vunpack.c.h.b16 %v3832
    %v4597 = vunpack.c.l.b16 %v3833
    %v4598 = vunpack.c.h.b16 %v3833
    %v4599 = vunpack.c.l.b16 %v3834
    %v4600 = vunpack.c.h.b16 %v3834
    %v4601 = vunpack.c.l.b16 %v3835
    %v4602 = vunpack.c.h.b16 %v3835
    %v4603 = vunpack.c.l.b16 %v3836
    %v4604 = vunpack.c.h.b16 %v3836
    %v4605 = vunpack.c.l.b16 %v3837
    %v4606 = vunpack.c.h.b16 %v3837
    %v4607 = vunpack.c.l.b16 %v3838
    %v4608 = vunpack.c.h.b16 %v3838
    %v4609 = vunpack.c.l.b16 %v3839
    %v4610 = vunpack.c.h.b16 %v3839
    %v4611 = vunpack.c.l.b16 %v3840
    %v4612 = vunpack.c.h.b16 %v3840
    %v4613 = vunpack.c.l.b16 %v3841
    %v4614 = vunpack.c.h.b16 %v3841
    %v4615 = vunpack.c.l.b16 %v3842
    %v4616 = vunpack.c.h.b16 %v3842
    %v4617 = vunpack.c.l.b16 %v3843
    %v4618 = vunpack.c.h.b16 %v3843
    %v4619 = vunpack.c.l.b16 %v3844
    %v4620 = vunpack.c.h.b16 %v3844
    %v4621 = vunpack.c.l.b16 %v3845
    %v4622 = vunpack.c.h.b16 %v3845
    %v4623 = vunpack.c.l.b16 %v3846
    %v4624 = vunpack.c.h.b16 %v3846
    %v4625 = vunpack.c.l.b16 %v3847
    %v4626 = vunpack.c.h.b16 %v3847
    %v4627 = vunpack.c.l.b16 %v3848
    %v4628 = vunpack.c.h.b16 %v3848
    %v4629 = vunpack.c.l.b16 %v3849
    %v4630 = vunpack.c.h.b16 %v3849
    %v4631 = vunpack.c.l.b16 %v3850
    %v4632 = vunpack.c.h.b16 %v3850
    %v4633 = vunpack.c.l.b16 %v3851
    %v4634 = vunpack.c.h.b16 %v3851
    %v4635 = vunpack.c.l.b16 %v3852
    %v4636 = vunpack.c.h.b16 %v3852
    %v4637 = vunpack.c.l.b16 %v3853
    %v4638 = vunpack.c.h.b16 %v3853
    %v4639 = vunpack.c.l.b16 %v3854
    %v4640 = vunpack.c.h.b16 %v3854
    %v4641 = vunpack.c.l.b16 %v3855
    %v4642 = vunpack.c.h.b16 %v3855
    %v4643 = vunpack.c.l.b16 %v3856
    %v4644 = vunpack.c.h.b16 %v3856
    %v4645 = vunpack.c.l.b16 %v3857
    %v4646 = vunpack.c.h.b16 %v3857
    %v4647 = vunpack.c.l.b16 %v3858
    %v4648 = vunpack.c.h.b16 %v3858
    %v4649 = vpack.c.b16 %v4141, %v4137
    %v4650 = vpack.c.b16 %v4142, %v4138
    %v4651 = vpack.c.b16 %v4143, %v4139
    %v4652 = vpack.c.b16 %v4144, %v4140
    %v4653 = vpack.c.b16 %v4149, %v4145
    %v4654 = vpack.c.b16 %v4150, %v4146
    %v4655 = vpack.c.b16 %v4151, %v4147
    %v4656 = vpack.c.b16 %v4152, %v4148
    %v4657 = vpack.c.b16 %v4157, %v4153
    %v4658 = vpack.c.b16 %v4158, %v4154
    %v4659 = vpack.c.b16 %v4159, %v4155
    %v4660 = vpack.c.b16 %v4160, %v4156
    %v4661 = vpack.c.b16 %v4165, %v4161
    %v4662 = vpack.c.b16 %v4166, %v4162
    %v4663 = vpack.c.b16 %v4167, %v4163
    %v4664 = vpack.c.b16 %v4168, %v4164
    %v4665 = vpack.c.b16 %v4173, %v4169
    %v4666 = vpack.c.b16 %v4174, %v4170
    %v4667 = vpack.c.b16 %v4175, %v4171
    %v4668 = vpack.c.b16 %v4176, %v4172
    %v4669 = vpack.c.b16 %v4181, %v4177
    %v4670 = vpack.c.b16 %v4182, %v4178
    %v4671 = vpack.c.b16 %v4183, %v4179
    %v4672 = vpack.c.b16 %v4184, %v4180
    %v4673 = vpack.c.b16 %v4189, %v4185
    %v4674 = vpack.c.b16 %v4190, %v4186
    %v4675 = vpack.c.b16 %v4191, %v4187
    %v4676 = vpack.c.b16 %v4192, %v4188
    %v4677 = vpack.c.b16 %v4197, %v4193
    %v4678 = vpack.c.b16 %v4198, %v4194
    %v4679 = vpack.c.b16 %v4199, %v4195
    %v4680 = vpack.c.b16 %v4200, %v4196
    %v4681 = vpack.c.b16 %v4205, %v4201
    %v4682 = vpack.c.b16 %v4206, %v4202
    %v4683 = vpack.c.b16 %v4207, %v4203
    %v4684 = vpack.c.b16 %v4208, %v4204
    %v4685 = vpack.c.b16 %v4213, %v4209
    %v4686 = vpack.c.b16 %v4214, %v4210
    %v4687 = vpack.c.b16 %v4215, %v4211
    %v4688 = vpack.c.b16 %v4216, %v4212
    %v4689 = vpack.c.b16 %v4221, %v4217
    %v4690 = vpack.c.b16 %v4222, %v4218
    %v4691 = vpack.c.b16 %v4223, %v4219
    %v4692 = vpack.c.b16 %v4224, %v4220
    %v4693 = vpack.c.b16 %v4229, %v4225
    %v4694 = vpack.c.b16 %v4230, %v4226
    %v4695 = vpack.c.b16 %v4231, %v4227
    %v4696 = vpack.c.b16 %v4232, %v4228
    %v4697 = vpack.c.b16 %v4237, %v4233
    %v4698 = vpack.c.b16 %v4238, %v4234
    %v4699 = vpack.c.b16 %v4239, %v4235
    %v4700 = vpack.c.b16 %v4240, %v4236
    %v4701 = vpack.c.b16 %v4245, %v4241
    %v4702 = vpack.c.b16 %v4246, %v4242
    %v4703 = vpack.c.b16 %v4247, %v4243
    %v4704 = vpack.c.b16 %v4248, %v4244
    %v4705 = vpack.c.b16 %v4253, %v4249
    %v4706 = vpack.c.b16 %v4254, %v4250
    %v4707 = vpack.c.b16 %v4255, %v4251
    %v4708 = vpack.c.b16 %v4256, %v4252
    %v4709 = vpack.c.b16 %v4261, %v4257
    %v4710 = vpack.c.b16 %v4262, %v4258
    %v4711 = vpack.c.b16 %v4263, %v4259
    %v4712 = vpack.c.b16 %v4264, %v4260
    %v4713 = vpack.c.b16 %v4269, %v4265
    %v4714 = vpack.c.b16 %v4270, %v4266
    %v4715 = vpack.c.b16 %v4271, %v4267
    %v4716 = vpack.c.b16 %v4272, %v4268
    %v4717 = vpack.c.b16 %v4277, %v4273
    %v4718 = vpack.c.b16 %v4278, %v4274
    %v4719 = vpack.c.b16 %v4279, %v4275
    %v4720 = vpack.c.b16 %v4280, %v4276
    %v4721 = vpack.c.b16 %v4285, %v4281
    %v4722 = vpack.c.b16 %v4286, %v4282
    %v4723 = vpack.c.b16 %v4287, %v4283
    %v4724 = vpack.c.b16 %v4288, %v4284
    %v4725 = vpack.c.b16 %v4293, %v4289
    %v4726 = vpack.c.b16 %v4294, %v4290
    %v4727 = vpack.c.b16 %v4295, %v4291
    %v4728 = vpack.c.b16 %v4296, %v4292
    %v4729 = vpack.c.b16 %v4301, %v4297
    %v4730 = vpack.c.b16 %v4302, %v4298
    %v4731 = vpack.c.b16 %v4303, %v4299
    %v4732 = vpack.c.b16 %v4304, %v4300
    %v4733 = vpack.c.b16 %v4309, %v4305
    %v4734 = vpack.c.b16 %v4310, %v4306
    %v4735 = vpack.c.b16 %v4311, %v4307
    %v4736 = vpack.c.b16 %v4312, %v4308
    %v4737 = vpack.c.b16 %v4317, %v4313
    %v4738 = vpack.c.b16 %v4318, %v4314
    %v4739 = vpack.c.b16 %v4319, %v4315
    %v4740 = vpack.c.b16 %v4320, %v4316
    %v4741 = vpack.c.b16 %v4325, %v4321
    %v4742 = vpack.c.b16 %v4326, %v4322
    %v4743 = vpack.c.b16 %v4327, %v4323
    %v4744 = vpack.c.b16 %v4328, %v4324
    %v4745 = vpack.c.b16 %v4333, %v4329
    %v4746 = vpack.c.b16 %v4334, %v4330
    %v4747 = vpack.c.b16 %v4335, %v4331
    %v4748 = vpack.c.b16 %v4336, %v4332
    %v4749 = vpack.c.b16 %v4341, %v4337
    %v4750 = vpack.c.b16 %v4342, %v4338
    %v4751 = vpack.c.b16 %v4343, %v4339
    %v4752 = vpack.c.b16 %v4344, %v4340
    %v4753 = vpack.c.b16 %v4349, %v4345
    %v4754 = vpack.c.b16 %v4350, %v4346
    %v4755 = vpack.c.b16 %v4351, %v4347
    %v4756 = vpack.c.b16 %v4352, %v4348
    %v4757 = vpack.c.b16 %v4357, %v4353
    %v4758 = vpack.c.b16 %v4358, %v4354
    %v4759 = vpack.c.b16 %v4359, %v4355
    %v4760 = vpack.c.b16 %v4360, %v4356
    %v4761 = vpack.c.b16 %v4365, %v4361
    %v4762 = vpack.c.b16 %v4366, %v4362
    %v4763 = vpack.c.b16 %v4367, %v4363
    %v4764 = vpack.c.b16 %v4368, %v4364
    %v4765 = vpack.c.b16 %v4373, %v4369
    %v4766 = vpack.c.b16 %v4374, %v4370
    %v4767 = vpack.c.b16 %v4375, %v4371
    %v4768 = vpack.c.b16 %v4376, %v4372
    %v4769 = vpack.c.b16 %v4381, %v4377
    %v4770 = vpack.c.b16 %v4382, %v4378
    %v4771 = vpack.c.b16 %v4383, %v4379
    %v4772 = vpack.c.b16 %v4384, %v4380
    %v4773 = vpack.c.b16 %v4389, %v4385
    %v4774 = vpack.c.b16 %v4390, %v4386
    %v4775 = vpack.c.b16 %v4391, %v4387
    %v4776 = vpack.c.b16 %v4392, %v4388
    %v4777 = vpack.c.b16 %v4397, %v4393
    %v4778 = vpack.c.b16 %v4398, %v4394
    %v4779 = vpack.c.b16 %v4399, %v4395
    %v4780 = vpack.c.b16 %v4400, %v4396
    %v4781 = vpack.c.b16 %v4405, %v4401
    %v4782 = vpack.c.b16 %v4406, %v4402
    %v4783 = vpack.c.b16 %v4407, %v4403
    %v4784 = vpack.c.b16 %v4408, %v4404
    %v4785 = vpack.c.b16 %v4413, %v4409
    %v4786 = vpack.c.b16 %v4414, %v4410
    %v4787 = vpack.c.b16 %v4415, %v4411
    %v4788 = vpack.c.b16 %v4416, %v4412
    %v4789 = vpack.c.b16 %v4421, %v4417
    %v4790 = vpack.c.b16 %v4422, %v4418
    %v4791 = vpack.c.b16 %v4423, %v4419
    %v4792 = vpack.c.b16 %v4424, %v4420
    %v4793 = vpack.c.b16 %v4429, %v4425
    %v4794 = vpack.c.b16 %v4430, %v4426
    %v4795 = vpack.c.b16 %v4431, %v4427
    %v4796 = vpack.c.b16 %v4432, %v4428
    %v4797 = vpack.c.b16 %v4437, %v4433
    %v4798 = vpack.c.b16 %v4438, %v4434
    %v4799 = vpack.c.b16 %v4439, %v4435
    %v4800 = vpack.c.b16 %v4440, %v4436
    %v4801 = vpack.c.b16 %v4445, %v4441
    %v4802 = vpack.c.b16 %v4446, %v4442
    %v4803 = vpack.c.b16 %v4447, %v4443
    %v4804 = vpack.c.b16 %v4448, %v4444
    %v4805 = vpack.c.b16 %v4453, %v4449
    %v4806 = vpack.c.b16 %v4454, %v4450
    %v4807 = vpack.c.b16 %v4455, %v4451
    %v4808 = vpack.c.b16 %v4456, %v4452
    %v4809 = vpack.c.b16 %v4461, %v4457
    %v4810 = vpack.c.b16 %v4462, %v4458
    %v4811 = vpack.c.b16 %v4463, %v4459
    %v4812 = vpack.c.b16 %v4464, %v4460
    %v4813 = vpack.c.b16 %v4469, %v4465
    %v4814 = vpack.c.b16 %v4470, %v4466
    %v4815 = vpack.c.b16 %v4471, %v4467
    %v4816 = vpack.c.b16 %v4472, %v4468
    %v4817 = vpack.c.b16 %v4477, %v4473
    %v4818 = vpack.c.b16 %v4478, %v4474
    %v4819 = vpack.c.b16 %v4479, %v4475
    %v4820 = vpack.c.b16 %v4480, %v4476
    %v4821 = vpack.c.b16 %v4485, %v4481
    %v4822 = vpack.c.b16 %v4486, %v4482
    %v4823 = vpack.c.b16 %v4487, %v4483
    %v4824 = vpack.c.b16 %v4488, %v4484
    %v4825 = vpack.c.b16 %v4493, %v4489
    %v4826 = vpack.c.b16 %v4494, %v4490
    %v4827 = vpack.c.b16 %v4495, %v4491
    %v4828 = vpack.c.b16 %v4496, %v4492
    %v4829 = vpack.c.b16 %v4501, %v4497
    %v4830 = vpack.c.b16 %v4502, %v4498
    %v4831 = vpack.c.b16 %v4503, %v4499
    %v4832 = vpack.c.b16 %v4504, %v4500
    %v4833 = vpack.c.b16 %v4509, %v4505
    %v4834 = vpack.c.b16 %v4510, %v4506
    %v4835 = vpack.c.b16 %v4511, %v4507
    %v4836 = vpack.c.b16 %v4512, %v4508
    %v4837 = vpack.c.b16 %v4517, %v4513
    %v4838 = vpack.c.b16 %v4518, %v4514
    %v4839 = vpack.c.b16 %v4519, %v4515
    %v4840 = vpack.c.b16 %v4520, %v4516
    %v4841 = vpack.c.b16 %v4525, %v4521
    %v4842 = vpack.c.b16 %v4526, %v4522
    %v4843 = vpack.c.b16 %v4527, %v4523
    %v4844 = vpack.c.b16 %v4528, %v4524
    %v4845 = vpack.c.b16 %v4533, %v4529
    %v4846 = vpack.c.b16 %v4534, %v4530
    %v4847 = vpack.c.b16 %v4535, %v4531
    %v4848 = vpack.c.b16 %v4536, %v4532
    %v4849 = vpack.c.b16 %v4541, %v4537
    %v4850 = vpack.c.b16 %v4542, %v4538
    %v4851 = vpack.c.b16 %v4543, %v4539
    %v4852 = vpack.c.b16 %v4544, %v4540
    %v4853 = vpack.c.b16 %v4549, %v4545
    %v4854 = vpack.c.b16 %v4550, %v4546
    %v4855 = vpack.c.b16 %v4551, %v4547
    %v4856 = vpack.c.b16 %v4552, %v4548
    %v4857 = vpack.c.b16 %v4557, %v4553
    %v4858 = vpack.c.b16 %v4558, %v4554
    %v4859 = vpack.c.b16 %v4559, %v4555
    %v4860 = vpack.c.b16 %v4560, %v4556
    %v4861 = vpack.c.b16 %v4565, %v4561
    %v4862 = vpack.c.b16 %v4566, %v4562
    %v4863 = vpack.c.b16 %v4567, %v4563
    %v4864 = vpack.c.b16 %v4568, %v4564
    %v4865 = vpack.c.b16 %v4573, %v4569
    %v4866 = vpack.c.b16 %v4574, %v4570
    %v4867 = vpack.c.b16 %v4575, %v4571
    %v4868 = vpack.c.b16 %v4576, %v4572
    %v4869 = vpack.c.b16 %v4581, %v4577
    %v4870 = vpack.c.b16 %v4582, %v4578
    %v4871 = vpack.c.b16 %v4583, %v4579
    %v4872 = vpack.c.b16 %v4584, %v4580
    %v4873 = vpack.c.b16 %v4589, %v4585
    %v4874 = vpack.c.b16 %v4590, %v4586
    %v4875 = vpack.c.b16 %v4591, %v4587
    %v4876 = vpack.c.b16 %v4592, %v4588
    %v4877 = vpack.c.b16 %v4597, %v4593
    %v4878 = vpack.c.b16 %v4598, %v4594
    %v4879 = vpack.c.b16 %v4599, %v4595
    %v4880 = vpack.c.b16 %v4600, %v4596
    %v4881 = vpack.c.b16 %v4605, %v4601
    %v4882 = vpack.c.b16 %v4606, %v4602
    %v4883 = vpack.c.b16 %v4607, %v4603
    %v4884 = vpack.c.b16 %v4608, %v4604
    %v4885 = vpack.c.b16 %v4613, %v4609
    %v4886 = vpack.c.b16 %v4614, %v4610
    %v4887 = vpack.c.b16 %v4615, %v4611
    %v4888 = vpack.c.b16 %v4616, %v4612
    %v4889 = vpack.c.b16 %v4621, %v4617
    %v4890 = vpack.c.b16 %v4622, %v4618
    %v4891 = vpack.c.b16 %v4623, %v4619
    %v4892 = vpack.c.b16 %v4624, %v4620
    %v4893 = vpack.c.b16 %v4629, %v4625
    %v4894 = vpack.c.b16 %v4630, %v4626
    %v4895 = vpack.c.b16 %v4631, %v4627
    %v4896 = vpack.c.b16 %v4632, %v4628
    %v4897 = vpack.c.b16 %v4637, %v4633
    %v4898 = vpack.c.b16 %v4638, %v4634
    %v4899 = vpack.c.b16 %v4639, %v4635
    %v4900 = vpack.c.b16 %v4640, %v4636
    %v4901 = vpack.c.b16 %v4645, %v4641
    %v4902 = vpack.c.b16 %v4646, %v4642
    %v4903 = vpack.c.b16 %v4647, %v4643
    %v4904 = vpack.c.b16 %v4648, %v4644
    %5161 = vmatprep.subr.bf16.mxu0 %v4678
    %5162 = vmatpush1.bf16.msra.mxu0 %v4677
    %5163 = vmatprep.subr.bf16.mxu0 %v4674
    %5164 = vmatpush1.bf16.msra.mxu0 %v4673
    %5165 = vmatprep.subr.bf16.mxu0 %v4670
    %5166 = vmatpush1.bf16.msra.mxu0 %v4669
    %5167 = vmatprep.subr.bf16.mxu0 %v4666
    %5168 = vmatpush1.bf16.msra.mxu0 %v4665
    %5169 = vmatprep.subr.bf16.mxu0 %v4662
    %5170 = vmatpush1.bf16.msra.mxu0 %v4661
    %5171 = vmatprep.subr.bf16.mxu0 %v4658
    %5172 = vmatpush1.bf16.msra.mxu0 %v4657
    %5173 = vmatprep.subr.bf16.mxu0 %v4654
    %5174 = vmatpush1.bf16.msra.mxu0 %v4653
    %5175 = vmatprep.subr.bf16.mxu0 %v4650
    %5176 = vmatpush1.bf16.msra.mxu0 %v4649
    %5177 = vmatprep.subr.bf16.mxu0 %v4710
    %5178 = vmatpush2.bf16.msra.mxu0 %v4709
    %5179 = vmatprep.subr.bf16.mxu0 %v4706
    %5180 = vmatpush2.bf16.msra.mxu0 %v4705
    %5181 = vmatprep.subr.bf16.mxu0 %v4702
    %5182 = vmatpush2.bf16.msra.mxu0 %v4701
    %5183 = vmatprep.subr.bf16.mxu0 %v4698
    %5184 = vmatpush2.bf16.msra.mxu0 %v4697
    %5185 = vmatprep.subr.bf16.mxu0 %v4694
    %5186 = vmatpush2.bf16.msra.mxu0 %v4693
    %5187 = vmatprep.subr.bf16.mxu0 %v4690
    %5188 = vmatpush2.bf16.msra.mxu0 %v4689
    %5189 = vmatprep.subr.bf16.mxu0 %v4686
    %5190 = vmatpush2.bf16.msra.mxu0 %v4685
    %5191 = vmatprep.subr.bf16.mxu0 %v4682
    %5192 = vmatpush2.bf16.msra.mxu0 %v4681
    %5193 = vmatprep.mubr.bf16.mxu0 %v3596
    %5194 = vmatmul.mubr.bf16.gmra.mxu0 %v3595
    %v5195 = vpop.f32.mrf.mxu0
    %v5196 = vadd.f32 %v3864, %v5195
    %v5197 = vpop.f32.mrf.mxu0
    %v5198 = vadd.f32 %v3868, %v5197
    %v5199 = vpop.f32.mrf.mxu0
    %v5200 = vadd.f32 %v3864, %v5199
    %v5201 = vpop.f32.mrf.mxu0
    %v5202 = vadd.f32 %v3868, %v5201
    %5203 = vdwg.mxu0
    %5204 = vmatprep.subr.bf16.mxu0 %v4742
    %5205 = vmatpush1.bf16.msra.mxu0 %v4741
    %5206 = vmatprep.subr.bf16.mxu0 %v4738
    %5207 = vmatpush1.bf16.msra.mxu0 %v4737
    %5208 = vmatprep.subr.bf16.mxu0 %v4734
    %5209 = vmatpush1.bf16.msra.mxu0 %v4733
    %5210 = vmatprep.subr.bf16.mxu0 %v4730
    %5211 = vmatpush1.bf16.msra.mxu0 %v4729
    %5212 = vmatprep.subr.bf16.mxu0 %v4726
    %5213 = vmatpush1.bf16.msra.mxu0 %v4725
    %5214 = vmatprep.subr.bf16.mxu0 %v4722
    %5215 = vmatpush1.bf16.msra.mxu0 %v4721
    %5216 = vmatprep.subr.bf16.mxu0 %v4718
    %5217 = vmatpush1.bf16.msra.mxu0 %v4717
    %5218 = vmatprep.subr.bf16.mxu0 %v4714
    %5219 = vmatpush1.bf16.msra.mxu0 %v4713
    %5220 = vmatprep.subr.bf16.mxu0 %v4774
    %5221 = vmatpush2.bf16.msra.mxu0 %v4773
    %5222 = vmatprep.subr.bf16.mxu0 %v4770
    %5223 = vmatpush2.bf16.msra.mxu0 %v4769
    %5224 = vmatprep.subr.bf16.mxu0 %v4766
    %5225 = vmatpush2.bf16.msra.mxu0 %v4765
    %5226 = vmatprep.subr.bf16.mxu0 %v4762
    %5227 = vmatpush2.bf16.msra.mxu0 %v4761
    %5228 = vmatprep.subr.bf16.mxu0 %v4758
    %5229 = vmatpush2.bf16.msra.mxu0 %v4757
    %5230 = vmatprep.subr.bf16.mxu0 %v4754
    %5231 = vmatpush2.bf16.msra.mxu0 %v4753
    %5232 = vmatprep.subr.bf16.mxu0 %v4750
    %5233 = vmatpush2.bf16.msra.mxu0 %v4749
    %5234 = vmatprep.subr.bf16.mxu0 %v4746
    %5235 = vmatpush2.bf16.msra.mxu0 %v4745
    %5236 = vmatprep.mubr.bf16.mxu0 %v3598
    %5237 = vmatmul.mubr.bf16.gmra.mxu0 %v3597
    %v5238 = vpop.f32.mrf.mxu0
    %v5239 = vadd.f32 %v5196, %v5238
    %v5240 = vpop.f32.mrf.mxu0
    %v5241 = vadd.f32 %v5198, %v5240
    %v5242 = vpop.f32.mrf.mxu0
    %v5243 = vadd.f32 %v5200, %v5242
    %v5244 = vpop.f32.mrf.mxu0
    %v5245 = vadd.f32 %v5202, %v5244
    %5246 = vdwg.mxu0
    %5247 = vmatprep.subr.bf16.mxu0 %v4806
    %5248 = vmatpush1.bf16.msra.mxu0 %v4805
    %5249 = vmatprep.subr.bf16.mxu0 %v4802
    %5250 = vmatpush1.bf16.msra.mxu0 %v4801
    %5251 = vmatprep.subr.bf16.mxu0 %v4798
    %5252 = vmatpush1.bf16.msra.mxu0 %v4797
    %5253 = vmatprep.subr.bf16.mxu0 %v4794
    %5254 = vmatpush1.bf16.msra.mxu0 %v4793
    %5255 = vmatprep.subr.bf16.mxu0 %v4790
    %5256 = vmatpush1.bf16.msra.mxu0 %v4789
    %5257 = vmatprep.subr.bf16.mxu0 %v4786
    %5258 = vmatpush1.bf16.msra.mxu0 %v4785
    %5259 = vmatprep.subr.bf16.mxu0 %v4782
    %5260 = vmatpush1.bf16.msra.mxu0 %v4781
    %5261 = vmatprep.subr.bf16.mxu0 %v4778
    %5262 = vmatpush1.bf16.msra.mxu0 %v4777
    %5263 = vmatprep.subr.bf16.mxu0 %v4838
    %5264 = vmatpush2.bf16.msra.mxu0 %v4837
    %5265 = vmatprep.subr.bf16.mxu0 %v4834
    %5266 = vmatpush2.bf16.msra.mxu0 %v4833
    %5267 = vmatprep.subr.bf16.mxu0 %v4830
    %5268 = vmatpush2.bf16.msra.mxu0 %v4829
    %5269 = vmatprep.subr.bf16.mxu0 %v4826
    %5270 = vmatpush2.bf16.msra.mxu0 %v4825
    %5271 = vmatprep.subr.bf16.mxu0 %v4822
    %5272 = vmatpush2.bf16.msra.mxu0 %v4821
    %5273 = vmatprep.subr.bf16.mxu0 %v4818
    %5274 = vmatpush2.bf16.msra.mxu0 %v4817
    %5275 = vmatprep.subr.bf16.mxu0 %v4814
    %5276 = vmatpush2.bf16.msra.mxu0 %v4813
    %5277 = vmatprep.subr.bf16.mxu0 %v4810
    %5278 = vmatpush2.bf16.msra.mxu0 %v4809
    %5279 = vmatprep.mubr.bf16.mxu0 %v3600
    %5280 = vmatmul.mubr.bf16.gmra.mxu0 %v3599
    %v5281 = vpop.f32.mrf.mxu0
    %v5282 = vadd.f32 %v5239, %v5281
    %v5283 = vpop.f32.mrf.mxu0
    %v5284 = vadd.f32 %v5241, %v5283
    %v5285 = vpop.f32.mrf.mxu0
    %v5286 = vadd.f32 %v5243, %v5285
    %v5287 = vpop.f32.mrf.mxu0
    %v5288 = vadd.f32 %v5245, %v5287
    %5289 = vdwg.mxu0
    %5290 = vmatprep.subr.bf16.mxu0 %v4870
    %5291 = vmatpush1.bf16.msra.mxu0 %v4869
    %5292 = vmatprep.subr.bf16.mxu0 %v4866
    %5293 = vmatpush1.bf16.msra.mxu0 %v4865
    %5294 = vmatprep.subr.bf16.mxu0 %v4862
    %5295 = vmatpush1.bf16.msra.mxu0 %v4861
    %5296 = vmatprep.subr.bf16.mxu0 %v4858
    %5297 = vmatpush1.bf16.msra.mxu0 %v4857
    %5298 = vmatprep.subr.bf16.mxu0 %v4854
    %5299 = vmatpush1.bf16.msra.mxu0 %v4853
    %5300 = vmatprep.subr.bf16.mxu0 %v4850
    %5301 = vmatpush1.bf16.msra.mxu0 %v4849
    %5302 = vmatprep.subr.bf16.mxu0 %v4846
    %5303 = vmatpush1.bf16.msra.mxu0 %v4845
    %5304 = vmatprep.subr.bf16.mxu0 %v4842
    %5305 = vmatpush1.bf16.msra.mxu0 %v4841
    %5306 = vmatprep.subr.bf16.mxu0 %v4902
    %5307 = vmatpush2.bf16.msra.mxu0 %v4901
    %5308 = vmatprep.subr.bf16.mxu0 %v4898
    %5309 = vmatpush2.bf16.msra.mxu0 %v4897
    %5310 = vmatprep.subr.bf16.mxu0 %v4894
    %5311 = vmatpush2.bf16.msra.mxu0 %v4893
    %5312 = vmatprep.subr.bf16.mxu0 %v4890
    %5313 = vmatpush2.bf16.msra.mxu0 %v4889
    %5314 = vmatprep.subr.bf16.mxu0 %v4886
    %5315 = vmatpush2.bf16.msra.mxu0 %v4885
    %5316 = vmatprep.subr.bf16.mxu0 %v4882
    %5317 = vmatpush2.bf16.msra.mxu0 %v4881
    %5318 = vmatprep.subr.bf16.mxu0 %v4878
    %5319 = vmatpush2.bf16.msra.mxu0 %v4877
    %5320 = vmatprep.subr.bf16.mxu0 %v4874
    %5321 = vmatpush2.bf16.msra.mxu0 %v4873
    %5322 = vmatprep.mubr.bf16.mxu0 %v3602
    %5323 = vmatmul.mubr.bf16.gmra.mxu0 %v3601
    %v5324 = vpop.f32.mrf.mxu0
    %v5325 = vadd.f32 %v5282, %v5324
    %v5326 = vpop.f32.mrf.mxu0
    %v5327 = vadd.f32 %v5284, %v5326
    %v5328 = vpop.f32.mrf.mxu0
    %v5329 = vadd.f32 %v5286, %v5328
    %v5330 = vpop.f32.mrf.mxu0
    %v5331 = vadd.f32 %v5288, %v5330
    %5332 = vdwg.mxu0
    %5333 = vmatprep.subr.bf16.mxu0 %v4680
    %5334 = vmatpush1.bf16.msra.mxu0 %v4679
    %5335 = vmatprep.subr.bf16.mxu0 %v4676
    %5336 = vmatpush1.bf16.msra.mxu0 %v4675
    %5337 = vmatprep.subr.bf16.mxu0 %v4672
    %5338 = vmatpush1.bf16.msra.mxu0 %v4671
    %5339 = vmatprep.subr.bf16.mxu0 %v4668
    %5340 = vmatpush1.bf16.msra.mxu0 %v4667
    %5341 = vmatprep.subr.bf16.mxu0 %v4664
    %5342 = vmatpush1.bf16.msra.mxu0 %v4663
    %5343 = vmatprep.subr.bf16.mxu0 %v4660
    %5344 = vmatpush1.bf16.msra.mxu0 %v4659
    %5345 = vmatprep.subr.bf16.mxu0 %v4656
    %5346 = vmatpush1.bf16.msra.mxu0 %v4655
    %5347 = vmatprep.subr.bf16.mxu0 %v4652
    %5348 = vmatpush1.bf16.msra.mxu0 %v4651
    %5349 = vmatprep.subr.bf16.mxu0 %v4712
    %5350 = vmatpush2.bf16.msra.mxu0 %v4711
    %5351 = vmatprep.subr.bf16.mxu0 %v4708
    %5352 = vmatpush2.bf16.msra.mxu0 %v4707
    %5353 = vmatprep.subr.bf16.mxu0 %v4704
    %5354 = vmatpush2.bf16.msra.mxu0 %v4703
    %5355 = vmatprep.subr.bf16.mxu0 %v4700
    %5356 = vmatpush2.bf16.msra.mxu0 %v4699
    %5357 = vmatprep.subr.bf16.mxu0 %v4696
    %5358 = vmatpush2.bf16.msra.mxu0 %v4695
    %5359 = vmatprep.subr.bf16.mxu0 %v4692
    %5360 = vmatpush2.bf16.msra.mxu0 %v4691
    %5361 = vmatprep.subr.bf16.mxu0 %v4688
    %5362 = vmatpush2.bf16.msra.mxu0 %v4687
    %5363 = vmatprep.subr.bf16.mxu0 %v4684
    %5364 = vmatpush2.bf16.msra.mxu0 %v4683
    %5365 = vmatprep.mubr.bf16.mxu0 %v3596
    %5366 = vmatmul.mubr.bf16.gmra.mxu0 %v3595
    %v5367 = vpop.f32.mrf.mxu0
    %v5368 = vadd.f32 %v3872, %v5367
    %v5369 = vpop.f32.mrf.mxu0
    %v5370 = vadd.f32 %v3876, %v5369
    %v5371 = vpop.f32.mrf.mxu0
    %v5372 = vadd.f32 %v3872, %v5371
    %v5373 = vpop.f32.mrf.mxu0
    %v5374 = vadd.f32 %v3876, %v5373
    %5375 = vdwg.mxu0
    %5376 = vmatprep.subr.bf16.mxu0 %v4744
    %5377 = vmatpush1.bf16.msra.mxu0 %v4743
    %5378 = vmatprep.subr.bf16.mxu0 %v4740
    %5379 = vmatpush1.bf16.msra.mxu0 %v4739
    %5380 = vmatprep.subr.bf16.mxu0 %v4736
    %5381 = vmatpush1.bf16.msra.mxu0 %v4735
    %5382 = vmatprep.subr.bf16.mxu0 %v4732
    %5383 = vmatpush1.bf16.msra.mxu0 %v4731
    %5384 = vmatprep.subr.bf16.mxu0 %v4728
    %5385 = vmatpush1.bf16.msra.mxu0 %v4727
    %5386 = vmatprep.subr.bf16.mxu0 %v4724
    %5387 = vmatpush1.bf16.msra.mxu0 %v4723
    %5388 = vmatprep.subr.bf16.mxu0 %v4720
    %5389 = vmatpush1.bf16.msra.mxu0 %v4719
    %5390 = vmatprep.subr.bf16.mxu0 %v4716
    %5391 = vmatpush1.bf16.msra.mxu0 %v4715
    %5392 = vmatprep.subr.bf16.mxu0 %v4776
    %5393 = vmatpush2.bf16.msra.mxu0 %v4775
    %5394 = vmatprep.subr.bf16.mxu0 %v4772
    %5395 = vmatpush2.bf16.msra.mxu0 %v4771
    %5396 = vmatprep.subr.bf16.mxu0 %v4768
    %5397 = vmatpush2.bf16.msra.mxu0 %v4767
    %5398 = vmatprep.subr.bf16.mxu0 %v4764
    %5399 = vmatpush2.bf16.msra.mxu0 %v4763
    %5400 = vmatprep.subr.bf16.mxu0 %v4760
    %5401 = vmatpush2.bf16.msra.mxu0 %v4759
    %5402 = vmatprep.subr.bf16.mxu0 %v4756
    %5403 = vmatpush2.bf16.msra.mxu0 %v4755
    %5404 = vmatprep.subr.bf16.mxu0 %v4752
    %5405 = vmatpush2.bf16.msra.mxu0 %v4751
    %5406 = vmatprep.subr.bf16.mxu0 %v4748
    %5407 = vmatpush2.bf16.msra.mxu0 %v4747
    %5408 = vmatprep.mubr.bf16.mxu0 %v3598
    %5409 = vmatmul.mubr.bf16.gmra.mxu0 %v3597
    %v5410 = vpop.f32.mrf.mxu0
    %v5411 = vadd.f32 %v5368, %v5410
    %v5412 = vpop.f32.mrf.mxu0
    %v5413 = vadd.f32 %v5370, %v5412
    %v5414 = vpop.f32.mrf.mxu0
    %v5415 = vadd.f32 %v5372, %v5414
    %v5416 = vpop.f32.mrf.mxu0
    %v5417 = vadd.f32 %v5374, %v5416
    %5418 = vdwg.mxu0
    %5419 = vmatprep.subr.bf16.mxu0 %v4808
    %5420 = vmatpush1.bf16.msra.mxu0 %v4807
    %5421 = vmatprep.subr.bf16.mxu0 %v4804
    %5422 = vmatpush1.bf16.msra.mxu0 %v4803
    %5423 = vmatprep.subr.bf16.mxu0 %v4800
    %5424 = vmatpush1.bf16.msra.mxu0 %v4799
    %5425 = vmatprep.subr.bf16.mxu0 %v4796
    %5426 = vmatpush1.bf16.msra.mxu0 %v4795
    %5427 = vmatprep.subr.bf16.mxu0 %v4792
    %5428 = vmatpush1.bf16.msra.mxu0 %v4791
    %5429 = vmatprep.subr.bf16.mxu0 %v4788
    %5430 = vmatpush1.bf16.msra.mxu0 %v4787
    %5431 = vmatprep.subr.bf16.mxu0 %v4784
    %5432 = vmatpush1.bf16.msra.mxu0 %v4783
    %5433 = vmatprep.subr.bf16.mxu0 %v4780
    %5434 = vmatpush1.bf16.msra.mxu0 %v4779
    %5435 = vmatprep.subr.bf16.mxu0 %v4840
    %5436 = vmatpush2.bf16.msra.mxu0 %v4839
    %5437 = vmatprep.subr.bf16.mxu0 %v4836
    %5438 = vmatpush2.bf16.msra.mxu0 %v4835
    %5439 = vmatprep.subr.bf16.mxu0 %v4832
    %5440 = vmatpush2.bf16.msra.mxu0 %v4831
    %5441 = vmatprep.subr.bf16.mxu0 %v4828
    %5442 = vmatpush2.bf16.msra.mxu0 %v4827
    %5443 = vmatprep.subr.bf16.mxu0 %v4824
    %5444 = vmatpush2.bf16.msra.mxu0 %v4823
    %5445 = vmatprep.subr.bf16.mxu0 %v4820
    %5446 = vmatpush2.bf16.msra.mxu0 %v4819
    %5447 = vmatprep.subr.bf16.mxu0 %v4816
    %5448 = vmatpush2.bf16.msra.mxu0 %v4815
    %5449 = vmatprep.subr.bf16.mxu0 %v4812
    %5450 = vmatpush2.bf16.msra.mxu0 %v4811
    %5451 = vmatprep.mubr.bf16.mxu0 %v3600
    %5452 = vmatmul.mubr.bf16.gmra.mxu0 %v3599
    %v5453 = vpop.f32.mrf.mxu0
    %v5454 = vadd.f32 %v5411, %v5453
    %v5455 = vpop.f32.mrf.mxu0
    %v5456 = vadd.f32 %v5413, %v5455
    %v5457 = vpop.f32.mrf.mxu0
    %v5458 = vadd.f32 %v5415, %v5457
    %v5459 = vpop.f32.mrf.mxu0
    %v5460 = vadd.f32 %v5417, %v5459
    %5461 = vdwg.mxu0
    %5462 = vmatprep.subr.bf16.mxu0 %v4872
    %5463 = vmatpush1.bf16.msra.mxu0 %v4871
    %5464 = vmatprep.subr.bf16.mxu0 %v4868
    %5465 = vmatpush1.bf16.msra.mxu0 %v4867
    %5466 = vmatprep.subr.bf16.mxu0 %v4864
    %5467 = vmatpush1.bf16.msra.mxu0 %v4863
    %5468 = vmatprep.subr.bf16.mxu0 %v4860
    %5469 = vmatpush1.bf16.msra.mxu0 %v4859
    %5470 = vmatprep.subr.bf16.mxu0 %v4856
    %5471 = vmatpush1.bf16.msra.mxu0 %v4855
    %5472 = vmatprep.subr.bf16.mxu0 %v4852
    %5473 = vmatpush1.bf16.msra.mxu0 %v4851
    %5474 = vmatprep.subr.bf16.mxu0 %v4848
    %5475 = vmatpush1.bf16.msra.mxu0 %v4847
    %5476 = vmatprep.subr.bf16.mxu0 %v4844
    %5477 = vmatpush1.bf16.msra.mxu0 %v4843
    %5478 = vmatprep.subr.bf16.mxu0 %v4904
    %5479 = vmatpush2.bf16.msra.mxu0 %v4903
    %5480 = vmatprep.subr.bf16.mxu0 %v4900
    %5481 = vmatpush2.bf16.msra.mxu0 %v4899
    %5482 = vmatprep.subr.bf16.mxu0 %v4896
    %5483 = vmatpush2.bf16.msra.mxu0 %v4895
    %5484 = vmatprep.subr.bf16.mxu0 %v4892
    %5485 = vmatpush2.bf16.msra.mxu0 %v4891
    %5486 = vmatprep.subr.bf16.mxu0 %v4888
    %5487 = vmatpush2.bf16.msra.mxu0 %v4887
    %5488 = vmatprep.subr.bf16.mxu0 %v4884
    %5489 = vmatpush2.bf16.msra.mxu0 %v4883
    %5490 = vmatprep.subr.bf16.mxu0 %v4880
    %5491 = vmatpush2.bf16.msra.mxu0 %v4879
    %5492 = vmatprep.subr.bf16.mxu0 %v4876
    %5493 = vmatpush2.bf16.msra.mxu0 %v4875
    %5494 = vmatprep.mubr.bf16.mxu0 %v3602
    %5495 = vmatmul.mubr.bf16.gmra.mxu0 %v3601
    %v5496 = vpop.f32.mrf.mxu0
    %v5497 = vadd.f32 %v5454, %v5496
    %v5498 = vpop.f32.mrf.mxu0
    %v5499 = vadd.f32 %v5456, %v5498
    %v5500 = vpop.f32.mrf.mxu0
    %v5501 = vadd.f32 %v5458, %v5500
    %v5502 = vpop.f32.mrf.mxu0
    %v5503 = vadd.f32 %v5460, %v5502
    %5504 = vdwg.mxu0
    %v5505 = vmax.f32 %v5325, 0.0
    %v5506 = vmax.f32 %v5327, 0.0
    %v5507 = vmax.f32 %v5497, 0.0
    %v5508 = vmax.f32 %v5499, 0.0
    %v5509 = vmax.f32 %v5329, 0.0
    %v5510 = vmax.f32 %v5331, 0.0
    %v5511 = vmax.f32 %v5501, 0.0
    %v5512 = vmax.f32 %v5503, 0.0
    %v5513 = vpack.c.bf16 %v5509, %v5505
    %v5514 = vpack.c.bf16 %v5510, %v5506
    %v5515 = vpack.c.bf16 %v5511, %v5507
    %v5516 = vpack.c.bf16 %v5512, %v5508
    %v5517 = vld [vmem:[#allocation11] sm:$0xf]
    %v5518 = vld [vmem:[#allocation11 + $0x4] sm:$0xf]
    %v5519 = vld [vmem:[#allocation11 + $0x8] sm:$0xf]
    %v5520 = vld [vmem:[#allocation11 + $0xc] sm:$0xf]
    %v5521 = vld [vmem:[#allocation11 + $0x10] sm:$0xf]
    %v5522 = vld [vmem:[#allocation11 + $0x14] sm:$0xf]
    %v5523 = vld [vmem:[#allocation11 + $0x18] sm:$0xf]
    %v5524 = vld [vmem:[#allocation11 + $0x1c] sm:$0xf]
    %v5525 = vld [vmem:[#allocation11 + $0x20] sm:$0xf]
    %v5526 = vld [vmem:[#allocation11 + $0x24] sm:$0xf]
    %v5527 = vld [vmem:[#allocation11 + $0x28] sm:$0xf]
    %v5528 = vld [vmem:[#allocation11 + $0x2c] sm:$0xf]
    %v5529 = vld [vmem:[#allocation11 + $0x30] sm:$0xf]
    %v5530 = vld [vmem:[#allocation11 + $0x34] sm:$0xf]
    %v5531 = vld [vmem:[#allocation11 + $0x38] sm:$0xf]
    %v5532 = vld [vmem:[#allocation11 + $0x3c] sm:$0xf]
    %v5533 = vld [vmem:[#allocation11 + $0x40] sm:$0xf]
    %v5534 = vld [vmem:[#allocation11 + $0x44] sm:$0xf]
    %v5535 = vld [vmem:[#allocation11 + $0x48] sm:$0xf]
    %v5536 = vld [vmem:[#allocation11 + $0x4c] sm:$0xf]
    %v5537 = vld [vmem:[#allocation11 + $0x50] sm:$0xf]
    %v5538 = vld [vmem:[#allocation11 + $0x54] sm:$0xf]
    %v5539 = vld [vmem:[#allocation11 + $0x58] sm:$0xf]
    %v5540 = vld [vmem:[#allocation11 + $0x5c] sm:$0xf]
    %v5541 = vld [vmem:[#allocation11 + $0x60] sm:$0xf]
    %v5542 = vld [vmem:[#allocation11 + $0x64] sm:$0xf]
    %v5543 = vld [vmem:[#allocation11 + $0x68] sm:$0xf]
    %v5544 = vld [vmem:[#allocation11 + $0x6c] sm:$0xf]
    %v5545 = vld [vmem:[#allocation11 + $0x70] sm:$0xf]
    %v5546 = vld [vmem:[#allocation11 + $0x74] sm:$0xf]
    %v5547 = vld [vmem:[#allocation11 + $0x78] sm:$0xf]
    %v5548 = vld [vmem:[#allocation11 + $0x7c] sm:$0xf]
    %v5549 = vld [vmem:[#allocation11 + $0x80] sm:$0xf]
    %v5550 = vld [vmem:[#allocation11 + $0x84] sm:$0xf]
    %v5551 = vld [vmem:[#allocation11 + $0x88] sm:$0xf]
    %v5552 = vld [vmem:[#allocation11 + $0x8c] sm:$0xf]
    %v5553 = vld [vmem:[#allocation11 + $0x90] sm:$0xf]
    %v5554 = vld [vmem:[#allocation11 + $0x94] sm:$0xf]
    %v5555 = vld [vmem:[#allocation11 + $0x98] sm:$0xf]
    %v5556 = vld [vmem:[#allocation11 + $0x9c] sm:$0xf]
    %v5557 = vld [vmem:[#allocation11 + $0xa0] sm:$0xf]
    %v5558 = vld [vmem:[#allocation11 + $0xa4] sm:$0xf]
    %v5559 = vld [vmem:[#allocation11 + $0xa8] sm:$0xf]
    %v5560 = vld [vmem:[#allocation11 + $0xac] sm:$0xf]
    %v5561 = vld [vmem:[#allocation11 + $0xb0] sm:$0xf]
    %v5562 = vld [vmem:[#allocation11 + $0xb4] sm:$0xf]
    %v5563 = vld [vmem:[#allocation11 + $0xb8] sm:$0xf]
    %v5564 = vld [vmem:[#allocation11 + $0xbc] sm:$0xf]
    %v5565 = vld [vmem:[#allocation11 + $0xc0] sm:$0xf]
    %v5566 = vld [vmem:[#allocation11 + $0xc4] sm:$0xf]
    %v5567 = vld [vmem:[#allocation11 + $0xc8] sm:$0xf]
    %v5568 = vld [vmem:[#allocation11 + $0xcc] sm:$0xf]
    %v5569 = vld [vmem:[#allocation11 + $0xd0] sm:$0xf]
    %v5570 = vld [vmem:[#allocation11 + $0xd4] sm:$0xf]
    %v5571 = vld [vmem:[#allocation11 + $0xd8] sm:$0xf]
    %v5572 = vld [vmem:[#allocation11 + $0xdc] sm:$0xf]
    %v5573 = vld [vmem:[#allocation11 + $0xe0] sm:$0xf]
    %v5574 = vld [vmem:[#allocation11 + $0xe4] sm:$0xf]
    %v5575 = vld [vmem:[#allocation11 + $0xe8] sm:$0xf]
    %v5576 = vld [vmem:[#allocation11 + $0xec] sm:$0xf]
    %v5577 = vld [vmem:[#allocation11 + $0xf0] sm:$0xf]
    %v5578 = vld [vmem:[#allocation11 + $0xf4] sm:$0xf]
    %v5579 = vld [vmem:[#allocation11 + $0xf8] sm:$0xf]
    %v5580 = vld [vmem:[#allocation11 + $0xfc] sm:$0xf]
    %v5581 = vld [vmem:[#allocation13] sm:$0x1]
    %v5583 = vlaneseq
    %v5584 = vshrl.u32 %v5583, 7
    %v5585 = vsub.s32 0, %v5584
    %v5586 = vrot.slane %v5581, %v5585
    %v5652 = vunpack.c.l.b16 %v5517
    %v5653 = vunpack.c.l.b16 %v5518
    %v5654 = vunpack.c.l.b16 %v5519
    %v5655 = vunpack.c.l.b16 %v5520
    %v5656 = vunpack.c.l.b16 %v5521
    %v5657 = vunpack.c.l.b16 %v5522
    %v5658 = vunpack.c.l.b16 %v5523
    %v5659 = vunpack.c.l.b16 %v5524
    %v5660 = vunpack.c.l.b16 %v5525
    %v5661 = vunpack.c.l.b16 %v5526
    %v5662 = vunpack.c.l.b16 %v5527
    %v5663 = vunpack.c.l.b16 %v5528
    %v5664 = vunpack.c.l.b16 %v5529
    %v5665 = vunpack.c.l.b16 %v5530
    %v5666 = vunpack.c.l.b16 %v5531
    %v5667 = vunpack.c.l.b16 %v5532
    %v5668 = vunpack.c.l.b16 %v5533
    %v5669 = vunpack.c.l.b16 %v5534
    %v5670 = vunpack.c.l.b16 %v5535
    %v5671 = vunpack.c.l.b16 %v5536
    %v5672 = vunpack.c.l.b16 %v5537
    %v5673 = vunpack.c.l.b16 %v5538
    %v5674 = vunpack.c.l.b16 %v5539
    %v5675 = vunpack.c.l.b16 %v5540
    %v5676 = vunpack.c.l.b16 %v5541
    %v5677 = vunpack.c.l.b16 %v5542
    %v5678 = vunpack.c.l.b16 %v5543
    %v5679 = vunpack.c.l.b16 %v5544
    %v5680 = vunpack.c.l.b16 %v5545
    %v5681 = vunpack.c.l.b16 %v5546
    %v5682 = vunpack.c.l.b16 %v5547
    %v5683 = vunpack.c.l.b16 %v5548
    %v5684 = vunpack.c.l.b16 %v5549
    %v5685 = vunpack.c.l.b16 %v5550
    %v5686 = vunpack.c.l.b16 %v5551
    %v5687 = vunpack.c.l.b16 %v5552
    %v5688 = vunpack.c.l.b16 %v5553
    %v5689 = vunpack.c.l.b16 %v5554
    %v5690 = vunpack.c.l.b16 %v5555
    %v5691 = vunpack.c.l.b16 %v5556
    %v5692 = vunpack.c.l.b16 %v5557
    %v5693 = vunpack.c.l.b16 %v5558
    %v5694 = vunpack.c.l.b16 %v5559
    %v5695 = vunpack.c.l.b16 %v5560
    %v5696 = vunpack.c.l.b16 %v5561
    %v5697 = vunpack.c.l.b16 %v5562
    %v5698 = vunpack.c.l.b16 %v5563
    %v5699 = vunpack.c.l.b16 %v5564
    %v5700 = vunpack.c.l.b16 %v5565
    %v5701 = vunpack.c.l.b16 %v5566
    %v5702 = vunpack.c.l.b16 %v5567
    %v5703 = vunpack.c.l.b16 %v5568
    %v5704 = vunpack.c.l.b16 %v5569
    %v5705 = vunpack.c.l.b16 %v5570
    %v5706 = vunpack.c.l.b16 %v5571
    %v5707 = vunpack.c.l.b16 %v5572
    %v5708 = vunpack.c.l.b16 %v5573
    %v5709 = vunpack.c.l.b16 %v5574
    %v5710 = vunpack.c.l.b16 %v5575
    %v5711 = vunpack.c.l.b16 %v5576
    %v5712 = vunpack.c.l.b16 %v5577
    %v5713 = vunpack.c.l.b16 %v5578
    %v5714 = vunpack.c.l.b16 %v5579
    %v5715 = vunpack.c.l.b16 %v5580
    %v5716 = vpack.c.b16 %v5653, %v5652
    %v5717 = vpack.c.b16 %v5655, %v5654
    %v5718 = vpack.c.b16 %v5657, %v5656
    %v5719 = vpack.c.b16 %v5659, %v5658
    %v5720 = vpack.c.b16 %v5661, %v5660
    %v5721 = vpack.c.b16 %v5663, %v5662
    %v5722 = vpack.c.b16 %v5665, %v5664
    %v5723 = vpack.c.b16 %v5667, %v5666
    %v5724 = vpack.c.b16 %v5669, %v5668
    %v5725 = vpack.c.b16 %v5671, %v5670
    %v5726 = vpack.c.b16 %v5673, %v5672
    %v5727 = vpack.c.b16 %v5675, %v5674
    %v5728 = vpack.c.b16 %v5677, %v5676
    %v5729 = vpack.c.b16 %v5679, %v5678
    %v5730 = vpack.c.b16 %v5681, %v5680
    %v5731 = vpack.c.b16 %v5683, %v5682
    %v5732 = vpack.c.b16 %v5685, %v5684
    %v5733 = vpack.c.b16 %v5687, %v5686
    %v5734 = vpack.c.b16 %v5689, %v5688
    %v5735 = vpack.c.b16 %v5691, %v5690
    %v5736 = vpack.c.b16 %v5693, %v5692
    %v5737 = vpack.c.b16 %v5695, %v5694
    %v5738 = vpack.c.b16 %v5697, %v5696
    %v5739 = vpack.c.b16 %v5699, %v5698
    %v5740 = vpack.c.b16 %v5701, %v5700
    %v5741 = vpack.c.b16 %v5703, %v5702
    %v5742 = vpack.c.b16 %v5705, %v5704
    %v5743 = vpack.c.b16 %v5707, %v5706
    %v5744 = vpack.c.b16 %v5709, %v5708
    %v5745 = vpack.c.b16 %v5711, %v5710
    %v5746 = vpack.c.b16 %v5713, %v5712
    %v5747 = vpack.c.b16 %v5715, %v5714
    %5780 = vmatprep.subr.bf16.mxu0 0
    %5781 = vmatpush1.bf16.msra.mxu0 %v5723
    %5782 = vmatprep.subr.bf16.mxu0 0
    %5783 = vmatpush1.bf16.msra.mxu0 %v5722
    %5784 = vmatprep.subr.bf16.mxu0 0
    %5785 = vmatpush1.bf16.msra.mxu0 %v5721
    %5786 = vmatprep.subr.bf16.mxu0 0
    %5787 = vmatpush1.bf16.msra.mxu0 %v5720
    %5788 = vmatprep.subr.bf16.mxu0 0
    %5789 = vmatpush1.bf16.msra.mxu0 %v5719
    %5790 = vmatprep.subr.bf16.mxu0 0
    %5791 = vmatpush1.bf16.msra.mxu0 %v5718
    %5792 = vmatprep.subr.bf16.mxu0 0
    %5793 = vmatpush1.bf16.msra.mxu0 %v5717
    %5794 = vmatprep.subr.bf16.mxu0 0
    %5795 = vmatpush1.bf16.msra.mxu0 %v5716
    %5796 = vmatprep.subr.bf16.mxu0 0
    %5797 = vmatpush2.bf16.msra.mxu0 %v5731
    %5798 = vmatprep.subr.bf16.mxu0 0
    %5799 = vmatpush2.bf16.msra.mxu0 %v5730
    %5800 = vmatprep.subr.bf16.mxu0 0
    %5801 = vmatpush2.bf16.msra.mxu0 %v5729
    %5802 = vmatprep.subr.bf16.mxu0 0
    %5803 = vmatpush2.bf16.msra.mxu0 %v5728
    %5804 = vmatprep.subr.bf16.mxu0 0
    %5805 = vmatpush2.bf16.msra.mxu0 %v5727
    %5806 = vmatprep.subr.bf16.mxu0 0
    %5807 = vmatpush2.bf16.msra.mxu0 %v5726
    %5808 = vmatprep.subr.bf16.mxu0 0
    %5809 = vmatpush2.bf16.msra.mxu0 %v5725
    %5810 = vmatprep.subr.bf16.mxu0 0
    %5811 = vmatpush2.bf16.msra.mxu0 %v5724
    %5812 = vmatprep.mubr.bf16.mxu0 %v5514
    %5813 = vmatmul.mubr.bf16.gmra.mxu0 %v5513
    %v5814 = vpop.f32.mrf.mxu0
    %v5815 = vadd.f32 %v5586, %v5814
    %v5816 = vpop.f32.mrf.mxu0
    %v5817 = vpop.f32.mrf.mxu0
    %v5818 = vadd.f32 %v5586, %v5817
    %v5819 = vpop.f32.mrf.mxu0
    %5820 = vdwg.mxu0
    %5821 = vmatprep.subr.bf16.mxu0 0
    %5822 = vmatpush1.bf16.msra.mxu0 %v5739
    %5823 = vmatprep.subr.bf16.mxu0 0
    %5824 = vmatpush1.bf16.msra.mxu0 %v5738
    %5825 = vmatprep.subr.bf16.mxu0 0
    %5826 = vmatpush1.bf16.msra.mxu0 %v5737
    %5827 = vmatprep.subr.bf16.mxu0 0
    %5828 = vmatpush1.bf16.msra.mxu0 %v5736
    %5829 = vmatprep.subr.bf16.mxu0 0
    %5830 = vmatpush1.bf16.msra.mxu0 %v5735
    %5831 = vmatprep.subr.bf16.mxu0 0
    %5832 = vmatpush1.bf16.msra.mxu0 %v5734
    %5833 = vmatprep.subr.bf16.mxu0 0
    %5834 = vmatpush1.bf16.msra.mxu0 %v5733
    %5835 = vmatprep.subr.bf16.mxu0 0
    %5836 = vmatpush1.bf16.msra.mxu0 %v5732
    %5837 = vmatprep.subr.bf16.mxu0 0
    %5838 = vmatpush2.bf16.msra.mxu0 %v5747
    %5839 = vmatprep.subr.bf16.mxu0 0
    %5840 = vmatpush2.bf16.msra.mxu0 %v5746
    %5841 = vmatprep.subr.bf16.mxu0 0
    %5842 = vmatpush2.bf16.msra.mxu0 %v5745
    %5843 = vmatprep.subr.bf16.mxu0 0
    %5844 = vmatpush2.bf16.msra.mxu0 %v5744
    %5845 = vmatprep.subr.bf16.mxu0 0
    %5846 = vmatpush2.bf16.msra.mxu0 %v5743
    %5847 = vmatprep.subr.bf16.mxu0 0
    %5848 = vmatpush2.bf16.msra.mxu0 %v5742
    %5849 = vmatprep.subr.bf16.mxu0 0
    %5850 = vmatpush2.bf16.msra.mxu0 %v5741
    %5851 = vmatprep.subr.bf16.mxu0 0
    %5852 = vmatpush2.bf16.msra.mxu0 %v5740
    %5853 = vmatprep.mubr.bf16.mxu0 %v5516
    %5854 = vmatmul.mubr.bf16.gmra.mxu0 %v5515
    %v5855 = vpop.f32.mrf.mxu0
    %v5856 = vadd.f32 %v5815, %v5855
    %v5857 = vpop.f32.mrf.mxu0
    %v5858 = vpop.f32.mrf.mxu0
    %v5859 = vadd.f32 %v5818, %v5858
    %v5860 = vpop.f32.mrf.mxu0
    %5861 = vdwg.mxu0
    %5862 = vst [vmem:[#allocation14] sm:$0xff] %v5856
    %5863 = vst [vmem:[#allocation14 + $0x8] sm:$0xff] %v5859
    // Predicated region
    $region58: #{tpu_custom_call.1} parent=1 // pred_check
      _
    $region59: #{tpu_custom_call.1} parent=1 // pred_check_branch
      %5865 = sbr.rel (0) target = $region61
    $region60: #{tpu_custom_call.1} parent=1 // pred_region
      %s5867 = ssub.s32 256, 256
      %5868 = vsyncadd [#allocation4], %s5867
      %s5869 = sshll.u32 [#allocation14], 4
      %s5870 = int_to_ptr.vmem [resolvable:$true] %s5869
      %5875 = dma.vmem_to_hbm [thread:$0]  %s5870, 256, %s7, [#allocation4], 128, 128, 8
    $region61: #{tpu_custom_call.1} parent=1 // pred_fallthru
      _
    // Predicated region
    $region62: #{tpu_custom_call.1} parent=1 // pred_check
      _
    $region63: #{tpu_custom_call.1} parent=1 // pred_check_branch
      %5877 = sbr.rel (0) target = $region65
    $region64: #{tpu_custom_call.1} parent=1 // pred_region
      %5878 = dma.done [#allocation4], 256
    $region65: #{tpu_custom_call.1} parent=1 // pred_fallthru
      _
    %5879 = vsyncpa [#allocation3], 1
    %5880 = vsyncpa [#allocation6], 1
    %5881 = vsyncpa [#allocation9], 1
    %5882 = vsyncpa [#allocation12], 1
    %5883 = vsyncpa [#allocation4], 1

// kernel: tpu_custom_call.1
$region0: #{tpu_custom_call.1}
  #allocation0 [shape = 'u32[]', space=smem, size = 0x4, offset = 0x4, fixed_abs, tag = 'smem constant byte address 0x4 - core index']
  #allocation1 [shape = 'u32[144,128]{1,0:T(1,128)}', space=vmem, size = 0x12000, scoped, tag = 'internal scratch']
  %s0 = inlined_call_operand.hbm [shape: bf16[16,896], index: 0, kind: input, shape index: {}]
  %s1 = inlined_call_operand.hbm [shape: bf16[896,1024], index: 1, kind: input, shape index: {}]
  %s2 = inlined_call_operand.hbm [shape: f32[1,1024], index: 2, kind: input, shape index: {}]
  %s3 = inlined_call_operand.hbm [shape: bf16[1024,512], index: 3, kind: input, shape index: {}]
  %s4 = inlined_call_operand.hbm [shape: f32[1,512], index: 4, kind: input, shape index: {}]
  %s5 = inlined_call_operand.hbm [shape: bf16[512,128], index: 5, kind: input, shape index: {}]
  %s6 = inlined_call_operand.hbm [shape: f32[1,128], index: 6, kind: input, shape index: {}]
  %s7 = inlined_call_operand.hbm [shape: f32[16,128], index: 7, kind: output, shape index: {}]
  %s8 = sld [smem:[#allocation0]]
  $region66: #{tpu_custom_call.1} parent=0
    _
  %s10 = ssub.s32 1, %s8
  %s11 = scalar_select 0, %s10, %s8
  $region1: #{tpu_custom_call.1} parent=0
    #allocation2 [shape = 'u8[28672]{0}', space=vmem, size = 0x7000, scoped, tag = 'input window, operand 0, single buffered']
    #allocation3 [shape = 's32[1]{0}', space=sflag, size = 0x4, scoped, tag = 'scoped memory for tpu_custom_call.1']
    #allocation4 [shape = 's32[1]{0}', space=sflag, size = 0x4, scoped, tag = 'scoped memory for tpu_custom_call.1']
    #allocation5 [shape = 'u8[1835008]{0}', space=vmem, size = 0x1c0000, scoped, tag = 'input window, operand 1, single buffered']
    #allocation6 [shape = 's32[1]{0}', space=sflag, size = 0x4, scoped, tag = 'scoped memory for tpu_custom_call.1']
    #allocation7 [shape = 'u8[4096]{0}', space=vmem, size = 0x1000, scoped, tag = 'input window, operand 2, single buffered']
    #allocation8 [shape = 'u8[1048576]{0}', space=vmem, size = 0x100000, scoped, tag = 'input window, operand 3, single buffered']
    #allocation9 [shape = 's32[1]{0}', space=sflag, size = 0x4, scoped, tag = 'scoped memory for tpu_custom_call.1']
    #allocation10 [shape = 'u8[2048]{0}', space=vmem, size = 0x800, scoped, tag = 'input window, operand 4, single buffered']
    #allocation11 [shape = 'u8[131072]{0}', space=vmem, size = 0x20000, scoped, tag = 'input window, operand 5, single buffered']
    #allocation12 [shape = 's32[1]{0}', space=sflag, size = 0x4, scoped, tag = 'scoped memory for tpu_custom_call.1']
    #allocation13 [shape = 'u8[512]{0}', space=vmem, size = 0x400, scoped, tag = 'input window, operand 6, single buffered']
    #allocation14 [shape = 'u8[8192]{0}', space=vmem, size = 0x2000, scoped, tag = 'output window, operand 0, single buffered']
    %12 = vsyncpa [#allocation3], 0
    %13 = vsyncpa [#allocation6], 0
    %14 = vsyncpa [#allocation9], 0
    %15 = vsyncpa [#allocation12], 0
    %16 = vsyncpa [#allocation4], 0
    // Predicated region
    $region2: #{tpu_custom_call.1} parent=1 // pred_check
      _
    $region3: #{tpu_custom_call.1} parent=1 // pred_check_branch
      %18 = sbr.rel (0) target = $region5
    $region4: #{tpu_custom_call.1} parent=1 // pred_region
      %s20 = ssub.s32 896, 896
      %21 = vsyncadd [#allocation3], %s20
      %s22 = sshll.u32 [#allocation2], 4
      %s23 = int_to_ptr.vmem [resolvable:$true] %s22
      %28 = dma.hbm_to_vmem [thread:$0]  %s0, 896, %s23, [#allocation3], 448, 448, 28
    $region5: #{tpu_custom_call.1} parent=1 // pred_fallthru
      _
    // Predicated region
    $region6: #{tpu_custom_call.1} parent=1 // pred_check
      _
    $region7: #{tpu_custom_call.1} parent=1 // pred_check_branch
      %30 = sbr.rel (0) target = $region9
    $region8: #{tpu_custom_call.1} parent=1 // pred_region
      %s32 = ssub.s32 57344, 57344
      %33 = vsyncadd [#allocation6], %s32
      %s34 = sshll.u32 [#allocation5], 4
      %s35 = int_to_ptr.vmem [resolvable:$true] %s34
      %40 = dma.hbm_to_vmem [thread:$0]  %s1, 57344, %s35, [#allocation6], 512, 512, 32
    $region9: #{tpu_custom_call.1} parent=1 // pred_fallthru
      _
    // Predicated region
    $region10: #{tpu_custom_call.1} parent=1 // pred_check
      _
    $region11: #{tpu_custom_call.1} parent=1 // pred_check_branch
      %42 = sbr.rel (0) target = $region13
    $region12: #{tpu_custom_call.1} parent=1 // pred_region
      %s44 = ssub.s32 128, 128
      %45 = vsyncadd [#allocation6], %s44
      %s47 = sshll.u32 [#allocation7], 4
      %s48 = int_to_ptr.vmem [resolvable:$true] %s47
      %50 = dma.hbm_to_vmem [thread:$0]  %s2, 128, %s48, [#allocation6]
    $region13: #{tpu_custom_call.1} parent=1 // pred_fallthru
      _
    // Predicated region
    $region14: #{tpu_custom_call.1} parent=1 // pred_check
      _
    $region15: #{tpu_custom_call.1} parent=1 // pred_check_branch
      %52 = sbr.rel (0) target = $region17
    $region16: #{tpu_custom_call.1} parent=1 // pred_region
      %s54 = ssub.s32 32768, 32768
      %55 = vsyncadd [#allocation9], %s54
      %s56 = sshll.u32 [#allocation8], 4
      %s57 = int_to_ptr.vmem [resolvable:$true] %s56
      %62 = dma.hbm_to_vmem [thread:$0]  %s3, 32768, %s57, [#allocation9], 256, 256, 16
    $region17: #{tpu_custom_call.1} parent=1 // pred_fallthru
      _
    // Predicated region
    $region18: #{tpu_custom_call.1} parent=1 // pred_check
      _
    $region19: #{tpu_custom_call.1} parent=1 // pred_check_branch
      %64 = sbr.rel (0) target = $region21
    $region20: #{tpu_custom_call.1} parent=1 // pred_region
      %s66 = ssub.s32 64, 64
      %67 = vsyncadd [#allocation9], %s66
      %s69 = sshll.u32 [#allocation10], 4
      %s70 = int_to_ptr.vmem [resolvable:$true] %s69
      %72 = dma.hbm_to_vmem [thread:$0]  %s4, 64, %s70, [#allocation9]
    $region21: #{tpu_custom_call.1} parent=1 // pred_fallthru
      _
    // Predicated region
    $region22: #{tpu_custom_call.1} parent=1 // pred_check
      _
    $region23: #{tpu_custom_call.1} parent=1 // pred_check_branch
      %74 = sbr.rel (0) target = $region25
    $region24: #{tpu_custom_call.1} parent=1 // pred_region
      %s76 = ssub.s32 4096, 4096
      %77 = vsyncadd [#allocation12], %s76
      %s78 = sshll.u32 [#allocation11], 4
      %s79 = int_to_ptr.vmem [resolvable:$true] %s78
      %84 = dma.hbm_to_vmem [thread:$0]  %s5, 4096, %s79, [#allocation12], 64, 64, 4
    $region25: #{tpu_custom_call.1} parent=1 // pred_fallthru
      _
    // Predicated region
    $region26: #{tpu_custom_call.1} parent=1 // pred_check
      _
    $region27: #{tpu_custom_call.1} parent=1 // pred_check_branch
      %86 = sbr.rel (0) target = $region29
    $region28: #{tpu_custom_call.1} parent=1 // pred_region
      %s88 = ssub.s32 16, 16
      %89 = vsyncadd [#allocation12], %s88
      %s91 = sshll.u32 [#allocation13], 4
      %s92 = int_to_ptr.vmem [resolvable:$true] %s91
      %94 = dma.hbm_to_vmem [thread:$0]  %s6, 16, %s92, [#allocation12]
    $region29: #{tpu_custom_call.1} parent=1 // pred_fallthru
      _
    // Predicated region
    $region30: #{tpu_custom_call.1} parent=1 // pred_check
      _
    $region31: #{tpu_custom_call.1} parent=1 // pred_check_branch
      %96 = sbr.rel (0) target = $region33
    $region32: #{tpu_custom_call.1} parent=1 // pred_region
      %97 = dma.done [#allocation3], 896
    $region33: #{tpu_custom_call.1} parent=1 // pred_fallthru
      _
    // Predicated region
    $region34: #{tpu_custom_call.1} parent=1 // pred_check
      _
    $region35: #{tpu_custom_call.1} parent=1 // pred_check_branch
      %99 = sbr.rel (0) target = $region37
    $region36: #{tpu_custom_call.1} parent=1 // pred_region
      %100 = dma.done [#allocation6], 57344
    $region37: #{tpu_custom_call.1} parent=1 // pred_fallthru
      _
    // Predicated region
    $region38: #{tpu_custom_call.1} parent=1 // pred_check
      _
    $region39: #{tpu_custom_call.1} parent=1 // pred_check_branch
      %102 = sbr.rel (0) target = $region41
    $region40: #{tpu_custom_call.1} parent=1 // pred_region
      %103 = dma.done [#allocation6], 128
    $region41: #{tpu_custom_call.1} parent=1 // pred_fallthru
      _
    // Predicated region
    $region42: #{tpu_custom_call.1} parent=1 // pred_check
      _
    $region43: #{tpu_custom_call.1} parent=1 // pred_check_branch
      %105 = sbr.rel (0) target = $region45
    $region44: #{tpu_custom_call.1} parent=1 // pred_region
      %106 = dma.done [#allocation9], 32768
    $region45: #{tpu_custom_call.1} parent=1 // pred_fallthru
      _
    // Predicated region
    $region46: #{tpu_custom_call.1} parent=1 // pred_check
      _
    $region47: #{tpu_custom_call.1} parent=1 // pred_check_branch
      %108 = sbr.rel (0) target = $region49
    $region48: #{tpu_custom_call.1} parent=1 // pred_region
      %109 = dma.done [#allocation9], 64
    $region49: #{tpu_custom_call.1} parent=1 // pred_fallthru
      _
    // Predicated region
    $region50: #{tpu_custom_call.1} parent=1 // pred_check
      _
    $region51: #{tpu_custom_call.1} parent=1 // pred_check_branch
      %111 = sbr.rel (0) target = $region53
    $region52: #{tpu_custom_call.1} parent=1 // pred_region
      %112 = dma.done [#allocation12], 4096
    $region53: #{tpu_custom_call.1} parent=1 // pred_fallthru
      _
    // Predicated region
    $region54: #{tpu_custom_call.1} parent=1 // pred_check
      _
    $region55: #{tpu_custom_call.1} parent=1 // pred_check_branch
      %114 = sbr.rel (0) target = $region57
    $region56: #{tpu_custom_call.1} parent=1 // pred_region
      %115 = dma.done [#allocation12], 16
    $region57: #{tpu_custom_call.1} parent=1 // pred_fallthru
      _
    %v117 = vld [vmem:[#allocation2] sm:$0xff]
    %v118 = vld [vmem:[#allocation2 + $0x8] sm:$0xff]
    %v119 = vld [vmem:[#allocation2 + $0x10] sm:$0xff]
    %v120 = vld [vmem:[#allocation2 + $0x18] sm:$0xf]
    %v121 = vld [vmem:[#allocation2 + $0x1c] sm:$0xff]
    %v122 = vld [vmem:[#allocation2 + $0x24] sm:$0xff]
    %v123 = vld [vmem:[#allocation2 + $0x2c] sm:$0xff]
    %v124 = vld [vmem:[#allocation2 + $0x34] sm:$0xf]
    %v125 = vld [vmem:[#allocation5] sm:$0xff]
    %v126 = vld [vmem:[#allocation5 + $0x8] sm:$0xff]
    %v127 = vld [vmem:[#allocation5 + $0x10] sm:$0xff]
    %v128 = vld [vmem:[#allocation5 + $0x18] sm:$0xff]
    %v129 = vld [vmem:[#allocation5 + $0x20] sm:$0xff]
    %v130 = vld [vmem:[#allocation5 + $0x28] sm:$0xff]
    %v131 = vld [vmem:[#allocation5 + $0x30] sm:$0xff]
    %v132 = vld [vmem:[#allocation5 + $0x38] sm:$0xff]
    %v133 = vld [vmem:[#allocation5 + $0x40] sm:$0xff]
    %v134 = vld [vmem:[#allocation5 + $0x48] sm:$0xff]
    %v135 = vld [vmem:[#allocation5 + $0x50] sm:$0xff]
    %v136 = vld [vmem:[#allocation5 + $0x58] sm:$0xff]
    %v137 = vld [vmem:[#allocation5 + $0x60] sm:$0xff]
    %v138 = vld [vmem:[#allocation5 + $0x68] sm:$0xff]
    %v139 = vld [vmem:[#allocation5 + $0x70] sm:$0xff]
    %v140 = vld [vmem:[#allocation5 + $0x78] sm:$0xff]
    %v141 = vld [vmem:[#allocation5 + $0x80] sm:$0xff]
    %v142 = vld [vmem:[#allocation5 + $0x88] sm:$0xff]
    %v143 = vld [vmem:[#allocation5 + $0x90] sm:$0xff]
    %v144 = vld [vmem:[#allocation5 + $0x98] sm:$0xff]
    %v145 = vld [vmem:[#allocation5 + $0xa0] sm:$0xff]
    %v146 = vld [vmem:[#allocation5 + $0xa8] sm:$0xff]
    %v147 = vld [vmem:[#allocation5 + $0xb0] sm:$0xff]
    %v148 = vld [vmem:[#allocation5 + $0xb8] sm:$0xff]
    %v149 = vld [vmem:[#allocation5 + $0xc0] sm:$0xff]
    %v150 = vld [vmem:[#allocation5 + $0xc8] sm:$0xff]
    %v151 = vld [vmem:[#allocation5 + $0xd0] sm:$0xff]
    %v152 = vld [vmem:[#allocation5 + $0xd8] sm:$0xff]
    %v153 = vld [vmem:[#allocation5 + $0xe0] sm:$0xff]
    %v154 = vld [vmem:[#allocation5 + $0xe8] sm:$0xff]
    %v155 = vld [vmem:[#allocation5 + $0xf0] sm:$0xff]
    %v156 = vld [vmem:[#allocation5 + $0xf8] sm:$0xff]
    %v157 = vld [vmem:[#allocation5 + $0x100] sm:$0xff]
    %v158 = vld [vmem:[#allocation5 + $0x108] sm:$0xff]
    %v159 = vld [vmem:[#allocation5 + $0x110] sm:$0xff]
    %v160 = vld [vmem:[#allocation5 + $0x118] sm:$0xff]
    %v161 = vld [vmem:[#allocation5 + $0x120] sm:$0xff]
    %v162 = vld [vmem:[#allocation5 + $0x128] sm:$0xff]
    %v163 = vld [vmem:[#allocation5 + $0x130] sm:$0xff]
    %v164 = vld [vmem:[#allocation5 + $0x138] sm:$0xff]
    %v165 = vld [vmem:[#allocation5 + $0x140] sm:$0xff]
    %v166 = vld [vmem:[#allocation5 + $0x148] sm:$0xff]
    %v167 = vld [vmem:[#allocation5 + $0x150] sm:$0xff]
    %v168 = vld [vmem:[#allocation5 + $0x158] sm:$0xff]
    %v169 = vld [vmem:[#allocation5 + $0x160] sm:$0xff]
    %v170 = vld [vmem:[#allocation5 + $0x168] sm:$0xff]
    %v171 = vld [vmem:[#allocation5 + $0x170] sm:$0xff]
    %v172 = vld [vmem:[#allocation5 + $0x178] sm:$0xff]
    %v173 = vld [vmem:[#allocation5 + $0x180] sm:$0xff]
    %v174 = vld [vmem:[#allocation5 + $0x188] sm:$0xff]
    %v175 = vld [vmem:[#allocation5 + $0x190] sm:$0xff]
    %v176 = vld [vmem:[#allocation5 + $0x198] sm:$0xff]
    %v177 = vld [vmem:[#allocation5 + $0x1a0] sm:$0xff]
    %v178 = vld [vmem:[#allocation5 + $0x1a8] sm:$0xff]
    %v179 = vld [vmem:[#allocation5 + $0x1b0] sm:$0xff]
    %v180 = vld [vmem:[#allocation5 + $0x1b8] sm:$0xff]
    %v181 = vld [vmem:[#allocation5 + $0x1c0] sm:$0xff]
    %v182 = vld [vmem:[#allocation5 + $0x1c8] sm:$0xff]
    %v183 = vld [vmem:[#allocation5 + $0x1d0] sm:$0xff]
    %v184 = vld [vmem:[#allocation5 + $0x1d8] sm:$0xff]
    %v185 = vld [vmem:[#allocation5 + $0x1e0] sm:$0xff]
    %v186 = vld [vmem:[#allocation5 + $0x1e8] sm:$0xff]
    %v187 = vld [vmem:[#allocation5 + $0x1f0] sm:$0xff]
    %v188 = vld [vmem:[#allocation5 + $0x1f8] sm:$0xff]
    %v189 = vld [vmem:[#allocation5 + $0x200] sm:$0xff]
    %v190 = vld [vmem:[#allocation5 + $0x208] sm:$0xff]
    %v191 = vld [vmem:[#allocation5 + $0x210] sm:$0xff]
    %v192 = vld [vmem:[#allocation5 + $0x218] sm:$0xff]
    %v193 = vld [vmem:[#allocation5 + $0x220] sm:$0xff]
    %v194 = vld [vmem:[#allocation5 + $0x228] sm:$0xff]
    %v195 = vld [vmem:[#allocation5 + $0x230] sm:$0xff]
    %v196 = vld [vmem:[#allocation5 + $0x238] sm:$0xff]
    %v197 = vld [vmem:[#allocation5 + $0x240] sm:$0xff]
    %v198 = vld [vmem:[#allocation5 + $0x248] sm:$0xff]
    %v199 = vld [vmem:[#allocation5 + $0x250] sm:$0xff]
    %v200 = vld [vmem:[#allocation5 + $0x258] sm:$0xff]
    %v201 = vld [vmem:[#allocation5 + $0x260] sm:$0xff]
    %v202 = vld [vmem:[#allocation5 + $0x268] sm:$0xff]
    %v203 = vld [vmem:[#allocation5 + $0x270] sm:$0xff]
    %v204 = vld [vmem:[#allocation5 + $0x278] sm:$0xff]
    %v205 = vld [vmem:[#allocation5 + $0x280] sm:$0xff]
    %v206 = vld [vmem:[#allocation5 + $0x288] sm:$0xff]
    %v207 = vld [vmem:[#allocation5 + $0x290] sm:$0xff]
    %v208 = vld [vmem:[#allocation5 + $0x298] sm:$0xff]
    %v209 = vld [vmem:[#allocation5 + $0x2a0] sm:$0xff]
    %v210 = vld [vmem:[#allocation5 + $0x2a8] sm:$0xff]
    %v211 = vld [vmem:[#allocation5 + $0x2b0] sm:$0xff]
    %v212 = vld [vmem:[#allocation5 + $0x2b8] sm:$0xff]
    %v213 = vld [vmem:[#allocation5 + $0x2c0] sm:$0xff]
    %v214 = vld [vmem:[#allocation5 + $0x2c8] sm:$0xff]
    %v215 = vld [vmem:[#allocation5 + $0x2d0] sm:$0xff]
    %v216 = vld [vmem:[#allocation5 + $0x2d8] sm:$0xff]
    %v217 = vld [vmem:[#allocation5 + $0x2e0] sm:$0xff]
    %v218 = vld [vmem:[#allocation5 + $0x2e8] sm:$0xff]
    %v219 = vld [vmem:[#allocation5 + $0x2f0] sm:$0xff]
    %v220 = vld [vmem:[#allocation5 + $0x2f8] sm:$0xff]
    %v221 = vld [vmem:[#allocation5 + $0x300] sm:$0xff]
    %v222 = vld [vmem:[#allocation5 + $0x308] sm:$0xff]
    %v223 = vld [vmem:[#allocation5 + $0x310] sm:$0xff]
    %v224 = vld [vmem:[#allocation5 + $0x318] sm:$0xff]
    %v225 = vld [vmem:[#allocation5 + $0x320] sm:$0xff]
    %v226 = vld [vmem:[#allocation5 + $0x328] sm:$0xff]
    %v227 = vld [vmem:[#allocation5 + $0x330] sm:$0xff]
    %v228 = vld [vmem:[#allocation5 + $0x338] sm:$0xff]
    %v229 = vld [vmem:[#allocation5 + $0x340] sm:$0xff]
    %v230 = vld [vmem:[#allocation5 + $0x348] sm:$0xff]
    %v231 = vld [vmem:[#allocation5 + $0x350] sm:$0xff]
    %v232 = vld [vmem:[#allocation5 + $0x358] sm:$0xff]
    %v233 = vld [vmem:[#allocation5 + $0x360] sm:$0xff]
    %v234 = vld [vmem:[#allocation5 + $0x368] sm:$0xff]
    %v235 = vld [vmem:[#allocation5 + $0x370] sm:$0xff]
    %v236 = vld [vmem:[#allocation5 + $0x378] sm:$0xff]
    %v237 = vld [vmem:[#allocation5 + $0x380] sm:$0xff]
    %v238 = vld [vmem:[#allocation5 + $0x388] sm:$0xff]
    %v239 = vld [vmem:[#allocation5 + $0x390] sm:$0xff]
    %v240 = vld [vmem:[#allocation5 + $0x398] sm:$0xff]
    %v241 = vld [vmem:[#allocation5 + $0x3a0] sm:$0xff]
    %v242 = vld [vmem:[#allocation5 + $0x3a8] sm:$0xff]
    %v243 = vld [vmem:[#allocation5 + $0x3b0] sm:$0xff]
    %v244 = vld [vmem:[#allocation5 + $0x3b8] sm:$0xff]
    %v245 = vld [vmem:[#allocation5 + $0x3c0] sm:$0xff]
    %v246 = vld [vmem:[#allocation5 + $0x3c8] sm:$0xff]
    %v247 = vld [vmem:[#allocation5 + $0x3d0] sm:$0xff]
    %v248 = vld [vmem:[#allocation5 + $0x3d8] sm:$0xff]
    %v249 = vld [vmem:[#allocation5 + $0x3e0] sm:$0xff]
    %v250 = vld [vmem:[#allocation5 + $0x3e8] sm:$0xff]
    %v251 = vld [vmem:[#allocation5 + $0x3f0] sm:$0xff]
    %v252 = vld [vmem:[#allocation5 + $0x3f8] sm:$0xff]
    %v253 = vld [vmem:[#allocation5 + $0x400] sm:$0xff]
    %v254 = vld [vmem:[#allocation5 + $0x408] sm:$0xff]
    %v255 = vld [vmem:[#allocation5 + $0x410] sm:$0xff]
    %v256 = vld [vmem:[#allocation5 + $0x418] sm:$0xff]
    %v257 = vld [vmem:[#allocation5 + $0x420] sm:$0xff]
    %v258 = vld [vmem:[#allocation5 + $0x428] sm:$0xff]
    %v259 = vld [vmem:[#allocation5 + $0x430] sm:$0xff]
    %v260 = vld [vmem:[#allocation5 + $0x438] sm:$0xff]
    %v261 = vld [vmem:[#allocation5 + $0x440] sm:$0xff]
    %v262 = vld [vmem:[#allocation5 + $0x448] sm:$0xff]
    %v263 = vld [vmem:[#allocation5 + $0x450] sm:$0xff]
    %v264 = vld [vmem:[#allocation5 + $0x458] sm:$0xff]
    %v265 = vld [vmem:[#allocation5 + $0x460] sm:$0xff]
    %v266 = vld [vmem:[#allocation5 + $0x468] sm:$0xff]
    %v267 = vld [vmem:[#allocation5 + $0x470] sm:$0xff]
    %v268 = vld [vmem:[#allocation5 + $0x478] sm:$0xff]
    %v269 = vld [vmem:[#allocation5 + $0x480] sm:$0xff]
    %v270 = vld [vmem:[#allocation5 + $0x488] sm:$0xff]
    %v271 = vld [vmem:[#allocation5 + $0x490] sm:$0xff]
    %v272 = vld [vmem:[#allocation5 + $0x498] sm:$0xff]
    %v273 = vld [vmem:[#allocation5 + $0x4a0] sm:$0xff]
    %v274 = vld [vmem:[#allocation5 + $0x4a8] sm:$0xff]
    %v275 = vld [vmem:[#allocation5 + $0x4b0] sm:$0xff]
    %v276 = vld [vmem:[#allocation5 + $0x4b8] sm:$0xff]
    %v277 = vld [vmem:[#allocation5 + $0x4c0] sm:$0xff]
    %v278 = vld [vmem:[#allocation5 + $0x4c8] sm:$0xff]
    %v279 = vld [vmem:[#allocation5 + $0x4d0] sm:$0xff]
    %v280 = vld [vmem:[#allocation5 + $0x4d8] sm:$0xff]
    %v281 = vld [vmem:[#allocation5 + $0x4e0] sm:$0xff]
    %v282 = vld [vmem:[#allocation5 + $0x4e8] sm:$0xff]
    %v283 = vld [vmem:[#allocation5 + $0x4f0] sm:$0xff]
    %v284 = vld [vmem:[#allocation5 + $0x4f8] sm:$0xff]
    %v285 = vld [vmem:[#allocation5 + $0x500] sm:$0xff]
    %v286 = vld [vmem:[#allocation5 + $0x508] sm:$0xff]
    %v287 = vld [vmem:[#allocation5 + $0x510] sm:$0xff]
    %v288 = vld [vmem:[#allocation5 + $0x518] sm:$0xff]
    %v289 = vld [vmem:[#allocation5 + $0x520] sm:$0xff]
    %v290 = vld [vmem:[#allocation5 + $0x528] sm:$0xff]
    %v291 = vld [vmem:[#allocation5 + $0x530] sm:$0xff]
    %v292 = vld [vmem:[#allocation5 + $0x538] sm:$0xff]
    %v293 = vld [vmem:[#allocation5 + $0x540] sm:$0xff]
    %v294 = vld [vmem:[#allocation5 + $0x548] sm:$0xff]
    %v295 = vld [vmem:[#allocation5 + $0x550] sm:$0xff]
    %v296 = vld [vmem:[#allocation5 + $0x558] sm:$0xff]
    %v297 = vld [vmem:[#allocation5 + $0x560] sm:$0xff]
    %v298 = vld [vmem:[#allocation5 + $0x568] sm:$0xff]
    %v299 = vld [vmem:[#allocation5 + $0x570] sm:$0xff]
    %v300 = vld [vmem:[#allocation5 + $0x578] sm:$0xff]
    %v301 = vld [vmem:[#allocation5 + $0x580] sm:$0xff]
    %v302 = vld [vmem:[#allocation5 + $0x588] sm:$0xff]
    %v303 = vld [vmem:[#allocation5 + $0x590] sm:$0xff]
    %v304 = vld [vmem:[#allocation5 + $0x598] sm:$0xff]
    %v305 = vld [vmem:[#allocation5 + $0x5a0] sm:$0xff]
    %v306 = vld [vmem:[#allocation5 + $0x5a8] sm:$0xff]
    %v307 = vld [vmem:[#allocation5 + $0x5b0] sm:$0xff]
    %v308 = vld [vmem:[#allocation5 + $0x5b8] sm:$0xff]
    %v309 = vld [vmem:[#allocation5 + $0x5c0] sm:$0xff]
    %v310 = vld [vmem:[#allocation5 + $0x5c8] sm:$0xff]
    %v311 = vld [vmem:[#allocation5 + $0x5d0] sm:$0xff]
    %v312 = vld [vmem:[#allocation5 + $0x5d8] sm:$0xff]
    %v313 = vld [vmem:[#allocation5 + $0x5e0] sm:$0xff]
    %v314 = vld [vmem:[#allocation5 + $0x5e8] sm:$0xff]
    %v315 = vld [vmem:[#allocation5 + $0x5f0] sm:$0xff]
    %v316 = vld [vmem:[#allocation5 + $0x5f8] sm:$0xff]
    %v317 = vld [vmem:[#allocation5 + $0x600] sm:$0xff]
    %v318 = vld [vmem:[#allocation5 + $0x608] sm:$0xff]
    %v319 = vld [vmem:[#allocation5 + $0x610] sm:$0xff]
    %v320 = vld [vmem:[#allocation5 + $0x618] sm:$0xff]
    %v321 = vld [vmem:[#allocation5 + $0x620] sm:$0xff]
    %v322 = vld [vmem:[#allocation5 + $0x628] sm:$0xff]
    %v323 = vld [vmem:[#allocation5 + $0x630] sm:$0xff]
    %v324 = vld [vmem:[#allocation5 + $0x638] sm:$0xff]
    %v325 = vld [vmem:[#allocation5 + $0x640] sm:$0xff]
    %v326 = vld [vmem:[#allocation5 + $0x648] sm:$0xff]
    %v327 = vld [vmem:[#allocation5 + $0x650] sm:$0xff]
    %v328 = vld [vmem:[#allocation5 + $0x658] sm:$0xff]
    %v329 = vld [vmem:[#allocation5 + $0x660] sm:$0xff]
    %v330 = vld [vmem:[#allocation5 + $0x668] sm:$0xff]
    %v331 = vld [vmem:[#allocation5 + $0x670] sm:$0xff]
    %v332 = vld [vmem:[#allocation5 + $0x678] sm:$0xff]
    %v333 = vld [vmem:[#allocation5 + $0x680] sm:$0xff]
    %v334 = vld [vmem:[#allocation5 + $0x688] sm:$0xff]
    %v335 = vld [vmem:[#allocation5 + $0x690] sm:$0xff]
    %v336 = vld [vmem:[#allocation5 + $0x698] sm:$0xff]
    %v337 = vld [vmem:[#allocation5 + $0x6a0] sm:$0xff]
    %v338 = vld [vmem:[#allocation5 + $0x6a8] sm:$0xff]
    %v339 = vld [vmem:[#allocation5 + $0x6b0] sm:$0xff]
    %v340 = vld [vmem:[#allocation5 + $0x6b8] sm:$0xff]
    %v341 = vld [vmem:[#allocation5 + $0x6c0] sm:$0xff]
    %v342 = vld [vmem:[#allocation5 + $0x6c8] sm:$0xff]
    %v343 = vld [vmem:[#allocation5 + $0x6d0] sm:$0xff]
    %v344 = vld [vmem:[#allocation5 + $0x6d8] sm:$0xff]
    %v345 = vld [vmem:[#allocation5 + $0x6e0] sm:$0xff]
    %v346 = vld [vmem:[#allocation5 + $0x6e8] sm:$0xff]
    %v347 = vld [vmem:[#allocation5 + $0x6f0] sm:$0xff]
    %v348 = vld [vmem:[#allocation5 + $0x6f8] sm:$0xff]
    %v349 = vld [vmem:[#allocation5 + $0x700] sm:$0xff]
    %v350 = vld [vmem:[#allocation5 + $0x708] sm:$0xff]
    %v351 = vld [vmem:[#allocation5 + $0x710] sm:$0xff]
    %v352 = vld [vmem:[#allocation5 + $0x718] sm:$0xff]
    %v353 = vld [vmem:[#allocation5 + $0x720] sm:$0xff]
    %v354 = vld [vmem:[#allocation5 + $0x728] sm:$0xff]
    %v355 = vld [vmem:[#allocation5 + $0x730] sm:$0xff]
    %v356 = vld [vmem:[#allocation5 + $0x738] sm:$0xff]
    %v357 = vld [vmem:[#allocation5 + $0x740] sm:$0xff]
    %v358 = vld [vmem:[#allocation5 + $0x748] sm:$0xff]
    %v359 = vld [vmem:[#allocation5 + $0x750] sm:$0xff]
    %v360 = vld [vmem:[#allocation5 + $0x758] sm:$0xff]
    %v361 = vld [vmem:[#allocation5 + $0x760] sm:$0xff]
    %v362 = vld [vmem:[#allocation5 + $0x768] sm:$0xff]
    %v363 = vld [vmem:[#allocation5 + $0x770] sm:$0xff]
    %v364 = vld [vmem:[#allocation5 + $0x778] sm:$0xff]
    %v365 = vld [vmem:[#allocation5 + $0x780] sm:$0xff]
    %v366 = vld [vmem:[#allocation5 + $0x788] sm:$0xff]
    %v367 = vld [vmem:[#allocation5 + $0x790] sm:$0xff]
    %v368 = vld [vmem:[#allocation5 + $0x798] sm:$0xff]
    %v369 = vld [vmem:[#allocation5 + $0x7a0] sm:$0xff]
    %v370 = vld [vmem:[#allocation5 + $0x7a8] sm:$0xff]
    %v371 = vld [vmem:[#allocation5 + $0x7b0] sm:$0xff]
    %v372 = vld [vmem:[#allocation5 + $0x7b8] sm:$0xff]
    %v373 = vld [vmem:[#allocation5 + $0x7c0] sm:$0xff]
    %v374 = vld [vmem:[#allocation5 + $0x7c8] sm:$0xff]
    %v375 = vld [vmem:[#allocation5 + $0x7d0] sm:$0xff]
    %v376 = vld [vmem:[#allocation5 + $0x7d8] sm:$0xff]
    %v377 = vld [vmem:[#allocation5 + $0x7e0] sm:$0xff]
    %v378 = vld [vmem:[#allocation5 + $0x7e8] sm:$0xff]
    %v379 = vld [vmem:[#allocation5 + $0x7f0] sm:$0xff]
    %v380 = vld [vmem:[#allocation5 + $0x7f8] sm:$0xff]
    %v381 = vld [vmem:[#allocation5 + $0x800] sm:$0xff]
    %v382 = vld [vmem:[#allocation5 + $0x808] sm:$0xff]
    %v383 = vld [vmem:[#allocation5 + $0x810] sm:$0xff]
    %v384 = vld [vmem:[#allocation5 + $0x818] sm:$0xff]
    %v385 = vld [vmem:[#allocation5 + $0x820] sm:$0xff]
    %v386 = vld [vmem:[#allocation5 + $0x828] sm:$0xff]
    %v387 = vld [vmem:[#allocation5 + $0x830] sm:$0xff]
    %v388 = vld [vmem:[#allocation5 + $0x838] sm:$0xff]
    %v389 = vld [vmem:[#allocation5 + $0x840] sm:$0xff]
    %v390 = vld [vmem:[#allocation5 + $0x848] sm:$0xff]
    %v391 = vld [vmem:[#allocation5 + $0x850] sm:$0xff]
    %v392 = vld [vmem:[#allocation5 + $0x858] sm:$0xff]
    %v393 = vld [vmem:[#allocation5 + $0x860] sm:$0xff]
    %v394 = vld [vmem:[#allocation5 + $0x868] sm:$0xff]
    %v395 = vld [vmem:[#allocation5 + $0x870] sm:$0xff]
    %v396 = vld [vmem:[#allocation5 + $0x878] sm:$0xff]
    %v397 = vld [vmem:[#allocation5 + $0x880] sm:$0xff]
    %v398 = vld [vmem:[#allocation5 + $0x888] sm:$0xff]
    %v399 = vld [vmem:[#allocation5 + $0x890] sm:$0xff]
    %v400 = vld [vmem:[#allocation5 + $0x898] sm:$0xff]
    %v401 = vld [vmem:[#allocation5 + $0x8a0] sm:$0xff]
    %v402 = vld [vmem:[#allocation5 + $0x8a8] sm:$0xff]
    %v403 = vld [vmem:[#allocation5 + $0x8b0] sm:$0xff]
    %v404 = vld [vmem:[#allocation5 + $0x8b8] sm:$0xff]
    %v405 = vld [vmem:[#allocation5 + $0x8c0] sm:$0xff]
    %v406 = vld [vmem:[#allocation5 + $0x8c8] sm:$0xff]
    %v407 = vld [vmem:[#allocation5 + $0x8d0] sm:$0xff]
    %v408 = vld [vmem:[#allocation5 + $0x8d8] sm:$0xff]
    %v409 = vld [vmem:[#allocation5 + $0x8e0] sm:$0xff]
    %v410 = vld [vmem:[#allocation5 + $0x8e8] sm:$0xff]
    %v411 = vld [vmem:[#allocation5 + $0x8f0] sm:$0xff]
    %v412 = vld [vmem:[#allocation5 + $0x8f8] sm:$0xff]
    %v413 = vld [vmem:[#allocation5 + $0x900] sm:$0xff]
    %v414 = vld [vmem:[#allocation5 + $0x908] sm:$0xff]
    %v415 = vld [vmem:[#allocation5 + $0x910] sm:$0xff]
    %v416 = vld [vmem:[#allocation5 + $0x918] sm:$0xff]
    %v417 = vld [vmem:[#allocation5 + $0x920] sm:$0xff]
    %v418 = vld [vmem:[#allocation5 + $0x928] sm:$0xff]
    %v419 = vld [vmem:[#allocation5 + $0x930] sm:$0xff]
    %v420 = vld [vmem:[#allocation5 + $0x938] sm:$0xff]
    %v421 = vld [vmem:[#allocation5 + $0x940] sm:$0xff]
    %v422 = vld [vmem:[#allocation5 + $0x948] sm:$0xff]
    %v423 = vld [vmem:[#allocation5 + $0x950] sm:$0xff]
    %v424 = vld [vmem:[#allocation5 + $0x958] sm:$0xff]
    %v425 = vld [vmem:[#allocation5 + $0x960] sm:$0xff]
    %v426 = vld [vmem:[#allocation5 + $0x968] sm:$0xff]
    %v427 = vld [vmem:[#allocation5 + $0x970] sm:$0xff]
    %v428 = vld [vmem:[#allocation5 + $0x978] sm:$0xff]
    %v429 = vld [vmem:[#allocation5 + $0x980] sm:$0xff]
    %v430 = vld [vmem:[#allocation5 + $0x988] sm:$0xff]
    %v431 = vld [vmem:[#allocation5 + $0x990] sm:$0xff]
    %v432 = vld [vmem:[#allocation5 + $0x998] sm:$0xff]
    %v433 = vld [vmem:[#allocation5 + $0x9a0] sm:$0xff]
    %v434 = vld [vmem:[#allocation5 + $0x9a8] sm:$0xff]
    %v435 = vld [vmem:[#allocation5 + $0x9b0] sm:$0xff]
    %v436 = vld [vmem:[#allocation5 + $0x9b8] sm:$0xff]
    %v437 = vld [vmem:[#allocation5 + $0x9c0] sm:$0xff]
    %v438 = vld [vmem:[#allocation5 + $0x9c8] sm:$0xff]
    %v439 = vld [vmem:[#allocation5 + $0x9d0] sm:$0xff]
    %v440 = vld [vmem:[#allocation5 + $0x9d8] sm:$0xff]
    %v441 = vld [vmem:[#allocation5 + $0x9e0] sm:$0xff]
    %v442 = vld [vmem:[#allocation5 + $0x9e8] sm:$0xff]
    %v443 = vld [vmem:[#allocation5 + $0x9f0] sm:$0xff]
    %v444 = vld [vmem:[#allocation5 + $0x9f8] sm:$0xff]
    %v445 = vld [vmem:[#allocation5 + $0xa00] sm:$0xff]
    %v446 = vld [vmem:[#allocation5 + $0xa08] sm:$0xff]
    %v447 = vld [vmem:[#allocation5 + $0xa10] sm:$0xff]
    %v448 = vld [vmem:[#allocation5 + $0xa18] sm:$0xff]
    %v449 = vld [vmem:[#allocation5 + $0xa20] sm:$0xff]
    %v450 = vld [vmem:[#allocation5 + $0xa28] sm:$0xff]
    %v451 = vld [vmem:[#allocation5 + $0xa30] sm:$0xff]
    %v452 = vld [vmem:[#allocation5 + $0xa38] sm:$0xff]
    %v453 = vld [vmem:[#allocation5 + $0xa40] sm:$0xff]
    %v454 = vld [vmem:[#allocation5 + $0xa48] sm:$0xff]
    %v455 = vld [vmem:[#allocation5 + $0xa50] sm:$0xff]
    %v456 = vld [vmem:[#allocation5 + $0xa58] sm:$0xff]
    %v457 = vld [vmem:[#allocation5 + $0xa60] sm:$0xff]
    %v458 = vld [vmem:[#allocation5 + $0xa68] sm:$0xff]
    %v459 = vld [vmem:[#allocation5 + $0xa70] sm:$0xff]
    %v460 = vld [vmem:[#allocation5 + $0xa78] sm:$0xff]
    %v461 = vld [vmem:[#allocation5 + $0xa80] sm:$0xff]
    %v462 = vld [vmem:[#allocation5 + $0xa88] sm:$0xff]
    %v463 = vld [vmem:[#allocation5 + $0xa90] sm:$0xff]
    %v464 = vld [vmem:[#allocation5 + $0xa98] sm:$0xff]
    %v465 = vld [vmem:[#allocation5 + $0xaa0] sm:$0xff]
    %v466 = vld [vmem:[#allocation5 + $0xaa8] sm:$0xff]
    %v467 = vld [vmem:[#allocation5 + $0xab0] sm:$0xff]
    %v468 = vld [vmem:[#allocation5 + $0xab8] sm:$0xff]
    %v469 = vld [vmem:[#allocation5 + $0xac0] sm:$0xff]
    %v470 = vld [vmem:[#allocation5 + $0xac8] sm:$0xff]
    %v471 = vld [vmem:[#allocation5 + $0xad0] sm:$0xff]
    %v472 = vld [vmem:[#allocation5 + $0xad8] sm:$0xff]
    %v473 = vld [vmem:[#allocation5 + $0xae0] sm:$0xff]
    %v474 = vld [vmem:[#allocation5 + $0xae8] sm:$0xff]
    %v475 = vld [vmem:[#allocation5 + $0xaf0] sm:$0xff]
    %v476 = vld [vmem:[#allocation5 + $0xaf8] sm:$0xff]
    %v477 = vld [vmem:[#allocation5 + $0xb00] sm:$0xff]
    %v478 = vld [vmem:[#allocation5 + $0xb08] sm:$0xff]
    %v479 = vld [vmem:[#allocation5 + $0xb10] sm:$0xff]
    %v480 = vld [vmem:[#allocation5 + $0xb18] sm:$0xff]
    %v481 = vld [vmem:[#allocation5 + $0xb20] sm:$0xff]
    %v482 = vld [vmem:[#allocation5 + $0xb28] sm:$0xff]
    %v483 = vld [vmem:[#allocation5 + $0xb30] sm:$0xff]
    %v484 = vld [vmem:[#allocation5 + $0xb38] sm:$0xff]
    %v485 = vld [vmem:[#allocation5 + $0xb40] sm:$0xff]
    %v486 = vld [vmem:[#allocation5 + $0xb48] sm:$0xff]
    %v487 = vld [vmem:[#allocation5 + $0xb50] sm:$0xff]
    %v488 = vld [vmem:[#allocation5 + $0xb58] sm:$0xff]
    %v489 = vld [vmem:[#allocation5 + $0xb60] sm:$0xff]
    %v490 = vld [vmem:[#allocation5 + $0xb68] sm:$0xff]
    %v491 = vld [vmem:[#allocation5 + $0xb70] sm:$0xff]
    %v492 = vld [vmem:[#allocation5 + $0xb78] sm:$0xff]
    %v493 = vld [vmem:[#allocation5 + $0xb80] sm:$0xff]
    %v494 = vld [vmem:[#allocation5 + $0xb88] sm:$0xff]
    %v495 = vld [vmem:[#allocation5 + $0xb90] sm:$0xff]
    %v496 = vld [vmem:[#allocation5 + $0xb98] sm:$0xff]
    %v497 = vld [vmem:[#allocation5 + $0xba0] sm:$0xff]
    %v498 = vld [vmem:[#allocation5 + $0xba8] sm:$0xff]
    %v499 = vld [vmem:[#allocation5 + $0xbb0] sm:$0xff]
    %v500 = vld [vmem:[#allocation5 + $0xbb8] sm:$0xff]
    %v501 = vld [vmem:[#allocation5 + $0xbc0] sm:$0xff]
    %v502 = vld [vmem:[#allocation5 + $0xbc8] sm:$0xff]
    %v503 = vld [vmem:[#allocation5 + $0xbd0] sm:$0xff]
    %v504 = vld [vmem:[#allocation5 + $0xbd8] sm:$0xff]
    %v505 = vld [vmem:[#allocation5 + $0xbe0] sm:$0xff]
    %v506 = vld [vmem:[#allocation5 + $0xbe8] sm:$0xff]
    %v507 = vld [vmem:[#allocation5 + $0xbf0] sm:$0xff]
    %v508 = vld [vmem:[#allocation5 + $0xbf8] sm:$0xff]
    %v509 = vld [vmem:[#allocation5 + $0xc00] sm:$0xff]
    %v510 = vld [vmem:[#allocation5 + $0xc08] sm:$0xff]
    %v511 = vld [vmem:[#allocation5 + $0xc10] sm:$0xff]
    %v512 = vld [vmem:[#allocation5 + $0xc18] sm:$0xff]
    %v513 = vld [vmem:[#allocation5 + $0xc20] sm:$0xff]
    %v514 = vld [vmem:[#allocation5 + $0xc28] sm:$0xff]
    %v515 = vld [vmem:[#allocation5 + $0xc30] sm:$0xff]
    %v516 = vld [vmem:[#allocation5 + $0xc38] sm:$0xff]
    %v517 = vld [vmem:[#allocation5 + $0xc40] sm:$0xff]
    %v518 = vld [vmem:[#allocation5 + $0xc48] sm:$0xff]
    %v519 = vld [vmem:[#allocation5 + $0xc50] sm:$0xff]
    %v520 = vld [vmem:[#allocation5 + $0xc58] sm:$0xff]
    %v521 = vld [vmem:[#allocation5 + $0xc60] sm:$0xff]
    %v522 = vld [vmem:[#allocation5 + $0xc68] sm:$0xff]
    %v523 = vld [vmem:[#allocation5 + $0xc70] sm:$0xff]
    %v524 = vld [vmem:[#allocation5 + $0xc78] sm:$0xff]
    %v525 = vld [vmem:[#allocation5 + $0xc80] sm:$0xff]
    %v526 = vld [vmem:[#allocation5 + $0xc88] sm:$0xff]
    %v527 = vld [vmem:[#allocation5 + $0xc90] sm:$0xff]
    %v528 = vld [vmem:[#allocation5 + $0xc98] sm:$0xff]
    %v529 = vld [vmem:[#allocation5 + $0xca0] sm:$0xff]
    %v530 = vld [vmem:[#allocation5 + $0xca8] sm:$0xff]
    %v531 = vld [vmem:[#allocation5 + $0xcb0] sm:$0xff]
    %v532 = vld [vmem:[#allocation5 + $0xcb8] sm:$0xff]
    %v533 = vld [vmem:[#allocation5 + $0xcc0] sm:$0xff]
    %v534 = vld [vmem:[#allocation5 + $0xcc8] sm:$0xff]
    %v535 = vld [vmem:[#allocation5 + $0xcd0] sm:$0xff]
    %v536 = vld [vmem:[#allocation5 + $0xcd8] sm:$0xff]
    %v537 = vld [vmem:[#allocation5 + $0xce0] sm:$0xff]
    %v538 = vld [vmem:[#allocation5 + $0xce8] sm:$0xff]
    %v539 = vld [vmem:[#allocation5 + $0xcf0] sm:$0xff]
    %v540 = vld [vmem:[#allocation5 + $0xcf8] sm:$0xff]
    %v541 = vld [vmem:[#allocation5 + $0xd00] sm:$0xff]
    %v542 = vld [vmem:[#allocation5 + $0xd08] sm:$0xff]
    %v543 = vld [vmem:[#allocation5 + $0xd10] sm:$0xff]
    %v544 = vld [vmem:[#allocation5 + $0xd18] sm:$0xff]
    %v545 = vld [vmem:[#allocation5 + $0xd20] sm:$0xff]
    %v546 = vld [vmem:[#allocation5 + $0xd28] sm:$0xff]
    %v547 = vld [vmem:[#allocation5 + $0xd30] sm:$0xff]
    %v548 = vld [vmem:[#allocation5 + $0xd38] sm:$0xff]
    %v549 = vld [vmem:[#allocation5 + $0xd40] sm:$0xff]
    %v550 = vld [vmem:[#allocation5 + $0xd48] sm:$0xff]
    %v551 = vld [vmem:[#allocation5 + $0xd50] sm:$0xff]
    %v552 = vld [vmem:[#allocation5 + $0xd58] sm:$0xff]
    %v553 = vld [vmem:[#allocation5 + $0xd60] sm:$0xff]
    %v554 = vld [vmem:[#allocation5 + $0xd68] sm:$0xff]
    %v555 = vld [vmem:[#allocation5 + $0xd70] sm:$0xff]
    %v556 = vld [vmem:[#allocation5 + $0xd78] sm:$0xff]
    %v557 = vld [vmem:[#allocation5 + $0xd80] sm:$0xff]
    %v558 = vld [vmem:[#allocation5 + $0xd88] sm:$0xff]
    %v559 = vld [vmem:[#allocation5 + $0xd90] sm:$0xff]
    %v560 = vld [vmem:[#allocation5 + $0xd98] sm:$0xff]
    %v561 = vld [vmem:[#allocation5 + $0xda0] sm:$0xff]
    %v562 = vld [vmem:[#allocation5 + $0xda8] sm:$0xff]
    %v563 = vld [vmem:[#allocation5 + $0xdb0] sm:$0xff]
    %v564 = vld [vmem:[#allocation5 + $0xdb8] sm:$0xff]
    %v565 = vld [vmem:[#allocation5 + $0xdc0] sm:$0xff]
    %v566 = vld [vmem:[#allocation5 + $0xdc8] sm:$0xff]
    %v567 = vld [vmem:[#allocation5 + $0xdd0] sm:$0xff]
    %v568 = vld [vmem:[#allocation5 + $0xdd8] sm:$0xff]
    %v569 = vld [vmem:[#allocation5 + $0xde0] sm:$0xff]
    %v570 = vld [vmem:[#allocation5 + $0xde8] sm:$0xff]
    %v571 = vld [vmem:[#allocation5 + $0xdf0] sm:$0xff]
    %v572 = vld [vmem:[#allocation5 + $0xdf8] sm:$0xff]
    %v573 = vld [vmem:[#allocation7] sm:$0xff]
    %v575 = vlaneseq
    %v576 = vshrl.u32 %v575, 7
    %v577 = vsub.s32 0, %v576
    %v578 = vrot.slane %v573, %v577
    %v579 = vlaneseq
    %v580 = vshrl.u32 %v579, 7
    %v581 = vsub.s32 1, %v580
    %v582 = vrot.slane %v573, %v581
    %v583 = vlaneseq
    %v584 = vshrl.u32 %v583, 7
    %v585 = vsub.s32 2, %v584
    %v586 = vrot.slane %v573, %v585
    %v587 = vlaneseq
    %v588 = vshrl.u32 %v587, 7
    %v589 = vsub.s32 3, %v588
    %v590 = vrot.slane %v573, %v589
    %v591 = vlaneseq
    %v592 = vshrl.u32 %v591, 7
    %v593 = vsub.s32 4, %v592
    %v594 = vrot.slane %v573, %v593
    %v595 = vlaneseq
    %v596 = vshrl.u32 %v595, 7
    %v597 = vsub.s32 5, %v596
    %v598 = vrot.slane %v573, %v597
    %v599 = vlaneseq
    %v600 = vshrl.u32 %v599, 7
    %v601 = vsub.s32 6, %v600
    %v602 = vrot.slane %v573, %v601
    %v603 = vlaneseq
    %v604 = vshrl.u32 %v603, 7
    %v605 = vsub.s32 7, %v604
    %v606 = vrot.slane %v573, %v605
    %v623 = vunpack.c.l.b16 %v117
    %v624 = vunpack.c.h.b16 %v117
    %v625 = vunpack.c.l.b16 %v118
    %v626 = vunpack.c.h.b16 %v118
    %v627 = vunpack.c.l.b16 %v119
    %v628 = vunpack.c.h.b16 %v119
    %v629 = vunpack.c.l.b16 %v120
    %v630 = vunpack.c.l.b16 %v121
    %v631 = vunpack.c.h.b16 %v121
    %v632 = vunpack.c.l.b16 %v122
    %v633 = vunpack.c.h.b16 %v122
    %v634 = vunpack.c.l.b16 %v123
    %v635 = vunpack.c.h.b16 %v123
    %v636 = vunpack.c.l.b16 %v124
    %v637 = vpack.c.b16 %v630, %v623
    %v638 = vpack.c.b16 %v631, %v624
    %v639 = vpack.c.b16 %v632, %v625
    %v640 = vpack.c.b16 %v633, %v626
    %v641 = vpack.c.b16 %v634, %v627
    %v642 = vpack.c.b16 %v635, %v628
    %v643 = vpack.c.b16 %v636, %v629
    %v1099 = vunpack.c.l.b16 %v125
    %v1100 = vunpack.c.h.b16 %v125
    %v1101 = vunpack.c.l.b16 %v126
    %v1102 = vunpack.c.h.b16 %v126
    %v1103 = vunpack.c.l.b16 %v127
    %v1104 = vunpack.c.h.b16 %v127
    %v1105 = vunpack.c.l.b16 %v128
    %v1106 = vunpack.c.h.b16 %v128
    %v1107 = vunpack.c.l.b16 %v129
    %v1108 = vunpack.c.h.b16 %v129
    %v1109 = vunpack.c.l.b16 %v130
    %v1110 = vunpack.c.h.b16 %v130
    %v1111 = vunpack.c.l.b16 %v131
    %v1112 = vunpack.c.h.b16 %v131
    %v1113 = vunpack.c.l.b16 %v132
    %v1114 = vunpack.c.h.b16 %v132
    %v1115 = vunpack.c.l.b16 %v133
    %v1116 = vunpack.c.h.b16 %v133
    %v1117 = vunpack.c.l.b16 %v134
    %v1118 = vunpack.c.h.b16 %v134
    %v1119 = vunpack.c.l.b16 %v135
    %v1120 = vunpack.c.h.b16 %v135
    %v1121 = vunpack.c.l.b16 %v136
    %v1122 = vunpack.c.h.b16 %v136
    %v1123 = vunpack.c.l.b16 %v137
    %v1124 = vunpack.c.h.b16 %v137
    %v1125 = vunpack.c.l.b16 %v138
    %v1126 = vunpack.c.h.b16 %v138
    %v1127 = vunpack.c.l.b16 %v139
    %v1128 = vunpack.c.h.b16 %v139
    %v1129 = vunpack.c.l.b16 %v140
    %v1130 = vunpack.c.h.b16 %v140
    %v1131 = vunpack.c.l.b16 %v141
    %v1132 = vunpack.c.h.b16 %v141
    %v1133 = vunpack.c.l.b16 %v142
    %v1134 = vunpack.c.h.b16 %v142
    %v1135 = vunpack.c.l.b16 %v143
    %v1136 = vunpack.c.h.b16 %v143
    %v1137 = vunpack.c.l.b16 %v144
    %v1138 = vunpack.c.h.b16 %v144
    %v1139 = vunpack.c.l.b16 %v145
    %v1140 = vunpack.c.h.b16 %v145
    %v1141 = vunpack.c.l.b16 %v146
    %v1142 = vunpack.c.h.b16 %v146
    %v1143 = vunpack.c.l.b16 %v147
    %v1144 = vunpack.c.h.b16 %v147
    %v1145 = vunpack.c.l.b16 %v148
    %v1146 = vunpack.c.h.b16 %v148
    %v1147 = vunpack.c.l.b16 %v149
    %v1148 = vunpack.c.h.b16 %v149
    %v1149 = vunpack.c.l.b16 %v150
    %v1150 = vunpack.c.h.b16 %v150
    %v1151 = vunpack.c.l.b16 %v151
    %v1152 = vunpack.c.h.b16 %v151
    %v1153 = vunpack.c.l.b16 %v152
    %v1154 = vunpack.c.h.b16 %v152
    %v1155 = vunpack.c.l.b16 %v153
    %v1156 = vunpack.c.h.b16 %v153
    %v1157 = vunpack.c.l.b16 %v154
    %v1158 = vunpack.c.h.b16 %v154
    %v1159 = vunpack.c.l.b16 %v155
    %v1160 = vunpack.c.h.b16 %v155
    %v1161 = vunpack.c.l.b16 %v156
    %v1162 = vunpack.c.h.b16 %v156
    %v1163 = vunpack.c.l.b16 %v157
    %v1164 = vunpack.c.h.b16 %v157
    %v1165 = vunpack.c.l.b16 %v158
    %v1166 = vunpack.c.h.b16 %v158
    %v1167 = vunpack.c.l.b16 %v159
    %v1168 = vunpack.c.h.b16 %v159
    %v1169 = vunpack.c.l.b16 %v160
    %v1170 = vunpack.c.h.b16 %v160
    %v1171 = vunpack.c.l.b16 %v161
    %v1172 = vunpack.c.h.b16 %v161
    %v1173 = vunpack.c.l.b16 %v162
    %v1174 = vunpack.c.h.b16 %v162
    %v1175 = vunpack.c.l.b16 %v163
    %v1176 = vunpack.c.h.b16 %v163
    %v1177 = vunpack.c.l.b16 %v164
    %v1178 = vunpack.c.h.b16 %v164
    %v1179 = vunpack.c.l.b16 %v165
    %v1180 = vunpack.c.h.b16 %v165
    %v1181 = vunpack.c.l.b16 %v166
    %v1182 = vunpack.c.h.b16 %v166
    %v1183 = vunpack.c.l.b16 %v167
    %v1184 = vunpack.c.h.b16 %v167
    %v1185 = vunpack.c.l.b16 %v168
    %v1186 = vunpack.c.h.b16 %v168
    %v1187 = vunpack.c.l.b16 %v169
    %v1188 = vunpack.c.h.b16 %v169
    %v1189 = vunpack.c.l.b16 %v170
    %v1190 = vunpack.c.h.b16 %v170
    %v1191 = vunpack.c.l.b16 %v171
    %v1192 = vunpack.c.h.b16 %v171
    %v1193 = vunpack.c.l.b16 %v172
    %v1194 = vunpack.c.h.b16 %v172
    %v1195 = vunpack.c.l.b16 %v173
    %v1196 = vunpack.c.h.b16 %v173
    %v1197 = vunpack.c.l.b16 %v174
    %v1198 = vunpack.c.h.b16 %v174
    %v1199 = vunpack.c.l.b16 %v175
    %v1200 = vunpack.c.h.b16 %v175
    %v1201 = vunpack.c.l.b16 %v176
    %v1202 = vunpack.c.h.b16 %v176
    %v1203 = vunpack.c.l.b16 %v177
    %v1204 = vunpack.c.h.b16 %v177
    %v1205 = vunpack.c.l.b16 %v178
    %v1206 = vunpack.c.h.b16 %v178
    %v1207 = vunpack.c.l.b16 %v179
    %v1208 = vunpack.c.h.b16 %v179
    %v1209 = vunpack.c.l.b16 %v180
    %v1210 = vunpack.c.h.b16 %v180
    %v1211 = vunpack.c.l.b16 %v181
    %v1212 = vunpack.c.h.b16 %v181
    %v1213 = vunpack.c.l.b16 %v182
    %v1214 = vunpack.c.h.b16 %v182
    %v1215 = vunpack.c.l.b16 %v183
    %v1216 = vunpack.c.h.b16 %v183
    %v1217 = vunpack.c.l.b16 %v184
    %v1218 = vunpack.c.h.b16 %v184
    %v1219 = vunpack.c.l.b16 %v185
    %v1220 = vunpack.c.h.b16 %v185
    %v1221 = vunpack.c.l.b16 %v186
    %v1222 = vunpack.c.h.b16 %v186
    %v1223 = vunpack.c.l.b16 %v187
    %v1224 = vunpack.c.h.b16 %v187
    %v1225 = vunpack.c.l.b16 %v188
    %v1226 = vunpack.c.h.b16 %v188
    %v1227 = vunpack.c.l.b16 %v189
    %v1228 = vunpack.c.h.b16 %v189
    %v1229 = vunpack.c.l.b16 %v190
    %v1230 = vunpack.c.h.b16 %v190
    %v1231 = vunpack.c.l.b16 %v191
    %v1232 = vunpack.c.h.b16 %v191
    %v1233 = vunpack.c.l.b16 %v192
    %v1234 = vunpack.c.h.b16 %v192
    %v1235 = vunpack.c.l.b16 %v193
    %v1236 = vunpack.c.h.b16 %v193
    %v1237 = vunpack.c.l.b16 %v194
    %v1238 = vunpack.c.h.b16 %v194
    %v1239 = vunpack.c.l.b16 %v195
    %v1240 = vunpack.c.h.b16 %v195
    %v1241 = vunpack.c.l.b16 %v196
    %v1242 = vunpack.c.h.b16 %v196
    %v1243 = vunpack.c.l.b16 %v197
    %v1244 = vunpack.c.h.b16 %v197
    %v1245 = vunpack.c.l.b16 %v198
    %v1246 = vunpack.c.h.b16 %v198
    %v1247 = vunpack.c.l.b16 %v199
    %v1248 = vunpack.c.h.b16 %v199
    %v1249 = vunpack.c.l.b16 %v200
    %v1250 = vunpack.c.h.b16 %v200
    %v1251 = vunpack.c.l.b16 %v201
    %v1252 = vunpack.c.h.b16 %v201
    %v1253 = vunpack.c.l.b16 %v202
    %v1254 = vunpack.c.h.b16 %v202
    %v1255 = vunpack.c.l.b16 %v203
    %v1256 = vunpack.c.h.b16 %v203
    %v1257 = vunpack.c.l.b16 %v204
    %v1258 = vunpack.c.h.b16 %v204
    %v1259 = vunpack.c.l.b16 %v205
    %v1260 = vunpack.c.h.b16 %v205
    %v1261 = vunpack.c.l.b16 %v206
    %v1262 = vunpack.c.h.b16 %v206
    %v1263 = vunpack.c.l.b16 %v207
    %v1264 = vunpack.c.h.b16 %v207
    %v1265 = vunpack.c.l.b16 %v208
    %v1266 = vunpack.c.h.b16 %v208
    %v1267 = vunpack.c.l.b16 %v209
    %v1268 = vunpack.c.h.b16 %v209
    %v1269 = vunpack.c.l.b16 %v210
    %v1270 = vunpack.c.h.b16 %v210
    %v1271 = vunpack.c.l.b16 %v211
    %v1272 = vunpack.c.h.b16 %v211
    %v1273 = vunpack.c.l.b16 %v212
    %v1274 = vunpack.c.h.b16 %v212
    %v1275 = vunpack.c.l.b16 %v213
    %v1276 = vunpack.c.h.b16 %v213
    %v1277 = vunpack.c.l.b16 %v214
    %v1278 = vunpack.c.h.b16 %v214
    %v1279 = vunpack.c.l.b16 %v215
    %v1280 = vunpack.c.h.b16 %v215
    %v1281 = vunpack.c.l.b16 %v216
    %v1282 = vunpack.c.h.b16 %v216
    %v1283 = vunpack.c.l.b16 %v217
    %v1284 = vunpack.c.h.b16 %v217
    %v1285 = vunpack.c.l.b16 %v218
    %v1286 = vunpack.c.h.b16 %v218
    %v1287 = vunpack.c.l.b16 %v219
    %v1288 = vunpack.c.h.b16 %v219
    %v1289 = vunpack.c.l.b16 %v220
    %v1290 = vunpack.c.h.b16 %v220
    %v1291 = vunpack.c.l.b16 %v221
    %v1292 = vunpack.c.h.b16 %v221
    %v1293 = vunpack.c.l.b16 %v222
    %v1294 = vunpack.c.h.b16 %v222
    %v1295 = vunpack.c.l.b16 %v223
    %v1296 = vunpack.c.h.b16 %v223
    %v1297 = vunpack.c.l.b16 %v224
    %v1298 = vunpack.c.h.b16 %v224
    %v1299 = vunpack.c.l.b16 %v225
    %v1300 = vunpack.c.h.b16 %v225
    %v1301 = vunpack.c.l.b16 %v226
    %v1302 = vunpack.c.h.b16 %v226
    %v1303 = vunpack.c.l.b16 %v227
    %v1304 = vunpack.c.h.b16 %v227
    %v1305 = vunpack.c.l.b16 %v228
    %v1306 = vunpack.c.h.b16 %v228
    %v1307 = vunpack.c.l.b16 %v229
    %v1308 = vunpack.c.h.b16 %v229
    %v1309 = vunpack.c.l.b16 %v230
    %v1310 = vunpack.c.h.b16 %v230
    %v1311 = vunpack.c.l.b16 %v231
    %v1312 = vunpack.c.h.b16 %v231
    %v1313 = vunpack.c.l.b16 %v232
    %v1314 = vunpack.c.h.b16 %v232
    %v1315 = vunpack.c.l.b16 %v233
    %v1316 = vunpack.c.h.b16 %v233
    %v1317 = vunpack.c.l.b16 %v234
    %v1318 = vunpack.c.h.b16 %v234
    %v1319 = vunpack.c.l.b16 %v235
    %v1320 = vunpack.c.h.b16 %v235
    %v1321 = vunpack.c.l.b16 %v236
    %v1322 = vunpack.c.h.b16 %v236
    %v1323 = vunpack.c.l.b16 %v237
    %v1324 = vunpack.c.h.b16 %v237
    %v1325 = vunpack.c.l.b16 %v238
    %v1326 = vunpack.c.h.b16 %v238
    %v1327 = vunpack.c.l.b16 %v239
    %v1328 = vunpack.c.h.b16 %v239
    %v1329 = vunpack.c.l.b16 %v240
    %v1330 = vunpack.c.h.b16 %v240
    %v1331 = vunpack.c.l.b16 %v241
    %v1332 = vunpack.c.h.b16 %v241
    %v1333 = vunpack.c.l.b16 %v242
    %v1334 = vunpack.c.h.b16 %v242
    %v1335 = vunpack.c.l.b16 %v243
    %v1336 = vunpack.c.h.b16 %v243
    %v1337 = vunpack.c.l.b16 %v244
    %v1338 = vunpack.c.h.b16 %v244
    %v1339 = vunpack.c.l.b16 %v245
    %v1340 = vunpack.c.h.b16 %v245
    %v1341 = vunpack.c.l.b16 %v246
    %v1342 = vunpack.c.h.b16 %v246
    %v1343 = vunpack.c.l.b16 %v247
    %v1344 = vunpack.c.h.b16 %v247
    %v1345 = vunpack.c.l.b16 %v248
    %v1346 = vunpack.c.h.b16 %v248
    %v1347 = vunpack.c.l.b16 %v249
    %v1348 = vunpack.c.h.b16 %v249
    %v1349 = vunpack.c.l.b16 %v250
    %v1350 = vunpack.c.h.b16 %v250
    %v1351 = vunpack.c.l.b16 %v251
    %v1352 = vunpack.c.h.b16 %v251
    %v1353 = vunpack.c.l.b16 %v252
    %v1354 = vunpack.c.h.b16 %v252
    %v1355 = vunpack.c.l.b16 %v253
    %v1356 = vunpack.c.h.b16 %v253
    %v1357 = vunpack.c.l.b16 %v254
    %v1358 = vunpack.c.h.b16 %v254
    %v1359 = vunpack.c.l.b16 %v255
    %v1360 = vunpack.c.h.b16 %v255
    %v1361 = vunpack.c.l.b16 %v256
    %v1362 = vunpack.c.h.b16 %v256
    %v1363 = vunpack.c.l.b16 %v257
    %v1364 = vunpack.c.h.b16 %v257
    %v1365 = vunpack.c.l.b16 %v258
    %v1366 = vunpack.c.h.b16 %v258
    %v1367 = vunpack.c.l.b16 %v259
    %v1368 = vunpack.c.h.b16 %v259
    %v1369 = vunpack.c.l.b16 %v260
    %v1370 = vunpack.c.h.b16 %v260
    %v1371 = vunpack.c.l.b16 %v261
    %v1372 = vunpack.c.h.b16 %v261
    %v1373 = vunpack.c.l.b16 %v262
    %v1374 = vunpack.c.h.b16 %v262
    %v1375 = vunpack.c.l.b16 %v263
    %v1376 = vunpack.c.h.b16 %v263
    %v1377 = vunpack.c.l.b16 %v264
    %v1378 = vunpack.c.h.b16 %v264
    %v1379 = vunpack.c.l.b16 %v265
    %v1380 = vunpack.c.h.b16 %v265
    %v1381 = vunpack.c.l.b16 %v266
    %v1382 = vunpack.c.h.b16 %v266
    %v1383 = vunpack.c.l.b16 %v267
    %v1384 = vunpack.c.h.b16 %v267
    %v1385 = vunpack.c.l.b16 %v268
    %v1386 = vunpack.c.h.b16 %v268
    %v1387 = vunpack.c.l.b16 %v269
    %v1388 = vunpack.c.h.b16 %v269
    %v1389 = vunpack.c.l.b16 %v270
    %v1390 = vunpack.c.h.b16 %v270
    %v1391 = vunpack.c.l.b16 %v271
    %v1392 = vunpack.c.h.b16 %v271
    %v1393 = vunpack.c.l.b16 %v272
    %v1394 = vunpack.c.h.b16 %v272
    %v1395 = vunpack.c.l.b16 %v273
    %v1396 = vunpack.c.h.b16 %v273
    %v1397 = vunpack.c.l.b16 %v274
    %v1398 = vunpack.c.h.b16 %v274
    %v1399 = vunpack.c.l.b16 %v275
    %v1400 = vunpack.c.h.b16 %v275
    %v1401 = vunpack.c.l.b16 %v276
    %v1402 = vunpack.c.h.b16 %v276
    %v1403 = vunpack.c.l.b16 %v277
    %v1404 = vunpack.c.h.b16 %v277
    %v1405 = vunpack.c.l.b16 %v278
    %v1406 = vunpack.c.h.b16 %v278
    %v1407 = vunpack.c.l.b16 %v279
    %v1408 = vunpack.c.h.b16 %v279
    %v1409 = vunpack.c.l.b16 %v280
    %v1410 = vunpack.c.h.b16 %v280
    %v1411 = vunpack.c.l.b16 %v281
    %v1412 = vunpack.c.h.b16 %v281
    %v1413 = vunpack.c.l.b16 %v282
    %v1414 = vunpack.c.h.b16 %v282
    %v1415 = vunpack.c.l.b16 %v283
    %v1416 = vunpack.c.h.b16 %v283
    %v1417 = vunpack.c.l.b16 %v284
    %v1418 = vunpack.c.h.b16 %v284
    %v1419 = vunpack.c.l.b16 %v285
    %v1420 = vunpack.c.h.b16 %v285
    %v1421 = vunpack.c.l.b16 %v286
    %v1422 = vunpack.c.h.b16 %v286
    %v1423 = vunpack.c.l.b16 %v287
    %v1424 = vunpack.c.h.b16 %v287
    %v1425 = vunpack.c.l.b16 %v288
    %v1426 = vunpack.c.h.b16 %v288
    %v1427 = vunpack.c.l.b16 %v289
    %v1428 = vunpack.c.h.b16 %v289
    %v1429 = vunpack.c.l.b16 %v290
    %v1430 = vunpack.c.h.b16 %v290
    %v1431 = vunpack.c.l.b16 %v291
    %v1432 = vunpack.c.h.b16 %v291
    %v1433 = vunpack.c.l.b16 %v292
    %v1434 = vunpack.c.h.b16 %v292
    %v1435 = vunpack.c.l.b16 %v293
    %v1436 = vunpack.c.h.b16 %v293
    %v1437 = vunpack.c.l.b16 %v294
    %v1438 = vunpack.c.h.b16 %v294
    %v1439 = vunpack.c.l.b16 %v295
    %v1440 = vunpack.c.h.b16 %v295
    %v1441 = vunpack.c.l.b16 %v296
    %v1442 = vunpack.c.h.b16 %v296
    %v1443 = vunpack.c.l.b16 %v297
    %v1444 = vunpack.c.h.b16 %v297
    %v1445 = vunpack.c.l.b16 %v298
    %v1446 = vunpack.c.h.b16 %v298
    %v1447 = vunpack.c.l.b16 %v299
    %v1448 = vunpack.c.h.b16 %v299
    %v1449 = vunpack.c.l.b16 %v300
    %v1450 = vunpack.c.h.b16 %v300
    %v1451 = vunpack.c.l.b16 %v301
    %v1452 = vunpack.c.h.b16 %v301
    %v1453 = vunpack.c.l.b16 %v302
    %v1454 = vunpack.c.h.b16 %v302
    %v1455 = vunpack.c.l.b16 %v303
    %v1456 = vunpack.c.h.b16 %v303
    %v1457 = vunpack.c.l.b16 %v304
    %v1458 = vunpack.c.h.b16 %v304
    %v1459 = vunpack.c.l.b16 %v305
    %v1460 = vunpack.c.h.b16 %v305
    %v1461 = vunpack.c.l.b16 %v306
    %v1462 = vunpack.c.h.b16 %v306
    %v1463 = vunpack.c.l.b16 %v307
    %v1464 = vunpack.c.h.b16 %v307
    %v1465 = vunpack.c.l.b16 %v308
    %v1466 = vunpack.c.h.b16 %v308
    %v1467 = vunpack.c.l.b16 %v309
    %v1468 = vunpack.c.h.b16 %v309
    %v1469 = vunpack.c.l.b16 %v310
    %v1470 = vunpack.c.h.b16 %v310
    %v1471 = vunpack.c.l.b16 %v311
    %v1472 = vunpack.c.h.b16 %v311
    %v1473 = vunpack.c.l.b16 %v312
    %v1474 = vunpack.c.h.b16 %v312
    %v1475 = vunpack.c.l.b16 %v313
    %v1476 = vunpack.c.h.b16 %v313
    %v1477 = vunpack.c.l.b16 %v314
    %v1478 = vunpack.c.h.b16 %v314
    %v1479 = vunpack.c.l.b16 %v315
    %v1480 = vunpack.c.h.b16 %v315
    %v1481 = vunpack.c.l.b16 %v316
    %v1482 = vunpack.c.h.b16 %v316
    %v1483 = vunpack.c.l.b16 %v317
    %v1484 = vunpack.c.h.b16 %v317
    %v1485 = vunpack.c.l.b16 %v318
    %v1486 = vunpack.c.h.b16 %v318
    %v1487 = vunpack.c.l.b16 %v319
    %v1488 = vunpack.c.h.b16 %v319
    %v1489 = vunpack.c.l.b16 %v320
    %v1490 = vunpack.c.h.b16 %v320
    %v1491 = vunpack.c.l.b16 %v321
    %v1492 = vunpack.c.h.b16 %v321
    %v1493 = vunpack.c.l.b16 %v322
    %v1494 = vunpack.c.h.b16 %v322
    %v1495 = vunpack.c.l.b16 %v323
    %v1496 = vunpack.c.h.b16 %v323
    %v1497 = vunpack.c.l.b16 %v324
    %v1498 = vunpack.c.h.b16 %v324
    %v1499 = vunpack.c.l.b16 %v325
    %v1500 = vunpack.c.h.b16 %v325
    %v1501 = vunpack.c.l.b16 %v326
    %v1502 = vunpack.c.h.b16 %v326
    %v1503 = vunpack.c.l.b16 %v327
    %v1504 = vunpack.c.h.b16 %v327
    %v1505 = vunpack.c.l.b16 %v328
    %v1506 = vunpack.c.h.b16 %v328
    %v1507 = vunpack.c.l.b16 %v329
    %v1508 = vunpack.c.h.b16 %v329
    %v1509 = vunpack.c.l.b16 %v330
    %v1510 = vunpack.c.h.b16 %v330
    %v1511 = vunpack.c.l.b16 %v331
    %v1512 = vunpack.c.h.b16 %v331
    %v1513 = vunpack.c.l.b16 %v332
    %v1514 = vunpack.c.h.b16 %v332
    %v1515 = vunpack.c.l.b16 %v333
    %v1516 = vunpack.c.h.b16 %v333
    %v1517 = vunpack.c.l.b16 %v334
    %v1518 = vunpack.c.h.b16 %v334
    %v1519 = vunpack.c.l.b16 %v335
    %v1520 = vunpack.c.h.b16 %v335
    %v1521 = vunpack.c.l.b16 %v336
    %v1522 = vunpack.c.h.b16 %v336
    %v1523 = vunpack.c.l.b16 %v337
    %v1524 = vunpack.c.h.b16 %v337
    %v1525 = vunpack.c.l.b16 %v338
    %v1526 = vunpack.c.h.b16 %v338
    %v1527 = vunpack.c.l.b16 %v339
    %v1528 = vunpack.c.h.b16 %v339
    %v1529 = vunpack.c.l.b16 %v340
    %v1530 = vunpack.c.h.b16 %v340
    %v1531 = vunpack.c.l.b16 %v341
    %v1532 = vunpack.c.h.b16 %v341
    %v1533 = vunpack.c.l.b16 %v342
    %v1534 = vunpack.c.h.b16 %v342
    %v1535 = vunpack.c.l.b16 %v343
    %v1536 = vunpack.c.h.b16 %v343
    %v1537 = vunpack.c.l.b16 %v344
    %v1538 = vunpack.c.h.b16 %v344
    %v1539 = vunpack.c.l.b16 %v345
    %v1540 = vunpack.c.h.b16 %v345
    %v1541 = vunpack.c.l.b16 %v346
    %v1542 = vunpack.c.h.b16 %v346
    %v1543 = vunpack.c.l.b16 %v347
    %v1544 = vunpack.c.h.b16 %v347
    %v1545 = vunpack.c.l.b16 %v348
    %v1546 = vunpack.c.h.b16 %v348
    %v1547 = vunpack.c.l.b16 %v349
    %v1548 = vunpack.c.h.b16 %v349
    %v1549 = vunpack.c.l.b16 %v350
    %v1550 = vunpack.c.h.b16 %v350
    %v1551 = vunpack.c.l.b16 %v351
    %v1552 = vunpack.c.h.b16 %v351
    %v1553 = vunpack.c.l.b16 %v352
    %v1554 = vunpack.c.h.b16 %v352
    %v1555 = vunpack.c.l.b16 %v353
    %v1556 = vunpack.c.h.b16 %v353
    %v1557 = vunpack.c.l.b16 %v354
    %v1558 = vunpack.c.h.b16 %v354
    %v1559 = vunpack.c.l.b16 %v355
    %v1560 = vunpack.c.h.b16 %v355
    %v1561 = vunpack.c.l.b16 %v356
    %v1562 = vunpack.c.h.b16 %v356
    %v1563 = vunpack.c.l.b16 %v357
    %v1564 = vunpack.c.h.b16 %v357
    %v1565 = vunpack.c.l.b16 %v358
    %v1566 = vunpack.c.h.b16 %v358
    %v1567 = vunpack.c.l.b16 %v359
    %v1568 = vunpack.c.h.b16 %v359
    %v1569 = vunpack.c.l.b16 %v360
    %v1570 = vunpack.c.h.b16 %v360
    %v1571 = vunpack.c.l.b16 %v361
    %v1572 = vunpack.c.h.b16 %v361
    %v1573 = vunpack.c.l.b16 %v362
    %v1574 = vunpack.c.h.b16 %v362
    %v1575 = vunpack.c.l.b16 %v363
    %v1576 = vunpack.c.h.b16 %v363
    %v1577 = vunpack.c.l.b16 %v364
    %v1578 = vunpack.c.h.b16 %v364
    %v1579 = vunpack.c.l.b16 %v365
    %v1580 = vunpack.c.h.b16 %v365
    %v1581 = vunpack.c.l.b16 %v366
    %v1582 = vunpack.c.h.b16 %v366
    %v1583 = vunpack.c.l.b16 %v367
    %v1584 = vunpack.c.h.b16 %v367
    %v1585 = vunpack.c.l.b16 %v368
    %v1586 = vunpack.c.h.b16 %v368
    %v1587 = vunpack.c.l.b16 %v369
    %v1588 = vunpack.c.h.b16 %v369
    %v1589 = vunpack.c.l.b16 %v370
    %v1590 = vunpack.c.h.b16 %v370
    %v1591 = vunpack.c.l.b16 %v371
    %v1592 = vunpack.c.h.b16 %v371
    %v1593 = vunpack.c.l.b16 %v372
    %v1594 = vunpack.c.h.b16 %v372
    %v1595 = vunpack.c.l.b16 %v373
    %v1596 = vunpack.c.h.b16 %v373
    %v1597 = vunpack.c.l.b16 %v374
    %v1598 = vunpack.c.h.b16 %v374
    %v1599 = vunpack.c.l.b16 %v375
    %v1600 = vunpack.c.h.b16 %v375
    %v1601 = vunpack.c.l.b16 %v376
    %v1602 = vunpack.c.h.b16 %v376
    %v1603 = vunpack.c.l.b16 %v377
    %v1604 = vunpack.c.h.b16 %v377
    %v1605 = vunpack.c.l.b16 %v378
    %v1606 = vunpack.c.h.b16 %v378
    %v1607 = vunpack.c.l.b16 %v379
    %v1608 = vunpack.c.h.b16 %v379
    %v1609 = vunpack.c.l.b16 %v380
    %v1610 = vunpack.c.h.b16 %v380
    %v1611 = vunpack.c.l.b16 %v381
    %v1612 = vunpack.c.h.b16 %v381
    %v1613 = vunpack.c.l.b16 %v382
    %v1614 = vunpack.c.h.b16 %v382
    %v1615 = vunpack.c.l.b16 %v383
    %v1616 = vunpack.c.h.b16 %v383
    %v1617 = vunpack.c.l.b16 %v384
    %v1618 = vunpack.c.h.b16 %v384
    %v1619 = vunpack.c.l.b16 %v385
    %v1620 = vunpack.c.h.b16 %v385
    %v1621 = vunpack.c.l.b16 %v386
    %v1622 = vunpack.c.h.b16 %v386
    %v1623 = vunpack.c.l.b16 %v387
    %v1624 = vunpack.c.h.b16 %v387
    %v1625 = vunpack.c.l.b16 %v388
    %v1626 = vunpack.c.h.b16 %v388
    %v1627 = vunpack.c.l.b16 %v389
    %v1628 = vunpack.c.h.b16 %v389
    %v1629 = vunpack.c.l.b16 %v390
    %v1630 = vunpack.c.h.b16 %v390
    %v1631 = vunpack.c.l.b16 %v391
    %v1632 = vunpack.c.h.b16 %v391
    %v1633 = vunpack.c.l.b16 %v392
    %v1634 = vunpack.c.h.b16 %v392
    %v1635 = vunpack.c.l.b16 %v393
    %v1636 = vunpack.c.h.b16 %v393
    %v1637 = vunpack.c.l.b16 %v394
    %v1638 = vunpack.c.h.b16 %v394
    %v1639 = vunpack.c.l.b16 %v395
    %v1640 = vunpack.c.h.b16 %v395
    %v1641 = vunpack.c.l.b16 %v396
    %v1642 = vunpack.c.h.b16 %v396
    %v1643 = vunpack.c.l.b16 %v397
    %v1644 = vunpack.c.h.b16 %v397
    %v1645 = vunpack.c.l.b16 %v398
    %v1646 = vunpack.c.h.b16 %v398
    %v1647 = vunpack.c.l.b16 %v399
    %v1648 = vunpack.c.h.b16 %v399
    %v1649 = vunpack.c.l.b16 %v400
    %v1650 = vunpack.c.h.b16 %v400
    %v1651 = vunpack.c.l.b16 %v401
    %v1652 = vunpack.c.h.b16 %v401
    %v1653 = vunpack.c.l.b16 %v402
    %v1654 = vunpack.c.h.b16 %v402
    %v1655 = vunpack.c.l.b16 %v403
    %v1656 = vunpack.c.h.b16 %v403
    %v1657 = vunpack.c.l.b16 %v404
    %v1658 = vunpack.c.h.b16 %v404
    %v1659 = vunpack.c.l.b16 %v405
    %v1660 = vunpack.c.h.b16 %v405
    %v1661 = vunpack.c.l.b16 %v406
    %v1662 = vunpack.c.h.b16 %v406
    %v1663 = vunpack.c.l.b16 %v407
    %v1664 = vunpack.c.h.b16 %v407
    %v1665 = vunpack.c.l.b16 %v408
    %v1666 = vunpack.c.h.b16 %v408
    %v1667 = vunpack.c.l.b16 %v409
    %v1668 = vunpack.c.h.b16 %v409
    %v1669 = vunpack.c.l.b16 %v410
    %v1670 = vunpack.c.h.b16 %v410
    %v1671 = vunpack.c.l.b16 %v411
    %v1672 = vunpack.c.h.b16 %v411
    %v1673 = vunpack.c.l.b16 %v412
    %v1674 = vunpack.c.h.b16 %v412
    %v1675 = vunpack.c.l.b16 %v413
    %v1676 = vunpack.c.h.b16 %v413
    %v1677 = vunpack.c.l.b16 %v414
    %v1678 = vunpack.c.h.b16 %v414
    %v1679 = vunpack.c.l.b16 %v415
    %v1680 = vunpack.c.h.b16 %v415
    %v1681 = vunpack.c.l.b16 %v416
    %v1682 = vunpack.c.h.b16 %v416
    %v1683 = vunpack.c.l.b16 %v417
    %v1684 = vunpack.c.h.b16 %v417
    %v1685 = vunpack.c.l.b16 %v418
    %v1686 = vunpack.c.h.b16 %v418
    %v1687 = vunpack.c.l.b16 %v419
    %v1688 = vunpack.c.h.b16 %v419
    %v1689 = vunpack.c.l.b16 %v420
    %v1690 = vunpack.c.h.b16 %v420
    %v1691 = vunpack.c.l.b16 %v421
    %v1692 = vunpack.c.h.b16 %v421
    %v1693 = vunpack.c.l.b16 %v422
    %v1694 = vunpack.c.h.b16 %v422
    %v1695 = vunpack.c.l.b16 %v423
    %v1696 = vunpack.c.h.b16 %v423
    %v1697 = vunpack.c.l.b16 %v424
    %v1698 = vunpack.c.h.b16 %v424
    %v1699 = vunpack.c.l.b16 %v425
    %v1700 = vunpack.c.h.b16 %v425
    %v1701 = vunpack.c.l.b16 %v426
    %v1702 = vunpack.c.h.b16 %v426
    %v1703 = vunpack.c.l.b16 %v427
    %v1704 = vunpack.c.h.b16 %v427
    %v1705 = vunpack.c.l.b16 %v428
    %v1706 = vunpack.c.h.b16 %v428
    %v1707 = vunpack.c.l.b16 %v429
    %v1708 = vunpack.c.h.b16 %v429
    %v1709 = vunpack.c.l.b16 %v430
    %v1710 = vunpack.c.h.b16 %v430
    %v1711 = vunpack.c.l.b16 %v431
    %v1712 = vunpack.c.h.b16 %v431
    %v1713 = vunpack.c.l.b16 %v432
    %v1714 = vunpack.c.h.b16 %v432
    %v1715 = vunpack.c.l.b16 %v433
    %v1716 = vunpack.c.h.b16 %v433
    %v1717 = vunpack.c.l.b16 %v434
    %v1718 = vunpack.c.h.b16 %v434
    %v1719 = vunpack.c.l.b16 %v435
    %v1720 = vunpack.c.h.b16 %v435
    %v1721 = vunpack.c.l.b16 %v436
    %v1722 = vunpack.c.h.b16 %v436
    %v1723 = vunpack.c.l.b16 %v437
    %v1724 = vunpack.c.h.b16 %v437
    %v1725 = vunpack.c.l.b16 %v438
    %v1726 = vunpack.c.h.b16 %v438
    %v1727 = vunpack.c.l.b16 %v439
    %v1728 = vunpack.c.h.b16 %v439
    %v1729 = vunpack.c.l.b16 %v440
    %v1730 = vunpack.c.h.b16 %v440
    %v1731 = vunpack.c.l.b16 %v441
    %v1732 = vunpack.c.h.b16 %v441
    %v1733 = vunpack.c.l.b16 %v442
    %v1734 = vunpack.c.h.b16 %v442
    %v1735 = vunpack.c.l.b16 %v443
    %v1736 = vunpack.c.h.b16 %v443
    %v1737 = vunpack.c.l.b16 %v444
    %v1738 = vunpack.c.h.b16 %v444
    %v1739 = vunpack.c.l.b16 %v445
    %v1740 = vunpack.c.h.b16 %v445
    %v1741 = vunpack.c.l.b16 %v446
    %v1742 = vunpack.c.h.b16 %v446
    %v1743 = vunpack.c.l.b16 %v447
    %v1744 = vunpack.c.h.b16 %v447
    %v1745 = vunpack.c.l.b16 %v448
    %v1746 = vunpack.c.h.b16 %v448
    %v1747 = vunpack.c.l.b16 %v449
    %v1748 = vunpack.c.h.b16 %v449
    %v1749 = vunpack.c.l.b16 %v450
    %v1750 = vunpack.c.h.b16 %v450
    %v1751 = vunpack.c.l.b16 %v451
    %v1752 = vunpack.c.h.b16 %v451
    %v1753 = vunpack.c.l.b16 %v452
    %v1754 = vunpack.c.h.b16 %v452
    %v1755 = vunpack.c.l.b16 %v453
    %v1756 = vunpack.c.h.b16 %v453
    %v1757 = vunpack.c.l.b16 %v454
    %v1758 = vunpack.c.h.b16 %v454
    %v1759 = vunpack.c.l.b16 %v455
    %v1760 = vunpack.c.h.b16 %v455
    %v1761 = vunpack.c.l.b16 %v456
    %v1762 = vunpack.c.h.b16 %v456
    %v1763 = vunpack.c.l.b16 %v457
    %v1764 = vunpack.c.h.b16 %v457
    %v1765 = vunpack.c.l.b16 %v458
    %v1766 = vunpack.c.h.b16 %v458
    %v1767 = vunpack.c.l.b16 %v459
    %v1768 = vunpack.c.h.b16 %v459
    %v1769 = vunpack.c.l.b16 %v460
    %v1770 = vunpack.c.h.b16 %v460
    %v1771 = vunpack.c.l.b16 %v461
    %v1772 = vunpack.c.h.b16 %v461
    %v1773 = vunpack.c.l.b16 %v462
    %v1774 = vunpack.c.h.b16 %v462
    %v1775 = vunpack.c.l.b16 %v463
    %v1776 = vunpack.c.h.b16 %v463
    %v1777 = vunpack.c.l.b16 %v464
    %v1778 = vunpack.c.h.b16 %v464
    %v1779 = vunpack.c.l.b16 %v465
    %v1780 = vunpack.c.h.b16 %v465
    %v1781 = vunpack.c.l.b16 %v466
    %v1782 = vunpack.c.h.b16 %v466
    %v1783 = vunpack.c.l.b16 %v467
    %v1784 = vunpack.c.h.b16 %v467
    %v1785 = vunpack.c.l.b16 %v468
    %v1786 = vunpack.c.h.b16 %v468
    %v1787 = vunpack.c.l.b16 %v469
    %v1788 = vunpack.c.h.b16 %v469
    %v1789 = vunpack.c.l.b16 %v470
    %v1790 = vunpack.c.h.b16 %v470
    %v1791 = vunpack.c.l.b16 %v471
    %v1792 = vunpack.c.h.b16 %v471
    %v1793 = vunpack.c.l.b16 %v472
    %v1794 = vunpack.c.h.b16 %v472
    %v1795 = vunpack.c.l.b16 %v473
    %v1796 = vunpack.c.h.b16 %v473
    %v1797 = vunpack.c.l.b16 %v474
    %v1798 = vunpack.c.h.b16 %v474
    %v1799 = vunpack.c.l.b16 %v475
    %v1800 = vunpack.c.h.b16 %v475
    %v1801 = vunpack.c.l.b16 %v476
    %v1802 = vunpack.c.h.b16 %v476
    %v1803 = vunpack.c.l.b16 %v477
    %v1804 = vunpack.c.h.b16 %v477
    %v1805 = vunpack.c.l.b16 %v478
    %v1806 = vunpack.c.h.b16 %v478
    %v1807 = vunpack.c.l.b16 %v479
    %v1808 = vunpack.c.h.b16 %v479
    %v1809 = vunpack.c.l.b16 %v480
    %v1810 = vunpack.c.h.b16 %v480
    %v1811 = vunpack.c.l.b16 %v481
    %v1812 = vunpack.c.h.b16 %v481
    %v1813 = vunpack.c.l.b16 %v482
    %v1814 = vunpack.c.h.b16 %v482
    %v1815 = vunpack.c.l.b16 %v483
    %v1816 = vunpack.c.h.b16 %v483
    %v1817 = vunpack.c.l.b16 %v484
    %v1818 = vunpack.c.h.b16 %v484
    %v1819 = vunpack.c.l.b16 %v485
    %v1820 = vunpack.c.h.b16 %v485
    %v1821 = vunpack.c.l.b16 %v486
    %v1822 = vunpack.c.h.b16 %v486
    %v1823 = vunpack.c.l.b16 %v487
    %v1824 = vunpack.c.h.b16 %v487
    %v1825 = vunpack.c.l.b16 %v488
    %v1826 = vunpack.c.h.b16 %v488
    %v1827 = vunpack.c.l.b16 %v489
    %v1828 = vunpack.c.h.b16 %v489
    %v1829 = vunpack.c.l.b16 %v490
    %v1830 = vunpack.c.h.b16 %v490
    %v1831 = vunpack.c.l.b16 %v491
    %v1832 = vunpack.c.h.b16 %v491
    %v1833 = vunpack.c.l.b16 %v492
    %v1834 = vunpack.c.h.b16 %v492
    %v1835 = vunpack.c.l.b16 %v493
    %v1836 = vunpack.c.h.b16 %v493
    %v1837 = vunpack.c.l.b16 %v494
    %v1838 = vunpack.c.h.b16 %v494
    %v1839 = vunpack.c.l.b16 %v495
    %v1840 = vunpack.c.h.b16 %v495
    %v1841 = vunpack.c.l.b16 %v496
    %v1842 = vunpack.c.h.b16 %v496
    %v1843 = vunpack.c.l.b16 %v497
    %v1844 = vunpack.c.h.b16 %v497
    %v1845 = vunpack.c.l.b16 %v498
    %v1846 = vunpack.c.h.b16 %v498
    %v1847 = vunpack.c.l.b16 %v499
    %v1848 = vunpack.c.h.b16 %v499
    %v1849 = vunpack.c.l.b16 %v500
    %v1850 = vunpack.c.h.b16 %v500
    %v1851 = vunpack.c.l.b16 %v501
    %v1852 = vunpack.c.h.b16 %v501
    %v1853 = vunpack.c.l.b16 %v502
    %v1854 = vunpack.c.h.b16 %v502
    %v1855 = vunpack.c.l.b16 %v503
    %v1856 = vunpack.c.h.b16 %v503
    %v1857 = vunpack.c.l.b16 %v504
    %v1858 = vunpack.c.h.b16 %v504
    %v1859 = vunpack.c.l.b16 %v505
    %v1860 = vunpack.c.h.b16 %v505
    %v1861 = vunpack.c.l.b16 %v506
    %v1862 = vunpack.c.h.b16 %v506
    %v1863 = vunpack.c.l.b16 %v507
    %v1864 = vunpack.c.h.b16 %v507
    %v1865 = vunpack.c.l.b16 %v508
    %v1866 = vunpack.c.h.b16 %v508
    %v1867 = vunpack.c.l.b16 %v509
    %v1868 = vunpack.c.h.b16 %v509
    %v1869 = vunpack.c.l.b16 %v510
    %v1870 = vunpack.c.h.b16 %v510
    %v1871 = vunpack.c.l.b16 %v511
    %v1872 = vunpack.c.h.b16 %v511
    %v1873 = vunpack.c.l.b16 %v512
    %v1874 = vunpack.c.h.b16 %v512
    %v1875 = vunpack.c.l.b16 %v513
    %v1876 = vunpack.c.h.b16 %v513
    %v1877 = vunpack.c.l.b16 %v514
    %v1878 = vunpack.c.h.b16 %v514
    %v1879 = vunpack.c.l.b16 %v515
    %v1880 = vunpack.c.h.b16 %v515
    %v1881 = vunpack.c.l.b16 %v516
    %v1882 = vunpack.c.h.b16 %v516
    %v1883 = vunpack.c.l.b16 %v517
    %v1884 = vunpack.c.h.b16 %v517
    %v1885 = vunpack.c.l.b16 %v518
    %v1886 = vunpack.c.h.b16 %v518
    %v1887 = vunpack.c.l.b16 %v519
    %v1888 = vunpack.c.h.b16 %v519
    %v1889 = vunpack.c.l.b16 %v520
    %v1890 = vunpack.c.h.b16 %v520
    %v1891 = vunpack.c.l.b16 %v521
    %v1892 = vunpack.c.h.b16 %v521
    %v1893 = vunpack.c.l.b16 %v522
    %v1894 = vunpack.c.h.b16 %v522
    %v1895 = vunpack.c.l.b16 %v523
    %v1896 = vunpack.c.h.b16 %v523
    %v1897 = vunpack.c.l.b16 %v524
    %v1898 = vunpack.c.h.b16 %v524
    %v1899 = vunpack.c.l.b16 %v525
    %v1900 = vunpack.c.h.b16 %v525
    %v1901 = vunpack.c.l.b16 %v526
    %v1902 = vunpack.c.h.b16 %v526
    %v1903 = vunpack.c.l.b16 %v527
    %v1904 = vunpack.c.h.b16 %v527
    %v1905 = vunpack.c.l.b16 %v528
    %v1906 = vunpack.c.h.b16 %v528
    %v1907 = vunpack.c.l.b16 %v529
    %v1908 = vunpack.c.h.b16 %v529
    %v1909 = vunpack.c.l.b16 %v530
    %v1910 = vunpack.c.h.b16 %v530
    %v1911 = vunpack.c.l.b16 %v531
    %v1912 = vunpack.c.h.b16 %v531
    %v1913 = vunpack.c.l.b16 %v532
    %v1914 = vunpack.c.h.b16 %v532
    %v1915 = vunpack.c.l.b16 %v533
    %v1916 = vunpack.c.h.b16 %v533
    %v1917 = vunpack.c.l.b16 %v534
    %v1918 = vunpack.c.h.b16 %v534
    %v1919 = vunpack.c.l.b16 %v535
    %v1920 = vunpack.c.h.b16 %v535
    %v1921 = vunpack.c.l.b16 %v536
    %v1922 = vunpack.c.h.b16 %v536
    %v1923 = vunpack.c.l.b16 %v537
    %v1924 = vunpack.c.h.b16 %v537
    %v1925 = vunpack.c.l.b16 %v538
    %v1926 = vunpack.c.h.b16 %v538
    %v1927 = vunpack.c.l.b16 %v539
    %v1928 = vunpack.c.h.b16 %v539
    %v1929 = vunpack.c.l.b16 %v540
    %v1930 = vunpack.c.h.b16 %v540
    %v1931 = vunpack.c.l.b16 %v541
    %v1932 = vunpack.c.h.b16 %v541
    %v1933 = vunpack.c.l.b16 %v542
    %v1934 = vunpack.c.h.b16 %v542
    %v1935 = vunpack.c.l.b16 %v543
    %v1936 = vunpack.c.h.b16 %v543
    %v1937 = vunpack.c.l.b16 %v544
    %v1938 = vunpack.c.h.b16 %v544
    %v1939 = vunpack.c.l.b16 %v545
    %v1940 = vunpack.c.h.b16 %v545
    %v1941 = vunpack.c.l.b16 %v546
    %v1942 = vunpack.c.h.b16 %v546
    %v1943 = vunpack.c.l.b16 %v547
    %v1944 = vunpack.c.h.b16 %v547
    %v1945 = vunpack.c.l.b16 %v548
    %v1946 = vunpack.c.h.b16 %v548
    %v1947 = vunpack.c.l.b16 %v549
    %v1948 = vunpack.c.h.b16 %v549
    %v1949 = vunpack.c.l.b16 %v550
    %v1950 = vunpack.c.h.b16 %v550
    %v1951 = vunpack.c.l.b16 %v551
    %v1952 = vunpack.c.h.b16 %v551
    %v1953 = vunpack.c.l.b16 %v552
    %v1954 = vunpack.c.h.b16 %v552
    %v1955 = vunpack.c.l.b16 %v553
    %v1956 = vunpack.c.h.b16 %v553
    %v1957 = vunpack.c.l.b16 %v554
    %v1958 = vunpack.c.h.b16 %v554
    %v1959 = vunpack.c.l.b16 %v555
    %v1960 = vunpack.c.h.b16 %v555
    %v1961 = vunpack.c.l.b16 %v556
    %v1962 = vunpack.c.h.b16 %v556
    %v1963 = vunpack.c.l.b16 %v557
    %v1964 = vunpack.c.h.b16 %v557
    %v1965 = vunpack.c.l.b16 %v558
    %v1966 = vunpack.c.h.b16 %v558
    %v1967 = vunpack.c.l.b16 %v559
    %v1968 = vunpack.c.h.b16 %v559
    %v1969 = vunpack.c.l.b16 %v560
    %v1970 = vunpack.c.h.b16 %v560
    %v1971 = vunpack.c.l.b16 %v561
    %v1972 = vunpack.c.h.b16 %v561
    %v1973 = vunpack.c.l.b16 %v562
    %v1974 = vunpack.c.h.b16 %v562
    %v1975 = vunpack.c.l.b16 %v563
    %v1976 = vunpack.c.h.b16 %v563
    %v1977 = vunpack.c.l.b16 %v564
    %v1978 = vunpack.c.h.b16 %v564
    %v1979 = vunpack.c.l.b16 %v565
    %v1980 = vunpack.c.h.b16 %v565
    %v1981 = vunpack.c.l.b16 %v566
    %v1982 = vunpack.c.h.b16 %v566
    %v1983 = vunpack.c.l.b16 %v567
    %v1984 = vunpack.c.h.b16 %v567
    %v1985 = vunpack.c.l.b16 %v568
    %v1986 = vunpack.c.h.b16 %v568
    %v1987 = vunpack.c.l.b16 %v569
    %v1988 = vunpack.c.h.b16 %v569
    %v1989 = vunpack.c.l.b16 %v570
    %v1990 = vunpack.c.h.b16 %v570
    %v1991 = vunpack.c.l.b16 %v571
    %v1992 = vunpack.c.h.b16 %v571
    %v1993 = vunpack.c.l.b16 %v572
    %v1994 = vunpack.c.h.b16 %v572
    %v1995 = vpack.c.b16 %v1107, %v1099
    %v1996 = vpack.c.b16 %v1108, %v1100
    %v1997 = vpack.c.b16 %v1109, %v1101
    %v1998 = vpack.c.b16 %v1110, %v1102
    %v1999 = vpack.c.b16 %v1111, %v1103
    %v2000 = vpack.c.b16 %v1112, %v1104
    %v2001 = vpack.c.b16 %v1113, %v1105
    %v2002 = vpack.c.b16 %v1114, %v1106
    %v2003 = vpack.c.b16 %v1123, %v1115
    %v2004 = vpack.c.b16 %v1124, %v1116
    %v2005 = vpack.c.b16 %v1125, %v1117
    %v2006 = vpack.c.b16 %v1126, %v1118
    %v2007 = vpack.c.b16 %v1127, %v1119
    %v2008 = vpack.c.b16 %v1128, %v1120
    %v2009 = vpack.c.b16 %v1129, %v1121
    %v2010 = vpack.c.b16 %v1130, %v1122
    %v2011 = vpack.c.b16 %v1139, %v1131
    %v2012 = vpack.c.b16 %v1140, %v1132
    %v2013 = vpack.c.b16 %v1141, %v1133
    %v2014 = vpack.c.b16 %v1142, %v1134
    %v2015 = vpack.c.b16 %v1143, %v1135
    %v2016 = vpack.c.b16 %v1144, %v1136
    %v2017 = vpack.c.b16 %v1145, %v1137
    %v2018 = vpack.c.b16 %v1146, %v1138
    %v2019 = vpack.c.b16 %v1155, %v1147
    %v2020 = vpack.c.b16 %v1156, %v1148
    %v2021 = vpack.c.b16 %v1157, %v1149
    %v2022 = vpack.c.b16 %v1158, %v1150
    %v2023 = vpack.c.b16 %v1159, %v1151
    %v2024 = vpack.c.b16 %v1160, %v1152
    %v2025 = vpack.c.b16 %v1161, %v1153
    %v2026 = vpack.c.b16 %v1162, %v1154
    %v2027 = vpack.c.b16 %v1171, %v1163
    %v2028 = vpack.c.b16 %v1172, %v1164
    %v2029 = vpack.c.b16 %v1173, %v1165
    %v2030 = vpack.c.b16 %v1174, %v1166
    %v2031 = vpack.c.b16 %v1175, %v1167
    %v2032 = vpack.c.b16 %v1176, %v1168
    %v2033 = vpack.c.b16 %v1177, %v1169
    %v2034 = vpack.c.b16 %v1178, %v1170
    %v2035 = vpack.c.b16 %v1187, %v1179
    %v2036 = vpack.c.b16 %v1188, %v1180
    %v2037 = vpack.c.b16 %v1189, %v1181
    %v2038 = vpack.c.b16 %v1190, %v1182
    %v2039 = vpack.c.b16 %v1191, %v1183
    %v2040 = vpack.c.b16 %v1192, %v1184
    %v2041 = vpack.c.b16 %v1193, %v1185
    %v2042 = vpack.c.b16 %v1194, %v1186
    %v2043 = vpack.c.b16 %v1203, %v1195
    %v2044 = vpack.c.b16 %v1204, %v1196
    %v2045 = vpack.c.b16 %v1205, %v1197
    %v2046 = vpack.c.b16 %v1206, %v1198
    %v2047 = vpack.c.b16 %v1207, %v1199
    %v2048 = vpack.c.b16 %v1208, %v1200
    %v2049 = vpack.c.b16 %v1209, %v1201
    %v2050 = vpack.c.b16 %v1210, %v1202
    %v2051 = vpack.c.b16 %v1219, %v1211
    %v2052 = vpack.c.b16 %v1220, %v1212
    %v2053 = vpack.c.b16 %v1221, %v1213
    %v2054 = vpack.c.b16 %v1222, %v1214
    %v2055 = vpack.c.b16 %v1223, %v1215
    %v2056 = vpack.c.b16 %v1224, %v1216
    %v2057 = vpack.c.b16 %v1225, %v1217
    %v2058 = vpack.c.b16 %v1226, %v1218
    %v2059 = vpack.c.b16 %v1235, %v1227
    %v2060 = vpack.c.b16 %v1236, %v1228
    %v2061 = vpack.c.b16 %v1237, %v1229
    %v2062 = vpack.c.b16 %v1238, %v1230
    %v2063 = vpack.c.b16 %v1239, %v1231
    %v2064 = vpack.c.b16 %v1240, %v1232
    %v2065 = vpack.c.b16 %v1241, %v1233
    %v2066 = vpack.c.b16 %v1242, %v1234
    %v2067 = vpack.c.b16 %v1251, %v1243
    %v2068 = vpack.c.b16 %v1252, %v1244
    %v2069 = vpack.c.b16 %v1253, %v1245
    %v2070 = vpack.c.b16 %v1254, %v1246
    %v2071 = vpack.c.b16 %v1255, %v1247
    %v2072 = vpack.c.b16 %v1256, %v1248
    %v2073 = vpack.c.b16 %v1257, %v1249
    %v2074 = vpack.c.b16 %v1258, %v1250
    %v2075 = vpack.c.b16 %v1267, %v1259
    %v2076 = vpack.c.b16 %v1268, %v1260
    %v2077 = vpack.c.b16 %v1269, %v1261
    %v2078 = vpack.c.b16 %v1270, %v1262
    %v2079 = vpack.c.b16 %v1271, %v1263
    %v2080 = vpack.c.b16 %v1272, %v1264
    %v2081 = vpack.c.b16 %v1273, %v1265
    %v2082 = vpack.c.b16 %v1274, %v1266
    %v2083 = vpack.c.b16 %v1283, %v1275
    %v2084 = vpack.c.b16 %v1284, %v1276
    %v2085 = vpack.c.b16 %v1285, %v1277
    %v2086 = vpack.c.b16 %v1286, %v1278
    %v2087 = vpack.c.b16 %v1287, %v1279
    %v2088 = vpack.c.b16 %v1288, %v1280
    %v2089 = vpack.c.b16 %v1289, %v1281
    %v2090 = vpack.c.b16 %v1290, %v1282
    %v2091 = vpack.c.b16 %v1299, %v1291
    %v2092 = vpack.c.b16 %v1300, %v1292
    %v2093 = vpack.c.b16 %v1301, %v1293
    %v2094 = vpack.c.b16 %v1302, %v1294
    %v2095 = vpack.c.b16 %v1303, %v1295
    %v2096 = vpack.c.b16 %v1304, %v1296
    %v2097 = vpack.c.b16 %v1305, %v1297
    %v2098 = vpack.c.b16 %v1306, %v1298
    %v2099 = vpack.c.b16 %v1315, %v1307
    %v2100 = vpack.c.b16 %v1316, %v1308
    %v2101 = vpack.c.b16 %v1317, %v1309
    %v2102 = vpack.c.b16 %v1318, %v1310
    %v2103 = vpack.c.b16 %v1319, %v1311
    %v2104 = vpack.c.b16 %v1320, %v1312
    %v2105 = vpack.c.b16 %v1321, %v1313
    %v2106 = vpack.c.b16 %v1322, %v1314
    %v2107 = vpack.c.b16 %v1331, %v1323
    %v2108 = vpack.c.b16 %v1332, %v1324
    %v2109 = vpack.c.b16 %v1333, %v1325
    %v2110 = vpack.c.b16 %v1334, %v1326
    %v2111 = vpack.c.b16 %v1335, %v1327
    %v2112 = vpack.c.b16 %v1336, %v1328
    %v2113 = vpack.c.b16 %v1337, %v1329
    %v2114 = vpack.c.b16 %v1338, %v1330
    %v2115 = vpack.c.b16 %v1347, %v1339
    %v2116 = vpack.c.b16 %v1348, %v1340
    %v2117 = vpack.c.b16 %v1349, %v1341
    %v2118 = vpack.c.b16 %v1350, %v1342
    %v2119 = vpack.c.b16 %v1351, %v1343
    %v2120 = vpack.c.b16 %v1352, %v1344
    %v2121 = vpack.c.b16 %v1353, %v1345
    %v2122 = vpack.c.b16 %v1354, %v1346
    %v2123 = vpack.c.b16 %v1363, %v1355
    %v2124 = vpack.c.b16 %v1364, %v1356
    %v2125 = vpack.c.b16 %v1365, %v1357
    %v2126 = vpack.c.b16 %v1366, %v1358
    %v2127 = vpack.c.b16 %v1367, %v1359
    %v2128 = vpack.c.b16 %v1368, %v1360
    %v2129 = vpack.c.b16 %v1369, %v1361
    %v2130 = vpack.c.b16 %v1370, %v1362
    %v2131 = vpack.c.b16 %v1379, %v1371
    %v2132 = vpack.c.b16 %v1380, %v1372
    %v2133 = vpack.c.b16 %v1381, %v1373
    %v2134 = vpack.c.b16 %v1382, %v1374
    %v2135 = vpack.c.b16 %v1383, %v1375
    %v2136 = vpack.c.b16 %v1384, %v1376
    %v2137 = vpack.c.b16 %v1385, %v1377
    %v2138 = vpack.c.b16 %v1386, %v1378
    %v2139 = vpack.c.b16 %v1395, %v1387
    %v2140 = vpack.c.b16 %v1396, %v1388
    %v2141 = vpack.c.b16 %v1397, %v1389
    %v2142 = vpack.c.b16 %v1398, %v1390
    %v2143 = vpack.c.b16 %v1399, %v1391
    %v2144 = vpack.c.b16 %v1400, %v1392
    %v2145 = vpack.c.b16 %v1401, %v1393
    %v2146 = vpack.c.b16 %v1402, %v1394
    %v2147 = vpack.c.b16 %v1411, %v1403
    %v2148 = vpack.c.b16 %v1412, %v1404
    %v2149 = vpack.c.b16 %v1413, %v1405
    %v2150 = vpack.c.b16 %v1414, %v1406
    %v2151 = vpack.c.b16 %v1415, %v1407
    %v2152 = vpack.c.b16 %v1416, %v1408
    %v2153 = vpack.c.b16 %v1417, %v1409
    %v2154 = vpack.c.b16 %v1418, %v1410
    %v2155 = vpack.c.b16 %v1427, %v1419
    %v2156 = vpack.c.b16 %v1428, %v1420
    %v2157 = vpack.c.b16 %v1429, %v1421
    %v2158 = vpack.c.b16 %v1430, %v1422
    %v2159 = vpack.c.b16 %v1431, %v1423
    %v2160 = vpack.c.b16 %v1432, %v1424
    %v2161 = vpack.c.b16 %v1433, %v1425
    %v2162 = vpack.c.b16 %v1434, %v1426
    %v2163 = vpack.c.b16 %v1443, %v1435
    %v2164 = vpack.c.b16 %v1444, %v1436
    %v2165 = vpack.c.b16 %v1445, %v1437
    %v2166 = vpack.c.b16 %v1446, %v1438
    %v2167 = vpack.c.b16 %v1447, %v1439
    %v2168 = vpack.c.b16 %v1448, %v1440
    %v2169 = vpack.c.b16 %v1449, %v1441
    %v2170 = vpack.c.b16 %v1450, %v1442
    %v2171 = vpack.c.b16 %v1459, %v1451
    %v2172 = vpack.c.b16 %v1460, %v1452
    %v2173 = vpack.c.b16 %v1461, %v1453
    %v2174 = vpack.c.b16 %v1462, %v1454
    %v2175 = vpack.c.b16 %v1463, %v1455
    %v2176 = vpack.c.b16 %v1464, %v1456
    %v2177 = vpack.c.b16 %v1465, %v1457
    %v2178 = vpack.c.b16 %v1466, %v1458
    %v2179 = vpack.c.b16 %v1475, %v1467
    %v2180 = vpack.c.b16 %v1476, %v1468
    %v2181 = vpack.c.b16 %v1477, %v1469
    %v2182 = vpack.c.b16 %v1478, %v1470
    %v2183 = vpack.c.b16 %v1479, %v1471
    %v2184 = vpack.c.b16 %v1480, %v1472
    %v2185 = vpack.c.b16 %v1481, %v1473
    %v2186 = vpack.c.b16 %v1482, %v1474
    %v2187 = vpack.c.b16 %v1491, %v1483
    %v2188 = vpack.c.b16 %v1492, %v1484
    %v2189 = vpack.c.b16 %v1493, %v1485
    %v2190 = vpack.c.b16 %v1494, %v1486
    %v2191 = vpack.c.b16 %v1495, %v1487
    %v2192 = vpack.c.b16 %v1496, %v1488
    %v2193 = vpack.c.b16 %v1497, %v1489
    %v2194 = vpack.c.b16 %v1498, %v1490
    %v2195 = vpack.c.b16 %v1507, %v1499
    %v2196 = vpack.c.b16 %v1508, %v1500
    %v2197 = vpack.c.b16 %v1509, %v1501
    %v2198 = vpack.c.b16 %v1510, %v1502
    %v2199 = vpack.c.b16 %v1511, %v1503
    %v2200 = vpack.c.b16 %v1512, %v1504
    %v2201 = vpack.c.b16 %v1513, %v1505
    %v2202 = vpack.c.b16 %v1514, %v1506
    %v2203 = vpack.c.b16 %v1523, %v1515
    %v2204 = vpack.c.b16 %v1524, %v1516
    %v2205 = vpack.c.b16 %v1525, %v1517
    %v2206 = vpack.c.b16 %v1526, %v1518
    %v2207 = vpack.c.b16 %v1527, %v1519
    %v2208 = vpack.c.b16 %v1528, %v1520
    %v2209 = vpack.c.b16 %v1529, %v1521
    %v2210 = vpack.c.b16 %v1530, %v1522
    %v2211 = vpack.c.b16 %v1539, %v1531
    %v2212 = vpack.c.b16 %v1540, %v1532
    %v2213 = vpack.c.b16 %v1541, %v1533
    %v2214 = vpack.c.b16 %v1542, %v1534
    %v2215 = vpack.c.b16 %v1543, %v1535
    %v2216 = vpack.c.b16 %v1544, %v1536
    %v2217 = vpack.c.b16 %v1545, %v1537
    %v2218 = vpack.c.b16 %v1546, %v1538
    %v2219 = vpack.c.b16 %v1555, %v1547
    %v2220 = vpack.c.b16 %v1556, %v1548
    %v2221 = vpack.c.b16 %v1557, %v1549
    %v2222 = vpack.c.b16 %v1558, %v1550
    %v2223 = vpack.c.b16 %v1559, %v1551
    %v2224 = vpack.c.b16 %v1560, %v1552
    %v2225 = vpack.c.b16 %v1561, %v1553
    %v2226 = vpack.c.b16 %v1562, %v1554
    %v2227 = vpack.c.b16 %v1571, %v1563
    %v2228 = vpack.c.b16 %v1572, %v1564
    %v2229 = vpack.c.b16 %v1573, %v1565
    %v2230 = vpack.c.b16 %v1574, %v1566
    %v2231 = vpack.c.b16 %v1575, %v1567
    %v2232 = vpack.c.b16 %v1576, %v1568
    %v2233 = vpack.c.b16 %v1577, %v1569
    %v2234 = vpack.c.b16 %v1578, %v1570
    %v2235 = vpack.c.b16 %v1587, %v1579
    %v2236 = vpack.c.b16 %v1588, %v1580
    %v2237 = vpack.c.b16 %v1589, %v1581
    %v2238 = vpack.c.b16 %v1590, %v1582
    %v2239 = vpack.c.b16 %v1591, %v1583
    %v2240 = vpack.c.b16 %v1592, %v1584
    %v2241 = vpack.c.b16 %v1593, %v1585
    %v2242 = vpack.c.b16 %v1594, %v1586
    %v2243 = vpack.c.b16 %v1603, %v1595
    %v2244 = vpack.c.b16 %v1604, %v1596
    %v2245 = vpack.c.b16 %v1605, %v1597
    %v2246 = vpack.c.b16 %v1606, %v1598
    %v2247 = vpack.c.b16 %v1607, %v1599
    %v2248 = vpack.c.b16 %v1608, %v1600
    %v2249 = vpack.c.b16 %v1609, %v1601
    %v2250 = vpack.c.b16 %v1610, %v1602
    %v2251 = vpack.c.b16 %v1619, %v1611
    %v2252 = vpack.c.b16 %v1620, %v1612
    %v2253 = vpack.c.b16 %v1621, %v1613
    %v2254 = vpack.c.b16 %v1622, %v1614
    %v2255 = vpack.c.b16 %v1623, %v1615
    %v2256 = vpack.c.b16 %v1624, %v1616
    %v2257 = vpack.c.b16 %v1625, %v1617
    %v2258 = vpack.c.b16 %v1626, %v1618
    %v2259 = vpack.c.b16 %v1635, %v1627
    %v2260 = vpack.c.b16 %v1636, %v1628
    %v2261 = vpack.c.b16 %v1637, %v1629
    %v2262 = vpack.c.b16 %v1638, %v1630
    %v2263 = vpack.c.b16 %v1639, %v1631
    %v2264 = vpack.c.b16 %v1640, %v1632
    %v2265 = vpack.c.b16 %v1641, %v1633
    %v2266 = vpack.c.b16 %v1642, %v1634
    %v2267 = vpack.c.b16 %v1651, %v1643
    %v2268 = vpack.c.b16 %v1652, %v1644
    %v2269 = vpack.c.b16 %v1653, %v1645
    %v2270 = vpack.c.b16 %v1654, %v1646
    %v2271 = vpack.c.b16 %v1655, %v1647
    %v2272 = vpack.c.b16 %v1656, %v1648
    %v2273 = vpack.c.b16 %v1657, %v1649
    %v2274 = vpack.c.b16 %v1658, %v1650
    %v2275 = vpack.c.b16 %v1667, %v1659
    %v2276 = vpack.c.b16 %v1668, %v1660
    %v2277 = vpack.c.b16 %v1669, %v1661
    %v2278 = vpack.c.b16 %v1670, %v1662
    %v2279 = vpack.c.b16 %v1671, %v1663
    %v2280 = vpack.c.b16 %v1672, %v1664
    %v2281 = vpack.c.b16 %v1673, %v1665
    %v2282 = vpack.c.b16 %v1674, %v1666
    %v2283 = vpack.c.b16 %v1683, %v1675
    %v2284 = vpack.c.b16 %v1684, %v1676
    %v2285 = vpack.c.b16 %v1685, %v1677
    %v2286 = vpack.c.b16 %v1686, %v1678
    %v2287 = vpack.c.b16 %v1687, %v1679
    %v2288 = vpack.c.b16 %v1688, %v1680
    %v2289 = vpack.c.b16 %v1689, %v1681
    %v2290 = vpack.c.b16 %v1690, %v1682
    %v2291 = vpack.c.b16 %v1699, %v1691
    %v2292 = vpack.c.b16 %v1700, %v1692
    %v2293 = vpack.c.b16 %v1701, %v1693
    %v2294 = vpack.c.b16 %v1702, %v1694
    %v2295 = vpack.c.b16 %v1703, %v1695
    %v2296 = vpack.c.b16 %v1704, %v1696
    %v2297 = vpack.c.b16 %v1705, %v1697
    %v2298 = vpack.c.b16 %v1706, %v1698
    %v2299 = vpack.c.b16 %v1715, %v1707
    %v2300 = vpack.c.b16 %v1716, %v1708
    %v2301 = vpack.c.b16 %v1717, %v1709
    %v2302 = vpack.c.b16 %v1718, %v1710
    %v2303 = vpack.c.b16 %v1719, %v1711
    %v2304 = vpack.c.b16 %v1720, %v1712
    %v2305 = vpack.c.b16 %v1721, %v1713
    %v2306 = vpack.c.b16 %v1722, %v1714
    %v2307 = vpack.c.b16 %v1731, %v1723
    %v2308 = vpack.c.b16 %v1732, %v1724
    %v2309 = vpack.c.b16 %v1733, %v1725
    %v2310 = vpack.c.b16 %v1734, %v1726
    %v2311 = vpack.c.b16 %v1735, %v1727
    %v2312 = vpack.c.b16 %v1736, %v1728
    %v2313 = vpack.c.b16 %v1737, %v1729
    %v2314 = vpack.c.b16 %v1738, %v1730
    %v2315 = vpack.c.b16 %v1747, %v1739
    %v2316 = vpack.c.b16 %v1748, %v1740
    %v2317 = vpack.c.b16 %v1749, %v1741
    %v2318 = vpack.c.b16 %v1750, %v1742
    %v2319 = vpack.c.b16 %v1751, %v1743
    %v2320 = vpack.c.b16 %v1752, %v1744
    %v2321 = vpack.c.b16 %v1753, %v1745
    %v2322 = vpack.c.b16 %v1754, %v1746
    %v2323 = vpack.c.b16 %v1763, %v1755
    %v2324 = vpack.c.b16 %v1764, %v1756
    %v2325 = vpack.c.b16 %v1765, %v1757
    %v2326 = vpack.c.b16 %v1766, %v1758
    %v2327 = vpack.c.b16 %v1767, %v1759
    %v2328 = vpack.c.b16 %v1768, %v1760
    %v2329 = vpack.c.b16 %v1769, %v1761
    %v2330 = vpack.c.b16 %v1770, %v1762
    %v2331 = vpack.c.b16 %v1779, %v1771
    %v2332 = vpack.c.b16 %v1780, %v1772
    %v2333 = vpack.c.b16 %v1781, %v1773
    %v2334 = vpack.c.b16 %v1782, %v1774
    %v2335 = vpack.c.b16 %v1783, %v1775
    %v2336 = vpack.c.b16 %v1784, %v1776
    %v2337 = vpack.c.b16 %v1785, %v1777
    %v2338 = vpack.c.b16 %v1786, %v1778
    %v2339 = vpack.c.b16 %v1795, %v1787
    %v2340 = vpack.c.b16 %v1796, %v1788
    %v2341 = vpack.c.b16 %v1797, %v1789
    %v2342 = vpack.c.b16 %v1798, %v1790
    %v2343 = vpack.c.b16 %v1799, %v1791
    %v2344 = vpack.c.b16 %v1800, %v1792
    %v2345 = vpack.c.b16 %v1801, %v1793
    %v2346 = vpack.c.b16 %v1802, %v1794
    %v2347 = vpack.c.b16 %v1811, %v1803
    %v2348 = vpack.c.b16 %v1812, %v1804
    %v2349 = vpack.c.b16 %v1813, %v1805
    %v2350 = vpack.c.b16 %v1814, %v1806
    %v2351 = vpack.c.b16 %v1815, %v1807
    %v2352 = vpack.c.b16 %v1816, %v1808
    %v2353 = vpack.c.b16 %v1817, %v1809
    %v2354 = vpack.c.b16 %v1818, %v1810
    %v2355 = vpack.c.b16 %v1827, %v1819
    %v2356 = vpack.c.b16 %v1828, %v1820
    %v2357 = vpack.c.b16 %v1829, %v1821
    %v2358 = vpack.c.b16 %v1830, %v1822
    %v2359 = vpack.c.b16 %v1831, %v1823
    %v2360 = vpack.c.b16 %v1832, %v1824
    %v2361 = vpack.c.b16 %v1833, %v1825
    %v2362 = vpack.c.b16 %v1834, %v1826
    %v2363 = vpack.c.b16 %v1843, %v1835
    %v2364 = vpack.c.b16 %v1844, %v1836
    %v2365 = vpack.c.b16 %v1845, %v1837
    %v2366 = vpack.c.b16 %v1846, %v1838
    %v2367 = vpack.c.b16 %v1847, %v1839
    %v2368 = vpack.c.b16 %v1848, %v1840
    %v2369 = vpack.c.b16 %v1849, %v1841
    %v2370 = vpack.c.b16 %v1850, %v1842
    %v2371 = vpack.c.b16 %v1859, %v1851
    %v2372 = vpack.c.b16 %v1860, %v1852
    %v2373 = vpack.c.b16 %v1861, %v1853
    %v2374 = vpack.c.b16 %v1862, %v1854
    %v2375 = vpack.c.b16 %v1863, %v1855
    %v2376 = vpack.c.b16 %v1864, %v1856
    %v2377 = vpack.c.b16 %v1865, %v1857
    %v2378 = vpack.c.b16 %v1866, %v1858
    %v2379 = vpack.c.b16 %v1875, %v1867
    %v2380 = vpack.c.b16 %v1876, %v1868
    %v2381 = vpack.c.b16 %v1877, %v1869
    %v2382 = vpack.c.b16 %v1878, %v1870
    %v2383 = vpack.c.b16 %v1879, %v1871
    %v2384 = vpack.c.b16 %v1880, %v1872
    %v2385 = vpack.c.b16 %v1881, %v1873
    %v2386 = vpack.c.b16 %v1882, %v1874
    %v2387 = vpack.c.b16 %v1891, %v1883
    %v2388 = vpack.c.b16 %v1892, %v1884
    %v2389 = vpack.c.b16 %v1893, %v1885
    %v2390 = vpack.c.b16 %v1894, %v1886
    %v2391 = vpack.c.b16 %v1895, %v1887
    %v2392 = vpack.c.b16 %v1896, %v1888
    %v2393 = vpack.c.b16 %v1897, %v1889
    %v2394 = vpack.c.b16 %v1898, %v1890
    %v2395 = vpack.c.b16 %v1907, %v1899
    %v2396 = vpack.c.b16 %v1908, %v1900
    %v2397 = vpack.c.b16 %v1909, %v1901
    %v2398 = vpack.c.b16 %v1910, %v1902
    %v2399 = vpack.c.b16 %v1911, %v1903
    %v2400 = vpack.c.b16 %v1912, %v1904
    %v2401 = vpack.c.b16 %v1913, %v1905
    %v2402 = vpack.c.b16 %v1914, %v1906
    %v2403 = vpack.c.b16 %v1923, %v1915
    %v2404 = vpack.c.b16 %v1924, %v1916
    %v2405 = vpack.c.b16 %v1925, %v1917
    %v2406 = vpack.c.b16 %v1926, %v1918
    %v2407 = vpack.c.b16 %v1927, %v1919
    %v2408 = vpack.c.b16 %v1928, %v1920
    %v2409 = vpack.c.b16 %v1929, %v1921
    %v2410 = vpack.c.b16 %v1930, %v1922
    %v2411 = vpack.c.b16 %v1939, %v1931
    %v2412 = vpack.c.b16 %v1940, %v1932
    %v2413 = vpack.c.b16 %v1941, %v1933
    %v2414 = vpack.c.b16 %v1942, %v1934
    %v2415 = vpack.c.b16 %v1943, %v1935
    %v2416 = vpack.c.b16 %v1944, %v1936
    %v2417 = vpack.c.b16 %v1945, %v1937
    %v2418 = vpack.c.b16 %v1946, %v1938
    %v2419 = vpack.c.b16 %v1955, %v1947
    %v2420 = vpack.c.b16 %v1956, %v1948
    %v2421 = vpack.c.b16 %v1957, %v1949
    %v2422 = vpack.c.b16 %v1958, %v1950
    %v2423 = vpack.c.b16 %v1959, %v1951
    %v2424 = vpack.c.b16 %v1960, %v1952
    %v2425 = vpack.c.b16 %v1961, %v1953
    %v2426 = vpack.c.b16 %v1962, %v1954
    %v2427 = vpack.c.b16 %v1971, %v1963
    %v2428 = vpack.c.b16 %v1972, %v1964
    %v2429 = vpack.c.b16 %v1973, %v1965
    %v2430 = vpack.c.b16 %v1974, %v1966
    %v2431 = vpack.c.b16 %v1975, %v1967
    %v2432 = vpack.c.b16 %v1976, %v1968
    %v2433 = vpack.c.b16 %v1977, %v1969
    %v2434 = vpack.c.b16 %v1978, %v1970
    %v2435 = vpack.c.b16 %v1987, %v1979
    %v2436 = vpack.c.b16 %v1988, %v1980
    %v2437 = vpack.c.b16 %v1989, %v1981
    %v2438 = vpack.c.b16 %v1990, %v1982
    %v2439 = vpack.c.b16 %v1991, %v1983
    %v2440 = vpack.c.b16 %v1992, %v1984
    %v2441 = vpack.c.b16 %v1993, %v1985
    %v2442 = vpack.c.b16 %v1994, %v1986
    %2891 = vmatprep.subr.bf16.mxu0 %v2052
    %2892 = vmatpush1.bf16.msra.mxu0 %v2051
    %2893 = vmatprep.subr.bf16.mxu0 %v2044
    %2894 = vmatpush1.bf16.msra.mxu0 %v2043
    %2895 = vmatprep.subr.bf16.mxu0 %v2036
    %2896 = vmatpush1.bf16.msra.mxu0 %v2035
    %2897 = vmatprep.subr.bf16.mxu0 %v2028
    %2898 = vmatpush1.bf16.msra.mxu0 %v2027
    %2899 = vmatprep.subr.bf16.mxu0 %v2020
    %2900 = vmatpush1.bf16.msra.mxu0 %v2019
    %2901 = vmatprep.subr.bf16.mxu0 %v2012
    %2902 = vmatpush1.bf16.msra.mxu0 %v2011
    %2903 = vmatprep.subr.bf16.mxu0 %v2004
    %2904 = vmatpush1.bf16.msra.mxu0 %v2003
    %2905 = vmatprep.subr.bf16.mxu0 %v1996
    %2906 = vmatpush1.bf16.msra.mxu0 %v1995
    %2907 = vmatprep.subr.bf16.mxu0 %v2116
    %2908 = vmatpush2.bf16.msra.mxu0 %v2115
    %2909 = vmatprep.subr.bf16.mxu0 %v2108
    %2910 = vmatpush2.bf16.msra.mxu0 %v2107
    %2911 = vmatprep.subr.bf16.mxu0 %v2100
    %2912 = vmatpush2.bf16.msra.mxu0 %v2099
    %2913 = vmatprep.subr.bf16.mxu0 %v2092
    %2914 = vmatpush2.bf16.msra.mxu0 %v2091
    %2915 = vmatprep.subr.bf16.mxu0 %v2084
    %2916 = vmatpush2.bf16.msra.mxu0 %v2083
    %2917 = vmatprep.subr.bf16.mxu0 %v2076
    %2918 = vmatpush2.bf16.msra.mxu0 %v2075
    %2919 = vmatprep.subr.bf16.mxu0 %v2068
    %2920 = vmatpush2.bf16.msra.mxu0 %v2067
    %2921 = vmatprep.subr.bf16.mxu0 %v2060
    %2922 = vmatpush2.bf16.msra.mxu0 %v2059
    %2923 = vmatprep.mubr.bf16.mxu0 %v638
    %2924 = vmatmul.mubr.bf16.gmra.mxu0 %v637
    %v2925 = vpop.f32.mrf.mxu0
    %v2926 = vadd.f32 %v578, %v2925
    %v2927 = vpop.f32.mrf.mxu0
    %v2928 = vadd.f32 %v582, %v2927
    %v2929 = vpop.f32.mrf.mxu0
    %v2930 = vadd.f32 %v578, %v2929
    %v2931 = vpop.f32.mrf.mxu0
    %v2932 = vadd.f32 %v582, %v2931
    %2933 = vdwg.mxu0
    %2934 = vmatprep.subr.bf16.mxu0 %v2180
    %2935 = vmatpush1.bf16.msra.mxu0 %v2179
    %2936 = vmatprep.subr.bf16.mxu0 %v2172
    %2937 = vmatpush1.bf16.msra.mxu0 %v2171
    %2938 = vmatprep.subr.bf16.mxu0 %v2164
    %2939 = vmatpush1.bf16.msra.mxu0 %v2163
    %2940 = vmatprep.subr.bf16.mxu0 %v2156
    %2941 = vmatpush1.bf16.msra.mxu0 %v2155
    %2942 = vmatprep.subr.bf16.mxu0 %v2148
    %2943 = vmatpush1.bf16.msra.mxu0 %v2147
    %2944 = vmatprep.subr.bf16.mxu0 %v2140
    %2945 = vmatpush1.bf16.msra.mxu0 %v2139
    %2946 = vmatprep.subr.bf16.mxu0 %v2132
    %2947 = vmatpush1.bf16.msra.mxu0 %v2131
    %2948 = vmatprep.subr.bf16.mxu0 %v2124
    %2949 = vmatpush1.bf16.msra.mxu0 %v2123
    %2950 = vmatprep.subr.bf16.mxu0 %v2244
    %2951 = vmatpush2.bf16.msra.mxu0 %v2243
    %2952 = vmatprep.subr.bf16.mxu0 %v2236
    %2953 = vmatpush2.bf16.msra.mxu0 %v2235
    %2954 = vmatprep.subr.bf16.mxu0 %v2228
    %2955 = vmatpush2.bf16.msra.mxu0 %v2227
    %2956 = vmatprep.subr.bf16.mxu0 %v2220
    %2957 = vmatpush2.bf16.msra.mxu0 %v2219
    %2958 = vmatprep.subr.bf16.mxu0 %v2212
    %2959 = vmatpush2.bf16.msra.mxu0 %v2211
    %2960 = vmatprep.subr.bf16.mxu0 %v2204
    %2961 = vmatpush2.bf16.msra.mxu0 %v2203
    %2962 = vmatprep.subr.bf16.mxu0 %v2196
    %2963 = vmatpush2.bf16.msra.mxu0 %v2195
    %2964 = vmatprep.subr.bf16.mxu0 %v2188
    %2965 = vmatpush2.bf16.msra.mxu0 %v2187
    %2966 = vmatprep.mubr.bf16.mxu0 %v640
    %2967 = vmatmul.mubr.bf16.gmra.mxu0 %v639
    %v2968 = vpop.f32.mrf.mxu0
    %v2969 = vadd.f32 %v2926, %v2968
    %v2970 = vpop.f32.mrf.mxu0
    %v2971 = vadd.f32 %v2928, %v2970
    %v2972 = vpop.f32.mrf.mxu0
    %v2973 = vadd.f32 %v2930, %v2972
    %v2974 = vpop.f32.mrf.mxu0
    %v2975 = vadd.f32 %v2932, %v2974
    %2976 = vdwg.mxu0
    %2977 = vmatprep.subr.bf16.mxu0 %v2308
    %2978 = vmatpush1.bf16.msra.mxu0 %v2307
    %2979 = vmatprep.subr.bf16.mxu0 %v2300
    %2980 = vmatpush1.bf16.msra.mxu0 %v2299
    %2981 = vmatprep.subr.bf16.mxu0 %v2292
    %2982 = vmatpush1.bf16.msra.mxu0 %v2291
    %2983 = vmatprep.subr.bf16.mxu0 %v2284
    %2984 = vmatpush1.bf16.msra.mxu0 %v2283
    %2985 = vmatprep.subr.bf16.mxu0 %v2276
    %2986 = vmatpush1.bf16.msra.mxu0 %v2275
    %2987 = vmatprep.subr.bf16.mxu0 %v2268
    %2988 = vmatpush1.bf16.msra.mxu0 %v2267
    %2989 = vmatprep.subr.bf16.mxu0 %v2260
    %2990 = vmatpush1.bf16.msra.mxu0 %v2259
    %2991 = vmatprep.subr.bf16.mxu0 %v2252
    %2992 = vmatpush1.bf16.msra.mxu0 %v2251
    %2993 = vmatprep.subr.bf16.mxu0 %v2372
    %2994 = vmatpush2.bf16.msra.mxu0 %v2371
    %2995 = vmatprep.subr.bf16.mxu0 %v2364
    %2996 = vmatpush2.bf16.msra.mxu0 %v2363
    %2997 = vmatprep.subr.bf16.mxu0 %v2356
    %2998 = vmatpush2.bf16.msra.mxu0 %v2355
    %2999 = vmatprep.subr.bf16.mxu0 %v2348
    %3000 = vmatpush2.bf16.msra.mxu0 %v2347
    %3001 = vmatprep.subr.bf16.mxu0 %v2340
    %3002 = vmatpush2.bf16.msra.mxu0 %v2339
    %3003 = vmatprep.subr.bf16.mxu0 %v2332
    %3004 = vmatpush2.bf16.msra.mxu0 %v2331
    %3005 = vmatprep.subr.bf16.mxu0 %v2324
    %3006 = vmatpush2.bf16.msra.mxu0 %v2323
    %3007 = vmatprep.subr.bf16.mxu0 %v2316
    %3008 = vmatpush2.bf16.msra.mxu0 %v2315
    %3009 = vmatprep.mubr.bf16.mxu0 %v642
    %3010 = vmatmul.mubr.bf16.gmra.mxu0 %v641
    %v3011 = vpop.f32.mrf.mxu0
    %v3012 = vadd.f32 %v2969, %v3011
    %v3013 = vpop.f32.mrf.mxu0
    %v3014 = vadd.f32 %v2971, %v3013
    %v3015 = vpop.f32.mrf.mxu0
    %v3016 = vadd.f32 %v2973, %v3015
    %v3017 = vpop.f32.mrf.mxu0
    %v3018 = vadd.f32 %v2975, %v3017
    %3019 = vdwg.mxu0
    %3020 = vmatprep.subr.bf16.mxu0 %v2436
    %3021 = vmatpush1.bf16.msra.mxu0 %v2435
    %3022 = vmatprep.subr.bf16.mxu0 %v2428
    %3023 = vmatpush1.bf16.msra.mxu0 %v2427
    %3024 = vmatprep.subr.bf16.mxu0 %v2420
    %3025 = vmatpush1.bf16.msra.mxu0 %v2419
    %3026 = vmatprep.subr.bf16.mxu0 %v2412
    %3027 = vmatpush1.bf16.msra.mxu0 %v2411
    %3028 = vmatprep.subr.bf16.mxu0 %v2404
    %3029 = vmatpush1.bf16.msra.mxu0 %v2403
    %3030 = vmatprep.subr.bf16.mxu0 %v2396
    %3031 = vmatpush1.bf16.msra.mxu0 %v2395
    %3032 = vmatprep.subr.bf16.mxu0 %v2388
    %3033 = vmatpush1.bf16.msra.mxu0 %v2387
    %3034 = vmatprep.subr.bf16.mxu0 %v2380
    %3035 = vmatpush1.bf16.msra.mxu0 %v2379
    %3036 = vmatprep.subr.bf16.mxu0 0
    %3037 = vmatpush2.bf16.msra.mxu0 0
    %3038 = vmatprep.subr.bf16.mxu0 0
    %3039 = vmatpush2.bf16.msra.mxu0 0
    %3040 = vmatprep.subr.bf16.mxu0 0
    %3041 = vmatpush2.bf16.msra.mxu0 0
    %3042 = vmatprep.subr.bf16.mxu0 0
    %3043 = vmatpush2.bf16.msra.mxu0 0
    %3044 = vmatprep.subr.bf16.mxu0 0
    %3045 = vmatpush2.bf16.msra.mxu0 0
    %3046 = vmatprep.subr.bf16.mxu0 0
    %3047 = vmatpush2.bf16.msra.mxu0 0
    %3048 = vmatprep.subr.bf16.mxu0 0
    %3049 = vmatpush2.bf16.msra.mxu0 0
    %3050 = vmatprep.subr.bf16.mxu0 0
    %3051 = vmatpush2.bf16.msra.mxu0 0
    %3052 = vmatprep.mubr.bf16.mxu0 0
    %3053 = vmatmul.mubr.bf16.gmra.mxu0 %v643
    %v3054 = vpop.f32.mrf.mxu0
    %v3055 = vadd.f32 %v3012, %v3054
    %v3056 = vpop.f32.mrf.mxu0
    %v3057 = vadd.f32 %v3014, %v3056
    %v3058 = vpop.f32.mrf.mxu0
    %v3059 = vadd.f32 %v3016, %v3058
    %v3060 = vpop.f32.mrf.mxu0
    %v3061 = vadd.f32 %v3018, %v3060
    %3062 = vdwg.mxu0
    %3063 = vmatprep.subr.bf16.mxu0 %v2054
    %3064 = vmatpush1.bf16.msra.mxu0 %v2053
    %3065 = vmatprep.subr.bf16.mxu0 %v2046
    %3066 = vmatpush1.bf16.msra.mxu0 %v2045
    %3067 = vmatprep.subr.bf16.mxu0 %v2038
    %3068 = vmatpush1.bf16.msra.mxu0 %v2037
    %3069 = vmatprep.subr.bf16.mxu0 %v2030
    %3070 = vmatpush1.bf16.msra.mxu0 %v2029
    %3071 = vmatprep.subr.bf16.mxu0 %v2022
    %3072 = vmatpush1.bf16.msra.mxu0 %v2021
    %3073 = vmatprep.subr.bf16.mxu0 %v2014
    %3074 = vmatpush1.bf16.msra.mxu0 %v2013
    %3075 = vmatprep.subr.bf16.mxu0 %v2006
    %3076 = vmatpush1.bf16.msra.mxu0 %v2005
    %3077 = vmatprep.subr.bf16.mxu0 %v1998
    %3078 = vmatpush1.bf16.msra.mxu0 %v1997
    %3079 = vmatprep.subr.bf16.mxu0 %v2118
    %3080 = vmatpush2.bf16.msra.mxu0 %v2117
    %3081 = vmatprep.subr.bf16.mxu0 %v2110
    %3082 = vmatpush2.bf16.msra.mxu0 %v2109
    %3083 = vmatprep.subr.bf16.mxu0 %v2102
    %3084 = vmatpush2.bf16.msra.mxu0 %v2101
    %3085 = vmatprep.subr.bf16.mxu0 %v2094
    %3086 = vmatpush2.bf16.msra.mxu0 %v2093
    %3087 = vmatprep.subr.bf16.mxu0 %v2086
    %3088 = vmatpush2.bf16.msra.mxu0 %v2085
    %3089 = vmatprep.subr.bf16.mxu0 %v2078
    %3090 = vmatpush2.bf16.msra.mxu0 %v2077
    %3091 = vmatprep.subr.bf16.mxu0 %v2070
    %3092 = vmatpush2.bf16.msra.mxu0 %v2069
    %3093 = vmatprep.subr.bf16.mxu0 %v2062
    %3094 = vmatpush2.bf16.msra.mxu0 %v2061
    %3095 = vmatprep.mubr.bf16.mxu0 %v638
    %3096 = vmatmul.mubr.bf16.gmra.mxu0 %v637
    %v3097 = vpop.f32.mrf.mxu0
    %v3098 = vadd.f32 %v586, %v3097
    %v3099 = vpop.f32.mrf.mxu0
    %v3100 = vadd.f32 %v590, %v3099
    %v3101 = vpop.f32.mrf.mxu0
    %v3102 = vadd.f32 %v586, %v3101
    %v3103 = vpop.f32.mrf.mxu0
    %v3104 = vadd.f32 %v590, %v3103
    %3105 = vdwg.mxu0
    %3106 = vmatprep.subr.bf16.mxu0 %v2182
    %3107 = vmatpush1.bf16.msra.mxu0 %v2181
    %3108 = vmatprep.subr.bf16.mxu0 %v2174
    %3109 = vmatpush1.bf16.msra.mxu0 %v2173
    %3110 = vmatprep.subr.bf16.mxu0 %v2166
    %3111 = vmatpush1.bf16.msra.mxu0 %v2165
    %3112 = vmatprep.subr.bf16.mxu0 %v2158
    %3113 = vmatpush1.bf16.msra.mxu0 %v2157
    %3114 = vmatprep.subr.bf16.mxu0 %v2150
    %3115 = vmatpush1.bf16.msra.mxu0 %v2149
    %3116 = vmatprep.subr.bf16.mxu0 %v2142
    %3117 = vmatpush1.bf16.msra.mxu0 %v2141
    %3118 = vmatprep.subr.bf16.mxu0 %v2134
    %3119 = vmatpush1.bf16.msra.mxu0 %v2133
    %3120 = vmatprep.subr.bf16.mxu0 %v2126
    %3121 = vmatpush1.bf16.msra.mxu0 %v2125
    %3122 = vmatprep.subr.bf16.mxu0 %v2246
    %3123 = vmatpush2.bf16.msra.mxu0 %v2245
    %3124 = vmatprep.subr.bf16.mxu0 %v2238
    %3125 = vmatpush2.bf16.msra.mxu0 %v2237
    %3126 = vmatprep.subr.bf16.mxu0 %v2230
    %3127 = vmatpush2.bf16.msra.mxu0 %v2229
    %3128 = vmatprep.subr.bf16.mxu0 %v2222
    %3129 = vmatpush2.bf16.msra.mxu0 %v2221
    %3130 = vmatprep.subr.bf16.mxu0 %v2214
    %3131 = vmatpush2.bf16.msra.mxu0 %v2213
    %3132 = vmatprep.subr.bf16.mxu0 %v2206
    %3133 = vmatpush2.bf16.msra.mxu0 %v2205
    %3134 = vmatprep.subr.bf16.mxu0 %v2198
    %3135 = vmatpush2.bf16.msra.mxu0 %v2197
    %3136 = vmatprep.subr.bf16.mxu0 %v2190
    %3137 = vmatpush2.bf16.msra.mxu0 %v2189
    %3138 = vmatprep.mubr.bf16.mxu0 %v640
    %3139 = vmatmul.mubr.bf16.gmra.mxu0 %v639
    %v3140 = vpop.f32.mrf.mxu0
    %v3141 = vadd.f32 %v3098, %v3140
    %v3142 = vpop.f32.mrf.mxu0
    %v3143 = vadd.f32 %v3100, %v3142
    %v3144 = vpop.f32.mrf.mxu0
    %v3145 = vadd.f32 %v3102, %v3144
    %v3146 = vpop.f32.mrf.mxu0
    %v3147 = vadd.f32 %v3104, %v3146
    %3148 = vdwg.mxu0
    %3149 = vmatprep.subr.bf16.mxu0 %v2310
    %3150 = vmatpush1.bf16.msra.mxu0 %v2309
    %3151 = vmatprep.subr.bf16.mxu0 %v2302
    %3152 = vmatpush1.bf16.msra.mxu0 %v2301
    %3153 = vmatprep.subr.bf16.mxu0 %v2294
    %3154 = vmatpush1.bf16.msra.mxu0 %v2293
    %3155 = vmatprep.subr.bf16.mxu0 %v2286
    %3156 = vmatpush1.bf16.msra.mxu0 %v2285
    %3157 = vmatprep.subr.bf16.mxu0 %v2278
    %3158 = vmatpush1.bf16.msra.mxu0 %v2277
    %3159 = vmatprep.subr.bf16.mxu0 %v2270
    %3160 = vmatpush1.bf16.msra.mxu0 %v2269
    %3161 = vmatprep.subr.bf16.mxu0 %v2262
    %3162 = vmatpush1.bf16.msra.mxu0 %v2261
    %3163 = vmatprep.subr.bf16.mxu0 %v2254
    %3164 = vmatpush1.bf16.msra.mxu0 %v2253
    %3165 = vmatprep.subr.bf16.mxu0 %v2374
    %3166 = vmatpush2.bf16.msra.mxu0 %v2373
    %3167 = vmatprep.subr.bf16.mxu0 %v2366
    %3168 = vmatpush2.bf16.msra.mxu0 %v2365
    %3169 = vmatprep.subr.bf16.mxu0 %v2358
    %3170 = vmatpush2.bf16.msra.mxu0 %v2357
    %3171 = vmatprep.subr.bf16.mxu0 %v2350
    %3172 = vmatpush2.bf16.msra.mxu0 %v2349
    %3173 = vmatprep.subr.bf16.mxu0 %v2342
    %3174 = vmatpush2.bf16.msra.mxu0 %v2341
    %3175 = vmatprep.subr.bf16.mxu0 %v2334
    %3176 = vmatpush2.bf16.msra.mxu0 %v2333
    %3177 = vmatprep.subr.bf16.mxu0 %v2326
    %3178 = vmatpush2.bf16.msra.mxu0 %v2325
    %3179 = vmatprep.subr.bf16.mxu0 %v2318
    %3180 = vmatpush2.bf16.msra.mxu0 %v2317
    %3181 = vmatprep.mubr.bf16.mxu0 %v642
    %3182 = vmatmul.mubr.bf16.gmra.mxu0 %v641
    %v3183 = vpop.f32.mrf.mxu0
    %v3184 = vadd.f32 %v3141, %v3183
    %v3185 = vpop.f32.mrf.mxu0
    %v3186 = vadd.f32 %v3143, %v3185
    %v3187 = vpop.f32.mrf.mxu0
    %v3188 = vadd.f32 %v3145, %v3187
    %v3189 = vpop.f32.mrf.mxu0
    %v3190 = vadd.f32 %v3147, %v3189
    %3191 = vdwg.mxu0
    %3192 = vmatprep.subr.bf16.mxu0 %v2438
    %3193 = vmatpush1.bf16.msra.mxu0 %v2437
    %3194 = vmatprep.subr.bf16.mxu0 %v2430
    %3195 = vmatpush1.bf16.msra.mxu0 %v2429
    %3196 = vmatprep.subr.bf16.mxu0 %v2422
    %3197 = vmatpush1.bf16.msra.mxu0 %v2421
    %3198 = vmatprep.subr.bf16.mxu0 %v2414
    %3199 = vmatpush1.bf16.msra.mxu0 %v2413
    %3200 = vmatprep.subr.bf16.mxu0 %v2406
    %3201 = vmatpush1.bf16.msra.mxu0 %v2405
    %3202 = vmatprep.subr.bf16.mxu0 %v2398
    %3203 = vmatpush1.bf16.msra.mxu0 %v2397
    %3204 = vmatprep.subr.bf16.mxu0 %v2390
    %3205 = vmatpush1.bf16.msra.mxu0 %v2389
    %3206 = vmatprep.subr.bf16.mxu0 %v2382
    %3207 = vmatpush1.bf16.msra.mxu0 %v2381
    %3208 = vmatprep.subr.bf16.mxu0 0
    %3209 = vmatpush2.bf16.msra.mxu0 0
    %3210 = vmatprep.subr.bf16.mxu0 0
    %3211 = vmatpush2.bf16.msra.mxu0 0
    %3212 = vmatprep.subr.bf16.mxu0 0
    %3213 = vmatpush2.bf16.msra.mxu0 0
    %3214 = vmatprep.subr.bf16.mxu0 0
    %3215 = vmatpush2.bf16.msra.mxu0 0
    %3216 = vmatprep.subr.bf16.mxu0 0
    %3217 = vmatpush2.bf16.msra.mxu0 0
    %3218 = vmatprep.subr.bf16.mxu0 0
    %3219 = vmatpush2.bf16.msra.mxu0 0
    %3220 = vmatprep.subr.bf16.mxu0 0
    %3221 = vmatpush2.bf16.msra.mxu0 0
    %3222 = vmatprep.subr.bf16.mxu0 0
    %3223 = vmatpush2.bf16.msra.mxu0 0
    %3224 = vmatprep.mubr.bf16.mxu0 0
    %3225 = vmatmul.mubr.bf16.gmra.mxu0 %v643
    %v3226 = vpop.f32.mrf.mxu0
    %v3227 = vadd.f32 %v3184, %v3226
    %v3228 = vpop.f32.mrf.mxu0
    %v3229 = vadd.f32 %v3186, %v3228
    %v3230 = vpop.f32.mrf.mxu0
    %v3231 = vadd.f32 %v3188, %v3230
    %v3232 = vpop.f32.mrf.mxu0
    %v3233 = vadd.f32 %v3190, %v3232
    %3234 = vdwg.mxu0
    %3235 = vmatprep.subr.bf16.mxu0 %v2056
    %3236 = vmatpush1.bf16.msra.mxu0 %v2055
    %3237 = vmatprep.subr.bf16.mxu0 %v2048
    %3238 = vmatpush1.bf16.msra.mxu0 %v2047
    %3239 = vmatprep.subr.bf16.mxu0 %v2040
    %3240 = vmatpush1.bf16.msra.mxu0 %v2039
    %3241 = vmatprep.subr.bf16.mxu0 %v2032
    %3242 = vmatpush1.bf16.msra.mxu0 %v2031
    %3243 = vmatprep.subr.bf16.mxu0 %v2024
    %3244 = vmatpush1.bf16.msra.mxu0 %v2023
    %3245 = vmatprep.subr.bf16.mxu0 %v2016
    %3246 = vmatpush1.bf16.msra.mxu0 %v2015
    %3247 = vmatprep.subr.bf16.mxu0 %v2008
    %3248 = vmatpush1.bf16.msra.mxu0 %v2007
    %3249 = vmatprep.subr.bf16.mxu0 %v2000
    %3250 = vmatpush1.bf16.msra.mxu0 %v1999
    %3251 = vmatprep.subr.bf16.mxu0 %v2120
    %3252 = vmatpush2.bf16.msra.mxu0 %v2119
    %3253 = vmatprep.subr.bf16.mxu0 %v2112
    %3254 = vmatpush2.bf16.msra.mxu0 %v2111
    %3255 = vmatprep.subr.bf16.mxu0 %v2104
    %3256 = vmatpush2.bf16.msra.mxu0 %v2103
    %3257 = vmatprep.subr.bf16.mxu0 %v2096
    %3258 = vmatpush2.bf16.msra.mxu0 %v2095
    %3259 = vmatprep.subr.bf16.mxu0 %v2088
    %3260 = vmatpush2.bf16.msra.mxu0 %v2087
    %3261 = vmatprep.subr.bf16.mxu0 %v2080
    %3262 = vmatpush2.bf16.msra.mxu0 %v2079
    %3263 = vmatprep.subr.bf16.mxu0 %v2072
    %3264 = vmatpush2.bf16.msra.mxu0 %v2071
    %3265 = vmatprep.subr.bf16.mxu0 %v2064
    %3266 = vmatpush2.bf16.msra.mxu0 %v2063
    %3267 = vmatprep.mubr.bf16.mxu0 %v638
    %3268 = vmatmul.mubr.bf16.gmra.mxu0 %v637
    %v3269 = vpop.f32.mrf.mxu0
    %v3270 = vadd.f32 %v594, %v3269
    %v3271 = vpop.f32.mrf.mxu0
    %v3272 = vadd.f32 %v598, %v3271
    %v3273 = vpop.f32.mrf.mxu0
    %v3274 = vadd.f32 %v594, %v3273
    %v3275 = vpop.f32.mrf.mxu0
    %v3276 = vadd.f32 %v598, %v3275
    %3277 = vdwg.mxu0
    %3278 = vmatprep.subr.bf16.mxu0 %v2184
    %3279 = vmatpush1.bf16.msra.mxu0 %v2183
    %3280 = vmatprep.subr.bf16.mxu0 %v2176
    %3281 = vmatpush1.bf16.msra.mxu0 %v2175
    %3282 = vmatprep.subr.bf16.mxu0 %v2168
    %3283 = vmatpush1.bf16.msra.mxu0 %v2167
    %3284 = vmatprep.subr.bf16.mxu0 %v2160
    %3285 = vmatpush1.bf16.msra.mxu0 %v2159
    %3286 = vmatprep.subr.bf16.mxu0 %v2152
    %3287 = vmatpush1.bf16.msra.mxu0 %v2151
    %3288 = vmatprep.subr.bf16.mxu0 %v2144
    %3289 = vmatpush1.bf16.msra.mxu0 %v2143
    %3290 = vmatprep.subr.bf16.mxu0 %v2136
    %3291 = vmatpush1.bf16.msra.mxu0 %v2135
    %3292 = vmatprep.subr.bf16.mxu0 %v2128
    %3293 = vmatpush1.bf16.msra.mxu0 %v2127
    %3294 = vmatprep.subr.bf16.mxu0 %v2248
    %3295 = vmatpush2.bf16.msra.mxu0 %v2247
    %3296 = vmatprep.subr.bf16.mxu0 %v2240
    %3297 = vmatpush2.bf16.msra.mxu0 %v2239
    %3298 = vmatprep.subr.bf16.mxu0 %v2232
    %3299 = vmatpush2.bf16.msra.mxu0 %v2231
    %3300 = vmatprep.subr.bf16.mxu0 %v2224
    %3301 = vmatpush2.bf16.msra.mxu0 %v2223
    %3302 = vmatprep.subr.bf16.mxu0 %v2216
    %3303 = vmatpush2.bf16.msra.mxu0 %v2215
    %3304 = vmatprep.subr.bf16.mxu0 %v2208
    %3305 = vmatpush2.bf16.msra.mxu0 %v2207
    %3306 = vmatprep.subr.bf16.mxu0 %v2200
    %3307 = vmatpush2.bf16.msra.mxu0 %v2199
    %3308 = vmatprep.subr.bf16.mxu0 %v2192
    %3309 = vmatpush2.bf16.msra.mxu0 %v2191
    %3310 = vmatprep.mubr.bf16.mxu0 %v640
    %3311 = vmatmul.mubr.bf16.gmra.mxu0 %v639
    %v3312 = vpop.f32.mrf.mxu0
    %v3313 = vadd.f32 %v3270, %v3312
    %v3314 = vpop.f32.mrf.mxu0
    %v3315 = vadd.f32 %v3272, %v3314
    %v3316 = vpop.f32.mrf.mxu0
    %v3317 = vadd.f32 %v3274, %v3316
    %v3318 = vpop.f32.mrf.mxu0
    %v3319 = vadd.f32 %v3276, %v3318
    %3320 = vdwg.mxu0
    %3321 = vmatprep.subr.bf16.mxu0 %v2312
    %3322 = vmatpush1.bf16.msra.mxu0 %v2311
    %3323 = vmatprep.subr.bf16.mxu0 %v2304
    %3324 = vmatpush1.bf16.msra.mxu0 %v2303
    %3325 = vmatprep.subr.bf16.mxu0 %v2296
    %3326 = vmatpush1.bf16.msra.mxu0 %v2295
    %3327 = vmatprep.subr.bf16.mxu0 %v2288
    %3328 = vmatpush1.bf16.msra.mxu0 %v2287
    %3329 = vmatprep.subr.bf16.mxu0 %v2280
    %3330 = vmatpush1.bf16.msra.mxu0 %v2279
    %3331 = vmatprep.subr.bf16.mxu0 %v2272
    %3332 = vmatpush1.bf16.msra.mxu0 %v2271
    %3333 = vmatprep.subr.bf16.mxu0 %v2264
    %3334 = vmatpush1.bf16.msra.mxu0 %v2263
    %3335 = vmatprep.subr.bf16.mxu0 %v2256
    %3336 = vmatpush1.bf16.msra.mxu0 %v2255
    %3337 = vmatprep.subr.bf16.mxu0 %v2376
    %3338 = vmatpush2.bf16.msra.mxu0 %v2375
    %3339 = vmatprep.subr.bf16.mxu0 %v2368
    %3340 = vmatpush2.bf16.msra.mxu0 %v2367
    %3341 = vmatprep.subr.bf16.mxu0 %v2360
    %3342 = vmatpush2.bf16.msra.mxu0 %v2359
    %3343 = vmatprep.subr.bf16.mxu0 %v2352
    %3344 = vmatpush2.bf16.msra.mxu0 %v2351
    %3345 = vmatprep.subr.bf16.mxu0 %v2344
    %3346 = vmatpush2.bf16.msra.mxu0 %v2343
    %3347 = vmatprep.subr.bf16.mxu0 %v2336
    %3348 = vmatpush2.bf16.msra.mxu0 %v2335
    %3349 = vmatprep.subr.bf16.mxu0 %v2328
    %3350 = vmatpush2.bf16.msra.mxu0 %v2327
    %3351 = vmatprep.subr.bf16.mxu0 %v2320
    %3352 = vmatpush2.bf16.msra.mxu0 %v2319
    %3353 = vmatprep.mubr.bf16.mxu0 %v642
    %3354 = vmatmul.mubr.bf16.gmra.mxu0 %v641
    %v3355 = vpop.f32.mrf.mxu0
    %v3356 = vadd.f32 %v3313, %v3355
    %v3357 = vpop.f32.mrf.mxu0
    %v3358 = vadd.f32 %v3315, %v3357
    %v3359 = vpop.f32.mrf.mxu0
    %v3360 = vadd.f32 %v3317, %v3359
    %v3361 = vpop.f32.mrf.mxu0
    %v3362 = vadd.f32 %v3319, %v3361
    %3363 = vdwg.mxu0
    %3364 = vmatprep.subr.bf16.mxu0 %v2440
    %3365 = vmatpush1.bf16.msra.mxu0 %v2439
    %3366 = vmatprep.subr.bf16.mxu0 %v2432
    %3367 = vmatpush1.bf16.msra.mxu0 %v2431
    %3368 = vmatprep.subr.bf16.mxu0 %v2424
    %3369 = vmatpush1.bf16.msra.mxu0 %v2423
    %3370 = vmatprep.subr.bf16.mxu0 %v2416
    %3371 = vmatpush1.bf16.msra.mxu0 %v2415
    %3372 = vmatprep.subr.bf16.mxu0 %v2408
    %3373 = vmatpush1.bf16.msra.mxu0 %v2407
    %3374 = vmatprep.subr.bf16.mxu0 %v2400
    %3375 = vmatpush1.bf16.msra.mxu0 %v2399
    %3376 = vmatprep.subr.bf16.mxu0 %v2392
    %3377 = vmatpush1.bf16.msra.mxu0 %v2391
    %3378 = vmatprep.subr.bf16.mxu0 %v2384
    %3379 = vmatpush1.bf16.msra.mxu0 %v2383
    %3380 = vmatprep.subr.bf16.mxu0 0
    %3381 = vmatpush2.bf16.msra.mxu0 0
    %3382 = vmatprep.subr.bf16.mxu0 0
    %3383 = vmatpush2.bf16.msra.mxu0 0
    %3384 = vmatprep.subr.bf16.mxu0 0
    %3385 = vmatpush2.bf16.msra.mxu0 0
    %3386 = vmatprep.subr.bf16.mxu0 0
    %3387 = vmatpush2.bf16.msra.mxu0 0
    %3388 = vmatprep.subr.bf16.mxu0 0
    %3389 = vmatpush2.bf16.msra.mxu0 0
    %3390 = vmatprep.subr.bf16.mxu0 0
    %3391 = vmatpush2.bf16.msra.mxu0 0
    %3392 = vmatprep.subr.bf16.mxu0 0
    %3393 = vmatpush2.bf16.msra.mxu0 0
    %3394 = vmatprep.subr.bf16.mxu0 0
    %3395 = vmatpush2.bf16.msra.mxu0 0
    %3396 = vmatprep.mubr.bf16.mxu0 0
    %3397 = vmatmul.mubr.bf16.gmra.mxu0 %v643
    %v3398 = vpop.f32.mrf.mxu0
    %v3399 = vadd.f32 %v3356, %v3398
    %v3400 = vpop.f32.mrf.mxu0
    %v3401 = vadd.f32 %v3358, %v3400
    %v3402 = vpop.f32.mrf.mxu0
    %v3403 = vadd.f32 %v3360, %v3402
    %v3404 = vpop.f32.mrf.mxu0
    %v3405 = vadd.f32 %v3362, %v3404
    %3406 = vdwg.mxu0
    %3407 = vmatprep.subr.bf16.mxu0 %v2058
    %3408 = vmatpush1.bf16.msra.mxu0 %v2057
    %3409 = vmatprep.subr.bf16.mxu0 %v2050
    %3410 = vmatpush1.bf16.msra.mxu0 %v2049
    %3411 = vmatprep.subr.bf16.mxu0 %v2042
    %3412 = vmatpush1.bf16.msra.mxu0 %v2041
    %3413 = vmatprep.subr.bf16.mxu0 %v2034
    %3414 = vmatpush1.bf16.msra.mxu0 %v2033
    %3415 = vmatprep.subr.bf16.mxu0 %v2026
    %3416 = vmatpush1.bf16.msra.mxu0 %v2025
    %3417 = vmatprep.subr.bf16.mxu0 %v2018
    %3418 = vmatpush1.bf16.msra.mxu0 %v2017
    %3419 = vmatprep.subr.bf16.mxu0 %v2010
    %3420 = vmatpush1.bf16.msra.mxu0 %v2009
    %3421 = vmatprep.subr.bf16.mxu0 %v2002
    %3422 = vmatpush1.bf16.msra.mxu0 %v2001
    %3423 = vmatprep.subr.bf16.mxu0 %v2122
    %3424 = vmatpush2.bf16.msra.mxu0 %v2121
    %3425 = vmatprep.subr.bf16.mxu0 %v2114
    %3426 = vmatpush2.bf16.msra.mxu0 %v2113
    %3427 = vmatprep.subr.bf16.mxu0 %v2106
    %3428 = vmatpush2.bf16.msra.mxu0 %v2105
    %3429 = vmatprep.subr.bf16.mxu0 %v2098
    %3430 = vmatpush2.bf16.msra.mxu0 %v2097
    %3431 = vmatprep.subr.bf16.mxu0 %v2090
    %3432 = vmatpush2.bf16.msra.mxu0 %v2089
    %3433 = vmatprep.subr.bf16.mxu0 %v2082
    %3434 = vmatpush2.bf16.msra.mxu0 %v2081
    %3435 = vmatprep.subr.bf16.mxu0 %v2074
    %3436 = vmatpush2.bf16.msra.mxu0 %v2073
    %3437 = vmatprep.subr.bf16.mxu0 %v2066
    %3438 = vmatpush2.bf16.msra.mxu0 %v2065
    %3439 = vmatprep.mubr.bf16.mxu0 %v638
    %3440 = vmatmul.mubr.bf16.gmra.mxu0 %v637
    %v3441 = vpop.f32.mrf.mxu0
    %v3442 = vadd.f32 %v602, %v3441
    %v3443 = vpop.f32.mrf.mxu0
    %v3444 = vadd.f32 %v606, %v3443
    %v3445 = vpop.f32.mrf.mxu0
    %v3446 = vadd.f32 %v602, %v3445
    %v3447 = vpop.f32.mrf.mxu0
    %v3448 = vadd.f32 %v606, %v3447
    %3449 = vdwg.mxu0
    %3450 = vmatprep.subr.bf16.mxu0 %v2186
    %3451 = vmatpush1.bf16.msra.mxu0 %v2185
    %3452 = vmatprep.subr.bf16.mxu0 %v2178
    %3453 = vmatpush1.bf16.msra.mxu0 %v2177
    %3454 = vmatprep.subr.bf16.mxu0 %v2170
    %3455 = vmatpush1.bf16.msra.mxu0 %v2169
    %3456 = vmatprep.subr.bf16.mxu0 %v2162
    %3457 = vmatpush1.bf16.msra.mxu0 %v2161
    %3458 = vmatprep.subr.bf16.mxu0 %v2154
    %3459 = vmatpush1.bf16.msra.mxu0 %v2153
    %3460 = vmatprep.subr.bf16.mxu0 %v2146
    %3461 = vmatpush1.bf16.msra.mxu0 %v2145
    %3462 = vmatprep.subr.bf16.mxu0 %v2138
    %3463 = vmatpush1.bf16.msra.mxu0 %v2137
    %3464 = vmatprep.subr.bf16.mxu0 %v2130
    %3465 = vmatpush1.bf16.msra.mxu0 %v2129
    %3466 = vmatprep.subr.bf16.mxu0 %v2250
    %3467 = vmatpush2.bf16.msra.mxu0 %v2249
    %3468 = vmatprep.subr.bf16.mxu0 %v2242
    %3469 = vmatpush2.bf16.msra.mxu0 %v2241
    %3470 = vmatprep.subr.bf16.mxu0 %v2234
    %3471 = vmatpush2.bf16.msra.mxu0 %v2233
    %3472 = vmatprep.subr.bf16.mxu0 %v2226
    %3473 = vmatpush2.bf16.msra.mxu0 %v2225
    %3474 = vmatprep.subr.bf16.mxu0 %v2218
    %3475 = vmatpush2.bf16.msra.mxu0 %v2217
    %3476 = vmatprep.subr.bf16.mxu0 %v2210
    %3477 = vmatpush2.bf16.msra.mxu0 %v2209
    %3478 = vmatprep.subr.bf16.mxu0 %v2202
    %3479 = vmatpush2.bf16.msra.mxu0 %v2201
    %3480 = vmatprep.subr.bf16.mxu0 %v2194
    %3481 = vmatpush2.bf16.msra.mxu0 %v2193
    %3482 = vmatprep.mubr.bf16.mxu0 %v640
    %3483 = vmatmul.mubr.bf16.gmra.mxu0 %v639
    %v3484 = vpop.f32.mrf.mxu0
    %v3485 = vadd.f32 %v3442, %v3484
    %v3486 = vpop.f32.mrf.mxu0
    %v3487 = vadd.f32 %v3444, %v3486
    %v3488 = vpop.f32.mrf.mxu0
    %v3489 = vadd.f32 %v3446, %v3488
    %v3490 = vpop.f32.mrf.mxu0
    %v3491 = vadd.f32 %v3448, %v3490
    %3492 = vdwg.mxu0
    %3493 = vmatprep.subr.bf16.mxu0 %v2314
    %3494 = vmatpush1.bf16.msra.mxu0 %v2313
    %3495 = vmatprep.subr.bf16.mxu0 %v2306
    %3496 = vmatpush1.bf16.msra.mxu0 %v2305
    %3497 = vmatprep.subr.bf16.mxu0 %v2298
    %3498 = vmatpush1.bf16.msra.mxu0 %v2297
    %3499 = vmatprep.subr.bf16.mxu0 %v2290
    %3500 = vmatpush1.bf16.msra.mxu0 %v2289
    %3501 = vmatprep.subr.bf16.mxu0 %v2282
    %3502 = vmatpush1.bf16.msra.mxu0 %v2281
    %3503 = vmatprep.subr.bf16.mxu0 %v2274
    %3504 = vmatpush1.bf16.msra.mxu0 %v2273
    %3505 = vmatprep.subr.bf16.mxu0 %v2266
    %3506 = vmatpush1.bf16.msra.mxu0 %v2265
    %3507 = vmatprep.subr.bf16.mxu0 %v2258
    %3508 = vmatpush1.bf16.msra.mxu0 %v2257
    %3509 = vmatprep.subr.bf16.mxu0 %v2378
    %3510 = vmatpush2.bf16.msra.mxu0 %v2377
    %3511 = vmatprep.subr.bf16.mxu0 %v2370
    %3512 = vmatpush2.bf16.msra.mxu0 %v2369
    %3513 = vmatprep.subr.bf16.mxu0 %v2362
    %3514 = vmatpush2.bf16.msra.mxu0 %v2361
    %3515 = vmatprep.subr.bf16.mxu0 %v2354
    %3516 = vmatpush2.bf16.msra.mxu0 %v2353
    %3517 = vmatprep.subr.bf16.mxu0 %v2346
    %3518 = vmatpush2.bf16.msra.mxu0 %v2345
    %3519 = vmatprep.subr.bf16.mxu0 %v2338
    %3520 = vmatpush2.bf16.msra.mxu0 %v2337
    %3521 = vmatprep.subr.bf16.mxu0 %v2330
    %3522 = vmatpush2.bf16.msra.mxu0 %v2329
    %3523 = vmatprep.subr.bf16.mxu0 %v2322
    %3524 = vmatpush2.bf16.msra.mxu0 %v2321
    %3525 = vmatprep.mubr.bf16.mxu0 %v642
    %3526 = vmatmul.mubr.bf16.gmra.mxu0 %v641
    %v3527 = vpop.f32.mrf.mxu0
    %v3528 = vadd.f32 %v3485, %v3527
    %v3529 = vpop.f32.mrf.mxu0
    %v3530 = vadd.f32 %v3487, %v3529
    %v3531 = vpop.f32.mrf.mxu0
    %v3532 = vadd.f32 %v3489, %v3531
    %v3533 = vpop.f32.mrf.mxu0
    %v3534 = vadd.f32 %v3491, %v3533
    %3535 = vdwg.mxu0
    %3536 = vmatprep.subr.bf16.mxu0 %v2442
    %3537 = vmatpush1.bf16.msra.mxu0 %v2441
    %3538 = vmatprep.subr.bf16.mxu0 %v2434
    %3539 = vmatpush1.bf16.msra.mxu0 %v2433
    %3540 = vmatprep.subr.bf16.mxu0 %v2426
    %3541 = vmatpush1.bf16.msra.mxu0 %v2425
    %3542 = vmatprep.subr.bf16.mxu0 %v2418
    %3543 = vmatpush1.bf16.msra.mxu0 %v2417
    %3544 = vmatprep.subr.bf16.mxu0 %v2410
    %3545 = vmatpush1.bf16.msra.mxu0 %v2409
    %3546 = vmatprep.subr.bf16.mxu0 %v2402
    %3547 = vmatpush1.bf16.msra.mxu0 %v2401
    %3548 = vmatprep.subr.bf16.mxu0 %v2394
    %3549 = vmatpush1.bf16.msra.mxu0 %v2393
    %3550 = vmatprep.subr.bf16.mxu0 %v2386
    %3551 = vmatpush1.bf16.msra.mxu0 %v2385
    %3552 = vmatprep.subr.bf16.mxu0 0
    %3553 = vmatpush2.bf16.msra.mxu0 0
    %3554 = vmatprep.subr.bf16.mxu0 0
    %3555 = vmatpush2.bf16.msra.mxu0 0
    %3556 = vmatprep.subr.bf16.mxu0 0
    %3557 = vmatpush2.bf16.msra.mxu0 0
    %3558 = vmatprep.subr.bf16.mxu0 0
    %3559 = vmatpush2.bf16.msra.mxu0 0
    %3560 = vmatprep.subr.bf16.mxu0 0
    %3561 = vmatpush2.bf16.msra.mxu0 0
    %3562 = vmatprep.subr.bf16.mxu0 0
    %3563 = vmatpush2.bf16.msra.mxu0 0
    %3564 = vmatprep.subr.bf16.mxu0 0
    %3565 = vmatpush2.bf16.msra.mxu0 0
    %3566 = vmatprep.subr.bf16.mxu0 0
    %3567 = vmatpush2.bf16.msra.mxu0 0
    %3568 = vmatprep.mubr.bf16.mxu0 0
    %3569 = vmatmul.mubr.bf16.gmra.mxu0 %v643
    %v3570 = vpop.f32.mrf.mxu0
    %v3571 = vadd.f32 %v3528, %v3570
    %v3572 = vpop.f32.mrf.mxu0
    %v3573 = vadd.f32 %v3530, %v3572
    %v3574 = vpop.f32.mrf.mxu0
    %v3575 = vadd.f32 %v3532, %v3574
    %v3576 = vpop.f32.mrf.mxu0
    %v3577 = vadd.f32 %v3534, %v3576
    %3578 = vdwg.mxu0
    %v3579 = vmax.f32 %v3055, 0.0
    %v3580 = vmax.f32 %v3057, 0.0
    %v3581 = vmax.f32 %v3227, 0.0
    %v3582 = vmax.f32 %v3229, 0.0
    %v3583 = vmax.f32 %v3399, 0.0
    %v3584 = vmax.f32 %v3401, 0.0
    %v3585 = vmax.f32 %v3571, 0.0
    %v3586 = vmax.f32 %v3573, 0.0
    %v3587 = vmax.f32 %v3059, 0.0
    %v3588 = vmax.f32 %v3061, 0.0
    %v3589 = vmax.f32 %v3231, 0.0
    %v3590 = vmax.f32 %v3233, 0.0
    %v3591 = vmax.f32 %v3403, 0.0
    %v3592 = vmax.f32 %v3405, 0.0
    %v3593 = vmax.f32 %v3575, 0.0
    %v3594 = vmax.f32 %v3577, 0.0
    %v3595 = vpack.c.bf16 %v3587, %v3579
    %v3596 = vpack.c.bf16 %v3588, %v3580
    %v3597 = vpack.c.bf16 %v3589, %v3581
    %v3598 = vpack.c.bf16 %v3590, %v3582
    %v3599 = vpack.c.bf16 %v3591, %v3583
    %v3600 = vpack.c.bf16 %v3592, %v3584
    %v3601 = vpack.c.bf16 %v3593, %v3585
    %v3602 = vpack.c.bf16 %v3594, %v3586
    %v3603 = vld [vmem:[#allocation8] sm:$0xff]
    %v3604 = vld [vmem:[#allocation8 + $0x8] sm:$0xff]
    %v3605 = vld [vmem:[#allocation8 + $0x10] sm:$0xff]
    %v3606 = vld [vmem:[#allocation8 + $0x18] sm:$0xff]
    %v3607 = vld [vmem:[#allocation8 + $0x20] sm:$0xff]
    %v3608 = vld [vmem:[#allocation8 + $0x28] sm:$0xff]
    %v3609 = vld [vmem:[#allocation8 + $0x30] sm:$0xff]
    %v3610 = vld [vmem:[#allocation8 + $0x38] sm:$0xff]
    %v3611 = vld [vmem:[#allocation8 + $0x40] sm:$0xff]
    %v3612 = vld [vmem:[#allocation8 + $0x48] sm:$0xff]
    %v3613 = vld [vmem:[#allocation8 + $0x50] sm:$0xff]
    %v3614 = vld [vmem:[#allocation8 + $0x58] sm:$0xff]
    %v3615 = vld [vmem:[#allocation8 + $0x60] sm:$0xff]
    %v3616 = vld [vmem:[#allocation8 + $0x68] sm:$0xff]
    %v3617 = vld [vmem:[#allocation8 + $0x70] sm:$0xff]
    %v3618 = vld [vmem:[#allocation8 + $0x78] sm:$0xff]
    %v3619 = vld [vmem:[#allocation8 + $0x80] sm:$0xff]
    %v3620 = vld [vmem:[#allocation8 + $0x88] sm:$0xff]
    %v3621 = vld [vmem:[#allocation8 + $0x90] sm:$0xff]
    %v3622 = vld [vmem:[#allocation8 + $0x98] sm:$0xff]
    %v3623 = vld [vmem:[#allocation8 + $0xa0] sm:$0xff]
    %v3624 = vld [vmem:[#allocation8 + $0xa8] sm:$0xff]
    %v3625 = vld [vmem:[#allocation8 + $0xb0] sm:$0xff]
    %v3626 = vld [vmem:[#allocation8 + $0xb8] sm:$0xff]
    %v3627 = vld [vmem:[#allocation8 + $0xc0] sm:$0xff]
    %v3628 = vld [vmem:[#allocation8 + $0xc8] sm:$0xff]
    %v3629 = vld [vmem:[#allocation8 + $0xd0] sm:$0xff]
    %v3630 = vld [vmem:[#allocation8 + $0xd8] sm:$0xff]
    %v3631 = vld [vmem:[#allocation8 + $0xe0] sm:$0xff]
    %v3632 = vld [vmem:[#allocation8 + $0xe8] sm:$0xff]
    %v3633 = vld [vmem:[#allocation8 + $0xf0] sm:$0xff]
    %v3634 = vld [vmem:[#allocation8 + $0xf8] sm:$0xff]
    %v3635 = vld [vmem:[#allocation8 + $0x100] sm:$0xff]
    %v3636 = vld [vmem:[#allocation8 + $0x108] sm:$0xff]
    %v3637 = vld [vmem:[#allocation8 + $0x110] sm:$0xff]
    %v3638 = vld [vmem:[#allocation8 + $0x118] sm:$0xff]
    %v3639 = vld [vmem:[#allocation8 + $0x120] sm:$0xff]
    %v3640 = vld [vmem:[#allocation8 + $0x128] sm:$0xff]
    %v3641 = vld [vmem:[#allocation8 + $0x130] sm:$0xff]
    %v3642 = vld [vmem:[#allocation8 + $0x138] sm:$0xff]
    %v3643 = vld [vmem:[#allocation8 + $0x140] sm:$0xff]
    %v3644 = vld [vmem:[#allocation8 + $0x148] sm:$0xff]
    %v3645 = vld [vmem:[#allocation8 + $0x150] sm:$0xff]
    %v3646 = vld [vmem:[#allocation8 + $0x158] sm:$0xff]
    %v3647 = vld [vmem:[#allocation8 + $0x160] sm:$0xff]
    %v3648 = vld [vmem:[#allocation8 + $0x168] sm:$0xff]
    %v3649 = vld [vmem:[#allocation8 + $0x170] sm:$0xff]
    %v3650 = vld [vmem:[#allocation8 + $0x178] sm:$0xff]
    %v3651 = vld [vmem:[#allocation8 + $0x180] sm:$0xff]
    %v3652 = vld [vmem:[#allocation8 + $0x188] sm:$0xff]
    %v3653 = vld [vmem:[#allocation8 + $0x190] sm:$0xff]
    %v3654 = vld [vmem:[#allocation8 + $0x198] sm:$0xff]
    %v3655 = vld [vmem:[#allocation8 + $0x1a0] sm:$0xff]
    %v3656 = vld [vmem:[#allocation8 + $0x1a8] sm:$0xff]
    %v3657 = vld [vmem:[#allocation8 + $0x1b0] sm:$0xff]
    %v3658 = vld [vmem:[#allocation8 + $0x1b8] sm:$0xff]
    %v3659 = vld [vmem:[#allocation8 + $0x1c0] sm:$0xff]
    %v3660 = vld [vmem:[#allocation8 + $0x1c8] sm:$0xff]
    %v3661 = vld [vmem:[#allocation8 + $0x1d0] sm:$0xff]
    %v3662 = vld [vmem:[#allocation8 + $0x1d8] sm:$0xff]
    %v3663 = vld [vmem:[#allocation8 + $0x1e0] sm:$0xff]
    %v3664 = vld [vmem:[#allocation8 + $0x1e8] sm:$0xff]
    %v3665 = vld [vmem:[#allocation8 + $0x1f0] sm:$0xff]
    %v3666 = vld [vmem:[#allocation8 + $0x1f8] sm:$0xff]
    %v3667 = vld [vmem:[#allocation8 + $0x200] sm:$0xff]
    %v3668 = vld [vmem:[#allocation8 + $0x208] sm:$0xff]
    %v3669 = vld [vmem:[#allocation8 + $0x210] sm:$0xff]
    %v3670 = vld [vmem:[#allocation8 + $0x218] sm:$0xff]
    %v3671 = vld [vmem:[#allocation8 + $0x220] sm:$0xff]
    %v3672 = vld [vmem:[#allocation8 + $0x228] sm:$0xff]
    %v3673 = vld [vmem:[#allocation8 + $0x230] sm:$0xff]
    %v3674 = vld [vmem:[#allocation8 + $0x238] sm:$0xff]
    %v3675 = vld [vmem:[#allocation8 + $0x240] sm:$0xff]
    %v3676 = vld [vmem:[#allocation8 + $0x248] sm:$0xff]
    %v3677 = vld [vmem:[#allocation8 + $0x250] sm:$0xff]
    %v3678 = vld [vmem:[#allocation8 + $0x258] sm:$0xff]
    %v3679 = vld [vmem:[#allocation8 + $0x260] sm:$0xff]
    %v3680 = vld [vmem:[#allocation8 + $0x268] sm:$0xff]
    %v3681 = vld [vmem:[#allocation8 + $0x270] sm:$0xff]
    %v3682 = vld [vmem:[#allocation8 + $0x278] sm:$0xff]
    %v3683 = vld [vmem:[#allocation8 + $0x280] sm:$0xff]
    %v3684 = vld [vmem:[#allocation8 + $0x288] sm:$0xff]
    %v3685 = vld [vmem:[#allocation8 + $0x290] sm:$0xff]
    %v3686 = vld [vmem:[#allocation8 + $0x298] sm:$0xff]
    %v3687 = vld [vmem:[#allocation8 + $0x2a0] sm:$0xff]
    %v3688 = vld [vmem:[#allocation8 + $0x2a8] sm:$0xff]
    %v3689 = vld [vmem:[#allocation8 + $0x2b0] sm:$0xff]
    %v3690 = vld [vmem:[#allocation8 + $0x2b8] sm:$0xff]
    %v3691 = vld [vmem:[#allocation8 + $0x2c0] sm:$0xff]
    %v3692 = vld [vmem:[#allocation8 + $0x2c8] sm:$0xff]
    %v3693 = vld [vmem:[#allocation8 + $0x2d0] sm:$0xff]
    %v3694 = vld [vmem:[#allocation8 + $0x2d8] sm:$0xff]
    %v3695 = vld [vmem:[#allocation8 + $0x2e0] sm:$0xff]
    %v3696 = vld [vmem:[#allocation8 + $0x2e8] sm:$0xff]
    %v3697 = vld [vmem:[#allocation8 + $0x2f0] sm:$0xff]
    %v3698 = vld [vmem:[#allocation8 + $0x2f8] sm:$0xff]
    %v3699 = vld [vmem:[#allocation8 + $0x300] sm:$0xff]
    %v3700 = vld [vmem:[#allocation8 + $0x308] sm:$0xff]
    %v3701 = vld [vmem:[#allocation8 + $0x310] sm:$0xff]
    %v3702 = vld [vmem:[#allocation8 + $0x318] sm:$0xff]
    %v3703 = vld [vmem:[#allocation8 + $0x320] sm:$0xff]
    %v3704 = vld [vmem:[#allocation8 + $0x328] sm:$0xff]
    %v3705 = vld [vmem:[#allocation8 + $0x330] sm:$0xff]
    %v3706 = vld [vmem:[#allocation8 + $0x338] sm:$0xff]
    %v3707 = vld [vmem:[#allocation8 + $0x340] sm:$0xff]
    %v3708 = vld [vmem:[#allocation8 + $0x348] sm:$0xff]
    %v3709 = vld [vmem:[#allocation8 + $0x350] sm:$0xff]
    %v3710 = vld [vmem:[#allocation8 + $0x358] sm:$0xff]
    %v3711 = vld [vmem:[#allocation8 + $0x360] sm:$0xff]
    %v3712 = vld [vmem:[#allocation8 + $0x368] sm:$0xff]
    %v3713 = vld [vmem:[#allocation8 + $0x370] sm:$0xff]
    %v3714 = vld [vmem:[#allocation8 + $0x378] sm:$0xff]
    %v3715 = vld [vmem:[#allocation8 + $0x380] sm:$0xff]
    %v3716 = vld [vmem:[#allocation8 + $0x388] sm:$0xff]
    %v3717 = vld [vmem:[#allocation8 + $0x390] sm:$0xff]
    %v3718 = vld [vmem:[#allocation8 + $0x398] sm:$0xff]
    %v3719 = vld [vmem:[#allocation8 + $0x3a0] sm:$0xff]
    %v3720 = vld [vmem:[#allocation8 + $0x3a8] sm:$0xff]
    %v3721 = vld [vmem:[#allocation8 + $0x3b0] sm:$0xff]
    %v3722 = vld [vmem:[#allocation8 + $0x3b8] sm:$0xff]
    %v3723 = vld [vmem:[#allocation8 + $0x3c0] sm:$0xff]
    %v3724 = vld [vmem:[#allocation8 + $0x3c8] sm:$0xff]
    %v3725 = vld [vmem:[#allocation8 + $0x3d0] sm:$0xff]
    %v3726 = vld [vmem:[#allocation8 + $0x3d8] sm:$0xff]
    %v3727 = vld [vmem:[#allocation8 + $0x3e0] sm:$0xff]
    %v3728 = vld [vmem:[#allocation8 + $0x3e8] sm:$0xff]
    %v3729 = vld [vmem:[#allocation8 + $0x3f0] sm:$0xff]
    %v3730 = vld [vmem:[#allocation8 + $0x3f8] sm:$0xff]
    %v3731 = vld [vmem:[#allocation8 + $0x400] sm:$0xff]
    %v3732 = vld [vmem:[#allocation8 + $0x408] sm:$0xff]
    %v3733 = vld [vmem:[#allocation8 + $0x410] sm:$0xff]
    %v3734 = vld [vmem:[#allocation8 + $0x418] sm:$0xff]
    %v3735 = vld [vmem:[#allocation8 + $0x420] sm:$0xff]
    %v3736 = vld [vmem:[#allocation8 + $0x428] sm:$0xff]
    %v3737 = vld [vmem:[#allocation8 + $0x430] sm:$0xff]
    %v3738 = vld [vmem:[#allocation8 + $0x438] sm:$0xff]
    %v3739 = vld [vmem:[#allocation8 + $0x440] sm:$0xff]
    %v3740 = vld [vmem:[#allocation8 + $0x448] sm:$0xff]
    %v3741 = vld [vmem:[#allocation8 + $0x450] sm:$0xff]
    %v3742 = vld [vmem:[#allocation8 + $0x458] sm:$0xff]
    %v3743 = vld [vmem:[#allocation8 + $0x460] sm:$0xff]
    %v3744 = vld [vmem:[#allocation8 + $0x468] sm:$0xff]
    %v3745 = vld [vmem:[#allocation8 + $0x470] sm:$0xff]
    %v3746 = vld [vmem:[#allocation8 + $0x478] sm:$0xff]
    %v3747 = vld [vmem:[#allocation8 + $0x480] sm:$0xff]
    %v3748 = vld [vmem:[#allocation8 + $0x488] sm:$0xff]
    %v3749 = vld [vmem:[#allocation8 + $0x490] sm:$0xff]
    %v3750 = vld [vmem:[#allocation8 + $0x498] sm:$0xff]
    %v3751 = vld [vmem:[#allocation8 + $0x4a0] sm:$0xff]
    %v3752 = vld [vmem:[#allocation8 + $0x4a8] sm:$0xff]
    %v3753 = vld [vmem:[#allocation8 + $0x4b0] sm:$0xff]
    %v3754 = vld [vmem:[#allocation8 + $0x4b8] sm:$0xff]
    %v3755 = vld [vmem:[#allocation8 + $0x4c0] sm:$0xff]
    %v3756 = vld [vmem:[#allocation8 + $0x4c8] sm:$0xff]
    %v3757 = vld [vmem:[#allocation8 + $0x4d0] sm:$0xff]
    %v3758 = vld [vmem:[#allocation8 + $0x4d8] sm:$0xff]
    %v3759 = vld [vmem:[#allocation8 + $0x4e0] sm:$0xff]
    %v3760 = vld [vmem:[#allocation8 + $0x4e8] sm:$0xff]
    %v3761 = vld [vmem:[#allocation8 + $0x4f0] sm:$0xff]
    %v3762 = vld [vmem:[#allocation8 + $0x4f8] sm:$0xff]
    %v3763 = vld [vmem:[#allocation8 + $0x500] sm:$0xff]
    %v3764 = vld [vmem:[#allocation8 + $0x508] sm:$0xff]
    %v3765 = vld [vmem:[#allocation8 + $0x510] sm:$0xff]
    %v3766 = vld [vmem:[#allocation8 + $0x518] sm:$0xff]
    %v3767 = vld [vmem:[#allocation8 + $0x520] sm:$0xff]
    %v3768 = vld [vmem:[#allocation8 + $0x528] sm:$0xff]
    %v3769 = vld [vmem:[#allocation8 + $0x530] sm:$0xff]
    %v3770 = vld [vmem:[#allocation8 + $0x538] sm:$0xff]
    %v3771 = vld [vmem:[#allocation8 + $0x540] sm:$0xff]
    %v3772 = vld [vmem:[#allocation8 + $0x548] sm:$0xff]
    %v3773 = vld [vmem:[#allocation8 + $0x550] sm:$0xff]
    %v3774 = vld [vmem:[#allocation8 + $0x558] sm:$0xff]
    %v3775 = vld [vmem:[#allocation8 + $0x560] sm:$0xff]
    %v3776 = vld [vmem:[#allocation8 + $0x568] sm:$0xff]
    %v3777 = vld [vmem:[#allocation8 + $0x570] sm:$0xff]
    %v3778 = vld [vmem:[#allocation8 + $0x578] sm:$0xff]
    %v3779 = vld [vmem:[#allocation8 + $0x580] sm:$0xff]
    %v3780 = vld [vmem:[#allocation8 + $0x588] sm:$0xff]
    %v3781 = vld [vmem:[#allocation8 + $0x590] sm:$0xff]
    %v3782 = vld [vmem:[#allocation8 + $0x598] sm:$0xff]
    %v3783 = vld [vmem:[#allocation8 + $0x5a0] sm:$0xff]
    %v3784 = vld [vmem:[#allocation8 + $0x5a8] sm:$0xff]
    %v3785 = vld [vmem:[#allocation8 + $0x5b0] sm:$0xff]
    %v3786 = vld [vmem:[#allocation8 + $0x5b8] sm:$0xff]
    %v3787 = vld [vmem:[#allocation8 + $0x5c0] sm:$0xff]
    %v3788 = vld [vmem:[#allocation8 + $0x5c8] sm:$0xff]
    %v3789 = vld [vmem:[#allocation8 + $0x5d0] sm:$0xff]
    %v3790 = vld [vmem:[#allocation8 + $0x5d8] sm:$0xff]
    %v3791 = vld [vmem:[#allocation8 + $0x5e0] sm:$0xff]
    %v3792 = vld [vmem:[#allocation8 + $0x5e8] sm:$0xff]
    %v3793 = vld [vmem:[#allocation8 + $0x5f0] sm:$0xff]
    %v3794 = vld [vmem:[#allocation8 + $0x5f8] sm:$0xff]
    %v3795 = vld [vmem:[#allocation8 + $0x600] sm:$0xff]
    %v3796 = vld [vmem:[#allocation8 + $0x608] sm:$0xff]
    %v3797 = vld [vmem:[#allocation8 + $0x610] sm:$0xff]
    %v3798 = vld [vmem:[#allocation8 + $0x618] sm:$0xff]
    %v3799 = vld [vmem:[#allocation8 + $0x620] sm:$0xff]
    %v3800 = vld [vmem:[#allocation8 + $0x628] sm:$0xff]
    %v3801 = vld [vmem:[#allocation8 + $0x630] sm:$0xff]
    %v3802 = vld [vmem:[#allocation8 + $0x638] sm:$0xff]
    %v3803 = vld [vmem:[#allocation8 + $0x640] sm:$0xff]
    %v3804 = vld [vmem:[#allocation8 + $0x648] sm:$0xff]
    %v3805 = vld [vmem:[#allocation8 + $0x650] sm:$0xff]
    %v3806 = vld [vmem:[#allocation8 + $0x658] sm:$0xff]
    %v3807 = vld [vmem:[#allocation8 + $0x660] sm:$0xff]
    %v3808 = vld [vmem:[#allocation8 + $0x668] sm:$0xff]
    %v3809 = vld [vmem:[#allocation8 + $0x670] sm:$0xff]
    %v3810 = vld [vmem:[#allocation8 + $0x678] sm:$0xff]
    %v3811 = vld [vmem:[#allocation8 + $0x680] sm:$0xff]
    %v3812 = vld [vmem:[#allocation8 + $0x688] sm:$0xff]
    %v3813 = vld [vmem:[#allocation8 + $0x690] sm:$0xff]
    %v3814 = vld [vmem:[#allocation8 + $0x698] sm:$0xff]
    %v3815 = vld [vmem:[#allocation8 + $0x6a0] sm:$0xff]
    %v3816 = vld [vmem:[#allocation8 + $0x6a8] sm:$0xff]
    %v3817 = vld [vmem:[#allocation8 + $0x6b0] sm:$0xff]
    %v3818 = vld [vmem:[#allocation8 + $0x6b8] sm:$0xff]
    %v3819 = vld [vmem:[#allocation8 + $0x6c0] sm:$0xff]
    %v3820 = vld [vmem:[#allocation8 + $0x6c8] sm:$0xff]
    %v3821 = vld [vmem:[#allocation8 + $0x6d0] sm:$0xff]
    %v3822 = vld [vmem:[#allocation8 + $0x6d8] sm:$0xff]
    %v3823 = vld [vmem:[#allocation8 + $0x6e0] sm:$0xff]
    %v3824 = vld [vmem:[#allocation8 + $0x6e8] sm:$0xff]
    %v3825 = vld [vmem:[#allocation8 + $0x6f0] sm:$0xff]
    %v3826 = vld [vmem:[#allocation8 + $0x6f8] sm:$0xff]
    %v3827 = vld [vmem:[#allocation8 + $0x700] sm:$0xff]
    %v3828 = vld [vmem:[#allocation8 + $0x708] sm:$0xff]
    %v3829 = vld [vmem:[#allocation8 + $0x710] sm:$0xff]
    %v3830 = vld [vmem:[#allocation8 + $0x718] sm:$0xff]
    %v3831 = vld [vmem:[#allocation8 + $0x720] sm:$0xff]
    %v3832 = vld [vmem:[#allocation8 + $0x728] sm:$0xff]
    %v3833 = vld [vmem:[#allocation8 + $0x730] sm:$0xff]
    %v3834 = vld [vmem:[#allocation8 + $0x738] sm:$0xff]
    %v3835 = vld [vmem:[#allocation8 + $0x740] sm:$0xff]
    %v3836 = vld [vmem:[#allocation8 + $0x748] sm:$0xff]
    %v3837 = vld [vmem:[#allocation8 + $0x750] sm:$0xff]
    %v3838 = vld [vmem:[#allocation8 + $0x758] sm:$0xff]
    %v3839 = vld [vmem:[#allocation8 + $0x760] sm:$0xff]
    %v3840 = vld [vmem:[#allocation8 + $0x768] sm:$0xff]
    %v3841 = vld [vmem:[#allocation8 + $0x770] sm:$0xff]
    %v3842 = vld [vmem:[#allocation8 + $0x778] sm:$0xff]
    %v3843 = vld [vmem:[#allocation8 + $0x780] sm:$0xff]
    %v3844 = vld [vmem:[#allocation8 + $0x788] sm:$0xff]
    %v3845 = vld [vmem:[#allocation8 + $0x790] sm:$0xff]
    %v3846 = vld [vmem:[#allocation8 + $0x798] sm:$0xff]
    %v3847 = vld [vmem:[#allocation8 + $0x7a0] sm:$0xff]
    %v3848 = vld [vmem:[#allocation8 + $0x7a8] sm:$0xff]
    %v3849 = vld [vmem:[#allocation8 + $0x7b0] sm:$0xff]
    %v3850 = vld [vmem:[#allocation8 + $0x7b8] sm:$0xff]
    %v3851 = vld [vmem:[#allocation8 + $0x7c0] sm:$0xff]
    %v3852 = vld [vmem:[#allocation8 + $0x7c8] sm:$0xff]
    %v3853 = vld [vmem:[#allocation8 + $0x7d0] sm:$0xff]
    %v3854 = vld [vmem:[#allocation8 + $0x7d8] sm:$0xff]
    %v3855 = vld [vmem:[#allocation8 + $0x7e0] sm:$0xff]
    %v3856 = vld [vmem:[#allocation8 + $0x7e8] sm:$0xff]
    %v3857 = vld [vmem:[#allocation8 + $0x7f0] sm:$0xff]
    %v3858 = vld [vmem:[#allocation8 + $0x7f8] sm:$0xff]
    %v3859 = vld [vmem:[#allocation10] sm:$0xf]
    %v3861 = vlaneseq
    %v3862 = vshrl.u32 %v3861, 7
    %v3863 = vsub.s32 0, %v3862
    %v3864 = vrot.slane %v3859, %v3863
    %v3865 = vlaneseq
    %v3866 = vshrl.u32 %v3865, 7
    %v3867 = vsub.s32 1, %v3866
    %v3868 = vrot.slane %v3859, %v3867
    %v3869 = vlaneseq
    %v3870 = vshrl.u32 %v3869, 7
    %v3871 = vsub.s32 2, %v3870
    %v3872 = vrot.slane %v3859, %v3871
    %v3873 = vlaneseq
    %v3874 = vshrl.u32 %v3873, 7
    %v3875 = vsub.s32 3, %v3874
    %v3876 = vrot.slane %v3859, %v3875
    %v4137 = vunpack.c.l.b16 %v3603
    %v4138 = vunpack.c.h.b16 %v3603
    %v4139 = vunpack.c.l.b16 %v3604
    %v4140 = vunpack.c.h.b16 %v3604
    %v4141 = vunpack.c.l.b16 %v3605
    %v4142 = vunpack.c.h.b16 %v3605
    %v4143 = vunpack.c.l.b16 %v3606
    %v4144 = vunpack.c.h.b16 %v3606
    %v4145 = vunpack.c.l.b16 %v3607
    %v4146 = vunpack.c.h.b16 %v3607
    %v4147 = vunpack.c.l.b16 %v3608
    %v4148 = vunpack.c.h.b16 %v3608
    %v4149 = vunpack.c.l.b16 %v3609
    %v4150 = vunpack.c.h.b16 %v3609
    %v4151 = vunpack.c.l.b16 %v3610
    %v4152 = vunpack.c.h.b16 %v3610
    %v4153 = vunpack.c.l.b16 %v3611
    %v4154 = vunpack.c.h.b16 %v3611
    %v4155 = vunpack.c.l.b16 %v3612
    %v4156 = vunpack.c.h.b16 %v3612
    %v4157 = vunpack.c.l.b16 %v3613
    %v4158 = vunpack.c.h.b16 %v3613
    %v4159 = vunpack.c.l.b16 %v3614
    %v4160 = vunpack.c.h.b16 %v3614
    %v4161 = vunpack.c.l.b16 %v3615
    %v4162 = vunpack.c.h.b16 %v3615
    %v4163 = vunpack.c.l.b16 %v3616
    %v4164 = vunpack.c.h.b16 %v3616
    %v4165 = vunpack.c.l.b16 %v3617
    %v4166 = vunpack.c.h.b16 %v3617
    %v4167 = vunpack.c.l.b16 %v3618
    %v4168 = vunpack.c.h.b16 %v3618
    %v4169 = vunpack.c.l.b16 %v3619
    %v4170 = vunpack.c.h.b16 %v3619
    %v4171 = vunpack.c.l.b16 %v3620
    %v4172 = vunpack.c.h.b16 %v3620
    %v4173 = vunpack.c.l.b16 %v3621
    %v4174 = vunpack.c.h.b16 %v3621
    %v4175 = vunpack.c.l.b16 %v3622
    %v4176 = vunpack.c.h.b16 %v3622
    %v4177 = vunpack.c.l.b16 %v3623
    %v4178 = vunpack.c.h.b16 %v3623
    %v4179 = vunpack.c.l.b16 %v3624
    %v4180 = vunpack.c.h.b16 %v3624
    %v4181 = vunpack.c.l.b16 %v3625
    %v4182 = vunpack.c.h.b16 %v3625
    %v4183 = vunpack.c.l.b16 %v3626
    %v4184 = vunpack.c.h.b16 %v3626
    %v4185 = vunpack.c.l.b16 %v3627
    %v4186 = vunpack.c.h.b16 %v3627
    %v4187 = vunpack.c.l.b16 %v3628
    %v4188 = vunpack.c.h.b16 %v3628
    %v4189 = vunpack.c.l.b16 %v3629
    %v4190 = vunpack.c.h.b16 %v3629
    %v4191 = vunpack.c.l.b16 %v3630
    %v4192 = vunpack.c.h.b16 %v3630
    %v4193 = vunpack.c.l.b16 %v3631
    %v4194 = vunpack.c.h.b16 %v3631
    %v4195 = vunpack.c.l.b16 %v3632
    %v4196 = vunpack.c.h.b16 %v3632
    %v4197 = vunpack.c.l.b16 %v3633
    %v4198 = vunpack.c.h.b16 %v3633
    %v4199 = vunpack.c.l.b16 %v3634
    %v4200 = vunpack.c.h.b16 %v3634
    %v4201 = vunpack.c.l.b16 %v3635
    %v4202 = vunpack.c.h.b16 %v3635
    %v4203 = vunpack.c.l.b16 %v3636
    %v4204 = vunpack.c.h.b16 %v3636
    %v4205 = vunpack.c.l.b16 %v3637
    %v4206 = vunpack.c.h.b16 %v3637
    %v4207 = vunpack.c.l.b16 %v3638
    %v4208 = vunpack.c.h.b16 %v3638
    %v4209 = vunpack.c.l.b16 %v3639
    %v4210 = vunpack.c.h.b16 %v3639
    %v4211 = vunpack.c.l.b16 %v3640
    %v4212 = vunpack.c.h.b16 %v3640
    %v4213 = vunpack.c.l.b16 %v3641
    %v4214 = vunpack.c.h.b16 %v3641
    %v4215 = vunpack.c.l.b16 %v3642
    %v4216 = vunpack.c.h.b16 %v3642
    %v4217 = vunpack.c.l.b16 %v3643
    %v4218 = vunpack.c.h.b16 %v3643
    %v4219 = vunpack.c.l.b16 %v3644
    %v4220 = vunpack.c.h.b16 %v3644
    %v4221 = vunpack.c.l.b16 %v3645
    %v4222 = vunpack.c.h.b16 %v3645
    %v4223 = vunpack.c.l.b16 %v3646
    %v4224 = vunpack.c.h.b16 %v3646
    %v4225 = vunpack.c.l.b16 %v3647
    %v4226 = vunpack.c.h.b16 %v3647
    %v4227 = vunpack.c.l.b16 %v3648
    %v4228 = vunpack.c.h.b16 %v3648
    %v4229 = vunpack.c.l.b16 %v3649
    %v4230 = vunpack.c.h.b16 %v3649
    %v4231 = vunpack.c.l.b16 %v3650
    %v4232 = vunpack.c.h.b16 %v3650
    %v4233 = vunpack.c.l.b16 %v3651
    %v4234 = vunpack.c.h.b16 %v3651
    %v4235 = vunpack.c.l.b16 %v3652
    %v4236 = vunpack.c.h.b16 %v3652
    %v4237 = vunpack.c.l.b16 %v3653
    %v4238 = vunpack.c.h.b16 %v3653
    %v4239 = vunpack.c.l.b16 %v3654
    %v4240 = vunpack.c.h.b16 %v3654
    %v4241 = vunpack.c.l.b16 %v3655
    %v4242 = vunpack.c.h.b16 %v3655
    %v4243 = vunpack.c.l.b16 %v3656
    %v4244 = vunpack.c.h.b16 %v3656
    %v4245 = vunpack.c.l.b16 %v3657
    %v4246 = vunpack.c.h.b16 %v3657
    %v4247 = vunpack.c.l.b16 %v3658
    %v4248 = vunpack.c.h.b16 %v3658
    %v4249 = vunpack.c.l.b16 %v3659
    %v4250 = vunpack.c.h.b16 %v3659
    %v4251 = vunpack.c.l.b16 %v3660
    %v4252 = vunpack.c.h.b16 %v3660
    %v4253 = vunpack.c.l.b16 %v3661
    %v4254 = vunpack.c.h.b16 %v3661
    %v4255 = vunpack.c.l.b16 %v3662
    %v4256 = vunpack.c.h.b16 %v3662
    %v4257 = vunpack.c.l.b16 %v3663
    %v4258 = vunpack.c.h.b16 %v3663
    %v4259 = vunpack.c.l.b16 %v3664
    %v4260 = vunpack.c.h.b16 %v3664
    %v4261 = vunpack.c.l.b16 %v3665
    %v4262 = vunpack.c.h.b16 %v3665
    %v4263 = vunpack.c.l.b16 %v3666
    %v4264 = vunpack.c.h.b16 %v3666
    %v4265 = vunpack.c.l.b16 %v3667
    %v4266 = vunpack.c.h.b16 %v3667
    %v4267 = vunpack.c.l.b16 %v3668
    %v4268 = vunpack.c.h.b16 %v3668
    %v4269 = vunpack.c.l.b16 %v3669
    %v4270 = vunpack.c.h.b16 %v3669
    %v4271 = vunpack.c.l.b16 %v3670
    %v4272 = vunpack.c.h.b16 %v3670
    %v4273 = vunpack.c.l.b16 %v3671
    %v4274 = vunpack.c.h.b16 %v3671
    %v4275 = vunpack.c.l.b16 %v3672
    %v4276 = vunpack.c.h.b16 %v3672
    %v4277 = vunpack.c.l.b16 %v3673
    %v4278 = vunpack.c.h.b16 %v3673
    %v4279 = vunpack.c.l.b16 %v3674
    %v4280 = vunpack.c.h.b16 %v3674
    %v4281 = vunpack.c.l.b16 %v3675
    %v4282 = vunpack.c.h.b16 %v3675
    %v4283 = vunpack.c.l.b16 %v3676
    %v4284 = vunpack.c.h.b16 %v3676
    %v4285 = vunpack.c.l.b16 %v3677
    %v4286 = vunpack.c.h.b16 %v3677
    %v4287 = vunpack.c.l.b16 %v3678
    %v4288 = vunpack.c.h.b16 %v3678
    %v4289 = vunpack.c.l.b16 %v3679
    %v4290 = vunpack.c.h.b16 %v3679
    %v4291 = vunpack.c.l.b16 %v3680
    %v4292 = vunpack.c.h.b16 %v3680
    %v4293 = vunpack.c.l.b16 %v3681
    %v4294 = vunpack.c.h.b16 %v3681
    %v4295 = vunpack.c.l.b16 %v3682
    %v4296 = vunpack.c.h.b16 %v3682
    %v4297 = vunpack.c.l.b16 %v3683
    %v4298 = vunpack.c.h.b16 %v3683
    %v4299 = vunpack.c.l.b16 %v3684
    %v4300 = vunpack.c.h.b16 %v3684
    %v4301 = vunpack.c.l.b16 %v3685
    %v4302 = vunpack.c.h.b16 %v3685
    %v4303 = vunpack.c.l.b16 %v3686
    %v4304 = vunpack.c.h.b16 %v3686
    %v4305 = vunpack.c.l.b16 %v3687
    %v4306 = vunpack.c.h.b16 %v3687
    %v4307 = vunpack.c.l.b16 %v3688
    %v4308 = vunpack.c.h.b16 %v3688
    %v4309 = vunpack.c.l.b16 %v3689
    %v4310 = vunpack.c.h.b16 %v3689
    %v4311 = vunpack.c.l.b16 %v3690
    %v4312 = vunpack.c.h.b16 %v3690
    %v4313 = vunpack.c.l.b16 %v3691
    %v4314 = vunpack.c.h.b16 %v3691
    %v4315 = vunpack.c.l.b16 %v3692
    %v4316 = vunpack.c.h.b16 %v3692
    %v4317 = vunpack.c.l.b16 %v3693
    %v4318 = vunpack.c.h.b16 %v3693
    %v4319 = vunpack.c.l.b16 %v3694
    %v4320 = vunpack.c.h.b16 %v3694
    %v4321 = vunpack.c.l.b16 %v3695
    %v4322 = vunpack.c.h.b16 %v3695
    %v4323 = vunpack.c.l.b16 %v3696
    %v4324 = vunpack.c.h.b16 %v3696
    %v4325 = vunpack.c.l.b16 %v3697
    %v4326 = vunpack.c.h.b16 %v3697
    %v4327 = vunpack.c.l.b16 %v3698
    %v4328 = vunpack.c.h.b16 %v3698
    %v4329 = vunpack.c.l.b16 %v3699
    %v4330 = vunpack.c.h.b16 %v3699
    %v4331 = vunpack.c.l.b16 %v3700
    %v4332 = vunpack.c.h.b16 %v3700
    %v4333 = vunpack.c.l.b16 %v3701
    %v4334 = vunpack.c.h.b16 %v3701
    %v4335 = vunpack.c.l.b16 %v3702
    %v4336 = vunpack.c.h.b16 %v3702
    %v4337 = vunpack.c.l.b16 %v3703
    %v4338 = vunpack.c.h.b16 %v3703
    %v4339 = vunpack.c.l.b16 %v3704
    %v4340 = vunpack.c.h.b16 %v3704
    %v4341 = vunpack.c.l.b16 %v3705
    %v4342 = vunpack.c.h.b16 %v3705
    %v4343 = vunpack.c.l.b16 %v3706
    %v4344 = vunpack.c.h.b16 %v3706
    %v4345 = vunpack.c.l.b16 %v3707
    %v4346 = vunpack.c.h.b16 %v3707
    %v4347 = vunpack.c.l.b16 %v3708
    %v4348 = vunpack.c.h.b16 %v3708
    %v4349 = vunpack.c.l.b16 %v3709
    %v4350 = vunpack.c.h.b16 %v3709
    %v4351 = vunpack.c.l.b16 %v3710
    %v4352 = vunpack.c.h.b16 %v3710
    %v4353 = vunpack.c.l.b16 %v3711
    %v4354 = vunpack.c.h.b16 %v3711
    %v4355 = vunpack.c.l.b16 %v3712
    %v4356 = vunpack.c.h.b16 %v3712
    %v4357 = vunpack.c.l.b16 %v3713
    %v4358 = vunpack.c.h.b16 %v3713
    %v4359 = vunpack.c.l.b16 %v3714
    %v4360 = vunpack.c.h.b16 %v3714
    %v4361 = vunpack.c.l.b16 %v3715
    %v4362 = vunpack.c.h.b16 %v3715
    %v4363 = vunpack.c.l.b16 %v3716
    %v4364 = vunpack.c.h.b16 %v3716
    %v4365 = vunpack.c.l.b16 %v3717
    %v4366 = vunpack.c.h.b16 %v3717
    %v4367 = vunpack.c.l.b16 %v3718
    %v4368 = vunpack.c.h.b16 %v3718
    %v4369 = vunpack.c.l.b16 %v3719
    %v4370 = vunpack.c.h.b16 %v3719
    %v4371 = vunpack.c.l.b16 %v3720
    %v4372 = vunpack.c.h.b16 %v3720
    %v4373 = vunpack.c.l.b16 %v3721
    %v4374 = vunpack.c.h.b16 %v3721
    %v4375 = vunpack.c.l.b16 %v3722
    %v4376 = vunpack.c.h.b16 %v3722
    %v4377 = vunpack.c.l.b16 %v3723
    %v4378 = vunpack.c.h.b16 %v3723
    %v4379 = vunpack.c.l.b16 %v3724
    %v4380 = vunpack.c.h.b16 %v3724
    %v4381 = vunpack.c.l.b16 %v3725
    %v4382 = vunpack.c.h.b16 %v3725
    %v4383 = vunpack.c.l.b16 %v3726
    %v4384 = vunpack.c.h.b16 %v3726
    %v4385 = vunpack.c.l.b16 %v3727
    %v4386 = vunpack.c.h.b16 %v3727
    %v4387 = vunpack.c.l.b16 %v3728
    %v4388 = vunpack.c.h.b16 %v3728
    %v4389 = vunpack.c.l.b16 %v3729
    %v4390 = vunpack.c.h.b16 %v3729
    %v4391 = vunpack.c.l.b16 %v3730
    %v4392 = vunpack.c.h.b16 %v3730
    %v4393 = vunpack.c.l.b16 %v3731
    %v4394 = vunpack.c.h.b16 %v3731
    %v4395 = vunpack.c.l.b16 %v3732
    %v4396 = vunpack.c.h.b16 %v3732
    %v4397 = vunpack.c.l.b16 %v3733
    %v4398 = vunpack.c.h.b16 %v3733
    %v4399 = vunpack.c.l.b16 %v3734
    %v4400 = vunpack.c.h.b16 %v3734
    %v4401 = vunpack.c.l.b16 %v3735
    %v4402 = vunpack.c.h.b16 %v3735
    %v4403 = vunpack.c.l.b16 %v3736
    %v4404 = vunpack.c.h.b16 %v3736
    %v4405 = vunpack.c.l.b16 %v3737
    %v4406 = vunpack.c.h.b16 %v3737
    %v4407 = vunpack.c.l.b16 %v3738
    %v4408 = vunpack.c.h.b16 %v3738
    %v4409 = vunpack.c.l.b16 %v3739
    %v4410 = vunpack.c.h.b16 %v3739
    %v4411 = vunpack.c.l.b16 %v3740
    %v4412 = vunpack.c.h.b16 %v3740
    %v4413 = vunpack.c.l.b16 %v3741
    %v4414 = vunpack.c.h.b16 %v3741
    %v4415 = vunpack.c.l.b16 %v3742
    %v4416 = vunpack.c.h.b16 %v3742
    %v4417 = vunpack.c.l.b16 %v3743
    %v4418 = vunpack.c.h.b16 %v3743
    %v4419 = vunpack.c.l.b16 %v3744
    %v4420 = vunpack.c.h.b16 %v3744
    %v4421 = vunpack.c.l.b16 %v3745
    %v4422 = vunpack.c.h.b16 %v3745
    %v4423 = vunpack.c.l.b16 %v3746
    %v4424 = vunpack.c.h.b16 %v3746
    %v4425 = vunpack.c.l.b16 %v3747
    %v4426 = vunpack.c.h.b16 %v3747
    %v4427 = vunpack.c.l.b16 %v3748
    %v4428 = vunpack.c.h.b16 %v3748
    %v4429 = vunpack.c.l.b16 %v3749
    %v4430 = vunpack.c.h.b16 %v3749
    %v4431 = vunpack.c.l.b16 %v3750
    %v4432 = vunpack.c.h.b16 %v3750
    %v4433 = vunpack.c.l.b16 %v3751
    %v4434 = vunpack.c.h.b16 %v3751
    %v4435 = vunpack.c.l.b16 %v3752
    %v4436 = vunpack.c.h.b16 %v3752
    %v4437 = vunpack.c.l.b16 %v3753
    %v4438 = vunpack.c.h.b16 %v3753
    %v4439 = vunpack.c.l.b16 %v3754
    %v4440 = vunpack.c.h.b16 %v3754
    %v4441 = vunpack.c.l.b16 %v3755
    %v4442 = vunpack.c.h.b16 %v3755
    %v4443 = vunpack.c.l.b16 %v3756
    %v4444 = vunpack.c.h.b16 %v3756
    %v4445 = vunpack.c.l.b16 %v3757
    %v4446 = vunpack.c.h.b16 %v3757
    %v4447 = vunpack.c.l.b16 %v3758
    %v4448 = vunpack.c.h.b16 %v3758
    %v4449 = vunpack.c.l.b16 %v3759
    %v4450 = vunpack.c.h.b16 %v3759
    %v4451 = vunpack.c.l.b16 %v3760
    %v4452 = vunpack.c.h.b16 %v3760
    %v4453 = vunpack.c.l.b16 %v3761
    %v4454 = vunpack.c.h.b16 %v3761
    %v4455 = vunpack.c.l.b16 %v3762
    %v4456 = vunpack.c.h.b16 %v3762
    %v4457 = vunpack.c.l.b16 %v3763
    %v4458 = vunpack.c.h.b16 %v3763
    %v4459 = vunpack.c.l.b16 %v3764
    %v4460 = vunpack.c.h.b16 %v3764
    %v4461 = vunpack.c.l.b16 %v3765
    %v4462 = vunpack.c.h.b16 %v3765
    %v4463 = vunpack.c.l.b16 %v3766
    %v4464 = vunpack.c.h.b16 %v3766
    %v4465 = vunpack.c.l.b16 %v3767
    %v4466 = vunpack.c.h.b16 %v3767
    %v4467 = vunpack.c.l.b16 %v3768
    %v4468 = vunpack.c.h.b16 %v3768
    %v4469 = vunpack.c.l.b16 %v3769
    %v4470 = vunpack.c.h.b16 %v3769
    %v4471 = vunpack.c.l.b16 %v3770
    %v4472 = vunpack.c.h.b16 %v3770
    %v4473 = vunpack.c.l.b16 %v3771
    %v4474 = vunpack.c.h.b16 %v3771
    %v4475 = vunpack.c.l.b16 %v3772
    %v4476 = vunpack.c.h.b16 %v3772
    %v4477 = vunpack.c.l.b16 %v3773
    %v4478 = vunpack.c.h.b16 %v3773
    %v4479 = vunpack.c.l.b16 %v3774
    %v4480 = vunpack.c.h.b16 %v3774
    %v4481 = vunpack.c.l.b16 %v3775
    %v4482 = vunpack.c.h.b16 %v3775
    %v4483 = vunpack.c.l.b16 %v3776
    %v4484 = vunpack.c.h.b16 %v3776
    %v4485 = vunpack.c.l.b16 %v3777
    %v4486 = vunpack.c.h.b16 %v3777
    %v4487 = vunpack.c.l.b16 %v3778
    %v4488 = vunpack.c.h.b16 %v3778
    %v4489 = vunpack.c.l.b16 %v3779
    %v4490 = vunpack.c.h.b16 %v3779
    %v4491 = vunpack.c.l.b16 %v3780
    %v4492 = vunpack.c.h.b16 %v3780
    %v4493 = vunpack.c.l.b16 %v3781
    %v4494 = vunpack.c.h.b16 %v3781
    %v4495 = vunpack.c.l.b16 %v3782
    %v4496 = vunpack.c.h.b16 %v3782
    %v4497 = vunpack.c.l.b16 %v3783
    %v4498 = vunpack.c.h.b16 %v3783
    %v4499 = vunpack.c.l.b16 %v3784
    %v4500 = vunpack.c.h.b16 %v3784
    %v4501 = vunpack.c.l.b16 %v3785
    %v4502 = vunpack.c.h.b16 %v3785
    %v4503 = vunpack.c.l.b16 %v3786
    %v4504 = vunpack.c.h.b16 %v3786
    %v4505 = vunpack.c.l.b16 %v3787
    %v4506 = vunpack.c.h.b16 %v3787
    %v4507 = vunpack.c.l.b16 %v3788
    %v4508 = vunpack.c.h.b16 %v3788
    %v4509 = vunpack.c.l.b16 %v3789
    %v4510 = vunpack.c.h.b16 %v3789
    %v4511 = vunpack.c.l.b16 %v3790
    %v4512 = vunpack.c.h.b16 %v3790
    %v4513 = vunpack.c.l.b16 %v3791
    %v4514 = vunpack.c.h.b16 %v3791
    %v4515 = vunpack.c.l.b16 %v3792
    %v4516 = vunpack.c.h.b16 %v3792
    %v4517 = vunpack.c.l.b16 %v3793
    %v4518 = vunpack.c.h.b16 %v3793
    %v4519 = vunpack.c.l.b16 %v3794
    %v4520 = vunpack.c.h.b16 %v3794
    %v4521 = vunpack.c.l.b16 %v3795
    %v4522 = vunpack.c.h.b16 %v3795
    %v4523 = vunpack.c.l.b16 %v3796
    %v4524 = vunpack.c.h.b16 %v3796
    %v4525 = vunpack.c.l.b16 %v3797
    %v4526 = vunpack.c.h.b16 %v3797
    %v4527 = vunpack.c.l.b16 %v3798
    %v4528 = vunpack.c.h.b16 %v3798
    %v4529 = vunpack.c.l.b16 %v3799
    %v4530 = vunpack.c.h.b16 %v3799
    %v4531 = vunpack.c.l.b16 %v3800
    %v4532 = vunpack.c.h.b16 %v3800
    %v4533 = vunpack.c.l.b16 %v3801
    %v4534 = vunpack.c.h.b16 %v3801
    %v4535 = vunpack.c.l.b16 %v3802
    %v4536 = vunpack.c.h.b16 %v3802
    %v4537 = vunpack.c.l.b16 %v3803
    %v4538 = vunpack.c.h.b16 %v3803
    %v4539 = vunpack.c.l.b16 %v3804
    %v4540 = vunpack.c.h.b16 %v3804
    %v4541 = vunpack.c.l.b16 %v3805
    %v4542 = vunpack.c.h.b16 %v3805
    %v4543 = vunpack.c.l.b16 %v3806
    %v4544 = vunpack.c.h.b16 %v3806
    %v4545 = vunpack.c.l.b16 %v3807
    %v4546 = vunpack.c.h.b16 %v3807
    %v4547 = vunpack.c.l.b16 %v3808
    %v4548 = vunpack.c.h.b16 %v3808
    %v4549 = vunpack.c.l.b16 %v3809
    %v4550 = vunpack.c.h.b16 %v3809
    %v4551 = vunpack.c.l.b16 %v3810
    %v4552 = vunpack.c.h.b16 %v3810
    %v4553 = vunpack.c.l.b16 %v3811
    %v4554 = vunpack.c.h.b16 %v3811
    %v4555 = vunpack.c.l.b16 %v3812
    %v4556 = vunpack.c.h.b16 %v3812
    %v4557 = vunpack.c.l.b16 %v3813
    %v4558 = vunpack.c.h.b16 %v3813
    %v4559 = vunpack.c.l.b16 %v3814
    %v4560 = vunpack.c.h.b16 %v3814
    %v4561 = vunpack.c.l.b16 %v3815
    %v4562 = vunpack.c.h.b16 %v3815
    %v4563 = vunpack.c.l.b16 %v3816
    %v4564 = vunpack.c.h.b16 %v3816
    %v4565 = vunpack.c.l.b16 %v3817
    %v4566 = vunpack.c.h.b16 %v3817
    %v4567 = vunpack.c.l.b16 %v3818
    %v4568 = vunpack.c.h.b16 %v3818
    %v4569 = vunpack.c.l.b16 %v3819
    %v4570 = vunpack.c.h.b16 %v3819
    %v4571 = vunpack.c.l.b16 %v3820
    %v4572 = vunpack.c.h.b16 %v3820
    %v4573 = vunpack.c.l.b16 %v3821
    %v4574 = vunpack.c.h.b16 %v3821
    %v4575 = vunpack.c.l.b16 %v3822
    %v4576 = vunpack.c.h.b16 %v3822
    %v4577 = vunpack.c.l.b16 %v3823
    %v4578 = vunpack.c.h.b16 %v3823
    %v4579 = vunpack.c.l.b16 %v3824
    %v4580 = vunpack.c.h.b16 %v3824
    %v4581 = vunpack.c.l.b16 %v3825
    %v4582 = vunpack.c.h.b16 %v3825
    %v4583 = vunpack.c.l.b16 %v3826
    %v4584 = vunpack.c.h.b16 %v3826
    %v4585 = vunpack.c.l.b16 %v3827
    %v4586 = vunpack.c.h.b16 %v3827
    %v4587 = vunpack.c.l.b16 %v3828
    %v4588 = vunpack.c.h.b16 %v3828
    %v4589 = vunpack.c.l.b16 %v3829
    %v4590 = vunpack.c.h.b16 %v3829
    %v4591 = vunpack.c.l.b16 %v3830
    %v4592 = vunpack.c.h.b16 %v3830
    %v4593 = vunpack.c.l.b16 %v3831
    %v4594 = vunpack.c.h.b16 %v3831
    %v4595 = vunpack.c.l.b16 %v3832
    %v4596 = vunpack.c.h.b16 %v3832
    %v4597 = vunpack.c.l.b16 %v3833
    %v4598 = vunpack.c.h.b16 %v3833
    %v4599 = vunpack.c.l.b16 %v3834
    %v4600 = vunpack.c.h.b16 %v3834
    %v4601 = vunpack.c.l.b16 %v3835
    %v4602 = vunpack.c.h.b16 %v3835
    %v4603 = vunpack.c.l.b16 %v3836
    %v4604 = vunpack.c.h.b16 %v3836
    %v4605 = vunpack.c.l.b16 %v3837
    %v4606 = vunpack.c.h.b16 %v3837
    %v4607 = vunpack.c.l.b16 %v3838
    %v4608 = vunpack.c.h.b16 %v3838
    %v4609 = vunpack.c.l.b16 %v3839
    %v4610 = vunpack.c.h.b16 %v3839
    %v4611 = vunpack.c.l.b16 %v3840
    %v4612 = vunpack.c.h.b16 %v3840
    %v4613 = vunpack.c.l.b16 %v3841
    %v4614 = vunpack.c.h.b16 %v3841
    %v4615 = vunpack.c.l.b16 %v3842
    %v4616 = vunpack.c.h.b16 %v3842
    %v4617 = vunpack.c.l.b16 %v3843
    %v4618 = vunpack.c.h.b16 %v3843
    %v4619 = vunpack.c.l.b16 %v3844
    %v4620 = vunpack.c.h.b16 %v3844
    %v4621 = vunpack.c.l.b16 %v3845
    %v4622 = vunpack.c.h.b16 %v3845
    %v4623 = vunpack.c.l.b16 %v3846
    %v4624 = vunpack.c.h.b16 %v3846
    %v4625 = vunpack.c.l.b16 %v3847
    %v4626 = vunpack.c.h.b16 %v3847
    %v4627 = vunpack.c.l.b16 %v3848
    %v4628 = vunpack.c.h.b16 %v3848
    %v4629 = vunpack.c.l.b16 %v3849
    %v4630 = vunpack.c.h.b16 %v3849
    %v4631 = vunpack.c.l.b16 %v3850
    %v4632 = vunpack.c.h.b16 %v3850
    %v4633 = vunpack.c.l.b16 %v3851
    %v4634 = vunpack.c.h.b16 %v3851
    %v4635 = vunpack.c.l.b16 %v3852
    %v4636 = vunpack.c.h.b16 %v3852
    %v4637 = vunpack.c.l.b16 %v3853
    %v4638 = vunpack.c.h.b16 %v3853
    %v4639 = vunpack.c.l.b16 %v3854
    %v4640 = vunpack.c.h.b16 %v3854
    %v4641 = vunpack.c.l.b16 %v3855
    %v4642 = vunpack.c.h.b16 %v3855
    %v4643 = vunpack.c.l.b16 %v3856
    %v4644 = vunpack.c.h.b16 %v3856
    %v4645 = vunpack.c.l.b16 %v3857
    %v4646 = vunpack.c.h.b16 %v3857
    %v4647 = vunpack.c.l.b16 %v3858
    %v4648 = vunpack.c.h.b16 %v3858
    %v4649 = vpack.c.b16 %v4141, %v4137
    %v4650 = vpack.c.b16 %v4142, %v4138
    %v4651 = vpack.c.b16 %v4143, %v4139
    %v4652 = vpack.c.b16 %v4144, %v4140
    %v4653 = vpack.c.b16 %v4149, %v4145
    %v4654 = vpack.c.b16 %v4150, %v4146
    %v4655 = vpack.c.b16 %v4151, %v4147
    %v4656 = vpack.c.b16 %v4152, %v4148
    %v4657 = vpack.c.b16 %v4157, %v4153
    %v4658 = vpack.c.b16 %v4158, %v4154
    %v4659 = vpack.c.b16 %v4159, %v4155
    %v4660 = vpack.c.b16 %v4160, %v4156
    %v4661 = vpack.c.b16 %v4165, %v4161
    %v4662 = vpack.c.b16 %v4166, %v4162
    %v4663 = vpack.c.b16 %v4167, %v4163
    %v4664 = vpack.c.b16 %v4168, %v4164
    %v4665 = vpack.c.b16 %v4173, %v4169
    %v4666 = vpack.c.b16 %v4174, %v4170
    %v4667 = vpack.c.b16 %v4175, %v4171
    %v4668 = vpack.c.b16 %v4176, %v4172
    %v4669 = vpack.c.b16 %v4181, %v4177
    %v4670 = vpack.c.b16 %v4182, %v4178
    %v4671 = vpack.c.b16 %v4183, %v4179
    %v4672 = vpack.c.b16 %v4184, %v4180
    %v4673 = vpack.c.b16 %v4189, %v4185
    %v4674 = vpack.c.b16 %v4190, %v4186
    %v4675 = vpack.c.b16 %v4191, %v4187
    %v4676 = vpack.c.b16 %v4192, %v4188
    %v4677 = vpack.c.b16 %v4197, %v4193
    %v4678 = vpack.c.b16 %v4198, %v4194
    %v4679 = vpack.c.b16 %v4199, %v4195
    %v4680 = vpack.c.b16 %v4200, %v4196
    %v4681 = vpack.c.b16 %v4205, %v4201
    %v4682 = vpack.c.b16 %v4206, %v4202
    %v4683 = vpack.c.b16 %v4207, %v4203
    %v4684 = vpack.c.b16 %v4208, %v4204
    %v4685 = vpack.c.b16 %v4213, %v4209
    %v4686 = vpack.c.b16 %v4214, %v4210
    %v4687 = vpack.c.b16 %v4215, %v4211
    %v4688 = vpack.c.b16 %v4216, %v4212
    %v4689 = vpack.c.b16 %v4221, %v4217
    %v4690 = vpack.c.b16 %v4222, %v4218
    %v4691 = vpack.c.b16 %v4223, %v4219
    %v4692 = vpack.c.b16 %v4224, %v4220
    %v4693 = vpack.c.b16 %v4229, %v4225
    %v4694 = vpack.c.b16 %v4230, %v4226
    %v4695 = vpack.c.b16 %v4231, %v4227
    %v4696 = vpack.c.b16 %v4232, %v4228
    %v4697 = vpack.c.b16 %v4237, %v4233
    %v4698 = vpack.c.b16 %v4238, %v4234
    %v4699 = vpack.c.b16 %v4239, %v4235
    %v4700 = vpack.c.b16 %v4240, %v4236
    %v4701 = vpack.c.b16 %v4245, %v4241
    %v4702 = vpack.c.b16 %v4246, %v4242
    %v4703 = vpack.c.b16 %v4247, %v4243
    %v4704 = vpack.c.b16 %v4248, %v4244
    %v4705 = vpack.c.b16 %v4253, %v4249
    %v4706 = vpack.c.b16 %v4254, %v4250
    %v4707 = vpack.c.b16 %v4255, %v4251
    %v4708 = vpack.c.b16 %v4256, %v4252
    %v4709 = vpack.c.b16 %v4261, %v4257
    %v4710 = vpack.c.b16 %v4262, %v4258
    %v4711 = vpack.c.b16 %v4263, %v4259
    %v4712 = vpack.c.b16 %v4264, %v4260
    %v4713 = vpack.c.b16 %v4269, %v4265
    %v4714 = vpack.c.b16 %v4270, %v4266
    %v4715 = vpack.c.b16 %v4271, %v4267
    %v4716 = vpack.c.b16 %v4272, %v4268
    %v4717 = vpack.c.b16 %v4277, %v4273
    %v4718 = vpack.c.b16 %v4278, %v4274
    %v4719 = vpack.c.b16 %v4279, %v4275
    %v4720 = vpack.c.b16 %v4280, %v4276
    %v4721 = vpack.c.b16 %v4285, %v4281
    %v4722 = vpack.c.b16 %v4286, %v4282
    %v4723 = vpack.c.b16 %v4287, %v4283
    %v4724 = vpack.c.b16 %v4288, %v4284
    %v4725 = vpack.c.b16 %v4293, %v4289
    %v4726 = vpack.c.b16 %v4294, %v4290
    %v4727 = vpack.c.b16 %v4295, %v4291
    %v4728 = vpack.c.b16 %v4296, %v4292
    %v4729 = vpack.c.b16 %v4301, %v4297
    %v4730 = vpack.c.b16 %v4302, %v4298
    %v4731 = vpack.c.b16 %v4303, %v4299
    %v4732 = vpack.c.b16 %v4304, %v4300
    %v4733 = vpack.c.b16 %v4309, %v4305
    %v4734 = vpack.c.b16 %v4310, %v4306
    %v4735 = vpack.c.b16 %v4311, %v4307
    %v4736 = vpack.c.b16 %v4312, %v4308
    %v4737 = vpack.c.b16 %v4317, %v4313
    %v4738 = vpack.c.b16 %v4318, %v4314
    %v4739 = vpack.c.b16 %v4319, %v4315
    %v4740 = vpack.c.b16 %v4320, %v4316
    %v4741 = vpack.c.b16 %v4325, %v4321
    %v4742 = vpack.c.b16 %v4326, %v4322
    %v4743 = vpack.c.b16 %v4327, %v4323
    %v4744 = vpack.c.b16 %v4328, %v4324
    %v4745 = vpack.c.b16 %v4333, %v4329
    %v4746 = vpack.c.b16 %v4334, %v4330
    %v4747 = vpack.c.b16 %v4335, %v4331
    %v4748 = vpack.c.b16 %v4336, %v4332
    %v4749 = vpack.c.b16 %v4341, %v4337
    %v4750 = vpack.c.b16 %v4342, %v4338
    %v4751 = vpack.c.b16 %v4343, %v4339
    %v4752 = vpack.c.b16 %v4344, %v4340
    %v4753 = vpack.c.b16 %v4349, %v4345
    %v4754 = vpack.c.b16 %v4350, %v4346
    %v4755 = vpack.c.b16 %v4351, %v4347
    %v4756 = vpack.c.b16 %v4352, %v4348
    %v4757 = vpack.c.b16 %v4357, %v4353
    %v4758 = vpack.c.b16 %v4358, %v4354
    %v4759 = vpack.c.b16 %v4359, %v4355
    %v4760 = vpack.c.b16 %v4360, %v4356
    %v4761 = vpack.c.b16 %v4365, %v4361
    %v4762 = vpack.c.b16 %v4366, %v4362
    %v4763 = vpack.c.b16 %v4367, %v4363
    %v4764 = vpack.c.b16 %v4368, %v4364
    %v4765 = vpack.c.b16 %v4373, %v4369
    %v4766 = vpack.c.b16 %v4374, %v4370
    %v4767 = vpack.c.b16 %v4375, %v4371
    %v4768 = vpack.c.b16 %v4376, %v4372
    %v4769 = vpack.c.b16 %v4381, %v4377
    %v4770 = vpack.c.b16 %v4382, %v4378
    %v4771 = vpack.c.b16 %v4383, %v4379
    %v4772 = vpack.c.b16 %v4384, %v4380
    %v4773 = vpack.c.b16 %v4389, %v4385
    %v4774 = vpack.c.b16 %v4390, %v4386
    %v4775 = vpack.c.b16 %v4391, %v4387
    %v4776 = vpack.c.b16 %v4392, %v4388
    %v4777 = vpack.c.b16 %v4397, %v4393
    %v4778 = vpack.c.b16 %v4398, %v4394
    %v4779 = vpack.c.b16 %v4399, %v4395
    %v4780 = vpack.c.b16 %v4400, %v4396
    %v4781 = vpack.c.b16 %v4405, %v4401
    %v4782 = vpack.c.b16 %v4406, %v4402
    %v4783 = vpack.c.b16 %v4407, %v4403
    %v4784 = vpack.c.b16 %v4408, %v4404
    %v4785 = vpack.c.b16 %v4413, %v4409
    %v4786 = vpack.c.b16 %v4414, %v4410
    %v4787 = vpack.c.b16 %v4415, %v4411
    %v4788 = vpack.c.b16 %v4416, %v4412
    %v4789 = vpack.c.b16 %v4421, %v4417
    %v4790 = vpack.c.b16 %v4422, %v4418
    %v4791 = vpack.c.b16 %v4423, %v4419
    %v4792 = vpack.c.b16 %v4424, %v4420
    %v4793 = vpack.c.b16 %v4429, %v4425
    %v4794 = vpack.c.b16 %v4430, %v4426
    %v4795 = vpack.c.b16 %v4431, %v4427
    %v4796 = vpack.c.b16 %v4432, %v4428
    %v4797 = vpack.c.b16 %v4437, %v4433
    %v4798 = vpack.c.b16 %v4438, %v4434
    %v4799 = vpack.c.b16 %v4439, %v4435
    %v4800 = vpack.c.b16 %v4440, %v4436
    %v4801 = vpack.c.b16 %v4445, %v4441
    %v4802 = vpack.c.b16 %v4446, %v4442
    %v4803 = vpack.c.b16 %v4447, %v4443
    %v4804 = vpack.c.b16 %v4448, %v4444
    %v4805 = vpack.c.b16 %v4453, %v4449
    %v4806 = vpack.c.b16 %v4454, %v4450
    %v4807 = vpack.c.b16 %v4455, %v4451
    %v4808 = vpack.c.b16 %v4456, %v4452
    %v4809 = vpack.c.b16 %v4461, %v4457
    %v4810 = vpack.c.b16 %v4462, %v4458
    %v4811 = vpack.c.b16 %v4463, %v4459
    %v4812 = vpack.c.b16 %v4464, %v4460
    %v4813 = vpack.c.b16 %v4469, %v4465
    %v4814 = vpack.c.b16 %v4470, %v4466
    %v4815 = vpack.c.b16 %v4471, %v4467
    %v4816 = vpack.c.b16 %v4472, %v4468
    %v4817 = vpack.c.b16 %v4477, %v4473
    %v4818 = vpack.c.b16 %v4478, %v4474
    %v4819 = vpack.c.b16 %v4479, %v4475
    %v4820 = vpack.c.b16 %v4480, %v4476
    %v4821 = vpack.c.b16 %v4485, %v4481
    %v4822 = vpack.c.b16 %v4486, %v4482
    %v4823 = vpack.c.b16 %v4487, %v4483
    %v4824 = vpack.c.b16 %v4488, %v4484
    %v4825 = vpack.c.b16 %v4493, %v4489
    %v4826 = vpack.c.b16 %v4494, %v4490
    %v4827 = vpack.c.b16 %v4495, %v4491
    %v4828 = vpack.c.b16 %v4496, %v4492
    %v4829 = vpack.c.b16 %v4501, %v4497
    %v4830 = vpack.c.b16 %v4502, %v4498
    %v4831 = vpack.c.b16 %v4503, %v4499
    %v4832 = vpack.c.b16 %v4504, %v4500
    %v4833 = vpack.c.b16 %v4509, %v4505
    %v4834 = vpack.c.b16 %v4510, %v4506
    %v4835 = vpack.c.b16 %v4511, %v4507
    %v4836 = vpack.c.b16 %v4512, %v4508
    %v4837 = vpack.c.b16 %v4517, %v4513
    %v4838 = vpack.c.b16 %v4518, %v4514
    %v4839 = vpack.c.b16 %v4519, %v4515
    %v4840 = vpack.c.b16 %v4520, %v4516
    %v4841 = vpack.c.b16 %v4525, %v4521
    %v4842 = vpack.c.b16 %v4526, %v4522
    %v4843 = vpack.c.b16 %v4527, %v4523
    %v4844 = vpack.c.b16 %v4528, %v4524
    %v4845 = vpack.c.b16 %v4533, %v4529
    %v4846 = vpack.c.b16 %v4534, %v4530
    %v4847 = vpack.c.b16 %v4535, %v4531
    %v4848 = vpack.c.b16 %v4536, %v4532
    %v4849 = vpack.c.b16 %v4541, %v4537
    %v4850 = vpack.c.b16 %v4542, %v4538
    %v4851 = vpack.c.b16 %v4543, %v4539
    %v4852 = vpack.c.b16 %v4544, %v4540
    %v4853 = vpack.c.b16 %v4549, %v4545
    %v4854 = vpack.c.b16 %v4550, %v4546
    %v4855 = vpack.c.b16 %v4551, %v4547
    %v4856 = vpack.c.b16 %v4552, %v4548
    %v4857 = vpack.c.b16 %v4557, %v4553
    %v4858 = vpack.c.b16 %v4558, %v4554
    %v4859 = vpack.c.b16 %v4559, %v4555
    %v4860 = vpack.c.b16 %v4560, %v4556
    %v4861 = vpack.c.b16 %v4565, %v4561
    %v4862 = vpack.c.b16 %v4566, %v4562
    %v4863 = vpack.c.b16 %v4567, %v4563
    %v4864 = vpack.c.b16 %v4568, %v4564
    %v4865 = vpack.c.b16 %v4573, %v4569
    %v4866 = vpack.c.b16 %v4574, %v4570
    %v4867 = vpack.c.b16 %v4575, %v4571
    %v4868 = vpack.c.b16 %v4576, %v4572
    %v4869 = vpack.c.b16 %v4581, %v4577
    %v4870 = vpack.c.b16 %v4582, %v4578
    %v4871 = vpack.c.b16 %v4583, %v4579
    %v4872 = vpack.c.b16 %v4584, %v4580
    %v4873 = vpack.c.b16 %v4589, %v4585
    %v4874 = vpack.c.b16 %v4590, %v4586
    %v4875 = vpack.c.b16 %v4591, %v4587
    %v4876 = vpack.c.b16 %v4592, %v4588
    %v4877 = vpack.c.b16 %v4597, %v4593
    %v4878 = vpack.c.b16 %v4598, %v4594
    %v4879 = vpack.c.b16 %v4599, %v4595
    %v4880 = vpack.c.b16 %v4600, %v4596
    %v4881 = vpack.c.b16 %v4605, %v4601
    %v4882 = vpack.c.b16 %v4606, %v4602
    %v4883 = vpack.c.b16 %v4607, %v4603
    %v4884 = vpack.c.b16 %v4608, %v4604
    %v4885 = vpack.c.b16 %v4613, %v4609
    %v4886 = vpack.c.b16 %v4614, %v4610
    %v4887 = vpack.c.b16 %v4615, %v4611
    %v4888 = vpack.c.b16 %v4616, %v4612
    %v4889 = vpack.c.b16 %v4621, %v4617
    %v4890 = vpack.c.b16 %v4622, %v4618
    %v4891 = vpack.c.b16 %v4623, %v4619
    %v4892 = vpack.c.b16 %v4624, %v4620
    %v4893 = vpack.c.b16 %v4629, %v4625
    %v4894 = vpack.c.b16 %v4630, %v4626
    %v4895 = vpack.c.b16 %v4631, %v4627
    %v4896 = vpack.c.b16 %v4632, %v4628
    %v4897 = vpack.c.b16 %v4637, %v4633
    %v4898 = vpack.c.b16 %v4638, %v4634
    %v4899 = vpack.c.b16 %v4639, %v4635
    %v4900 = vpack.c.b16 %v4640, %v4636
    %v4901 = vpack.c.b16 %v4645, %v4641
    %v4902 = vpack.c.b16 %v4646, %v4642
    %v4903 = vpack.c.b16 %v4647, %v4643
    %v4904 = vpack.c.b16 %v4648, %v4644
    %5161 = vmatprep.subr.bf16.mxu0 %v4678
    %5162 = vmatpush1.bf16.msra.mxu0 %v4677
    %5163 = vmatprep.subr.bf16.mxu0 %v4674
    %5164 = vmatpush1.bf16.msra.mxu0 %v4673
    %5165 = vmatprep.subr.bf16.mxu0 %v4670
    %5166 = vmatpush1.bf16.msra.mxu0 %v4669
    %5167 = vmatprep.subr.bf16.mxu0 %v4666
    %5168 = vmatpush1.bf16.msra.mxu0 %v4665
    %5169 = vmatprep.subr.bf16.mxu0 %v4662
    %5170 = vmatpush1.bf16.msra.mxu0 %v4661
    %5171 = vmatprep.subr.bf16.mxu0 %v4658
    %5172 = vmatpush1.bf16.msra.mxu0 %v4657
    %5173 = vmatprep.subr.bf16.mxu0 %v4654
    %5174 = vmatpush1.bf16.msra.mxu0 %v4653
    %5175 = vmatprep.subr.bf16.mxu0 %v4650
    %5176 = vmatpush1.bf16.msra.mxu0 %v4649
    %5177 = vmatprep.subr.bf16.mxu0 %v4710
    %5178 = vmatpush2.bf16.msra.mxu0 %v4709
    %5179 = vmatprep.subr.bf16.mxu0 %v4706
    %5180 = vmatpush2.bf16.msra.mxu0 %v4705
    %5181 = vmatprep.subr.bf16.mxu0 %v4702
    %5182 = vmatpush2.bf16.msra.mxu0 %v4701
    %5183 = vmatprep.subr.bf16.mxu0 %v4698
    %5184 = vmatpush2.bf16.msra.mxu0 %v4697
    %5185 = vmatprep.subr.bf16.mxu0 %v4694
    %5186 = vmatpush2.bf16.msra.mxu0 %v4693
    %5187 = vmatprep.subr.bf16.mxu0 %v4690
    %5188 = vmatpush2.bf16.msra.mxu0 %v4689
    %5189 = vmatprep.subr.bf16.mxu0 %v4686
    %5190 = vmatpush2.bf16.msra.mxu0 %v4685
    %5191 = vmatprep.subr.bf16.mxu0 %v4682
    %5192 = vmatpush2.bf16.msra.mxu0 %v4681
    %5193 = vmatprep.mubr.bf16.mxu0 %v3596
    %5194 = vmatmul.mubr.bf16.gmra.mxu0 %v3595
    %v5195 = vpop.f32.mrf.mxu0
    %v5196 = vadd.f32 %v3864, %v5195
    %v5197 = vpop.f32.mrf.mxu0
    %v5198 = vadd.f32 %v3868, %v5197
    %v5199 = vpop.f32.mrf.mxu0
    %v5200 = vadd.f32 %v3864, %v5199
    %v5201 = vpop.f32.mrf.mxu0
    %v5202 = vadd.f32 %v3868, %v5201
    %5203 = vdwg.mxu0
    %5204 = vmatprep.subr.bf16.mxu0 %v4742
    %5205 = vmatpush1.bf16.msra.mxu0 %v4741
    %5206 = vmatprep.subr.bf16.mxu0 %v4738
    %5207 = vmatpush1.bf16.msra.mxu0 %v4737
    %5208 = vmatprep.subr.bf16.mxu0 %v4734
    %5209 = vmatpush1.bf16.msra.mxu0 %v4733
    %5210 = vmatprep.subr.bf16.mxu0 %v4730
    %5211 = vmatpush1.bf16.msra.mxu0 %v4729
    %5212 = vmatprep.subr.bf16.mxu0 %v4726
    %5213 = vmatpush1.bf16.msra.mxu0 %v4725
    %5214 = vmatprep.subr.bf16.mxu0 %v4722
    %5215 = vmatpush1.bf16.msra.mxu0 %v4721
    %5216 = vmatprep.subr.bf16.mxu0 %v4718
    %5217 = vmatpush1.bf16.msra.mxu0 %v4717
    %5218 = vmatprep.subr.bf16.mxu0 %v4714
    %5219 = vmatpush1.bf16.msra.mxu0 %v4713
    %5220 = vmatprep.subr.bf16.mxu0 %v4774
    %5221 = vmatpush2.bf16.msra.mxu0 %v4773
    %5222 = vmatprep.subr.bf16.mxu0 %v4770
    %5223 = vmatpush2.bf16.msra.mxu0 %v4769
    %5224 = vmatprep.subr.bf16.mxu0 %v4766
    %5225 = vmatpush2.bf16.msra.mxu0 %v4765
    %5226 = vmatprep.subr.bf16.mxu0 %v4762
    %5227 = vmatpush2.bf16.msra.mxu0 %v4761
    %5228 = vmatprep.subr.bf16.mxu0 %v4758
    %5229 = vmatpush2.bf16.msra.mxu0 %v4757
    %5230 = vmatprep.subr.bf16.mxu0 %v4754
    %5231 = vmatpush2.bf16.msra.mxu0 %v4753
    %5232 = vmatprep.subr.bf16.mxu0 %v4750
    %5233 = vmatpush2.bf16.msra.mxu0 %v4749
    %5234 = vmatprep.subr.bf16.mxu0 %v4746
    %5235 = vmatpush2.bf16.msra.mxu0 %v4745
    %5236 = vmatprep.mubr.bf16.mxu0 %v3598
    %5237 = vmatmul.mubr.bf16.gmra.mxu0 %v3597
    %v5238 = vpop.f32.mrf.mxu0
    %v5239 = vadd.f32 %v5196, %v5238
    %v5240 = vpop.f32.mrf.mxu0
    %v5241 = vadd.f32 %v5198, %v5240
    %v5242 = vpop.f32.mrf.mxu0
    %v5243 = vadd.f32 %v5200, %v5242
    %v5244 = vpop.f32.mrf.mxu0
    %v5245 = vadd.f32 %v5202, %v5244
    %5246 = vdwg.mxu0
    %5247 = vmatprep.subr.bf16.mxu0 %v4806
    %5248 = vmatpush1.bf16.msra.mxu0 %v4805
    %5249 = vmatprep.subr.bf16.mxu0 %v4802
    %5250 = vmatpush1.bf16.msra.mxu0 %v4801
    %5251 = vmatprep.subr.bf16.mxu0 %v4798
    %5252 = vmatpush1.bf16.msra.mxu0 %v4797
    %5253 = vmatprep.subr.bf16.mxu0 %v4794
    %5254 = vmatpush1.bf16.msra.mxu0 %v4793
    %5255 = vmatprep.subr.bf16.mxu0 %v4790
    %5256 = vmatpush1.bf16.msra.mxu0 %v4789
    %5257 = vmatprep.subr.bf16.mxu0 %v4786
    %5258 = vmatpush1.bf16.msra.mxu0 %v4785
    %5259 = vmatprep.subr.bf16.mxu0 %v4782
    %5260 = vmatpush1.bf16.msra.mxu0 %v4781
    %5261 = vmatprep.subr.bf16.mxu0 %v4778
    %5262 = vmatpush1.bf16.msra.mxu0 %v4777
    %5263 = vmatprep.subr.bf16.mxu0 %v4838
    %5264 = vmatpush2.bf16.msra.mxu0 %v4837
    %5265 = vmatprep.subr.bf16.mxu0 %v4834
    %5266 = vmatpush2.bf16.msra.mxu0 %v4833
    %5267 = vmatprep.subr.bf16.mxu0 %v4830
    %5268 = vmatpush2.bf16.msra.mxu0 %v4829
    %5269 = vmatprep.subr.bf16.mxu0 %v4826
    %5270 = vmatpush2.bf16.msra.mxu0 %v4825
    %5271 = vmatprep.subr.bf16.mxu0 %v4822
    %5272 = vmatpush2.bf16.msra.mxu0 %v4821
    %5273 = vmatprep.subr.bf16.mxu0 %v4818
    %5274 = vmatpush2.bf16.msra.mxu0 %v4817
    %5275 = vmatprep.subr.bf16.mxu0 %v4814
    %5276 = vmatpush2.bf16.msra.mxu0 %v4813
    %5277 = vmatprep.subr.bf16.mxu0 %v4810
    %5278 = vmatpush2.bf16.msra.mxu0 %v4809
    %5279 = vmatprep.mubr.bf16.mxu0 %v3600
    %5280 = vmatmul.mubr.bf16.gmra.mxu0 %v3599
    %v5281 = vpop.f32.mrf.mxu0
    %v5282 = vadd.f32 %v5239, %v5281
    %v5283 = vpop.f32.mrf.mxu0
    %v5284 = vadd.f32 %v5241, %v5283
    %v5285 = vpop.f32.mrf.mxu0
    %v5286 = vadd.f32 %v5243, %v5285
    %v5287 = vpop.f32.mrf.mxu0
    %v5288 = vadd.f32 %v5245, %v5287
    %5289 = vdwg.mxu0
    %5290 = vmatprep.subr.bf16.mxu0 %v4870
    %5291 = vmatpush1.bf16.msra.mxu0 %v4869
    %5292 = vmatprep.subr.bf16.mxu0 %v4866
    %5293 = vmatpush1.bf16.msra.mxu0 %v4865
    %5294 = vmatprep.subr.bf16.mxu0 %v4862
    %5295 = vmatpush1.bf16.msra.mxu0 %v4861
    %5296 = vmatprep.subr.bf16.mxu0 %v4858
    %5297 = vmatpush1.bf16.msra.mxu0 %v4857
    %5298 = vmatprep.subr.bf16.mxu0 %v4854
    %5299 = vmatpush1.bf16.msra.mxu0 %v4853
    %5300 = vmatprep.subr.bf16.mxu0 %v4850
    %5301 = vmatpush1.bf16.msra.mxu0 %v4849
    %5302 = vmatprep.subr.bf16.mxu0 %v4846
    %5303 = vmatpush1.bf16.msra.mxu0 %v4845
    %5304 = vmatprep.subr.bf16.mxu0 %v4842
    %5305 = vmatpush1.bf16.msra.mxu0 %v4841
    %5306 = vmatprep.subr.bf16.mxu0 %v4902
    %5307 = vmatpush2.bf16.msra.mxu0 %v4901
    %5308 = vmatprep.subr.bf16.mxu0 %v4898
    %5309 = vmatpush2.bf16.msra.mxu0 %v4897
    %5310 = vmatprep.subr.bf16.mxu0 %v4894
    %5311 = vmatpush2.bf16.msra.mxu0 %v4893
    %5312 = vmatprep.subr.bf16.mxu0 %v4890
    %5313 = vmatpush2.bf16.msra.mxu0 %v4889
    %5314 = vmatprep.subr.bf16.mxu0 %v4886
    %5315 = vmatpush2.bf16.msra.mxu0 %v4885
    %5316 = vmatprep.subr.bf16.mxu0 %v4882
    %5317 = vmatpush2.bf16.msra.mxu0 %v4881
    %5318 = vmatprep.subr.bf16.mxu0 %v4878
    %5319 = vmatpush2.bf16.msra.mxu0 %v4877
    %5320 = vmatprep.subr.bf16.mxu0 %v4874
    %5321 = vmatpush2.bf16.msra.mxu0 %v4873
    %5322 = vmatprep.mubr.bf16.mxu0 %v3602
    %5323 = vmatmul.mubr.bf16.gmra.mxu0 %v3601
    %v5324 = vpop.f32.mrf.mxu0
    %v5325 = vadd.f32 %v5282, %v5324
    %v5326 = vpop.f32.mrf.mxu0
    %v5327 = vadd.f32 %v5284, %v5326
    %v5328 = vpop.f32.mrf.mxu0
    %v5329 = vadd.f32 %v5286, %v5328
    %v5330 = vpop.f32.mrf.mxu0
    %v5331 = vadd.f32 %v5288, %v5330
    %5332 = vdwg.mxu0
    %5333 = vmatprep.subr.bf16.mxu0 %v4680
    %5334 = vmatpush1.bf16.msra.mxu0 %v4679
    %5335 = vmatprep.subr.bf16.mxu0 %v4676
    %5336 = vmatpush1.bf16.msra.mxu0 %v4675
    %5337 = vmatprep.subr.bf16.mxu0 %v4672
    %5338 = vmatpush1.bf16.msra.mxu0 %v4671
    %5339 = vmatprep.subr.bf16.mxu0 %v4668
    %5340 = vmatpush1.bf16.msra.mxu0 %v4667
    %5341 = vmatprep.subr.bf16.mxu0 %v4664
    %5342 = vmatpush1.bf16.msra.mxu0 %v4663
    %5343 = vmatprep.subr.bf16.mxu0 %v4660
    %5344 = vmatpush1.bf16.msra.mxu0 %v4659
    %5345 = vmatprep.subr.bf16.mxu0 %v4656
    %5346 = vmatpush1.bf16.msra.mxu0 %v4655
    %5347 = vmatprep.subr.bf16.mxu0 %v4652
    %5348 = vmatpush1.bf16.msra.mxu0 %v4651
    %5349 = vmatprep.subr.bf16.mxu0 %v4712
    %5350 = vmatpush2.bf16.msra.mxu0 %v4711
    %5351 = vmatprep.subr.bf16.mxu0 %v4708
    %5352 = vmatpush2.bf16.msra.mxu0 %v4707
    %5353 = vmatprep.subr.bf16.mxu0 %v4704
    %5354 = vmatpush2.bf16.msra.mxu0 %v4703
    %5355 = vmatprep.subr.bf16.mxu0 %v4700
    %5356 = vmatpush2.bf16.msra.mxu0 %v4699
    %5357 = vmatprep.subr.bf16.mxu0 %v4696
    %5358 = vmatpush2.bf16.msra.mxu0 %v4695
    %5359 = vmatprep.subr.bf16.mxu0 %v4692
    %5360 = vmatpush2.bf16.msra.mxu0 %v4691
    %5361 = vmatprep.subr.bf16.mxu0 %v4688
    %5362 = vmatpush2.bf16.msra.mxu0 %v4687
    %5363 = vmatprep.subr.bf16.mxu0 %v4684
    %5364 = vmatpush2.bf16.msra.mxu0 %v4683
    %5365 = vmatprep.mubr.bf16.mxu0 %v3596
    %5366 = vmatmul.mubr.bf16.gmra.mxu0 %v3595
    %v5367 = vpop.f32.mrf.mxu0
    %v5368 = vadd.f32 %v3872, %v5367
    %v5369 = vpop.f32.mrf.mxu0
    %v5370 = vadd.f32 %v3876, %v5369
    %v5371 = vpop.f32.mrf.mxu0
    %v5372 = vadd.f32 %v3872, %v5371
    %v5373 = vpop.f32.mrf.mxu0
    %v5374 = vadd.f32 %v3876, %v5373
    %5375 = vdwg.mxu0
    %5376 = vmatprep.subr.bf16.mxu0 %v4744
    %5377 = vmatpush1.bf16.msra.mxu0 %v4743
    %5378 = vmatprep.subr.bf16.mxu0 %v4740
    %5379 = vmatpush1.bf16.msra.mxu0 %v4739
    %5380 = vmatprep.subr.bf16.mxu0 %v4736
    %5381 = vmatpush1.bf16.msra.mxu0 %v4735
    %5382 = vmatprep.subr.bf16.mxu0 %v4732
    %5383 = vmatpush1.bf16.msra.mxu0 %v4731
    %5384 = vmatprep.subr.bf16.mxu0 %v4728
    %5385 = vmatpush1.bf16.msra.mxu0 %v4727
    %5386 = vmatprep.subr.bf16.mxu0 %v4724
    %5387 = vmatpush1.bf16.msra.mxu0 %v4723
    %5388 = vmatprep.subr.bf16.mxu0 %v4720
    %5389 = vmatpush1.bf16.msra.mxu0 %v4719
    %5390 = vmatprep.subr.bf16.mxu0 %v4716
    %5391 = vmatpush1.bf16.msra.mxu0 %v4715
    %5392 = vmatprep.subr.bf16.mxu0 %v4776
    %5393 = vmatpush2.bf16.msra.mxu0 %v4775
    %5394 = vmatprep.subr.bf16.mxu0 %v4772
    %5395 = vmatpush2.bf16.msra.mxu0 %v4771
    %5396 = vmatprep.subr.bf16.mxu0 %v4768
    %5397 = vmatpush2.bf16.msra.mxu0 %v4767
    %5398 = vmatprep.subr.bf16.mxu0 %v4764
    %5399 = vmatpush2.bf16.msra.mxu0 %v4763
    %5400 = vmatprep.subr.bf16.mxu0 %v4760
    %5401 = vmatpush2.bf16.msra.mxu0 %v4759
    %5402 = vmatprep.subr.bf16.mxu0 %v4756
    %5403 = vmatpush2.bf16.msra.mxu0 %v4755
    %5404 = vmatprep.subr.bf16.mxu0 %v4752
    %5405 = vmatpush2.bf16.msra.mxu0 %v4751
    %5406 = vmatprep.subr.bf16.mxu0 %v4748
    %5407 = vmatpush2.bf16.msra.mxu0 %v4747
    %5408 = vmatprep.mubr.bf16.mxu0 %v3598
    %5409 = vmatmul.mubr.bf16.gmra.mxu0 %v3597
    %v5410 = vpop.f32.mrf.mxu0
    %v5411 = vadd.f32 %v5368, %v5410
    %v5412 = vpop.f32.mrf.mxu0
    %v5413 = vadd.f32 %v5370, %v5412
    %v5414 = vpop.f32.mrf.mxu0
    %v5415 = vadd.f32 %v5372, %v5414
    %v5416 = vpop.f32.mrf.mxu0
    %v5417 = vadd.f32 %v5374, %v5416
    %5418 = vdwg.mxu0
    %5419 = vmatprep.subr.bf16.mxu0 %v4808
    %5420 = vmatpush1.bf16.msra.mxu0 %v4807
    %5421 = vmatprep.subr.bf16.mxu0 %v4804
    %5422 = vmatpush1.bf16.msra.mxu0 %v4803
    %5423 = vmatprep.subr.bf16.mxu0 %v4800
    %5424 = vmatpush1.bf16.msra.mxu0 %v4799
    %5425 = vmatprep.subr.bf16.mxu0 %v4796
    %5426 = vmatpush1.bf16.msra.mxu0 %v4795
    %5427 = vmatprep.subr.bf16.mxu0 %v4792
    %5428 = vmatpush1.bf16.msra.mxu0 %v4791
    %5429 = vmatprep.subr.bf16.mxu0 %v4788
    %5430 = vmatpush1.bf16.msra.mxu0 %v4787
    %5431 = vmatprep.subr.bf16.mxu0 %v4784
    %5432 = vmatpush1.bf16.msra.mxu0 %v4783
    %5433 = vmatprep.subr.bf16.mxu0 %v4780
    %5434 = vmatpush1.bf16.msra.mxu0 %v4779
    %5435 = vmatprep.subr.bf16.mxu0 %v4840
    %5436 = vmatpush2.bf16.msra.mxu0 %v4839
    %5437 = vmatprep.subr.bf16.mxu0 %v4836
    %5438 = vmatpush2.bf16.msra.mxu0 %v4835
    %5439 = vmatprep.subr.bf16.mxu0 %v4832
    %5440 = vmatpush2.bf16.msra.mxu0 %v4831
    %5441 = vmatprep.subr.bf16.mxu0 %v4828
    %5442 = vmatpush2.bf16.msra.mxu0 %v4827
    %5443 = vmatprep.subr.bf16.mxu0 %v4824
    %5444 = vmatpush2.bf16.msra.mxu0 %v4823
    %5445 = vmatprep.subr.bf16.mxu0 %v4820
    %5446 = vmatpush2.bf16.msra.mxu0 %v4819
    %5447 = vmatprep.subr.bf16.mxu0 %v4816
    %5448 = vmatpush2.bf16.msra.mxu0 %v4815
    %5449 = vmatprep.subr.bf16.mxu0 %v4812
    %5450 = vmatpush2.bf16.msra.mxu0 %v4811
    %5451 = vmatprep.mubr.bf16.mxu0 %v3600
    %5452 = vmatmul.mubr.bf16.gmra.mxu0 %v3599
    %v5453 = vpop.f32.mrf.mxu0
    %v5454 = vadd.f32 %v5411, %v5453
    %v5455 = vpop.f32.mrf.mxu0
    %v5456 = vadd.f32 %v5413, %v5455
    %v5457 = vpop.f32.mrf.mxu0
    %v5458 = vadd.f32 %v5415, %v5457
    %v5459 = vpop.f32.mrf.mxu0
    %v5460 = vadd.f32 %v5417, %v5459
    %5461 = vdwg.mxu0
    %5462 = vmatprep.subr.bf16.mxu0 %v4872
    %5463 = vmatpush1.bf16.msra.mxu0 %v4871
    %5464 = vmatprep.subr.bf16.mxu0 %v4868
    %5465 = vmatpush1.bf16.msra.mxu0 %v4867
    %5466 = vmatprep.subr.bf16.mxu0 %v4864
    %5467 = vmatpush1.bf16.msra.mxu0 %v4863
    %5468 = vmatprep.subr.bf16.mxu0 %v4860
    %5469 = vmatpush1.bf16.msra.mxu0 %v4859
    %5470 = vmatprep.subr.bf16.mxu0 %v4856
    %5471 = vmatpush1.bf16.msra.mxu0 %v4855
    %5472 = vmatprep.subr.bf16.mxu0 %v4852
    %5473 = vmatpush1.bf16.msra.mxu0 %v4851
    %5474 = vmatprep.subr.bf16.mxu0 %v4848
    %5475 = vmatpush1.bf16.msra.mxu0 %v4847
    %5476 = vmatprep.subr.bf16.mxu0 %v4844
    %5477 = vmatpush1.bf16.msra.mxu0 %v4843
    %5478 = vmatprep.subr.bf16.mxu0 %v4904
    %5479 = vmatpush2.bf16.msra.mxu0 %v4903
    %5480 = vmatprep.subr.bf16.mxu0 %v4900
    %5481 = vmatpush2.bf16.msra.mxu0 %v4899
    %5482 = vmatprep.subr.bf16.mxu0 %v4896
    %5483 = vmatpush2.bf16.msra.mxu0 %v4895
    %5484 = vmatprep.subr.bf16.mxu0 %v4892
    %5485 = vmatpush2.bf16.msra.mxu0 %v4891
    %5486 = vmatprep.subr.bf16.mxu0 %v4888
    %5487 = vmatpush2.bf16.msra.mxu0 %v4887
    %5488 = vmatprep.subr.bf16.mxu0 %v4884
    %5489 = vmatpush2.bf16.msra.mxu0 %v4883
    %5490 = vmatprep.subr.bf16.mxu0 %v4880
    %5491 = vmatpush2.bf16.msra.mxu0 %v4879
    %5492 = vmatprep.subr.bf16.mxu0 %v4876
    %5493 = vmatpush2.bf16.msra.mxu0 %v4875
    %5494 = vmatprep.mubr.bf16.mxu0 %v3602
    %5495 = vmatmul.mubr.bf16.gmra.mxu0 %v3601
    %v5496 = vpop.f32.mrf.mxu0
    %v5497 = vadd.f32 %v5454, %v5496
    %v5498 = vpop.f32.mrf.mxu0
    %v5499 = vadd.f32 %v5456, %v5498
    %v5500 = vpop.f32.mrf.mxu0
    %v5501 = vadd.f32 %v5458, %v5500
    %v5502 = vpop.f32.mrf.mxu0
    %v5503 = vadd.f32 %v5460, %v5502
    %5504 = vdwg.mxu0
    %v5505 = vmax.f32 %v5325, 0.0
    %v5506 = vmax.f32 %v5327, 0.0
    %v5507 = vmax.f32 %v5497, 0.0
    %v5508 = vmax.f32 %v5499, 0.0
    %v5509 = vmax.f32 %v5329, 0.0
    %v5510 = vmax.f32 %v5331, 0.0
    %v5511 = vmax.f32 %v5501, 0.0
    %v5512 = vmax.f32 %v5503, 0.0
    %v5513 = vpack.c.bf16 %v5509, %v5505
    %v5514 = vpack.c.bf16 %v5510, %v5506
    %v5515 = vpack.c.bf16 %v5511, %v5507
    %v5516 = vpack.c.bf16 %v5512, %v5508
    %v5517 = vld [vmem:[#allocation11] sm:$0xf]
    %v5518 = vld [vmem:[#allocation11 + $0x4] sm:$0xf]
    %v5519 = vld [vmem:[#allocation11 + $0x8] sm:$0xf]
    %v5520 = vld [vmem:[#allocation11 + $0xc] sm:$0xf]
    %v5521 = vld [vmem:[#allocation11 + $0x10] sm:$0xf]
    %v5522 = vld [vmem:[#allocation11 + $0x14] sm:$0xf]
    %v5523 = vld [vmem:[#allocation11 + $0x18] sm:$0xf]
    %v5524 = vld [vmem:[#allocation11 + $0x1c] sm:$0xf]
    %v5525 = vld [vmem:[#allocation11 + $0x20] sm:$0xf]
    %v5526 = vld [vmem:[#allocation11 + $0x24] sm:$0xf]
    %v5527 = vld [vmem:[#allocation11 + $0x28] sm:$0xf]
    %v5528 = vld [vmem:[#allocation11 + $0x2c] sm:$0xf]
    %v5529 = vld [vmem:[#allocation11 + $0x30] sm:$0xf]
    %v5530 = vld [vmem:[#allocation11 + $0x34] sm:$0xf]
    %v5531 = vld [vmem:[#allocation11 + $0x38] sm:$0xf]
    %v5532 = vld [vmem:[#allocation11 + $0x3c] sm:$0xf]
    %v5533 = vld [vmem:[#allocation11 + $0x40] sm:$0xf]
    %v5534 = vld [vmem:[#allocation11 + $0x44] sm:$0xf]
    %v5535 = vld [vmem:[#allocation11 + $0x48] sm:$0xf]
    %v5536 = vld [vmem:[#allocation11 + $0x4c] sm:$0xf]
    %v5537 = vld [vmem:[#allocation11 + $0x50] sm:$0xf]
    %v5538 = vld [vmem:[#allocation11 + $0x54] sm:$0xf]
    %v5539 = vld [vmem:[#allocation11 + $0x58] sm:$0xf]
    %v5540 = vld [vmem:[#allocation11 + $0x5c] sm:$0xf]
    %v5541 = vld [vmem:[#allocation11 + $0x60] sm:$0xf]
    %v5542 = vld [vmem:[#allocation11 + $0x64] sm:$0xf]
    %v5543 = vld [vmem:[#allocation11 + $0x68] sm:$0xf]
    %v5544 = vld [vmem:[#allocation11 + $0x6c] sm:$0xf]
    %v5545 = vld [vmem:[#allocation11 + $0x70] sm:$0xf]
    %v5546 = vld [vmem:[#allocation11 + $0x74] sm:$0xf]
    %v5547 = vld [vmem:[#allocation11 + $0x78] sm:$0xf]
    %v5548 = vld [vmem:[#allocation11 + $0x7c] sm:$0xf]
    %v5549 = vld [vmem:[#allocation11 + $0x80] sm:$0xf]
    %v5550 = vld [vmem:[#allocation11 + $0x84] sm:$0xf]
    %v5551 = vld [vmem:[#allocation11 + $0x88] sm:$0xf]
    %v5552 = vld [vmem:[#allocation11 + $0x8c] sm:$0xf]
    %v5553 = vld [vmem:[#allocation11 + $0x90] sm:$0xf]
    %v5554 = vld [vmem:[#allocation11 + $0x94] sm:$0xf]
    %v5555 = vld [vmem:[#allocation11 + $0x98] sm:$0xf]
    %v5556 = vld [vmem:[#allocation11 + $0x9c] sm:$0xf]
    %v5557 = vld [vmem:[#allocation11 + $0xa0] sm:$0xf]
    %v5558 = vld [vmem:[#allocation11 + $0xa4] sm:$0xf]
    %v5559 = vld [vmem:[#allocation11 + $0xa8] sm:$0xf]
    %v5560 = vld [vmem:[#allocation11 + $0xac] sm:$0xf]
    %v5561 = vld [vmem:[#allocation11 + $0xb0] sm:$0xf]
    %v5562 = vld [vmem:[#allocation11 + $0xb4] sm:$0xf]
    %v5563 = vld [vmem:[#allocation11 + $0xb8] sm:$0xf]
    %v5564 = vld [vmem:[#allocation11 + $0xbc] sm:$0xf]
    %v5565 = vld [vmem:[#allocation11 + $0xc0] sm:$0xf]
    %v5566 = vld [vmem:[#allocation11 + $0xc4] sm:$0xf]
    %v5567 = vld [vmem:[#allocation11 + $0xc8] sm:$0xf]
    %v5568 = vld [vmem:[#allocation11 + $0xcc] sm:$0xf]
    %v5569 = vld [vmem:[#allocation11 + $0xd0] sm:$0xf]
    %v5570 = vld [vmem:[#allocation11 + $0xd4] sm:$0xf]
    %v5571 = vld [vmem:[#allocation11 + $0xd8] sm:$0xf]
    %v5572 = vld [vmem:[#allocation11 + $0xdc] sm:$0xf]
    %v5573 = vld [vmem:[#allocation11 + $0xe0] sm:$0xf]
    %v5574 = vld [vmem:[#allocation11 + $0xe4] sm:$0xf]
    %v5575 = vld [vmem:[#allocation11 + $0xe8] sm:$0xf]
    %v5576 = vld [vmem:[#allocation11 + $0xec] sm:$0xf]
    %v5577 = vld [vmem:[#allocation11 + $0xf0] sm:$0xf]
    %v5578 = vld [vmem:[#allocation11 + $0xf4] sm:$0xf]
    %v5579 = vld [vmem:[#allocation11 + $0xf8] sm:$0xf]
    %v5580 = vld [vmem:[#allocation11 + $0xfc] sm:$0xf]
    %v5581 = vld [vmem:[#allocation13] sm:$0x1]
    %v5583 = vlaneseq
    %v5584 = vshrl.u32 %v5583, 7
    %v5585 = vsub.s32 0, %v5584
    %v5586 = vrot.slane %v5581, %v5585
    %v5652 = vunpack.c.l.b16 %v5517
    %v5653 = vunpack.c.l.b16 %v5518
    %v5654 = vunpack.c.l.b16 %v5519
    %v5655 = vunpack.c.l.b16 %v5520
    %v5656 = vunpack.c.l.b16 %v5521
    %v5657 = vunpack.c.l.b16 %v5522
    %v5658 = vunpack.c.l.b16 %v5523
    %v5659 = vunpack.c.l.b16 %v5524
    %v5660 = vunpack.c.l.b16 %v5525
    %v5661 = vunpack.c.l.b16 %v5526
    %v5662 = vunpack.c.l.b16 %v5527
    %v5663 = vunpack.c.l.b16 %v5528
    %v5664 = vunpack.c.l.b16 %v5529
    %v5665 = vunpack.c.l.b16 %v5530
    %v5666 = vunpack.c.l.b16 %v5531
    %v5667 = vunpack.c.l.b16 %v5532
    %v5668 = vunpack.c.l.b16 %v5533
    %v5669 = vunpack.c.l.b16 %v5534
    %v5670 = vunpack.c.l.b16 %v5535
    %v5671 = vunpack.c.l.b16 %v5536
    %v5672 = vunpack.c.l.b16 %v5537
    %v5673 = vunpack.c.l.b16 %v5538
    %v5674 = vunpack.c.l.b16 %v5539
    %v5675 = vunpack.c.l.b16 %v5540
    %v5676 = vunpack.c.l.b16 %v5541
    %v5677 = vunpack.c.l.b16 %v5542
    %v5678 = vunpack.c.l.b16 %v5543
    %v5679 = vunpack.c.l.b16 %v5544
    %v5680 = vunpack.c.l.b16 %v5545
    %v5681 = vunpack.c.l.b16 %v5546
    %v5682 = vunpack.c.l.b16 %v5547
    %v5683 = vunpack.c.l.b16 %v5548
    %v5684 = vunpack.c.l.b16 %v5549
    %v5685 = vunpack.c.l.b16 %v5550
    %v5686 = vunpack.c.l.b16 %v5551
    %v5687 = vunpack.c.l.b16 %v5552
    %v5688 = vunpack.c.l.b16 %v5553
    %v5689 = vunpack.c.l.b16 %v5554
    %v5690 = vunpack.c.l.b16 %v5555
    %v5691 = vunpack.c.l.b16 %v5556
    %v5692 = vunpack.c.l.b16 %v5557
    %v5693 = vunpack.c.l.b16 %v5558
    %v5694 = vunpack.c.l.b16 %v5559
    %v5695 = vunpack.c.l.b16 %v5560
    %v5696 = vunpack.c.l.b16 %v5561
    %v5697 = vunpack.c.l.b16 %v5562
    %v5698 = vunpack.c.l.b16 %v5563
    %v5699 = vunpack.c.l.b16 %v5564
    %v5700 = vunpack.c.l.b16 %v5565
    %v5701 = vunpack.c.l.b16 %v5566
    %v5702 = vunpack.c.l.b16 %v5567
    %v5703 = vunpack.c.l.b16 %v5568
    %v5704 = vunpack.c.l.b16 %v5569
    %v5705 = vunpack.c.l.b16 %v5570
    %v5706 = vunpack.c.l.b16 %v5571
    %v5707 = vunpack.c.l.b16 %v5572
    %v5708 = vunpack.c.l.b16 %v5573
    %v5709 = vunpack.c.l.b16 %v5574
    %v5710 = vunpack.c.l.b16 %v5575
    %v5711 = vunpack.c.l.b16 %v5576
    %v5712 = vunpack.c.l.b16 %v5577
    %v5713 = vunpack.c.l.b16 %v5578
    %v5714 = vunpack.c.l.b16 %v5579
    %v5715 = vunpack.c.l.b16 %v5580
    %v5716 = vpack.c.b16 %v5653, %v5652
    %v5717 = vpack.c.b16 %v5655, %v5654
    %v5718 = vpack.c.b16 %v5657, %v5656
    %v5719 = vpack.c.b16 %v5659, %v5658
    %v5720 = vpack.c.b16 %v5661, %v5660
    %v5721 = vpack.c.b16 %v5663, %v5662
    %v5722 = vpack.c.b16 %v5665, %v5664
    %v5723 = vpack.c.b16 %v5667, %v5666
    %v5724 = vpack.c.b16 %v5669, %v5668
    %v5725 = vpack.c.b16 %v5671, %v5670
    %v5726 = vpack.c.b16 %v5673, %v5672
    %v5727 = vpack.c.b16 %v5675, %v5674
    %v5728 = vpack.c.b16 %v5677, %v5676
    %v5729 = vpack.c.b16 %v5679, %v5678
    %v5730 = vpack.c.b16 %v5681, %v5680
    %v5731 = vpack.c.b16 %v5683, %v5682
    %v5732 = vpack.c.b16 %v5685, %v5684
    %v5733 = vpack.c.b16 %v5687, %v5686
    %v5734 = vpack.c.b16 %v5689, %v5688
    %v5735 = vpack.c.b16 %v5691, %v5690
    %v5736 = vpack.c.b16 %v5693, %v5692
    %v5737 = vpack.c.b16 %v5695, %v5694
    %v5738 = vpack.c.b16 %v5697, %v5696
    %v5739 = vpack.c.b16 %v5699, %v5698
    %v5740 = vpack.c.b16 %v5701, %v5700
    %v5741 = vpack.c.b16 %v5703, %v5702
    %v5742 = vpack.c.b16 %v5705, %v5704
    %v5743 = vpack.c.b16 %v5707, %v5706
    %v5744 = vpack.c.b16 %v5709, %v5708
    %v5745 = vpack.c.b16 %v5711, %v5710
    %v5746 = vpack.c.b16 %v5713, %v5712
    %v5747 = vpack.c.b16 %v5715, %v5714
    %5780 = vmatprep.subr.bf16.mxu0 0
    %5781 = vmatpush1.bf16.msra.mxu0 %v5723
    %5782 = vmatprep.subr.bf16.mxu0 0
    %5783 = vmatpush1.bf16.msra.mxu0 %v5722
    %5784 = vmatprep.subr.bf16.mxu0 0
    %5785 = vmatpush1.bf16.msra.mxu0 %v5721
    %5786 = vmatprep.subr.bf16.mxu0 0
    %5787 = vmatpush1.bf16.msra.mxu0 %v5720
    %5788 = vmatprep.subr.bf16.mxu0 0
    %5789 = vmatpush1.bf16.msra.mxu0 %v5719
    %5790 = vmatprep.subr.bf16.mxu0 0
    %5791 = vmatpush1.bf16.msra.mxu0 %v5718
    %5792 = vmatprep.subr.bf16.mxu0 0
    %5793 = vmatpush1.bf16.msra.mxu0 %v5717
    %5794 = vmatprep.subr.bf16.mxu0 0
    %5795 = vmatpush1.bf16.msra.mxu0 %v5716
    %5796 = vmatprep.subr.bf16.mxu0 0
    %5797 = vmatpush2.bf16.msra.mxu0 %v5731
    %5798 = vmatprep.subr.bf16.mxu0 0
    %5799 = vmatpush2.bf16.msra.mxu0 %v5730
    %5800 = vmatprep.subr.bf16.mxu0 0
    %5801 = vmatpush2.bf16.msra.mxu0 %v5729
    %5802 = vmatprep.subr.bf16.mxu0 0
    %5803 = vmatpush2.bf16.msra.mxu0 %v5728
    %5804 = vmatprep.subr.bf16.mxu0 0
    %5805 = vmatpush2.bf16.msra.mxu0 %v5727
    %5806 = vmatprep.subr.bf16.mxu0 0
    %5807 = vmatpush2.bf16.msra.mxu0 %v5726
    %5808 = vmatprep.subr.bf16.mxu0 0
    %5809 = vmatpush2.bf16.msra.mxu0 %v5725
    %5810 = vmatprep.subr.bf16.mxu0 0
    %5811 = vmatpush2.bf16.msra.mxu0 %v5724
    %5812 = vmatprep.mubr.bf16.mxu0 %v5514
    %5813 = vmatmul.mubr.bf16.gmra.mxu0 %v5513
    %v5814 = vpop.f32.mrf.mxu0
    %v5815 = vadd.f32 %v5586, %v5814
    %v5816 = vpop.f32.mrf.mxu0
    %v5817 = vpop.f32.mrf.mxu0
    %v5818 = vadd.f32 %v5586, %v5817
    %v5819 = vpop.f32.mrf.mxu0
    %5820 = vdwg.mxu0
    %5821 = vmatprep.subr.bf16.mxu0 0
    %5822 = vmatpush1.bf16.msra.mxu0 %v5739
    %5823 = vmatprep.subr.bf16.mxu0 0
    %5824 = vmatpush1.bf16.msra.mxu0 %v5738
    %5825 = vmatprep.subr.bf16.mxu0 0
    %5826 = vmatpush1.bf16.msra.mxu0 %v5737
    %5827 = vmatprep.subr.bf16.mxu0 0
    %5828 = vmatpush1.bf16.msra.mxu0 %v5736
    %5829 = vmatprep.subr.bf16.mxu0 0
    %5830 = vmatpush1.bf16.msra.mxu0 %v5735
    %5831 = vmatprep.subr.bf16.mxu0 0
    %5832 = vmatpush1.bf16.msra.mxu0 %v5734
    %5833 = vmatprep.subr.bf16.mxu0 0
    %5834 = vmatpush1.bf16.msra.mxu0 %v5733
    %5835 = vmatprep.subr.bf16.mxu0 0
    %5836 = vmatpush1.bf16.msra.mxu0 %v5732
    %5837 = vmatprep.subr.bf16.mxu0 0
    %5838 = vmatpush2.bf16.msra.mxu0 %v5747
    %5839 = vmatprep.subr.bf16.mxu0 0
    %5840 = vmatpush2.bf16.msra.mxu0 %v5746
    %5841 = vmatprep.subr.bf16.mxu0 0
    %5842 = vmatpush2.bf16.msra.mxu0 %v5745
    %5843 = vmatprep.subr.bf16.mxu0 0
    %5844 = vmatpush2.bf16.msra.mxu0 %v5744
    %5845 = vmatprep.subr.bf16.mxu0 0
    %5846 = vmatpush2.bf16.msra.mxu0 %v5743
    %5847 = vmatprep.subr.bf16.mxu0 0
    %5848 = vmatpush2.bf16.msra.mxu0 %v5742
    %5849 = vmatprep.subr.bf16.mxu0 0
    %5850 = vmatpush2.bf16.msra.mxu0 %v5741
    %5851 = vmatprep.subr.bf16.mxu0 0
    %5852 = vmatpush2.bf16.msra.mxu0 %v5740
    %5853 = vmatprep.mubr.bf16.mxu0 %v5516
    %5854 = vmatmul.mubr.bf16.gmra.mxu0 %v5515
    %v5855 = vpop.f32.mrf.mxu0
    %v5856 = vadd.f32 %v5815, %v5855
    %v5857 = vpop.f32.mrf.mxu0
    %v5858 = vpop.f32.mrf.mxu0
    %v5859 = vadd.f32 %v5818, %v5858
    %v5860 = vpop.f32.mrf.mxu0
    %5861 = vdwg.mxu0
    %5862 = vst [vmem:[#allocation14] sm:$0xff] %v5856
    %5863 = vst [vmem:[#allocation14 + $0x8] sm:$0xff] %v5859
    // Predicated region
    $region58: #{tpu_custom_call.1} parent=1 // pred_check
      _
    $region59: #{tpu_custom_call.1} parent=1 // pred_check_branch
      %5865 = sbr.rel (0) target = $region61
    $region60: #{tpu_custom_call.1} parent=1 // pred_region
      %s5867 = ssub.s32 256, 256
      %5868 = vsyncadd [#allocation4], %s5867
      %s5869 = sshll.u32 [#allocation14], 4
      %s5870 = int_to_ptr.vmem [resolvable:$true] %s5869
      %5875 = dma.vmem_to_hbm [thread:$0]  %s5870, 256, %s7, [#allocation4], 128, 128, 8
    $region61: #{tpu_custom_call.1} parent=1 // pred_fallthru
      _
    // Predicated region
    $region62: #{tpu_custom_call.1} parent=1 // pred_check
      _
    $region63: #{tpu_custom_call.1} parent=1 // pred_check_branch
      %5877 = sbr.rel (0) target = $region65
    $region64: #{tpu_custom_call.1} parent=1 // pred_region
      %5878 = dma.done [#allocation4], 256
    $region65: #{tpu_custom_call.1} parent=1 // pred_fallthru
      _
    %5879 = vsyncpa [#allocation3], 1
    %5880 = vsyncpa [#allocation6], 1
    %5881 = vsyncpa [#allocation9], 1
    %5882 = vsyncpa [#allocation12], 1
    %5883 = vsyncpa [#allocation4], 1

</llo_original>
